<compile_context>
chip_gen: v5e
topology: v5e:2x2
jax: 0.10.0
libtpu: 0.0.40
codegen_flags: <defaults>
</compile_context>

<pallas_src>
import jax
import jax.numpy as jnp
from jax.experimental import pallas as pl
from jax.experimental.pallas import tpu as pltpu

# ------------------------- hyperparameters (real model widths, small synthetic B/S) ---------
B = 2                   # batch
S = 8                   # sequence length
HIDDEN = 256            # encoder out_features (torch: hidden = 256)
EMB = HIDDEN // 4       # 64  = CNN channel width (AA emb 56 + mod emb 8)
LH = HIDDEN // 2        # 128 = LSTM hidden per direction (bidirectional)
G = 4 * LH              # 512 = LSTM gate width (i,f,g,o)
G2 = 2 * G              # 1024 = both directions' gates stacked on the lane axis
DECH = 64               # Decoder_Linear hidden width
PAD = 3                 # max conv kernel 7 -> same padding 3
NTAP = 2 * PAD + 1      # 7 taps
SB = S * B
MOD_FEATS = 12          # synthetic mod feature size (real peptdeep ~109); must be > 6
MOD_FIX_K = 6           # Mod_Embedding_FixFirstK.k
MOD_HIDDEN = 8
AA_EMB_SIZE = 27        # peptdeep aa_embedding_size, padding_idx=0


# ------------------------- the Pallas kernel -------------------------------------------------
def rt_cnn_lstm_kernel(
    xflat_ref,                     # ((S+2P)*B, EMB) time-major, zero padded along seq
    cnn_w_ref, cnn_b_ref,          # (7, EMB, 3*EMB), (1, 3*EMB)
    wih0a_ref, wih0b_ref,          # (EMB, 2G), (3*EMB, 2G)  layer-0 W_ih, rows split, dirs col-stacked
    whh0_ref, b0_ref,              # (2, LH, G), (1, 2G)
    wih1a_ref, wih1b_ref,          # (LH, 2G), (LH, 2G)      layer-1 W_ih (fwd/bwd input halves)
    whh1_ref, b1_ref,              # (2, LH, G), (1, 2G)
    h0_ref, c0_ref,                # (4, 1, LH)  learnable initial states (layer*2 + dir)
    attnwa_ref, attnwb_ref,        # (LH, 1)     SeqAttentionSum weight, fwd/bwd halves
    dw1a_ref, dw1b_ref, db1_ref,   # (LH, DECH), (LH, DECH), (1, DECH)
    dw2_ref,                       # (DECH, 1)
    bmask_ref,                     # (SB, B) one-hot batch membership (row r = t*B + b)
    bmask_t_ref,                   # (B, SB) its transpose (host-precomputed, no in-kernel xpose)
    misc_ref,                      # SMEM (2,) f32: [prelu_alpha, final_bias]
    o_ref,                         # (B, 1) output
    fwd0_scr, bwd0_scr, fwd1_scr, bwd1_scr,   # (SB, LH) VMEM scratch (per layer/direction)
):
    f32 = jnp.float32

    # -------- SeqCNN: identity ++ conv(k=3,5,7) as 7 lane-dense tap matmuls ------------------
    x_id = xflat_ref[PAD * B:PAD * B + SB, :]                          # (SB, EMB) identity
    conv = jnp.dot(xflat_ref[0:SB, :], cnn_w_ref[0],
                   preferred_element_type=f32) + cnn_b_ref[...]        # (SB, 3*EMB)
    for dk in range(1, NTAP):
        conv = conv + jnp.dot(xflat_ref[dk * B:dk * B + SB, :], cnn_w_ref[dk],
                              preferred_element_type=f32)
    # (dropout p=0.1 after CNN -> identity in eval mode)

    # -------- SeqLSTM: 2 layers, bidirectional, hidden = LH per direction --------------------
    def run_dir(gx, whh, h_init, c_init, reverse, out_scr):
        # gx: (SB, G) precomputed input gates; only h @ W_hh is sequential.
        h = jnp.broadcast_to(h_init, (B, LH))
        c = jnp.broadcast_to(c_init, (B, LH))
        for s in range(S):                                             # static unroll (S=8)
            t = (S - 1 - s) if reverse else s
            g = gx[t * B:(t + 1) * B, :] + jnp.dot(h, whh, preferred_element_type=f32)
            gi = jax.nn.sigmoid(g[:, 0:LH])                            # torch gate order i,f,g,o
            gf = jax.nn.sigmoid(g[:, LH:2 * LH])
            gg = jnp.tanh(g[:, 2 * LH:3 * LH])
            go = jax.nn.sigmoid(g[:, 3 * LH:4 * LH])
            c = gf * c + gi * gg
            h = go * jnp.tanh(c)
            out_scr[t * B:(t + 1) * B, :] = h

    # layer 0: input = [x | conv3 | conv5 | conv7] via row-split weights (no concat);
    # both directions' input gates precomputed in ONE lane-dense (., 1024) matmul pair.
    gx0_all = (jnp.dot(x_id, wih0a_ref[...], preferred_element_type=f32)
               + jnp.dot(conv, wih0b_ref[...], preferred_element_type=f32)
               + b0_ref[...])                                          # (SB, 2G)
    for d in range(2):                                                 # 0 = fwd, 1 = bwd
        run_dir(gx0_all[:, d * G:(d + 1) * G], whh0_ref[d], h0_ref[d], c0_ref[d],
                reverse=(d == 1), out_scr=fwd0_scr if d == 0 else bwd0_scr)

    # layer 1: input = [h_fwd | h_bwd] of layer 0, fed via row-split, dir-col-stacked weights
    y0f = fwd0_scr[...]
    y0b = bwd0_scr[...]
    gx1_all = (jnp.dot(y0f, wih1a_ref[...], preferred_element_type=f32)
               + jnp.dot(y0b, wih1b_ref[...], preferred_element_type=f32)
               + b1_ref[...])                                          # (SB, 2G)
    for d in range(2):
        run_dir(gx1_all[:, d * G:(d + 1) * G], whh1_ref[d], h0_ref[2 + d], c0_ref[2 + d],
                reverse=(d == 1), out_scr=fwd1_scr if d == 0 else bwd1_scr)
    # (dropout p=0.1 after LSTM and p=0.2 in Model_RT_LSTM_CNN -> identity in eval)

    # -------- SeqAttentionSum: per-batch softmax over seq on the interleaved layout ----------
    y1f = fwd1_scr[...]                                                # (SB, LH) forward half
    y1b = bwd1_scr[...]                                                # (SB, LH) backward half
    logits = (jnp.dot(y1f, attnwa_ref[...], preferred_element_type=f32)
              + jnp.dot(y1b, attnwb_ref[...], preferred_element_type=f32))   # (SB, 1)
    bmask = bmask_ref[...]                                             # (SB, B)
    masked = logits - (1.0 - bmask) * 1e30                             # (SB, B)
    mx = jnp.max(masked, axis=0, keepdims=True)                        # (1, B) per-batch max
    e = jnp.exp(masked - mx) * bmask                                   # (SB, B)
    denom = jnp.sum(e, axis=0, keepdims=True)                          # (1, B)
    probs = e * pl.reciprocal(denom, approx=True)                      # (SB, B) per-batch probs
    prow = jnp.sum(probs, axis=1, keepdims=True)                       # (SB, 1) weight of row r

    # weighted sum over the sequence: pooled[b] = sum_r bmask_t[b,r] * prow[r] * y1[r]
    pooled_f = jnp.dot(bmask_t_ref[...], prow * y1f,
                       preferred_element_type=f32)                     # (B, LH)
    pooled_b = jnp.dot(bmask_t_ref[...], prow * y1b,
                       preferred_element_type=f32)                     # (B, LH)

    # -------- Decoder_Linear: Linear(256,64) -> PReLU -> Linear(64,1) ------------------------
    dec = (jnp.dot(pooled_f, dw1a_ref[...], preferred_element_type=f32)
           + jnp.dot(pooled_b, dw1b_ref[...], preferred_element_type=f32)
           + db1_ref[...])                                             # (B, DECH)
    alpha = misc_ref[0]
    act = jnp.where(dec >= 0.0, dec, alpha * dec)                      # PReLU (1 parameter)
    o_ref[...] = (jnp.dot(act, dw2_ref[...], preferred_element_type=f32)
                  + misc_ref[1])                                       # (B, 1) direct store


# ------------------------- pallas_call wrapper ------------------------------------------------
def _full_spec(a):
    n = a.ndim
    return pl.BlockSpec(a.shape, lambda i, _n=n: (0,) * _n)


def rt_lstm_cnn_pallas(xflat, p):
    dense = [
        xflat,
        p["cnn_w"], p["cnn_b"],
        p["wih0a"], p["wih0b"], p["whh0"], p["b0"],
        p["wih1a"], p["wih1b"], p["whh1"], p["b1"],
        p["h0"], p["c0"],
        p["attnw_a"], p["attnw_b"],
        p["dw1a"], p["dw1b"], p["db1"], p["dw2"],
        p["bmask"], p["bmask_t"],
    ]
    in_specs = [_full_spec(a) for a in dense] + [
        pl.BlockSpec(memory_space=pltpu.MemorySpace.SMEM)              # misc scalars
    ]
    out = pl.pallas_call(
        rt_cnn_lstm_kernel,
        out_shape=jax.ShapeDtypeStruct((B, 1), jnp.float32),
        grid=(1,),
        in_specs=in_specs,
        out_specs=pl.BlockSpec((B, 1), lambda i: (0, 0)),
        scratch_shapes=[pltpu.VMEM((SB, LH), jnp.float32) for _ in range(4)],
        compiler_params=pltpu.CompilerParams(
            dimension_semantics=("arbitrary",),
            vmem_limit_bytes=32 << 20,
        ),
    )(*dense, p["misc"])
    return out[:, 0]                                                   # .squeeze(1)


# ------------------------- glue: embeddings + layout prep (plain JAX) -------------------------
def input_nn(aa_indices, mod_x, p):
    # AA embedding (27, EMB-8, padding_idx=0) ++ Mod_Embedding_FixFirstK(mod_feats -> 8)
    aa_e = p["aa_emb"][aa_indices]                                               # (B,S,EMB-8)
    mod_e = jnp.concatenate(
        [mod_x[..., :MOD_FIX_K], mod_x[..., MOD_FIX_K:] @ p["mod_w"]], axis=-1
    )                                                                            # (B,S,8)
    x = jnp.concatenate([aa_e, mod_e], axis=-1)                                  # (B,S,EMB)
    # zero-pad the sequence for 'same' convolutions, then flatten time-major (row = t*B + b)
    xp = jnp.pad(x, ((0, 0), (PAD, PAD), (0, 0)))
    return jnp.transpose(xp, (1, 0, 2)).reshape((S + 2 * PAD) * B, EMB)


def model_rt_lstm_cnn_forward(aa_indices, mod_x, params):
    xflat = input_nn(aa_indices, mod_x, params)    # TODO(synk): embedding gather stays in JAX
    return rt_lstm_cnn_pallas(xflat, params)       # (B,)


# ------------------------- deterministic parameter init ---------------------------------------
def init_params(key):
    ks = jax.random.split(key, 24)

    def nrm(k, shp, scale=0.05):
        return scale * jax.random.normal(k, shp, dtype=jnp.float32)

    E3 = 3 * EMB
    # SeqCNN: Conv1d(EMB,EMB,k) for k=3,5,7 stacked into 7 taps of (EMB, 3*EMB);
    # tap dk corresponds to input offset dk-3; narrower kernels get structural zeros.
    w3, w5, w7 = nrm(ks[0], (3, EMB, EMB)), nrm(ks[1], (5, EMB, EMB)), nrm(ks[2], (7, EMB, EMB))
    cnn_w = jnp.zeros((NTAP, EMB, E3), jnp.float32)
    cnn_w = cnn_w.at[2:5, :, 0:EMB].set(w3)
    cnn_w = cnn_w.at[1:6, :, EMB:2 * EMB].set(w5)
    cnn_w = cnn_w.at[:, :, 2 * EMB:3 * EMB].set(w7)

    params = {
        "aa_emb": nrm(ks[4], (AA_EMB_SIZE, EMB - MOD_HIDDEN)).at[0].set(0.0),  # padding_idx=0
        "mod_w": nrm(ks[5], (MOD_FEATS - MOD_FIX_K, MOD_HIDDEN - MOD_FIX_K)),
        "cnn_w": cnn_w,
        "cnn_b": nrm(ks[3], (1, E3)),
        # LSTM layer 0: W_ih rows split into [identity | conv3,5,7]; fwd/bwd dirs col-stacked;
        # b = b_ih + b_hh combined
        "wih0a": nrm(ks[6], (EMB, G2)), "wih0b": nrm(ks[7], (E3, G2)),
        "whh0": nrm(ks[8], (2, LH, G)), "b0": nrm(ks[9], (1, G2)),
        # LSTM layer 1: W_ih rows split into [fwd half | bwd half] of layer-0 output
        "wih1a": nrm(ks[10], (LH, G2)), "wih1b": nrm(ks[11], (LH, G2)),
        "whh1": nrm(ks[12], (2, LH, G)), "b1": nrm(ks[13], (1, G2)),
        # learnable initial states (torch layout index = layer*2 + direction)
        "h0": nrm(ks[14], (4, 1, LH), 0.01), "c0": nrm(ks[15], (4, 1, LH), 0.01),
        # SeqAttentionSum Linear(256,1,bias=False), rows split fwd/bwd
        "attnw_a": nrm(ks[16], (LH, 1)), "attnw_b": nrm(ks[17], (LH, 1)),
        # Decoder_Linear: Linear(256,64) rows split fwd/bwd, PReLU, Linear(64,1)
        "dw1a": nrm(ks[18], (LH, DECH)), "dw1b": nrm(ks[19], (LH, DECH)),
        "db1": nrm(ks[20], (1, DECH)), "dw2": nrm(ks[21], (DECH, 1)),
        # [PReLU alpha (torch default 0.25), final Linear bias]
        "misc": jnp.array([0.25, 0.01], dtype=jnp.float32),
        # constant one-hot batch membership for time-major rows r = t*B + b (and transpose)
        "bmask": jnp.tile(jnp.eye(B, dtype=jnp.float32), (S, 1)),
        "bmask_t": jnp.tile(jnp.eye(B, dtype=jnp.float32), (1, S)),
    }
    return params


# ------------------------- main ---------------------------------------------------------------
if __name__ == "__main__":
    key = jax.random.PRNGKey(0)
    k_aa, k_mod, k_par = jax.random.split(key, 3)
    aa_indices = jax.random.randint(k_aa, (B, S), 0, AA_EMB_SIZE, dtype=jnp.int32)
    mod_x = jax.random.normal(k_mod, (B, S, MOD_FEATS), dtype=jnp.float32)
    params = init_params(k_par)

    out = model_rt_lstm_cnn_forward(aa_indices, mod_x, params)
    out = jax.block_until_ready(out)
    assert out.shape == (B,), out.shape
    assert bool(jnp.all(jnp.isfinite(out)))
    print("KERNEL_OK")
</pallas_src>

<mosaic_0001>
module attributes {stable_mosaic.version = 11 : i64} {
  func.func @rt_cnn_lstm_kernel(%arg0: i32, %arg1: memref<28x64xf32, #tpu.memory_space<vmem>>, %arg2: memref<7x64x192xf32, #tpu.memory_space<vmem>>, %arg3: memref<1x192xf32, #tpu.memory_space<vmem>>, %arg4: memref<64x1024xf32, #tpu.memory_space<vmem>>, %arg5: memref<192x1024xf32, #tpu.memory_space<vmem>>, %arg6: memref<2x128x512xf32, #tpu.memory_space<vmem>>, %arg7: memref<1x1024xf32, #tpu.memory_space<vmem>>, %arg8: memref<128x1024xf32, #tpu.memory_space<vmem>>, %arg9: memref<128x1024xf32, #tpu.memory_space<vmem>>, %arg10: memref<2x128x512xf32, #tpu.memory_space<vmem>>, %arg11: memref<1x1024xf32, #tpu.memory_space<vmem>>, %arg12: memref<4x1x128xf32, #tpu.memory_space<vmem>>, %arg13: memref<4x1x128xf32, #tpu.memory_space<vmem>>, %arg14: memref<128x1xf32, #tpu.memory_space<vmem>>, %arg15: memref<128x1xf32, #tpu.memory_space<vmem>>, %arg16: memref<128x64xf32, #tpu.memory_space<vmem>>, %arg17: memref<128x64xf32, #tpu.memory_space<vmem>>, %arg18: memref<1x64xf32, #tpu.memory_space<vmem>>, %arg19: memref<64x1xf32, #tpu.memory_space<vmem>>, %arg20: memref<16x2xf32, #tpu.memory_space<vmem>>, %arg21: memref<2x16xf32, #tpu.memory_space<vmem>>, %arg22: memref<2xf32, #tpu.memory_space<smem>>, %arg23: memref<2x1xf32, #tpu.memory_space<vmem>>, %arg24: memref<16x128xf32, #tpu.memory_space<vmem>>, %arg25: memref<16x128xf32, #tpu.memory_space<vmem>>, %arg26: memref<16x128xf32, #tpu.memory_space<vmem>>, %arg27: memref<16x128xf32, #tpu.memory_space<vmem>>) attributes {dimension_semantics = [#tpu.dimension_semantics<arbitrary>], iteration_bounds = array<i64: 1>, scalar_prefetch = 0 : i64, scratch_operands = 4 : i64, tpu.core_type = #tpu.core_type<tc>, window_params = [{pipeline_mode = #tpu.pipeline_mode<synchronous>, transform_indices = @transform_0, window_bounds = array<i64: 28, 64>}, {pipeline_mode = #tpu.pipeline_mode<synchronous>, transform_indices = @transform_1, window_bounds = array<i64: 7, 64, 192>}, {pipeline_mode = #tpu.pipeline_mode<synchronous>, transform_indices = @transform_2, window_bounds = array<i64: 1, 192>}, {pipeline_mode = #tpu.pipeline_mode<synchronous>, transform_indices = @transform_3, window_bounds = array<i64: 64, 1024>}, {pipeline_mode = #tpu.pipeline_mode<synchronous>, transform_indices = @transform_4, window_bounds = array<i64: 192, 1024>}, {pipeline_mode = #tpu.pipeline_mode<synchronous>, transform_indices = @transform_5, window_bounds = array<i64: 2, 128, 512>}, {pipeline_mode = #tpu.pipeline_mode<synchronous>, transform_indices = @transform_6, window_bounds = array<i64: 1, 1024>}, {pipeline_mode = #tpu.pipeline_mode<synchronous>, transform_indices = @transform_7, window_bounds = array<i64: 128, 1024>}, {pipeline_mode = #tpu.pipeline_mode<synchronous>, transform_indices = @transform_8, window_bounds = array<i64: 128, 1024>}, {pipeline_mode = #tpu.pipeline_mode<synchronous>, transform_indices = @transform_9, window_bounds = array<i64: 2, 128, 512>}, {pipeline_mode = #tpu.pipeline_mode<synchronous>, transform_indices = @transform_10, window_bounds = array<i64: 1, 1024>}, {pipeline_mode = #tpu.pipeline_mode<synchronous>, transform_indices = @transform_11, window_bounds = array<i64: 4, 1, 128>}, {pipeline_mode = #tpu.pipeline_mode<synchronous>, transform_indices = @transform_12, window_bounds = array<i64: 4, 1, 128>}, {pipeline_mode = #tpu.pipeline_mode<synchronous>, transform_indices = @transform_13, window_bounds = array<i64: 128, 1>}, {pipeline_mode = #tpu.pipeline_mode<synchronous>, transform_indices = @transform_14, window_bounds = array<i64: 128, 1>}, {pipeline_mode = #tpu.pipeline_mode<synchronous>, transform_indices = @transform_15, window_bounds = array<i64: 128, 64>}, {pipeline_mode = #tpu.pipeline_mode<synchronous>, transform_indices = @transform_16, window_bounds = array<i64: 128, 64>}, {pipeline_mode = #tpu.pipeline_mode<synchronous>, transform_indices = @transform_17, window_bounds = array<i64: 1, 64>}, {pipeline_mode = #tpu.pipeline_mode<synchronous>, transform_indices = @transform_18, window_bounds = array<i64: 64, 1>}, {pipeline_mode = #tpu.pipeline_mode<synchronous>, transform_indices = @transform_19, window_bounds = array<i64: 16, 2>}, {pipeline_mode = #tpu.pipeline_mode<synchronous>, transform_indices = @transform_20, window_bounds = array<i64: 2, 16>}, {transform_indices = @transform_21, window_bounds = array<i64: 2>}, {pipeline_mode = #tpu.pipeline_mode<synchronous>, transform_indices = @transform_22, window_bounds = array<i64: 2, 1>}]} {
    %c6 = arith.constant 6 : index
    %c0 = arith.constant 0 : index
    %0 = vector.load %arg1[%c6, %c0] : memref<28x64xf32, #tpu.memory_space<vmem>>, vector<16x64xf32>
    %c0_0 = arith.constant 0 : index
    %c0_1 = arith.constant 0 : index
    %1 = vector.load %arg1[%c0_0, %c0_1] : memref<28x64xf32, #tpu.memory_space<vmem>>, vector<16x64xf32>
    %c0_2 = arith.constant 0 : index
    %c0_3 = arith.constant 0 : index
    %c0_4 = arith.constant 0 : index
    %2 = vector.load %arg2[%c0_2, %c0_3, %c0_4] : memref<7x64x192xf32, #tpu.memory_space<vmem>>, vector<1x64x192xf32>
    %3 = vector.shape_cast %2 : vector<1x64x192xf32> to vector<64x192xf32>
    %cst = arith.constant dense<0.000000e+00> : vector<16x192xf32>
    %4 = tpu.matmul %1, %3, %cst {dimension_numbers = #tpu.dot_dimension_numbers<[1], [0], [0], [1], [0, 0, 1, 1], [], []>} : vector<16x64xf32>, vector<64x192xf32>, vector<16x192xf32> -> vector<16x192xf32>
    %c0_5 = arith.constant 0 : index
    %c0_6 = arith.constant 0 : index
    %5 = vector.load %arg3[%c0_5, %c0_6] : memref<1x192xf32, #tpu.memory_space<vmem>>, vector<1x192xf32>
    %6 = vector.broadcast %5 : vector<1x192xf32> to vector<16x192xf32>
    %7 = arith.addf %4, %6 : vector<16x192xf32>
    %c2 = arith.constant 2 : index
    %c0_7 = arith.constant 0 : index
    %8 = vector.load %arg1[%c2, %c0_7] : memref<28x64xf32, #tpu.memory_space<vmem>>, vector<16x64xf32>
    %c1 = arith.constant 1 : index
    %c0_8 = arith.constant 0 : index
    %c0_9 = arith.constant 0 : index
    %9 = vector.load %arg2[%c1, %c0_8, %c0_9] : memref<7x64x192xf32, #tpu.memory_space<vmem>>, vector<1x64x192xf32>
    %10 = vector.shape_cast %9 : vector<1x64x192xf32> to vector<64x192xf32>
    %cst_10 = arith.constant dense<0.000000e+00> : vector<16x192xf32>
    %11 = tpu.matmul %8, %10, %cst_10 {dimension_numbers = #tpu.dot_dimension_numbers<[1], [0], [0], [1], [0, 0, 1, 1], [], []>} : vector<16x64xf32>, vector<64x192xf32>, vector<16x192xf32> -> vector<16x192xf32>
    %12 = arith.addf %7, %11 : vector<16x192xf32>
    %c4 = arith.constant 4 : index
    %c0_11 = arith.constant 0 : index
    %13 = vector.load %arg1[%c4, %c0_11] : memref<28x64xf32, #tpu.memory_space<vmem>>, vector<16x64xf32>
    %c2_12 = arith.constant 2 : index
    %c0_13 = arith.constant 0 : index
    %c0_14 = arith.constant 0 : index
    %14 = vector.load %arg2[%c2_12, %c0_13, %c0_14] : memref<7x64x192xf32, #tpu.memory_space<vmem>>, vector<1x64x192xf32>
    %15 = vector.shape_cast %14 : vector<1x64x192xf32> to vector<64x192xf32>
    %cst_15 = arith.constant dense<0.000000e+00> : vector<16x192xf32>
    %16 = tpu.matmul %13, %15, %cst_15 {dimension_numbers = #tpu.dot_dimension_numbers<[1], [0], [0], [1], [0, 0, 1, 1], [], []>} : vector<16x64xf32>, vector<64x192xf32>, vector<16x192xf32> -> vector<16x192xf32>
    %17 = arith.addf %12, %16 : vector<16x192xf32>
    %c6_16 = arith.constant 6 : index
    %c0_17 = arith.constant 0 : index
    %18 = vector.load %arg1[%c6_16, %c0_17] : memref<28x64xf32, #tpu.memory_space<vmem>>, vector<16x64xf32>
    %c3 = arith.constant 3 : index
    %c0_18 = arith.constant 0 : index
    %c0_19 = arith.constant 0 : index
    %19 = vector.load %arg2[%c3, %c0_18, %c0_19] : memref<7x64x192xf32, #tpu.memory_space<vmem>>, vector<1x64x192xf32>
    %20 = vector.shape_cast %19 : vector<1x64x192xf32> to vector<64x192xf32>
    %cst_20 = arith.constant dense<0.000000e+00> : vector<16x192xf32>
    %21 = tpu.matmul %18, %20, %cst_20 {dimension_numbers = #tpu.dot_dimension_numbers<[1], [0], [0], [1], [0, 0, 1, 1], [], []>} : vector<16x64xf32>, vector<64x192xf32>, vector<16x192xf32> -> vector<16x192xf32>
    %22 = arith.addf %17, %21 : vector<16x192xf32>
    %c8 = arith.constant 8 : index
    %c0_21 = arith.constant 0 : index
    %23 = vector.load %arg1[%c8, %c0_21] : memref<28x64xf32, #tpu.memory_space<vmem>>, vector<16x64xf32>
    %c4_22 = arith.constant 4 : index
    %c0_23 = arith.constant 0 : index
    %c0_24 = arith.constant 0 : index
    %24 = vector.load %arg2[%c4_22, %c0_23, %c0_24] : memref<7x64x192xf32, #tpu.memory_space<vmem>>, vector<1x64x192xf32>
    %25 = vector.shape_cast %24 : vector<1x64x192xf32> to vector<64x192xf32>
    %cst_25 = arith.constant dense<0.000000e+00> : vector<16x192xf32>
    %26 = tpu.matmul %23, %25, %cst_25 {dimension_numbers = #tpu.dot_dimension_numbers<[1], [0], [0], [1], [0, 0, 1, 1], [], []>} : vector<16x64xf32>, vector<64x192xf32>, vector<16x192xf32> -> vector<16x192xf32>
    %27 = arith.addf %22, %26 : vector<16x192xf32>
    %c10 = arith.constant 10 : index
    %c0_26 = arith.constant 0 : index
    %28 = vector.load %arg1[%c10, %c0_26] : memref<28x64xf32, #tpu.memory_space<vmem>>, vector<16x64xf32>
    %c5 = arith.constant 5 : index
    %c0_27 = arith.constant 0 : index
    %c0_28 = arith.constant 0 : index
    %29 = vector.load %arg2[%c5, %c0_27, %c0_28] : memref<7x64x192xf32, #tpu.memory_space<vmem>>, vector<1x64x192xf32>
    %30 = vector.shape_cast %29 : vector<1x64x192xf32> to vector<64x192xf32>
    %cst_29 = arith.constant dense<0.000000e+00> : vector<16x192xf32>
    %31 = tpu.matmul %28, %30, %cst_29 {dimension_numbers = #tpu.dot_dimension_numbers<[1], [0], [0], [1], [0, 0, 1, 1], [], []>} : vector<16x64xf32>, vector<64x192xf32>, vector<16x192xf32> -> vector<16x192xf32>
    %32 = arith.addf %27, %31 : vector<16x192xf32>
    %c12 = arith.constant 12 : index
    %c0_30 = arith.constant 0 : index
    %33 = vector.load %arg1[%c12, %c0_30] : memref<28x64xf32, #tpu.memory_space<vmem>>, vector<16x64xf32>
    %c6_31 = arith.constant 6 : index
    %c0_32 = arith.constant 0 : index
    %c0_33 = arith.constant 0 : index
    %34 = vector.load %arg2[%c6_31, %c0_32, %c0_33] : memref<7x64x192xf32, #tpu.memory_space<vmem>>, vector<1x64x192xf32>
    %35 = vector.shape_cast %34 : vector<1x64x192xf32> to vector<64x192xf32>
    %cst_34 = arith.constant dense<0.000000e+00> : vector<16x192xf32>
    %36 = tpu.matmul %33, %35, %cst_34 {dimension_numbers = #tpu.dot_dimension_numbers<[1], [0], [0], [1], [0, 0, 1, 1], [], []>} : vector<16x64xf32>, vector<64x192xf32>, vector<16x192xf32> -> vector<16x192xf32>
    %37 = arith.addf %32, %36 : vector<16x192xf32>
    %c0_35 = arith.constant 0 : index
    %c0_36 = arith.constant 0 : index
    %38 = vector.load %arg4[%c0_35, %c0_36] : memref<64x1024xf32, #tpu.memory_space<vmem>>, vector<64x1024xf32>
    %cst_37 = arith.constant dense<0.000000e+00> : vector<16x1024xf32>
    %39 = tpu.matmul %0, %38, %cst_37 {dimension_numbers = #tpu.dot_dimension_numbers<[1], [0], [0], [1], [0, 0, 1, 1], [], []>} : vector<16x64xf32>, vector<64x1024xf32>, vector<16x1024xf32> -> vector<16x1024xf32>
    %c0_38 = arith.constant 0 : index
    %c0_39 = arith.constant 0 : index
    %40 = vector.load %arg5[%c0_38, %c0_39] : memref<192x1024xf32, #tpu.memory_space<vmem>>, vector<192x1024xf32>
    %cst_40 = arith.constant dense<0.000000e+00> : vector<16x1024xf32>
    %41 = tpu.matmul %37, %40, %cst_40 {dimension_numbers = #tpu.dot_dimension_numbers<[1], [0], [0], [1], [0, 0, 1, 1], [], []>} : vector<16x192xf32>, vector<192x1024xf32>, vector<16x1024xf32> -> vector<16x1024xf32>
    %42 = arith.addf %39, %41 : vector<16x1024xf32>
    %c0_41 = arith.constant 0 : index
    %c0_42 = arith.constant 0 : index
    %43 = vector.load %arg7[%c0_41, %c0_42] : memref<1x1024xf32, #tpu.memory_space<vmem>>, vector<1x1024xf32>
    %44 = vector.broadcast %43 : vector<1x1024xf32> to vector<16x1024xf32>
    %45 = arith.addf %42, %44 : vector<16x1024xf32>
    %46 = vector.extract_strided_slice %45 {offsets = [0, 0], sizes = [16, 512], strides = [1, 1]} : vector<16x1024xf32> to vector<16x512xf32>
    %c0_43 = arith.constant 0 : index
    %c0_44 = arith.constant 0 : index
    %c0_45 = arith.constant 0 : index
    %47 = vector.load %arg6[%c0_43, %c0_44, %c0_45] : memref<2x128x512xf32, #tpu.memory_space<vmem>>, vector<1x128x512xf32>
    %48 = vector.shape_cast %47 : vector<1x128x512xf32> to vector<128x512xf32>
    %c0_46 = arith.constant 0 : index
    %c0_47 = arith.constant 0 : index
    %c0_48 = arith.constant 0 : index
    %49 = vector.load %arg12[%c0_46, %c0_47, %c0_48] : memref<4x1x128xf32, #tpu.memory_space<vmem>>, vector<1x1x128xf32>
    %50 = vector.shape_cast %49 : vector<1x1x128xf32> to vector<1x128xf32>
    %c0_49 = arith.constant 0 : index
    %c0_50 = arith.constant 0 : index
    %c0_51 = arith.constant 0 : index
    %51 = vector.load %arg13[%c0_49, %c0_50, %c0_51] : memref<4x1x128xf32, #tpu.memory_space<vmem>>, vector<1x1x128xf32>
    %52 = vector.shape_cast %51 : vector<1x1x128xf32> to vector<1x128xf32>
    %53 = vector.shape_cast %50 : vector<1x128xf32> to vector<1x128xf32>
    %54 = vector.broadcast %53 : vector<1x128xf32> to vector<2x128xf32>
    %55 = vector.shape_cast %52 : vector<1x128xf32> to vector<1x128xf32>
    %56 = vector.broadcast %55 : vector<1x128xf32> to vector<2x128xf32>
    %57 = vector.extract_strided_slice %46 {offsets = [0, 0], sizes = [2, 512], strides = [1, 1]} : vector<16x512xf32> to vector<2x512xf32>
    %cst_52 = arith.constant dense<0.000000e+00> : vector<2x512xf32>
    %58 = tpu.matmul %54, %48, %cst_52 {dimension_numbers = #tpu.dot_dimension_numbers<[1], [0], [0], [1], [0, 0, 1, 1], [], []>} : vector<2x128xf32>, vector<128x512xf32>, vector<2x512xf32> -> vector<2x512xf32>
    %59 = arith.addf %57, %58 : vector<2x512xf32>
    %60 = vector.extract_strided_slice %59 {offsets = [0, 0], sizes = [2, 128], strides = [1, 1]} : vector<2x512xf32> to vector<2x128xf32>
    %61 = arith.negf %60 : vector<2x128xf32>
    %62 = math.exp %61 : vector<2x128xf32>
    %cst_53 = arith.constant 1.000000e+00 : f32
    %63 = vector.broadcast %cst_53 : f32 to vector<2x128xf32>
    %64 = arith.addf %63, %62 : vector<2x128xf32>
    %65 = arith.divf %63, %64 : vector<2x128xf32>
    %66 = vector.extract_strided_slice %59 {offsets = [0, 128], sizes = [2, 128], strides = [1, 1]} : vector<2x512xf32> to vector<2x128xf32>
    %67 = arith.negf %66 : vector<2x128xf32>
    %68 = math.exp %67 : vector<2x128xf32>
    %cst_54 = arith.constant 1.000000e+00 : f32
    %69 = vector.broadcast %cst_54 : f32 to vector<2x128xf32>
    %70 = arith.addf %69, %68 : vector<2x128xf32>
    %71 = arith.divf %69, %70 : vector<2x128xf32>
    %72 = vector.extract_strided_slice %59 {offsets = [0, 256], sizes = [2, 128], strides = [1, 1]} : vector<2x512xf32> to vector<2x128xf32>
    %73 = math.tanh %72 : vector<2x128xf32>
    %74 = vector.extract_strided_slice %59 {offsets = [0, 384], sizes = [2, 128], strides = [1, 1]} : vector<2x512xf32> to vector<2x128xf32>
    %75 = arith.negf %74 : vector<2x128xf32>
    %76 = math.exp %75 : vector<2x128xf32>
    %cst_55 = arith.constant 1.000000e+00 : f32
    %77 = vector.broadcast %cst_55 : f32 to vector<2x128xf32>
    %78 = arith.addf %77, %76 : vector<2x128xf32>
    %79 = arith.divf %77, %78 : vector<2x128xf32>
    %80 = arith.mulf %71, %56 : vector<2x128xf32>
    %81 = arith.mulf %65, %73 : vector<2x128xf32>
    %82 = arith.addf %80, %81 : vector<2x128xf32>
    %83 = math.tanh %82 : vector<2x128xf32>
    %84 = arith.mulf %79, %83 : vector<2x128xf32>
    %c0_56 = arith.constant 0 : index
    %c0_57 = arith.constant 0 : index
    %85 = vector.load %arg24[%c0_56, %c0_57] : memref<16x128xf32, #tpu.memory_space<vmem>>, vector<2x128xf32>
    tpu.vector_store %arg24[%c0_56, %c0_57], %84 {strides = array<i32>} : memref<16x128xf32, #tpu.memory_space<vmem>>, vector<2x128xf32>,
    %86 = vector.extract_strided_slice %46 {offsets = [2, 0], sizes = [2, 512], strides = [1, 1]} : vector<16x512xf32> to vector<2x512xf32>
    %cst_58 = arith.constant dense<0.000000e+00> : vector<2x512xf32>
    %87 = tpu.matmul %84, %48, %cst_58 {dimension_numbers = #tpu.dot_dimension_numbers<[1], [0], [0], [1], [0, 0, 1, 1], [], []>} : vector<2x128xf32>, vector<128x512xf32>, vector<2x512xf32> -> vector<2x512xf32>
    %88 = arith.addf %86, %87 : vector<2x512xf32>
    %89 = vector.extract_strided_slice %88 {offsets = [0, 0], sizes = [2, 128], strides = [1, 1]} : vector<2x512xf32> to vector<2x128xf32>
    %90 = arith.negf %89 : vector<2x128xf32>
    %91 = math.exp %90 : vector<2x128xf32>
    %cst_59 = arith.constant 1.000000e+00 : f32
    %92 = vector.broadcast %cst_59 : f32 to vector<2x128xf32>
    %93 = arith.addf %92, %91 : vector<2x128xf32>
    %94 = arith.divf %92, %93 : vector<2x128xf32>
    %95 = vector.extract_strided_slice %88 {offsets = [0, 128], sizes = [2, 128], strides = [1, 1]} : vector<2x512xf32> to vector<2x128xf32>
    %96 = arith.negf %95 : vector<2x128xf32>
    %97 = math.exp %96 : vector<2x128xf32>
    %cst_60 = arith.constant 1.000000e+00 : f32
    %98 = vector.broadcast %cst_60 : f32 to vector<2x128xf32>
    %99 = arith.addf %98, %97 : vector<2x128xf32>
    %100 = arith.divf %98, %99 : vector<2x128xf32>
    %101 = vector.extract_strided_slice %88 {offsets = [0, 256], sizes = [2, 128], strides = [1, 1]} : vector<2x512xf32> to vector<2x128xf32>
    %102 = math.tanh %101 : vector<2x128xf32>
    %103 = vector.extract_strided_slice %88 {offsets = [0, 384], sizes = [2, 128], strides = [1, 1]} : vector<2x512xf32> to vector<2x128xf32>
    %104 = arith.negf %103 : vector<2x128xf32>
    %105 = math.exp %104 : vector<2x128xf32>
    %cst_61 = arith.constant 1.000000e+00 : f32
    %106 = vector.broadcast %cst_61 : f32 to vector<2x128xf32>
    %107 = arith.addf %106, %105 : vector<2x128xf32>
    %108 = arith.divf %106, %107 : vector<2x128xf32>
    %109 = arith.mulf %100, %82 : vector<2x128xf32>
    %110 = arith.mulf %94, %102 : vector<2x128xf32>
    %111 = arith.addf %109, %110 : vector<2x128xf32>
    %112 = math.tanh %111 : vector<2x128xf32>
    %113 = arith.mulf %108, %112 : vector<2x128xf32>
    %c2_62 = arith.constant 2 : index
    %c0_63 = arith.constant 0 : index
    %114 = vector.load %arg24[%c2_62, %c0_63] : memref<16x128xf32, #tpu.memory_space<vmem>>, vector<2x128xf32>
    tpu.vector_store %arg24[%c2_62, %c0_63], %113 {strides = array<i32>} : memref<16x128xf32, #tpu.memory_space<vmem>>, vector<2x128xf32>,
    %115 = vector.extract_strided_slice %46 {offsets = [4, 0], sizes = [2, 512], strides = [1, 1]} : vector<16x512xf32> to vector<2x512xf32>
    %cst_64 = arith.constant dense<0.000000e+00> : vector<2x512xf32>
    %116 = tpu.matmul %113, %48, %cst_64 {dimension_numbers = #tpu.dot_dimension_numbers<[1], [0], [0], [1], [0, 0, 1, 1], [], []>} : vector<2x128xf32>, vector<128x512xf32>, vector<2x512xf32> -> vector<2x512xf32>
    %117 = arith.addf %115, %116 : vector<2x512xf32>
    %118 = vector.extract_strided_slice %117 {offsets = [0, 0], sizes = [2, 128], strides = [1, 1]} : vector<2x512xf32> to vector<2x128xf32>
    %119 = arith.negf %118 : vector<2x128xf32>
    %120 = math.exp %119 : vector<2x128xf32>
    %cst_65 = arith.constant 1.000000e+00 : f32
    %121 = vector.broadcast %cst_65 : f32 to vector<2x128xf32>
    %122 = arith.addf %121, %120 : vector<2x128xf32>
    %123 = arith.divf %121, %122 : vector<2x128xf32>
    %124 = vector.extract_strided_slice %117 {offsets = [0, 128], sizes = [2, 128], strides = [1, 1]} : vector<2x512xf32> to vector<2x128xf32>
    %125 = arith.negf %124 : vector<2x128xf32>
    %126 = math.exp %125 : vector<2x128xf32>
    %cst_66 = arith.constant 1.000000e+00 : f32
    %127 = vector.broadcast %cst_66 : f32 to vector<2x128xf32>
    %128 = arith.addf %127, %126 : vector<2x128xf32>
    %129 = arith.divf %127, %128 : vector<2x128xf32>
    %130 = vector.extract_strided_slice %117 {offsets = [0, 256], sizes = [2, 128], strides = [1, 1]} : vector<2x512xf32> to vector<2x128xf32>
    %131 = math.tanh %130 : vector<2x128xf32>
    %132 = vector.extract_strided_slice %117 {offsets = [0, 384], sizes = [2, 128], strides = [1, 1]} : vector<2x512xf32> to vector<2x128xf32>
    %133 = arith.negf %132 : vector<2x128xf32>
    %134 = math.exp %133 : vector<2x128xf32>
    %cst_67 = arith.constant 1.000000e+00 : f32
    %135 = vector.broadcast %cst_67 : f32 to vector<2x128xf32>
    %136 = arith.addf %135, %134 : vector<2x128xf32>
    %137 = arith.divf %135, %136 : vector<2x128xf32>
    %138 = arith.mulf %129, %111 : vector<2x128xf32>
    %139 = arith.mulf %123, %131 : vector<2x128xf32>
    %140 = arith.addf %138, %139 : vector<2x128xf32>
    %141 = math.tanh %140 : vector<2x128xf32>
    %142 = arith.mulf %137, %141 : vector<2x128xf32>
    %c4_68 = arith.constant 4 : index
    %c0_69 = arith.constant 0 : index
    %143 = vector.load %arg24[%c4_68, %c0_69] : memref<16x128xf32, #tpu.memory_space<vmem>>, vector<2x128xf32>
    tpu.vector_store %arg24[%c4_68, %c0_69], %142 {strides = array<i32>} : memref<16x128xf32, #tpu.memory_space<vmem>>, vector<2x128xf32>,
    %144 = vector.extract_strided_slice %46 {offsets = [6, 0], sizes = [2, 512], strides = [1, 1]} : vector<16x512xf32> to vector<2x512xf32>
    %cst_70 = arith.constant dense<0.000000e+00> : vector<2x512xf32>
    %145 = tpu.matmul %142, %48, %cst_70 {dimension_numbers = #tpu.dot_dimension_numbers<[1], [0], [0], [1], [0, 0, 1, 1], [], []>} : vector<2x128xf32>, vector<128x512xf32>, vector<2x512xf32> -> vector<2x512xf32>
    %146 = arith.addf %144, %145 : vector<2x512xf32>
    %147 = vector.extract_strided_slice %146 {offsets = [0, 0], sizes = [2, 128], strides = [1, 1]} : vector<2x512xf32> to vector<2x128xf32>
    %148 = arith.negf %147 : vector<2x128xf32>
    %149 = math.exp %148 : vector<2x128xf32>
    %cst_71 = arith.constant 1.000000e+00 : f32
    %150 = vector.broadcast %cst_71 : f32 to vector<2x128xf32>
    %151 = arith.addf %150, %149 : vector<2x128xf32>
    %152 = arith.divf %150, %151 : vector<2x128xf32>
    %153 = vector.extract_strided_slice %146 {offsets = [0, 128], sizes = [2, 128], strides = [1, 1]} : vector<2x512xf32> to vector<2x128xf32>
    %154 = arith.negf %153 : vector<2x128xf32>
    %155 = math.exp %154 : vector<2x128xf32>
    %cst_72 = arith.constant 1.000000e+00 : f32
    %156 = vector.broadcast %cst_72 : f32 to vector<2x128xf32>
    %157 = arith.addf %156, %155 : vector<2x128xf32>
    %158 = arith.divf %156, %157 : vector<2x128xf32>
    %159 = vector.extract_strided_slice %146 {offsets = [0, 256], sizes = [2, 128], strides = [1, 1]} : vector<2x512xf32> to vector<2x128xf32>
    %160 = math.tanh %159 : vector<2x128xf32>
    %161 = vector.extract_strided_slice %146 {offsets = [0, 384], sizes = [2, 128], strides = [1, 1]} : vector<2x512xf32> to vector<2x128xf32>
    %162 = arith.negf %161 : vector<2x128xf32>
    %163 = math.exp %162 : vector<2x128xf32>
    %cst_73 = arith.constant 1.000000e+00 : f32
    %164 = vector.broadcast %cst_73 : f32 to vector<2x128xf32>
    %165 = arith.addf %164, %163 : vector<2x128xf32>
    %166 = arith.divf %164, %165 : vector<2x128xf32>
    %167 = arith.mulf %158, %140 : vector<2x128xf32>
    %168 = arith.mulf %152, %160 : vector<2x128xf32>
    %169 = arith.addf %167, %168 : vector<2x128xf32>
    %170 = math.tanh %169 : vector<2x128xf32>
    %171 = arith.mulf %166, %170 : vector<2x128xf32>
    %c6_74 = arith.constant 6 : index
    %c0_75 = arith.constant 0 : index
    %172 = vector.load %arg24[%c6_74, %c0_75] : memref<16x128xf32, #tpu.memory_space<vmem>>, vector<2x128xf32>
    tpu.vector_store %arg24[%c6_74, %c0_75], %171 {strides = array<i32>} : memref<16x128xf32, #tpu.memory_space<vmem>>, vector<2x128xf32>,
    %173 = vector.extract_strided_slice %46 {offsets = [8, 0], sizes = [2, 512], strides = [1, 1]} : vector<16x512xf32> to vector<2x512xf32>
    %cst_76 = arith.constant dense<0.000000e+00> : vector<2x512xf32>
    %174 = tpu.matmul %171, %48, %cst_76 {dimension_numbers = #tpu.dot_dimension_numbers<[1], [0], [0], [1], [0, 0, 1, 1], [], []>} : vector<2x128xf32>, vector<128x512xf32>, vector<2x512xf32> -> vector<2x512xf32>
    %175 = arith.addf %173, %174 : vector<2x512xf32>
    %176 = vector.extract_strided_slice %175 {offsets = [0, 0], sizes = [2, 128], strides = [1, 1]} : vector<2x512xf32> to vector<2x128xf32>
    %177 = arith.negf %176 : vector<2x128xf32>
    %178 = math.exp %177 : vector<2x128xf32>
    %cst_77 = arith.constant 1.000000e+00 : f32
    %179 = vector.broadcast %cst_77 : f32 to vector<2x128xf32>
    %180 = arith.addf %179, %178 : vector<2x128xf32>
    %181 = arith.divf %179, %180 : vector<2x128xf32>
    %182 = vector.extract_strided_slice %175 {offsets = [0, 128], sizes = [2, 128], strides = [1, 1]} : vector<2x512xf32> to vector<2x128xf32>
    %183 = arith.negf %182 : vector<2x128xf32>
    %184 = math.exp %183 : vector<2x128xf32>
    %cst_78 = arith.constant 1.000000e+00 : f32
    %185 = vector.broadcast %cst_78 : f32 to vector<2x128xf32>
    %186 = arith.addf %185, %184 : vector<2x128xf32>
    %187 = arith.divf %185, %186 : vector<2x128xf32>
    %188 = vector.extract_strided_slice %175 {offsets = [0, 256], sizes = [2, 128], strides = [1, 1]} : vector<2x512xf32> to vector<2x128xf32>
    %189 = math.tanh %188 : vector<2x128xf32>
    %190 = vector.extract_strided_slice %175 {offsets = [0, 384], sizes = [2, 128], strides = [1, 1]} : vector<2x512xf32> to vector<2x128xf32>
    %191 = arith.negf %190 : vector<2x128xf32>
    %192 = math.exp %191 : vector<2x128xf32>
    %cst_79 = arith.constant 1.000000e+00 : f32
    %193 = vector.broadcast %cst_79 : f32 to vector<2x128xf32>
    %194 = arith.addf %193, %192 : vector<2x128xf32>
    %195 = arith.divf %193, %194 : vector<2x128xf32>
    %196 = arith.mulf %187, %169 : vector<2x128xf32>
    %197 = arith.mulf %181, %189 : vector<2x128xf32>
    %198 = arith.addf %196, %197 : vector<2x128xf32>
    %199 = math.tanh %198 : vector<2x128xf32>
    %200 = arith.mulf %195, %199 : vector<2x128xf32>
    %c8_80 = arith.constant 8 : index
    %c0_81 = arith.constant 0 : index
    %201 = vector.load %arg24[%c8_80, %c0_81] : memref<16x128xf32, #tpu.memory_space<vmem>>, vector<2x128xf32>
    tpu.vector_store %arg24[%c8_80, %c0_81], %200 {strides = array<i32>} : memref<16x128xf32, #tpu.memory_space<vmem>>, vector<2x128xf32>,
    %202 = vector.extract_strided_slice %46 {offsets = [10, 0], sizes = [2, 512], strides = [1, 1]} : vector<16x512xf32> to vector<2x512xf32>
    %cst_82 = arith.constant dense<0.000000e+00> : vector<2x512xf32>
    %203 = tpu.matmul %200, %48, %cst_82 {dimension_numbers = #tpu.dot_dimension_numbers<[1], [0], [0], [1], [0, 0, 1, 1], [], []>} : vector<2x128xf32>, vector<128x512xf32>, vector<2x512xf32> -> vector<2x512xf32>
    %204 = arith.addf %202, %203 : vector<2x512xf32>
    %205 = vector.extract_strided_slice %204 {offsets = [0, 0], sizes = [2, 128], strides = [1, 1]} : vector<2x512xf32> to vector<2x128xf32>
    %206 = arith.negf %205 : vector<2x128xf32>
    %207 = math.exp %206 : vector<2x128xf32>
    %cst_83 = arith.constant 1.000000e+00 : f32
    %208 = vector.broadcast %cst_83 : f32 to vector<2x128xf32>
    %209 = arith.addf %208, %207 : vector<2x128xf32>
    %210 = arith.divf %208, %209 : vector<2x128xf32>
    %211 = vector.extract_strided_slice %204 {offsets = [0, 128], sizes = [2, 128], strides = [1, 1]} : vector<2x512xf32> to vector<2x128xf32>
    %212 = arith.negf %211 : vector<2x128xf32>
    %213 = math.exp %212 : vector<2x128xf32>
    %cst_84 = arith.constant 1.000000e+00 : f32
    %214 = vector.broadcast %cst_84 : f32 to vector<2x128xf32>
    %215 = arith.addf %214, %213 : vector<2x128xf32>
    %216 = arith.divf %214, %215 : vector<2x128xf32>
    %217 = vector.extract_strided_slice %204 {offsets = [0, 256], sizes = [2, 128], strides = [1, 1]} : vector<2x512xf32> to vector<2x128xf32>
    %218 = math.tanh %217 : vector<2x128xf32>
    %219 = vector.extract_strided_slice %204 {offsets = [0, 384], sizes = [2, 128], strides = [1, 1]} : vector<2x512xf32> to vector<2x128xf32>
    %220 = arith.negf %219 : vector<2x128xf32>
    %221 = math.exp %220 : vector<2x128xf32>
    %cst_85 = arith.constant 1.000000e+00 : f32
    %222 = vector.broadcast %cst_85 : f32 to vector<2x128xf32>
    %223 = arith.addf %222, %221 : vector<2x128xf32>
    %224 = arith.divf %222, %223 : vector<2x128xf32>
    %225 = arith.mulf %216, %198 : vector<2x128xf32>
    %226 = arith.mulf %210, %218 : vector<2x128xf32>
    %227 = arith.addf %225, %226 : vector<2x128xf32>
    %228 = math.tanh %227 : vector<2x128xf32>
    %229 = arith.mulf %224, %228 : vector<2x128xf32>
    %c10_86 = arith.constant 10 : index
    %c0_87 = arith.constant 0 : index
    %230 = vector.load %arg24[%c10_86, %c0_87] : memref<16x128xf32, #tpu.memory_space<vmem>>, vector<2x128xf32>
    tpu.vector_store %arg24[%c10_86, %c0_87], %229 {strides = array<i32>} : memref<16x128xf32, #tpu.memory_space<vmem>>, vector<2x128xf32>,
    %231 = vector.extract_strided_slice %46 {offsets = [12, 0], sizes = [2, 512], strides = [1, 1]} : vector<16x512xf32> to vector<2x512xf32>
    %cst_88 = arith.constant dense<0.000000e+00> : vector<2x512xf32>
    %232 = tpu.matmul %229, %48, %cst_88 {dimension_numbers = #tpu.dot_dimension_numbers<[1], [0], [0], [1], [0, 0, 1, 1], [], []>} : vector<2x128xf32>, vector<128x512xf32>, vector<2x512xf32> -> vector<2x512xf32>
    %233 = arith.addf %231, %232 : vector<2x512xf32>
    %234 = vector.extract_strided_slice %233 {offsets = [0, 0], sizes = [2, 128], strides = [1, 1]} : vector<2x512xf32> to vector<2x128xf32>
    %235 = arith.negf %234 : vector<2x128xf32>
    %236 = math.exp %235 : vector<2x128xf32>
    %cst_89 = arith.constant 1.000000e+00 : f32
    %237 = vector.broadcast %cst_89 : f32 to vector<2x128xf32>
    %238 = arith.addf %237, %236 : vector<2x128xf32>
    %239 = arith.divf %237, %238 : vector<2x128xf32>
    %240 = vector.extract_strided_slice %233 {offsets = [0, 128], sizes = [2, 128], strides = [1, 1]} : vector<2x512xf32> to vector<2x128xf32>
    %241 = arith.negf %240 : vector<2x128xf32>
    %242 = math.exp %241 : vector<2x128xf32>
    %cst_90 = arith.constant 1.000000e+00 : f32
    %243 = vector.broadcast %cst_90 : f32 to vector<2x128xf32>
    %244 = arith.addf %243, %242 : vector<2x128xf32>
    %245 = arith.divf %243, %244 : vector<2x128xf32>
    %246 = vector.extract_strided_slice %233 {offsets = [0, 256], sizes = [2, 128], strides = [1, 1]} : vector<2x512xf32> to vector<2x128xf32>
    %247 = math.tanh %246 : vector<2x128xf32>
    %248 = vector.extract_strided_slice %233 {offsets = [0, 384], sizes = [2, 128], strides = [1, 1]} : vector<2x512xf32> to vector<2x128xf32>
    %249 = arith.negf %248 : vector<2x128xf32>
    %250 = math.exp %249 : vector<2x128xf32>
    %cst_91 = arith.constant 1.000000e+00 : f32
    %251 = vector.broadcast %cst_91 : f32 to vector<2x128xf32>
    %252 = arith.addf %251, %250 : vector<2x128xf32>
    %253 = arith.divf %251, %252 : vector<2x128xf32>
    %254 = arith.mulf %245, %227 : vector<2x128xf32>
    %255 = arith.mulf %239, %247 : vector<2x128xf32>
    %256 = arith.addf %254, %255 : vector<2x128xf32>
    %257 = math.tanh %256 : vector<2x128xf32>
    %258 = arith.mulf %253, %257 : vector<2x128xf32>
    %c12_92 = arith.constant 12 : index
    %c0_93 = arith.constant 0 : index
    %259 = vector.load %arg24[%c12_92, %c0_93] : memref<16x128xf32, #tpu.memory_space<vmem>>, vector<2x128xf32>
    tpu.vector_store %arg24[%c12_92, %c0_93], %258 {strides = array<i32>} : memref<16x128xf32, #tpu.memory_space<vmem>>, vector<2x128xf32>,
    %260 = vector.extract_strided_slice %46 {offsets = [14, 0], sizes = [2, 512], strides = [1, 1]} : vector<16x512xf32> to vector<2x512xf32>
    %cst_94 = arith.constant dense<0.000000e+00> : vector<2x512xf32>
    %261 = tpu.matmul %258, %48, %cst_94 {dimension_numbers = #tpu.dot_dimension_numbers<[1], [0], [0], [1], [0, 0, 1, 1], [], []>} : vector<2x128xf32>, vector<128x512xf32>, vector<2x512xf32> -> vector<2x512xf32>
    %262 = arith.addf %260, %261 : vector<2x512xf32>
    %263 = vector.extract_strided_slice %262 {offsets = [0, 0], sizes = [2, 128], strides = [1, 1]} : vector<2x512xf32> to vector<2x128xf32>
    %264 = arith.negf %263 : vector<2x128xf32>
    %265 = math.exp %264 : vector<2x128xf32>
    %cst_95 = arith.constant 1.000000e+00 : f32
    %266 = vector.broadcast %cst_95 : f32 to vector<2x128xf32>
    %267 = arith.addf %266, %265 : vector<2x128xf32>
    %268 = arith.divf %266, %267 : vector<2x128xf32>
    %269 = vector.extract_strided_slice %262 {offsets = [0, 128], sizes = [2, 128], strides = [1, 1]} : vector<2x512xf32> to vector<2x128xf32>
    %270 = arith.negf %269 : vector<2x128xf32>
    %271 = math.exp %270 : vector<2x128xf32>
    %cst_96 = arith.constant 1.000000e+00 : f32
    %272 = vector.broadcast %cst_96 : f32 to vector<2x128xf32>
    %273 = arith.addf %272, %271 : vector<2x128xf32>
    %274 = arith.divf %272, %273 : vector<2x128xf32>
    %275 = vector.extract_strided_slice %262 {offsets = [0, 256], sizes = [2, 128], strides = [1, 1]} : vector<2x512xf32> to vector<2x128xf32>
    %276 = math.tanh %275 : vector<2x128xf32>
    %277 = vector.extract_strided_slice %262 {offsets = [0, 384], sizes = [2, 128], strides = [1, 1]} : vector<2x512xf32> to vector<2x128xf32>
    %278 = arith.negf %277 : vector<2x128xf32>
    %279 = math.exp %278 : vector<2x128xf32>
    %cst_97 = arith.constant 1.000000e+00 : f32
    %280 = vector.broadcast %cst_97 : f32 to vector<2x128xf32>
    %281 = arith.addf %280, %279 : vector<2x128xf32>
    %282 = arith.divf %280, %281 : vector<2x128xf32>
    %283 = arith.mulf %274, %256 : vector<2x128xf32>
    %284 = arith.mulf %268, %276 : vector<2x128xf32>
    %285 = arith.addf %283, %284 : vector<2x128xf32>
    %286 = math.tanh %285 : vector<2x128xf32>
    %287 = arith.mulf %282, %286 : vector<2x128xf32>
    %c14 = arith.constant 14 : index
    %c0_98 = arith.constant 0 : index
    %288 = vector.load %arg24[%c14, %c0_98] : memref<16x128xf32, #tpu.memory_space<vmem>>, vector<2x128xf32>
    tpu.vector_store %arg24[%c14, %c0_98], %287 {strides = array<i32>} : memref<16x128xf32, #tpu.memory_space<vmem>>, vector<2x128xf32>,
    %289 = vector.extract_strided_slice %45 {offsets = [0, 512], sizes = [16, 512], strides = [1, 1]} : vector<16x1024xf32> to vector<16x512xf32>
    %c1_99 = arith.constant 1 : index
    %c0_100 = arith.constant 0 : index
    %c0_101 = arith.constant 0 : index
    %290 = vector.load %arg6[%c1_99, %c0_100, %c0_101] : memref<2x128x512xf32, #tpu.memory_space<vmem>>, vector<1x128x512xf32>
    %291 = vector.shape_cast %290 : vector<1x128x512xf32> to vector<128x512xf32>
    %c1_102 = arith.constant 1 : index
    %c0_103 = arith.constant 0 : index
    %c0_104 = arith.constant 0 : index
    %292 = vector.load %arg12[%c1_102, %c0_103, %c0_104] : memref<4x1x128xf32, #tpu.memory_space<vmem>>, vector<1x1x128xf32>
    %293 = vector.shape_cast %292 : vector<1x1x128xf32> to vector<1x128xf32>
    %c1_105 = arith.constant 1 : index
    %c0_106 = arith.constant 0 : index
    %c0_107 = arith.constant 0 : index
    %294 = vector.load %arg13[%c1_105, %c0_106, %c0_107] : memref<4x1x128xf32, #tpu.memory_space<vmem>>, vector<1x1x128xf32>
    %295 = vector.shape_cast %294 : vector<1x1x128xf32> to vector<1x128xf32>
    %296 = vector.shape_cast %293 : vector<1x128xf32> to vector<1x128xf32>
    %297 = vector.broadcast %296 : vector<1x128xf32> to vector<2x128xf32>
    %298 = vector.shape_cast %295 : vector<1x128xf32> to vector<1x128xf32>
    %299 = vector.broadcast %298 : vector<1x128xf32> to vector<2x128xf32>
    %300 = vector.extract_strided_slice %289 {offsets = [14, 0], sizes = [2, 512], strides = [1, 1]} : vector<16x512xf32> to vector<2x512xf32>
    %cst_108 = arith.constant dense<0.000000e+00> : vector<2x512xf32>
    %301 = tpu.matmul %297, %291, %cst_108 {dimension_numbers = #tpu.dot_dimension_numbers<[1], [0], [0], [1], [0, 0, 1, 1], [], []>} : vector<2x128xf32>, vector<128x512xf32>, vector<2x512xf32> -> vector<2x512xf32>
    %302 = arith.addf %300, %301 : vector<2x512xf32>
    %303 = vector.extract_strided_slice %302 {offsets = [0, 0], sizes = [2, 128], strides = [1, 1]} : vector<2x512xf32> to vector<2x128xf32>
    %304 = arith.negf %303 : vector<2x128xf32>
    %305 = math.exp %304 : vector<2x128xf32>
    %cst_109 = arith.constant 1.000000e+00 : f32
    %306 = vector.broadcast %cst_109 : f32 to vector<2x128xf32>
    %307 = arith.addf %306, %305 : vector<2x128xf32>
    %308 = arith.divf %306, %307 : vector<2x128xf32>
    %309 = vector.extract_strided_slice %302 {offsets = [0, 128], sizes = [2, 128], strides = [1, 1]} : vector<2x512xf32> to vector<2x128xf32>
    %310 = arith.negf %309 : vector<2x128xf32>
    %311 = math.exp %310 : vector<2x128xf32>
    %cst_110 = arith.constant 1.000000e+00 : f32
    %312 = vector.broadcast %cst_110 : f32 to vector<2x128xf32>
    %313 = arith.addf %312, %311 : vector<2x128xf32>
    %314 = arith.divf %312, %313 : vector<2x128xf32>
    %315 = vector.extract_strided_slice %302 {offsets = [0, 256], sizes = [2, 128], strides = [1, 1]} : vector<2x512xf32> to vector<2x128xf32>
    %316 = math.tanh %315 : vector<2x128xf32>
    %317 = vector.extract_strided_slice %302 {offsets = [0, 384], sizes = [2, 128], strides = [1, 1]} : vector<2x512xf32> to vector<2x128xf32>
    %318 = arith.negf %317 : vector<2x128xf32>
    %319 = math.exp %318 : vector<2x128xf32>
    %cst_111 = arith.constant 1.000000e+00 : f32
    %320 = vector.broadcast %cst_111 : f32 to vector<2x128xf32>
    %321 = arith.addf %320, %319 : vector<2x128xf32>
    %322 = arith.divf %320, %321 : vector<2x128xf32>
    %323 = arith.mulf %314, %299 : vector<2x128xf32>
    %324 = arith.mulf %308, %316 : vector<2x128xf32>
    %325 = arith.addf %323, %324 : vector<2x128xf32>
    %326 = math.tanh %325 : vector<2x128xf32>
    %327 = arith.mulf %322, %326 : vector<2x128xf32>
    %c14_112 = arith.constant 14 : index
    %c0_113 = arith.constant 0 : index
    %328 = vector.load %arg25[%c14_112, %c0_113] : memref<16x128xf32, #tpu.memory_space<vmem>>, vector<2x128xf32>
    tpu.vector_store %arg25[%c14_112, %c0_113], %327 {strides = array<i32>} : memref<16x128xf32, #tpu.memory_space<vmem>>, vector<2x128xf32>,
    %329 = vector.extract_strided_slice %289 {offsets = [12, 0], sizes = [2, 512], strides = [1, 1]} : vector<16x512xf32> to vector<2x512xf32>
    %cst_114 = arith.constant dense<0.000000e+00> : vector<2x512xf32>
    %330 = tpu.matmul %327, %291, %cst_114 {dimension_numbers = #tpu.dot_dimension_numbers<[1], [0], [0], [1], [0, 0, 1, 1], [], []>} : vector<2x128xf32>, vector<128x512xf32>, vector<2x512xf32> -> vector<2x512xf32>
    %331 = arith.addf %329, %330 : vector<2x512xf32>
    %332 = vector.extract_strided_slice %331 {offsets = [0, 0], sizes = [2, 128], strides = [1, 1]} : vector<2x512xf32> to vector<2x128xf32>
    %333 = arith.negf %332 : vector<2x128xf32>
    %334 = math.exp %333 : vector<2x128xf32>
    %cst_115 = arith.constant 1.000000e+00 : f32
    %335 = vector.broadcast %cst_115 : f32 to vector<2x128xf32>
    %336 = arith.addf %335, %334 : vector<2x128xf32>
    %337 = arith.divf %335, %336 : vector<2x128xf32>
    %338 = vector.extract_strided_slice %331 {offsets = [0, 128], sizes = [2, 128], strides = [1, 1]} : vector<2x512xf32> to vector<2x128xf32>
    %339 = arith.negf %338 : vector<2x128xf32>
    %340 = math.exp %339 : vector<2x128xf32>
    %cst_116 = arith.constant 1.000000e+00 : f32
    %341 = vector.broadcast %cst_116 : f32 to vector<2x128xf32>
    %342 = arith.addf %341, %340 : vector<2x128xf32>
    %343 = arith.divf %341, %342 : vector<2x128xf32>
    %344 = vector.extract_strided_slice %331 {offsets = [0, 256], sizes = [2, 128], strides = [1, 1]} : vector<2x512xf32> to vector<2x128xf32>
    %345 = math.tanh %344 : vector<2x128xf32>
    %346 = vector.extract_strided_slice %331 {offsets = [0, 384], sizes = [2, 128], strides = [1, 1]} : vector<2x512xf32> to vector<2x128xf32>
    %347 = arith.negf %346 : vector<2x128xf32>
    %348 = math.exp %347 : vector<2x128xf32>
    %cst_117 = arith.constant 1.000000e+00 : f32
    %349 = vector.broadcast %cst_117 : f32 to vector<2x128xf32>
    %350 = arith.addf %349, %348 : vector<2x128xf32>
    %351 = arith.divf %349, %350 : vector<2x128xf32>
    %352 = arith.mulf %343, %325 : vector<2x128xf32>
    %353 = arith.mulf %337, %345 : vector<2x128xf32>
    %354 = arith.addf %352, %353 : vector<2x128xf32>
    %355 = math.tanh %354 : vector<2x128xf32>
    %356 = arith.mulf %351, %355 : vector<2x128xf32>
    %c12_118 = arith.constant 12 : index
    %c0_119 = arith.constant 0 : index
    %357 = vector.load %arg25[%c12_118, %c0_119] : memref<16x128xf32, #tpu.memory_space<vmem>>, vector<2x128xf32>
    tpu.vector_store %arg25[%c12_118, %c0_119], %356 {strides = array<i32>} : memref<16x128xf32, #tpu.memory_space<vmem>>, vector<2x128xf32>,
    %358 = vector.extract_strided_slice %289 {offsets = [10, 0], sizes = [2, 512], strides = [1, 1]} : vector<16x512xf32> to vector<2x512xf32>
    %cst_120 = arith.constant dense<0.000000e+00> : vector<2x512xf32>
    %359 = tpu.matmul %356, %291, %cst_120 {dimension_numbers = #tpu.dot_dimension_numbers<[1], [0], [0], [1], [0, 0, 1, 1], [], []>} : vector<2x128xf32>, vector<128x512xf32>, vector<2x512xf32> -> vector<2x512xf32>
    %360 = arith.addf %358, %359 : vector<2x512xf32>
    %361 = vector.extract_strided_slice %360 {offsets = [0, 0], sizes = [2, 128], strides = [1, 1]} : vector<2x512xf32> to vector<2x128xf32>
    %362 = arith.negf %361 : vector<2x128xf32>
    %363 = math.exp %362 : vector<2x128xf32>
    %cst_121 = arith.constant 1.000000e+00 : f32
    %364 = vector.broadcast %cst_121 : f32 to vector<2x128xf32>
    %365 = arith.addf %364, %363 : vector<2x128xf32>
    %366 = arith.divf %364, %365 : vector<2x128xf32>
    %367 = vector.extract_strided_slice %360 {offsets = [0, 128], sizes = [2, 128], strides = [1, 1]} : vector<2x512xf32> to vector<2x128xf32>
    %368 = arith.negf %367 : vector<2x128xf32>
    %369 = math.exp %368 : vector<2x128xf32>
    %cst_122 = arith.constant 1.000000e+00 : f32
    %370 = vector.broadcast %cst_122 : f32 to vector<2x128xf32>
    %371 = arith.addf %370, %369 : vector<2x128xf32>
    %372 = arith.divf %370, %371 : vector<2x128xf32>
    %373 = vector.extract_strided_slice %360 {offsets = [0, 256], sizes = [2, 128], strides = [1, 1]} : vector<2x512xf32> to vector<2x128xf32>
    %374 = math.tanh %373 : vector<2x128xf32>
    %375 = vector.extract_strided_slice %360 {offsets = [0, 384], sizes = [2, 128], strides = [1, 1]} : vector<2x512xf32> to vector<2x128xf32>
    %376 = arith.negf %375 : vector<2x128xf32>
    %377 = math.exp %376 : vector<2x128xf32>
    %cst_123 = arith.constant 1.000000e+00 : f32
    %378 = vector.broadcast %cst_123 : f32 to vector<2x128xf32>
    %379 = arith.addf %378, %377 : vector<2x128xf32>
    %380 = arith.divf %378, %379 : vector<2x128xf32>
    %381 = arith.mulf %372, %354 : vector<2x128xf32>
    %382 = arith.mulf %366, %374 : vector<2x128xf32>
    %383 = arith.addf %381, %382 : vector<2x128xf32>
    %384 = math.tanh %383 : vector<2x128xf32>
    %385 = arith.mulf %380, %384 : vector<2x128xf32>
    %c10_124 = arith.constant 10 : index
    %c0_125 = arith.constant 0 : index
    %386 = vector.load %arg25[%c10_124, %c0_125] : memref<16x128xf32, #tpu.memory_space<vmem>>, vector<2x128xf32>
    tpu.vector_store %arg25[%c10_124, %c0_125], %385 {strides = array<i32>} : memref<16x128xf32, #tpu.memory_space<vmem>>, vector<2x128xf32>,
    %387 = vector.extract_strided_slice %289 {offsets = [8, 0], sizes = [2, 512], strides = [1, 1]} : vector<16x512xf32> to vector<2x512xf32>
    %cst_126 = arith.constant dense<0.000000e+00> : vector<2x512xf32>
    %388 = tpu.matmul %385, %291, %cst_126 {dimension_numbers = #tpu.dot_dimension_numbers<[1], [0], [0], [1], [0, 0, 1, 1], [], []>} : vector<2x128xf32>, vector<128x512xf32>, vector<2x512xf32> -> vector<2x512xf32>
    %389 = arith.addf %387, %388 : vector<2x512xf32>
    %390 = vector.extract_strided_slice %389 {offsets = [0, 0], sizes = [2, 128], strides = [1, 1]} : vector<2x512xf32> to vector<2x128xf32>
    %391 = arith.negf %390 : vector<2x128xf32>
    %392 = math.exp %391 : vector<2x128xf32>
    %cst_127 = arith.constant 1.000000e+00 : f32
    %393 = vector.broadcast %cst_127 : f32 to vector<2x128xf32>
    %394 = arith.addf %393, %392 : vector<2x128xf32>
    %395 = arith.divf %393, %394 : vector<2x128xf32>
    %396 = vector.extract_strided_slice %389 {offsets = [0, 128], sizes = [2, 128], strides = [1, 1]} : vector<2x512xf32> to vector<2x128xf32>
    %397 = arith.negf %396 : vector<2x128xf32>
    %398 = math.exp %397 : vector<2x128xf32>
    %cst_128 = arith.constant 1.000000e+00 : f32
    %399 = vector.broadcast %cst_128 : f32 to vector<2x128xf32>
    %400 = arith.addf %399, %398 : vector<2x128xf32>
    %401 = arith.divf %399, %400 : vector<2x128xf32>
    %402 = vector.extract_strided_slice %389 {offsets = [0, 256], sizes = [2, 128], strides = [1, 1]} : vector<2x512xf32> to vector<2x128xf32>
    %403 = math.tanh %402 : vector<2x128xf32>
    %404 = vector.extract_strided_slice %389 {offsets = [0, 384], sizes = [2, 128], strides = [1, 1]} : vector<2x512xf32> to vector<2x128xf32>
    %405 = arith.negf %404 : vector<2x128xf32>
    %406 = math.exp %405 : vector<2x128xf32>
    %cst_129 = arith.constant 1.000000e+00 : f32
    %407 = vector.broadcast %cst_129 : f32 to vector<2x128xf32>
    %408 = arith.addf %407, %406 : vector<2x128xf32>
    %409 = arith.divf %407, %408 : vector<2x128xf32>
    %410 = arith.mulf %401, %383 : vector<2x128xf32>
    %411 = arith.mulf %395, %403 : vector<2x128xf32>
    %412 = arith.addf %410, %411 : vector<2x128xf32>
    %413 = math.tanh %412 : vector<2x128xf32>
    %414 = arith.mulf %409, %413 : vector<2x128xf32>
    %c8_130 = arith.constant 8 : index
    %c0_131 = arith.constant 0 : index
    %415 = vector.load %arg25[%c8_130, %c0_131] : memref<16x128xf32, #tpu.memory_space<vmem>>, vector<2x128xf32>
    tpu.vector_store %arg25[%c8_130, %c0_131], %414 {strides = array<i32>} : memref<16x128xf32, #tpu.memory_space<vmem>>, vector<2x128xf32>,
    %416 = vector.extract_strided_slice %289 {offsets = [6, 0], sizes = [2, 512], strides = [1, 1]} : vector<16x512xf32> to vector<2x512xf32>
    %cst_132 = arith.constant dense<0.000000e+00> : vector<2x512xf32>
    %417 = tpu.matmul %414, %291, %cst_132 {dimension_numbers = #tpu.dot_dimension_numbers<[1], [0], [0], [1], [0, 0, 1, 1], [], []>} : vector<2x128xf32>, vector<128x512xf32>, vector<2x512xf32> -> vector<2x512xf32>
    %418 = arith.addf %416, %417 : vector<2x512xf32>
    %419 = vector.extract_strided_slice %418 {offsets = [0, 0], sizes = [2, 128], strides = [1, 1]} : vector<2x512xf32> to vector<2x128xf32>
    %420 = arith.negf %419 : vector<2x128xf32>
    %421 = math.exp %420 : vector<2x128xf32>
    %cst_133 = arith.constant 1.000000e+00 : f32
    %422 = vector.broadcast %cst_133 : f32 to vector<2x128xf32>
    %423 = arith.addf %422, %421 : vector<2x128xf32>
    %424 = arith.divf %422, %423 : vector<2x128xf32>
    %425 = vector.extract_strided_slice %418 {offsets = [0, 128], sizes = [2, 128], strides = [1, 1]} : vector<2x512xf32> to vector<2x128xf32>
    %426 = arith.negf %425 : vector<2x128xf32>
    %427 = math.exp %426 : vector<2x128xf32>
    %cst_134 = arith.constant 1.000000e+00 : f32
    %428 = vector.broadcast %cst_134 : f32 to vector<2x128xf32>
    %429 = arith.addf %428, %427 : vector<2x128xf32>
    %430 = arith.divf %428, %429 : vector<2x128xf32>
    %431 = vector.extract_strided_slice %418 {offsets = [0, 256], sizes = [2, 128], strides = [1, 1]} : vector<2x512xf32> to vector<2x128xf32>
    %432 = math.tanh %431 : vector<2x128xf32>
    %433 = vector.extract_strided_slice %418 {offsets = [0, 384], sizes = [2, 128], strides = [1, 1]} : vector<2x512xf32> to vector<2x128xf32>
    %434 = arith.negf %433 : vector<2x128xf32>
    %435 = math.exp %434 : vector<2x128xf32>
    %cst_135 = arith.constant 1.000000e+00 : f32
    %436 = vector.broadcast %cst_135 : f32 to vector<2x128xf32>
    %437 = arith.addf %436, %435 : vector<2x128xf32>
    %438 = arith.divf %436, %437 : vector<2x128xf32>
    %439 = arith.mulf %430, %412 : vector<2x128xf32>
    %440 = arith.mulf %424, %432 : vector<2x128xf32>
    %441 = arith.addf %439, %440 : vector<2x128xf32>
    %442 = math.tanh %441 : vector<2x128xf32>
    %443 = arith.mulf %438, %442 : vector<2x128xf32>
    %c6_136 = arith.constant 6 : index
    %c0_137 = arith.constant 0 : index
    %444 = vector.load %arg25[%c6_136, %c0_137] : memref<16x128xf32, #tpu.memory_space<vmem>>, vector<2x128xf32>
    tpu.vector_store %arg25[%c6_136, %c0_137], %443 {strides = array<i32>} : memref<16x128xf32, #tpu.memory_space<vmem>>, vector<2x128xf32>,
    %445 = vector.extract_strided_slice %289 {offsets = [4, 0], sizes = [2, 512], strides = [1, 1]} : vector<16x512xf32> to vector<2x512xf32>
    %cst_138 = arith.constant dense<0.000000e+00> : vector<2x512xf32>
    %446 = tpu.matmul %443, %291, %cst_138 {dimension_numbers = #tpu.dot_dimension_numbers<[1], [0], [0], [1], [0, 0, 1, 1], [], []>} : vector<2x128xf32>, vector<128x512xf32>, vector<2x512xf32> -> vector<2x512xf32>
    %447 = arith.addf %445, %446 : vector<2x512xf32>
    %448 = vector.extract_strided_slice %447 {offsets = [0, 0], sizes = [2, 128], strides = [1, 1]} : vector<2x512xf32> to vector<2x128xf32>
    %449 = arith.negf %448 : vector<2x128xf32>
    %450 = math.exp %449 : vector<2x128xf32>
    %cst_139 = arith.constant 1.000000e+00 : f32
    %451 = vector.broadcast %cst_139 : f32 to vector<2x128xf32>
    %452 = arith.addf %451, %450 : vector<2x128xf32>
    %453 = arith.divf %451, %452 : vector<2x128xf32>
    %454 = vector.extract_strided_slice %447 {offsets = [0, 128], sizes = [2, 128], strides = [1, 1]} : vector<2x512xf32> to vector<2x128xf32>
    %455 = arith.negf %454 : vector<2x128xf32>
    %456 = math.exp %455 : vector<2x128xf32>
    %cst_140 = arith.constant 1.000000e+00 : f32
    %457 = vector.broadcast %cst_140 : f32 to vector<2x128xf32>
    %458 = arith.addf %457, %456 : vector<2x128xf32>
    %459 = arith.divf %457, %458 : vector<2x128xf32>
    %460 = vector.extract_strided_slice %447 {offsets = [0, 256], sizes = [2, 128], strides = [1, 1]} : vector<2x512xf32> to vector<2x128xf32>
    %461 = math.tanh %460 : vector<2x128xf32>
    %462 = vector.extract_strided_slice %447 {offsets = [0, 384], sizes = [2, 128], strides = [1, 1]} : vector<2x512xf32> to vector<2x128xf32>
    %463 = arith.negf %462 : vector<2x128xf32>
    %464 = math.exp %463 : vector<2x128xf32>
    %cst_141 = arith.constant 1.000000e+00 : f32
    %465 = vector.broadcast %cst_141 : f32 to vector<2x128xf32>
    %466 = arith.addf %465, %464 : vector<2x128xf32>
    %467 = arith.divf %465, %466 : vector<2x128xf32>
    %468 = arith.mulf %459, %441 : vector<2x128xf32>
    %469 = arith.mulf %453, %461 : vector<2x128xf32>
    %470 = arith.addf %468, %469 : vector<2x128xf32>
    %471 = math.tanh %470 : vector<2x128xf32>
    %472 = arith.mulf %467, %471 : vector<2x128xf32>
    %c4_142 = arith.constant 4 : index
    %c0_143 = arith.constant 0 : index
    %473 = vector.load %arg25[%c4_142, %c0_143] : memref<16x128xf32, #tpu.memory_space<vmem>>, vector<2x128xf32>
    tpu.vector_store %arg25[%c4_142, %c0_143], %472 {strides = array<i32>} : memref<16x128xf32, #tpu.memory_space<vmem>>, vector<2x128xf32>,
    %474 = vector.extract_strided_slice %289 {offsets = [2, 0], sizes = [2, 512], strides = [1, 1]} : vector<16x512xf32> to vector<2x512xf32>
    %cst_144 = arith.constant dense<0.000000e+00> : vector<2x512xf32>
    %475 = tpu.matmul %472, %291, %cst_144 {dimension_numbers = #tpu.dot_dimension_numbers<[1], [0], [0], [1], [0, 0, 1, 1], [], []>} : vector<2x128xf32>, vector<128x512xf32>, vector<2x512xf32> -> vector<2x512xf32>
    %476 = arith.addf %474, %475 : vector<2x512xf32>
    %477 = vector.extract_strided_slice %476 {offsets = [0, 0], sizes = [2, 128], strides = [1, 1]} : vector<2x512xf32> to vector<2x128xf32>
    %478 = arith.negf %477 : vector<2x128xf32>
    %479 = math.exp %478 : vector<2x128xf32>
    %cst_145 = arith.constant 1.000000e+00 : f32
    %480 = vector.broadcast %cst_145 : f32 to vector<2x128xf32>
    %481 = arith.addf %480, %479 : vector<2x128xf32>
    %482 = arith.divf %480, %481 : vector<2x128xf32>
    %483 = vector.extract_strided_slice %476 {offsets = [0, 128], sizes = [2, 128], strides = [1, 1]} : vector<2x512xf32> to vector<2x128xf32>
    %484 = arith.negf %483 : vector<2x128xf32>
    %485 = math.exp %484 : vector<2x128xf32>
    %cst_146 = arith.constant 1.000000e+00 : f32
    %486 = vector.broadcast %cst_146 : f32 to vector<2x128xf32>
    %487 = arith.addf %486, %485 : vector<2x128xf32>
    %488 = arith.divf %486, %487 : vector<2x128xf32>
    %489 = vector.extract_strided_slice %476 {offsets = [0, 256], sizes = [2, 128], strides = [1, 1]} : vector<2x512xf32> to vector<2x128xf32>
    %490 = math.tanh %489 : vector<2x128xf32>
    %491 = vector.extract_strided_slice %476 {offsets = [0, 384], sizes = [2, 128], strides = [1, 1]} : vector<2x512xf32> to vector<2x128xf32>
    %492 = arith.negf %491 : vector<2x128xf32>
    %493 = math.exp %492 : vector<2x128xf32>
    %cst_147 = arith.constant 1.000000e+00 : f32
    %494 = vector.broadcast %cst_147 : f32 to vector<2x128xf32>
    %495 = arith.addf %494, %493 : vector<2x128xf32>
    %496 = arith.divf %494, %495 : vector<2x128xf32>
    %497 = arith.mulf %488, %470 : vector<2x128xf32>
    %498 = arith.mulf %482, %490 : vector<2x128xf32>
    %499 = arith.addf %497, %498 : vector<2x128xf32>
    %500 = math.tanh %499 : vector<2x128xf32>
    %501 = arith.mulf %496, %500 : vector<2x128xf32>
    %c2_148 = arith.constant 2 : index
    %c0_149 = arith.constant 0 : index
    %502 = vector.load %arg25[%c2_148, %c0_149] : memref<16x128xf32, #tpu.memory_space<vmem>>, vector<2x128xf32>
    tpu.vector_store %arg25[%c2_148, %c0_149], %501 {strides = array<i32>} : memref<16x128xf32, #tpu.memory_space<vmem>>, vector<2x128xf32>,
    %503 = vector.extract_strided_slice %289 {offsets = [0, 0], sizes = [2, 512], strides = [1, 1]} : vector<16x512xf32> to vector<2x512xf32>
    %cst_150 = arith.constant dense<0.000000e+00> : vector<2x512xf32>
    %504 = tpu.matmul %501, %291, %cst_150 {dimension_numbers = #tpu.dot_dimension_numbers<[1], [0], [0], [1], [0, 0, 1, 1], [], []>} : vector<2x128xf32>, vector<128x512xf32>, vector<2x512xf32> -> vector<2x512xf32>
    %505 = arith.addf %503, %504 : vector<2x512xf32>
    %506 = vector.extract_strided_slice %505 {offsets = [0, 0], sizes = [2, 128], strides = [1, 1]} : vector<2x512xf32> to vector<2x128xf32>
    %507 = arith.negf %506 : vector<2x128xf32>
    %508 = math.exp %507 : vector<2x128xf32>
    %cst_151 = arith.constant 1.000000e+00 : f32
    %509 = vector.broadcast %cst_151 : f32 to vector<2x128xf32>
    %510 = arith.addf %509, %508 : vector<2x128xf32>
    %511 = arith.divf %509, %510 : vector<2x128xf32>
    %512 = vector.extract_strided_slice %505 {offsets = [0, 128], sizes = [2, 128], strides = [1, 1]} : vector<2x512xf32> to vector<2x128xf32>
    %513 = arith.negf %512 : vector<2x128xf32>
    %514 = math.exp %513 : vector<2x128xf32>
    %cst_152 = arith.constant 1.000000e+00 : f32
    %515 = vector.broadcast %cst_152 : f32 to vector<2x128xf32>
    %516 = arith.addf %515, %514 : vector<2x128xf32>
    %517 = arith.divf %515, %516 : vector<2x128xf32>
    %518 = vector.extract_strided_slice %505 {offsets = [0, 256], sizes = [2, 128], strides = [1, 1]} : vector<2x512xf32> to vector<2x128xf32>
    %519 = math.tanh %518 : vector<2x128xf32>
    %520 = vector.extract_strided_slice %505 {offsets = [0, 384], sizes = [2, 128], strides = [1, 1]} : vector<2x512xf32> to vector<2x128xf32>
    %521 = arith.negf %520 : vector<2x128xf32>
    %522 = math.exp %521 : vector<2x128xf32>
    %cst_153 = arith.constant 1.000000e+00 : f32
    %523 = vector.broadcast %cst_153 : f32 to vector<2x128xf32>
    %524 = arith.addf %523, %522 : vector<2x128xf32>
    %525 = arith.divf %523, %524 : vector<2x128xf32>
    %526 = arith.mulf %517, %499 : vector<2x128xf32>
    %527 = arith.mulf %511, %519 : vector<2x128xf32>
    %528 = arith.addf %526, %527 : vector<2x128xf32>
    %529 = math.tanh %528 : vector<2x128xf32>
    %530 = arith.mulf %525, %529 : vector<2x128xf32>
    %c0_154 = arith.constant 0 : index
    %c0_155 = arith.constant 0 : index
    %531 = vector.load %arg25[%c0_154, %c0_155] : memref<16x128xf32, #tpu.memory_space<vmem>>, vector<2x128xf32>
    tpu.vector_store %arg25[%c0_154, %c0_155], %530 {strides = array<i32>} : memref<16x128xf32, #tpu.memory_space<vmem>>, vector<2x128xf32>,
    %c0_156 = arith.constant 0 : index
    %c0_157 = arith.constant 0 : index
    %532 = vector.load %arg24[%c0_156, %c0_157] : memref<16x128xf32, #tpu.memory_space<vmem>>, vector<16x128xf32>
    %c0_158 = arith.constant 0 : index
    %c0_159 = arith.constant 0 : index
    %533 = vector.load %arg25[%c0_158, %c0_159] : memref<16x128xf32, #tpu.memory_space<vmem>>, vector<16x128xf32>
    %c0_160 = arith.constant 0 : index
    %c0_161 = arith.constant 0 : index
    %534 = vector.load %arg8[%c0_160, %c0_161] : memref<128x1024xf32, #tpu.memory_space<vmem>>, vector<128x1024xf32>
    %cst_162 = arith.constant dense<0.000000e+00> : vector<16x1024xf32>
    %535 = tpu.matmul %532, %534, %cst_162 {dimension_numbers = #tpu.dot_dimension_numbers<[1], [0], [0], [1], [0, 0, 1, 1], [], []>} : vector<16x128xf32>, vector<128x1024xf32>, vector<16x1024xf32> -> vector<16x1024xf32>
    %c0_163 = arith.constant 0 : index
    %c0_164 = arith.constant 0 : index
    %536 = vector.load %arg9[%c0_163, %c0_164] : memref<128x1024xf32, #tpu.memory_space<vmem>>, vector<128x1024xf32>
    %cst_165 = arith.constant dense<0.000000e+00> : vector<16x1024xf32>
    %537 = tpu.matmul %533, %536, %cst_165 {dimension_numbers = #tpu.dot_dimension_numbers<[1], [0], [0], [1], [0, 0, 1, 1], [], []>} : vector<16x128xf32>, vector<128x1024xf32>, vector<16x1024xf32> -> vector<16x1024xf32>
    %538 = arith.addf %535, %537 : vector<16x1024xf32>
    %c0_166 = arith.constant 0 : index
    %c0_167 = arith.constant 0 : index
    %539 = vector.load %arg11[%c0_166, %c0_167] : memref<1x1024xf32, #tpu.memory_space<vmem>>, vector<1x1024xf32>
    %540 = vector.broadcast %539 : vector<1x1024xf32> to vector<16x1024xf32>
    %541 = arith.addf %538, %540 : vector<16x1024xf32>
    %542 = vector.extract_strided_slice %541 {offsets = [0, 0], sizes = [16, 512], strides = [1, 1]} : vector<16x1024xf32> to vector<16x512xf32>
    %c0_168 = arith.constant 0 : index
    %c0_169 = arith.constant 0 : index
    %c0_170 = arith.constant 0 : index
    %543 = vector.load %arg10[%c0_168, %c0_169, %c0_170] : memref<2x128x512xf32, #tpu.memory_space<vmem>>, vector<1x128x512xf32>
    %544 = vector.shape_cast %543 : vector<1x128x512xf32> to vector<128x512xf32>
    %c2_171 = arith.constant 2 : index
    %c0_172 = arith.constant 0 : index
    %c0_173 = arith.constant 0 : index
    %545 = vector.load %arg12[%c2_171, %c0_172, %c0_173] : memref<4x1x128xf32, #tpu.memory_space<vmem>>, vector<1x1x128xf32>
    %546 = vector.shape_cast %545 : vector<1x1x128xf32> to vector<1x128xf32>
    %c2_174 = arith.constant 2 : index
    %c0_175 = arith.constant 0 : index
    %c0_176 = arith.constant 0 : index
    %547 = vector.load %arg13[%c2_174, %c0_175, %c0_176] : memref<4x1x128xf32, #tpu.memory_space<vmem>>, vector<1x1x128xf32>
    %548 = vector.shape_cast %547 : vector<1x1x128xf32> to vector<1x128xf32>
    %549 = vector.shape_cast %546 : vector<1x128xf32> to vector<1x128xf32>
    %550 = vector.broadcast %549 : vector<1x128xf32> to vector<2x128xf32>
    %551 = vector.shape_cast %548 : vector<1x128xf32> to vector<1x128xf32>
    %552 = vector.broadcast %551 : vector<1x128xf32> to vector<2x128xf32>
    %553 = vector.extract_strided_slice %542 {offsets = [0, 0], sizes = [2, 512], strides = [1, 1]} : vector<16x512xf32> to vector<2x512xf32>
    %cst_177 = arith.constant dense<0.000000e+00> : vector<2x512xf32>
    %554 = tpu.matmul %550, %544, %cst_177 {dimension_numbers = #tpu.dot_dimension_numbers<[1], [0], [0], [1], [0, 0, 1, 1], [], []>} : vector<2x128xf32>, vector<128x512xf32>, vector<2x512xf32> -> vector<2x512xf32>
    %555 = arith.addf %553, %554 : vector<2x512xf32>
    %556 = vector.extract_strided_slice %555 {offsets = [0, 0], sizes = [2, 128], strides = [1, 1]} : vector<2x512xf32> to vector<2x128xf32>
    %557 = arith.negf %556 : vector<2x128xf32>
    %558 = math.exp %557 : vector<2x128xf32>
    %cst_178 = arith.constant 1.000000e+00 : f32
    %559 = vector.broadcast %cst_178 : f32 to vector<2x128xf32>
    %560 = arith.addf %559, %558 : vector<2x128xf32>
    %561 = arith.divf %559, %560 : vector<2x128xf32>
    %562 = vector.extract_strided_slice %555 {offsets = [0, 128], sizes = [2, 128], strides = [1, 1]} : vector<2x512xf32> to vector<2x128xf32>
    %563 = arith.negf %562 : vector<2x128xf32>
    %564 = math.exp %563 : vector<2x128xf32>
    %cst_179 = arith.constant 1.000000e+00 : f32
    %565 = vector.broadcast %cst_179 : f32 to vector<2x128xf32>
    %566 = arith.addf %565, %564 : vector<2x128xf32>
    %567 = arith.divf %565, %566 : vector<2x128xf32>
    %568 = vector.extract_strided_slice %555 {offsets = [0, 256], sizes = [2, 128], strides = [1, 1]} : vector<2x512xf32> to vector<2x128xf32>
    %569 = math.tanh %568 : vector<2x128xf32>
    %570 = vector.extract_strided_slice %555 {offsets = [0, 384], sizes = [2, 128], strides = [1, 1]} : vector<2x512xf32> to vector<2x128xf32>
    %571 = arith.negf %570 : vector<2x128xf32>
    %572 = math.exp %571 : vector<2x128xf32>
    %cst_180 = arith.constant 1.000000e+00 : f32
    %573 = vector.broadcast %cst_180 : f32 to vector<2x128xf32>
    %574 = arith.addf %573, %572 : vector<2x128xf32>
    %575 = arith.divf %573, %574 : vector<2x128xf32>
    %576 = arith.mulf %567, %552 : vector<2x128xf32>
    %577 = arith.mulf %561, %569 : vector<2x128xf32>
    %578 = arith.addf %576, %577 : vector<2x128xf32>
    %579 = math.tanh %578 : vector<2x128xf32>
    %580 = arith.mulf %575, %579 : vector<2x128xf32>
    %c0_181 = arith.constant 0 : index
    %c0_182 = arith.constant 0 : index
    %581 = vector.load %arg26[%c0_181, %c0_182] : memref<16x128xf32, #tpu.memory_space<vmem>>, vector<2x128xf32>
    tpu.vector_store %arg26[%c0_181, %c0_182], %580 {strides = array<i32>} : memref<16x128xf32, #tpu.memory_space<vmem>>, vector<2x128xf32>,
    %582 = vector.extract_strided_slice %542 {offsets = [2, 0], sizes = [2, 512], strides = [1, 1]} : vector<16x512xf32> to vector<2x512xf32>
    %cst_183 = arith.constant dense<0.000000e+00> : vector<2x512xf32>
    %583 = tpu.matmul %580, %544, %cst_183 {dimension_numbers = #tpu.dot_dimension_numbers<[1], [0], [0], [1], [0, 0, 1, 1], [], []>} : vector<2x128xf32>, vector<128x512xf32>, vector<2x512xf32> -> vector<2x512xf32>
    %584 = arith.addf %582, %583 : vector<2x512xf32>
    %585 = vector.extract_strided_slice %584 {offsets = [0, 0], sizes = [2, 128], strides = [1, 1]} : vector<2x512xf32> to vector<2x128xf32>
    %586 = arith.negf %585 : vector<2x128xf32>
    %587 = math.exp %586 : vector<2x128xf32>
    %cst_184 = arith.constant 1.000000e+00 : f32
    %588 = vector.broadcast %cst_184 : f32 to vector<2x128xf32>
    %589 = arith.addf %588, %587 : vector<2x128xf32>
    %590 = arith.divf %588, %589 : vector<2x128xf32>
    %591 = vector.extract_strided_slice %584 {offsets = [0, 128], sizes = [2, 128], strides = [1, 1]} : vector<2x512xf32> to vector<2x128xf32>
    %592 = arith.negf %591 : vector<2x128xf32>
    %593 = math.exp %592 : vector<2x128xf32>
    %cst_185 = arith.constant 1.000000e+00 : f32
    %594 = vector.broadcast %cst_185 : f32 to vector<2x128xf32>
    %595 = arith.addf %594, %593 : vector<2x128xf32>
    %596 = arith.divf %594, %595 : vector<2x128xf32>
    %597 = vector.extract_strided_slice %584 {offsets = [0, 256], sizes = [2, 128], strides = [1, 1]} : vector<2x512xf32> to vector<2x128xf32>
    %598 = math.tanh %597 : vector<2x128xf32>
    %599 = vector.extract_strided_slice %584 {offsets = [0, 384], sizes = [2, 128], strides = [1, 1]} : vector<2x512xf32> to vector<2x128xf32>
    %600 = arith.negf %599 : vector<2x128xf32>
    %601 = math.exp %600 : vector<2x128xf32>
    %cst_186 = arith.constant 1.000000e+00 : f32
    %602 = vector.broadcast %cst_186 : f32 to vector<2x128xf32>
    %603 = arith.addf %602, %601 : vector<2x128xf32>
    %604 = arith.divf %602, %603 : vector<2x128xf32>
    %605 = arith.mulf %596, %578 : vector<2x128xf32>
    %606 = arith.mulf %590, %598 : vector<2x128xf32>
    %607 = arith.addf %605, %606 : vector<2x128xf32>
    %608 = math.tanh %607 : vector<2x128xf32>
    %609 = arith.mulf %604, %608 : vector<2x128xf32>
    %c2_187 = arith.constant 2 : index
    %c0_188 = arith.constant 0 : index
    %610 = vector.load %arg26[%c2_187, %c0_188] : memref<16x128xf32, #tpu.memory_space<vmem>>, vector<2x128xf32>
    tpu.vector_store %arg26[%c2_187, %c0_188], %609 {strides = array<i32>} : memref<16x128xf32, #tpu.memory_space<vmem>>, vector<2x128xf32>,
    %611 = vector.extract_strided_slice %542 {offsets = [4, 0], sizes = [2, 512], strides = [1, 1]} : vector<16x512xf32> to vector<2x512xf32>
    %cst_189 = arith.constant dense<0.000000e+00> : vector<2x512xf32>
    %612 = tpu.matmul %609, %544, %cst_189 {dimension_numbers = #tpu.dot_dimension_numbers<[1], [0], [0], [1], [0, 0, 1, 1], [], []>} : vector<2x128xf32>, vector<128x512xf32>, vector<2x512xf32> -> vector<2x512xf32>
    %613 = arith.addf %611, %612 : vector<2x512xf32>
    %614 = vector.extract_strided_slice %613 {offsets = [0, 0], sizes = [2, 128], strides = [1, 1]} : vector<2x512xf32> to vector<2x128xf32>
    %615 = arith.negf %614 : vector<2x128xf32>
    %616 = math.exp %615 : vector<2x128xf32>
    %cst_190 = arith.constant 1.000000e+00 : f32
    %617 = vector.broadcast %cst_190 : f32 to vector<2x128xf32>
    %618 = arith.addf %617, %616 : vector<2x128xf32>
    %619 = arith.divf %617, %618 : vector<2x128xf32>
    %620 = vector.extract_strided_slice %613 {offsets = [0, 128], sizes = [2, 128], strides = [1, 1]} : vector<2x512xf32> to vector<2x128xf32>
    %621 = arith.negf %620 : vector<2x128xf32>
    %622 = math.exp %621 : vector<2x128xf32>
    %cst_191 = arith.constant 1.000000e+00 : f32
    %623 = vector.broadcast %cst_191 : f32 to vector<2x128xf32>
    %624 = arith.addf %623, %622 : vector<2x128xf32>
    %625 = arith.divf %623, %624 : vector<2x128xf32>
    %626 = vector.extract_strided_slice %613 {offsets = [0, 256], sizes = [2, 128], strides = [1, 1]} : vector<2x512xf32> to vector<2x128xf32>
    %627 = math.tanh %626 : vector<2x128xf32>
    %628 = vector.extract_strided_slice %613 {offsets = [0, 384], sizes = [2, 128], strides = [1, 1]} : vector<2x512xf32> to vector<2x128xf32>
    %629 = arith.negf %628 : vector<2x128xf32>
    %630 = math.exp %629 : vector<2x128xf32>
    %cst_192 = arith.constant 1.000000e+00 : f32
    %631 = vector.broadcast %cst_192 : f32 to vector<2x128xf32>
    %632 = arith.addf %631, %630 : vector<2x128xf32>
    %633 = arith.divf %631, %632 : vector<2x128xf32>
    %634 = arith.mulf %625, %607 : vector<2x128xf32>
    %635 = arith.mulf %619, %627 : vector<2x128xf32>
    %636 = arith.addf %634, %635 : vector<2x128xf32>
    %637 = math.tanh %636 : vector<2x128xf32>
    %638 = arith.mulf %633, %637 : vector<2x128xf32>
    %c4_193 = arith.constant 4 : index
    %c0_194 = arith.constant 0 : index
    %639 = vector.load %arg26[%c4_193, %c0_194] : memref<16x128xf32, #tpu.memory_space<vmem>>, vector<2x128xf32>
    tpu.vector_store %arg26[%c4_193, %c0_194], %638 {strides = array<i32>} : memref<16x128xf32, #tpu.memory_space<vmem>>, vector<2x128xf32>,
    %640 = vector.extract_strided_slice %542 {offsets = [6, 0], sizes = [2, 512], strides = [1, 1]} : vector<16x512xf32> to vector<2x512xf32>
    %cst_195 = arith.constant dense<0.000000e+00> : vector<2x512xf32>
    %641 = tpu.matmul %638, %544, %cst_195 {dimension_numbers = #tpu.dot_dimension_numbers<[1], [0], [0], [1], [0, 0, 1, 1], [], []>} : vector<2x128xf32>, vector<128x512xf32>, vector<2x512xf32> -> vector<2x512xf32>
    %642 = arith.addf %640, %641 : vector<2x512xf32>
    %643 = vector.extract_strided_slice %642 {offsets = [0, 0], sizes = [2, 128], strides = [1, 1]} : vector<2x512xf32> to vector<2x128xf32>
    %644 = arith.negf %643 : vector<2x128xf32>
    %645 = math.exp %644 : vector<2x128xf32>
    %cst_196 = arith.constant 1.000000e+00 : f32
    %646 = vector.broadcast %cst_196 : f32 to vector<2x128xf32>
    %647 = arith.addf %646, %645 : vector<2x128xf32>
    %648 = arith.divf %646, %647 : vector<2x128xf32>
    %649 = vector.extract_strided_slice %642 {offsets = [0, 128], sizes = [2, 128], strides = [1, 1]} : vector<2x512xf32> to vector<2x128xf32>
    %650 = arith.negf %649 : vector<2x128xf32>
    %651 = math.exp %650 : vector<2x128xf32>
    %cst_197 = arith.constant 1.000000e+00 : f32
    %652 = vector.broadcast %cst_197 : f32 to vector<2x128xf32>
    %653 = arith.addf %652, %651 : vector<2x128xf32>
    %654 = arith.divf %652, %653 : vector<2x128xf32>
    %655 = vector.extract_strided_slice %642 {offsets = [0, 256], sizes = [2, 128], strides = [1, 1]} : vector<2x512xf32> to vector<2x128xf32>
    %656 = math.tanh %655 : vector<2x128xf32>
    %657 = vector.extract_strided_slice %642 {offsets = [0, 384], sizes = [2, 128], strides = [1, 1]} : vector<2x512xf32> to vector<2x128xf32>
    %658 = arith.negf %657 : vector<2x128xf32>
    %659 = math.exp %658 : vector<2x128xf32>
    %cst_198 = arith.constant 1.000000e+00 : f32
    %660 = vector.broadcast %cst_198 : f32 to vector<2x128xf32>
    %661 = arith.addf %660, %659 : vector<2x128xf32>
    %662 = arith.divf %660, %661 : vector<2x128xf32>
    %663 = arith.mulf %654, %636 : vector<2x128xf32>
    %664 = arith.mulf %648, %656 : vector<2x128xf32>
    %665 = arith.addf %663, %664 : vector<2x128xf32>
    %666 = math.tanh %665 : vector<2x128xf32>
    %667 = arith.mulf %662, %666 : vector<2x128xf32>
    %c6_199 = arith.constant 6 : index
    %c0_200 = arith.constant 0 : index
    %668 = vector.load %arg26[%c6_199, %c0_200] : memref<16x128xf32, #tpu.memory_space<vmem>>, vector<2x128xf32>
    tpu.vector_store %arg26[%c6_199, %c0_200], %667 {strides = array<i32>} : memref<16x128xf32, #tpu.memory_space<vmem>>, vector<2x128xf32>,
    %669 = vector.extract_strided_slice %542 {offsets = [8, 0], sizes = [2, 512], strides = [1, 1]} : vector<16x512xf32> to vector<2x512xf32>
    %cst_201 = arith.constant dense<0.000000e+00> : vector<2x512xf32>
    %670 = tpu.matmul %667, %544, %cst_201 {dimension_numbers = #tpu.dot_dimension_numbers<[1], [0], [0], [1], [0, 0, 1, 1], [], []>} : vector<2x128xf32>, vector<128x512xf32>, vector<2x512xf32> -> vector<2x512xf32>
    %671 = arith.addf %669, %670 : vector<2x512xf32>
    %672 = vector.extract_strided_slice %671 {offsets = [0, 0], sizes = [2, 128], strides = [1, 1]} : vector<2x512xf32> to vector<2x128xf32>
    %673 = arith.negf %672 : vector<2x128xf32>
    %674 = math.exp %673 : vector<2x128xf32>
    %cst_202 = arith.constant 1.000000e+00 : f32
    %675 = vector.broadcast %cst_202 : f32 to vector<2x128xf32>
    %676 = arith.addf %675, %674 : vector<2x128xf32>
    %677 = arith.divf %675, %676 : vector<2x128xf32>
    %678 = vector.extract_strided_slice %671 {offsets = [0, 128], sizes = [2, 128], strides = [1, 1]} : vector<2x512xf32> to vector<2x128xf32>
    %679 = arith.negf %678 : vector<2x128xf32>
    %680 = math.exp %679 : vector<2x128xf32>
    %cst_203 = arith.constant 1.000000e+00 : f32
    %681 = vector.broadcast %cst_203 : f32 to vector<2x128xf32>
    %682 = arith.addf %681, %680 : vector<2x128xf32>
    %683 = arith.divf %681, %682 : vector<2x128xf32>
    %684 = vector.extract_strided_slice %671 {offsets = [0, 256], sizes = [2, 128], strides = [1, 1]} : vector<2x512xf32> to vector<2x128xf32>
    %685 = math.tanh %684 : vector<2x128xf32>
    %686 = vector.extract_strided_slice %671 {offsets = [0, 384], sizes = [2, 128], strides = [1, 1]} : vector<2x512xf32> to vector<2x128xf32>
    %687 = arith.negf %686 : vector<2x128xf32>
    %688 = math.exp %687 : vector<2x128xf32>
    %cst_204 = arith.constant 1.000000e+00 : f32
    %689 = vector.broadcast %cst_204 : f32 to vector<2x128xf32>
    %690 = arith.addf %689, %688 : vector<2x128xf32>
    %691 = arith.divf %689, %690 : vector<2x128xf32>
    %692 = arith.mulf %683, %665 : vector<2x128xf32>
    %693 = arith.mulf %677, %685 : vector<2x128xf32>
    %694 = arith.addf %692, %693 : vector<2x128xf32>
    %695 = math.tanh %694 : vector<2x128xf32>
    %696 = arith.mulf %691, %695 : vector<2x128xf32>
    %c8_205 = arith.constant 8 : index
    %c0_206 = arith.constant 0 : index
    %697 = vector.load %arg26[%c8_205, %c0_206] : memref<16x128xf32, #tpu.memory_space<vmem>>, vector<2x128xf32>
    tpu.vector_store %arg26[%c8_205, %c0_206], %696 {strides = array<i32>} : memref<16x128xf32, #tpu.memory_space<vmem>>, vector<2x128xf32>,
    %698 = vector.extract_strided_slice %542 {offsets = [10, 0], sizes = [2, 512], strides = [1, 1]} : vector<16x512xf32> to vector<2x512xf32>
    %cst_207 = arith.constant dense<0.000000e+00> : vector<2x512xf32>
    %699 = tpu.matmul %696, %544, %cst_207 {dimension_numbers = #tpu.dot_dimension_numbers<[1], [0], [0], [1], [0, 0, 1, 1], [], []>} : vector<2x128xf32>, vector<128x512xf32>, vector<2x512xf32> -> vector<2x512xf32>
    %700 = arith.addf %698, %699 : vector<2x512xf32>
    %701 = vector.extract_strided_slice %700 {offsets = [0, 0], sizes = [2, 128], strides = [1, 1]} : vector<2x512xf32> to vector<2x128xf32>
    %702 = arith.negf %701 : vector<2x128xf32>
    %703 = math.exp %702 : vector<2x128xf32>
    %cst_208 = arith.constant 1.000000e+00 : f32
    %704 = vector.broadcast %cst_208 : f32 to vector<2x128xf32>
    %705 = arith.addf %704, %703 : vector<2x128xf32>
    %706 = arith.divf %704, %705 : vector<2x128xf32>
    %707 = vector.extract_strided_slice %700 {offsets = [0, 128], sizes = [2, 128], strides = [1, 1]} : vector<2x512xf32> to vector<2x128xf32>
    %708 = arith.negf %707 : vector<2x128xf32>
    %709 = math.exp %708 : vector<2x128xf32>
    %cst_209 = arith.constant 1.000000e+00 : f32
    %710 = vector.broadcast %cst_209 : f32 to vector<2x128xf32>
    %711 = arith.addf %710, %709 : vector<2x128xf32>
    %712 = arith.divf %710, %711 : vector<2x128xf32>
    %713 = vector.extract_strided_slice %700 {offsets = [0, 256], sizes = [2, 128], strides = [1, 1]} : vector<2x512xf32> to vector<2x128xf32>
    %714 = math.tanh %713 : vector<2x128xf32>
    %715 = vector.extract_strided_slice %700 {offsets = [0, 384], sizes = [2, 128], strides = [1, 1]} : vector<2x512xf32> to vector<2x128xf32>
    %716 = arith.negf %715 : vector<2x128xf32>
    %717 = math.exp %716 : vector<2x128xf32>
    %cst_210 = arith.constant 1.000000e+00 : f32
    %718 = vector.broadcast %cst_210 : f32 to vector<2x128xf32>
    %719 = arith.addf %718, %717 : vector<2x128xf32>
    %720 = arith.divf %718, %719 : vector<2x128xf32>
    %721 = arith.mulf %712, %694 : vector<2x128xf32>
    %722 = arith.mulf %706, %714 : vector<2x128xf32>
    %723 = arith.addf %721, %722 : vector<2x128xf32>
    %724 = math.tanh %723 : vector<2x128xf32>
    %725 = arith.mulf %720, %724 : vector<2x128xf32>
    %c10_211 = arith.constant 10 : index
    %c0_212 = arith.constant 0 : index
    %726 = vector.load %arg26[%c10_211, %c0_212] : memref<16x128xf32, #tpu.memory_space<vmem>>, vector<2x128xf32>
    tpu.vector_store %arg26[%c10_211, %c0_212], %725 {strides = array<i32>} : memref<16x128xf32, #tpu.memory_space<vmem>>, vector<2x128xf32>,
    %727 = vector.extract_strided_slice %542 {offsets = [12, 0], sizes = [2, 512], strides = [1, 1]} : vector<16x512xf32> to vector<2x512xf32>
    %cst_213 = arith.constant dense<0.000000e+00> : vector<2x512xf32>
    %728 = tpu.matmul %725, %544, %cst_213 {dimension_numbers = #tpu.dot_dimension_numbers<[1], [0], [0], [1], [0, 0, 1, 1], [], []>} : vector<2x128xf32>, vector<128x512xf32>, vector<2x512xf32> -> vector<2x512xf32>
    %729 = arith.addf %727, %728 : vector<2x512xf32>
    %730 = vector.extract_strided_slice %729 {offsets = [0, 0], sizes = [2, 128], strides = [1, 1]} : vector<2x512xf32> to vector<2x128xf32>
    %731 = arith.negf %730 : vector<2x128xf32>
    %732 = math.exp %731 : vector<2x128xf32>
    %cst_214 = arith.constant 1.000000e+00 : f32
    %733 = vector.broadcast %cst_214 : f32 to vector<2x128xf32>
    %734 = arith.addf %733, %732 : vector<2x128xf32>
    %735 = arith.divf %733, %734 : vector<2x128xf32>
    %736 = vector.extract_strided_slice %729 {offsets = [0, 128], sizes = [2, 128], strides = [1, 1]} : vector<2x512xf32> to vector<2x128xf32>
    %737 = arith.negf %736 : vector<2x128xf32>
    %738 = math.exp %737 : vector<2x128xf32>
    %cst_215 = arith.constant 1.000000e+00 : f32
    %739 = vector.broadcast %cst_215 : f32 to vector<2x128xf32>
    %740 = arith.addf %739, %738 : vector<2x128xf32>
    %741 = arith.divf %739, %740 : vector<2x128xf32>
    %742 = vector.extract_strided_slice %729 {offsets = [0, 256], sizes = [2, 128], strides = [1, 1]} : vector<2x512xf32> to vector<2x128xf32>
    %743 = math.tanh %742 : vector<2x128xf32>
    %744 = vector.extract_strided_slice %729 {offsets = [0, 384], sizes = [2, 128], strides = [1, 1]} : vector<2x512xf32> to vector<2x128xf32>
    %745 = arith.negf %744 : vector<2x128xf32>
    %746 = math.exp %745 : vector<2x128xf32>
    %cst_216 = arith.constant 1.000000e+00 : f32
    %747 = vector.broadcast %cst_216 : f32 to vector<2x128xf32>
    %748 = arith.addf %747, %746 : vector<2x128xf32>
    %749 = arith.divf %747, %748 : vector<2x128xf32>
    %750 = arith.mulf %741, %723 : vector<2x128xf32>
    %751 = arith.mulf %735, %743 : vector<2x128xf32>
    %752 = arith.addf %750, %751 : vector<2x128xf32>
    %753 = math.tanh %752 : vector<2x128xf32>
    %754 = arith.mulf %749, %753 : vector<2x128xf32>
    %c12_217 = arith.constant 12 : index
    %c0_218 = arith.constant 0 : index
    %755 = vector.load %arg26[%c12_217, %c0_218] : memref<16x128xf32, #tpu.memory_space<vmem>>, vector<2x128xf32>
    tpu.vector_store %arg26[%c12_217, %c0_218], %754 {strides = array<i32>} : memref<16x128xf32, #tpu.memory_space<vmem>>, vector<2x128xf32>,
    %756 = vector.extract_strided_slice %542 {offsets = [14, 0], sizes = [2, 512], strides = [1, 1]} : vector<16x512xf32> to vector<2x512xf32>
    %cst_219 = arith.constant dense<0.000000e+00> : vector<2x512xf32>
    %757 = tpu.matmul %754, %544, %cst_219 {dimension_numbers = #tpu.dot_dimension_numbers<[1], [0], [0], [1], [0, 0, 1, 1], [], []>} : vector<2x128xf32>, vector<128x512xf32>, vector<2x512xf32> -> vector<2x512xf32>
    %758 = arith.addf %756, %757 : vector<2x512xf32>
    %759 = vector.extract_strided_slice %758 {offsets = [0, 0], sizes = [2, 128], strides = [1, 1]} : vector<2x512xf32> to vector<2x128xf32>
    %760 = arith.negf %759 : vector<2x128xf32>
    %761 = math.exp %760 : vector<2x128xf32>
    %cst_220 = arith.constant 1.000000e+00 : f32
    %762 = vector.broadcast %cst_220 : f32 to vector<2x128xf32>
    %763 = arith.addf %762, %761 : vector<2x128xf32>
    %764 = arith.divf %762, %763 : vector<2x128xf32>
    %765 = vector.extract_strided_slice %758 {offsets = [0, 128], sizes = [2, 128], strides = [1, 1]} : vector<2x512xf32> to vector<2x128xf32>
    %766 = arith.negf %765 : vector<2x128xf32>
    %767 = math.exp %766 : vector<2x128xf32>
    %cst_221 = arith.constant 1.000000e+00 : f32
    %768 = vector.broadcast %cst_221 : f32 to vector<2x128xf32>
    %769 = arith.addf %768, %767 : vector<2x128xf32>
    %770 = arith.divf %768, %769 : vector<2x128xf32>
    %771 = vector.extract_strided_slice %758 {offsets = [0, 256], sizes = [2, 128], strides = [1, 1]} : vector<2x512xf32> to vector<2x128xf32>
    %772 = math.tanh %771 : vector<2x128xf32>
    %773 = vector.extract_strided_slice %758 {offsets = [0, 384], sizes = [2, 128], strides = [1, 1]} : vector<2x512xf32> to vector<2x128xf32>
    %774 = arith.negf %773 : vector<2x128xf32>
    %775 = math.exp %774 : vector<2x128xf32>
    %cst_222 = arith.constant 1.000000e+00 : f32
    %776 = vector.broadcast %cst_222 : f32 to vector<2x128xf32>
    %777 = arith.addf %776, %775 : vector<2x128xf32>
    %778 = arith.divf %776, %777 : vector<2x128xf32>
    %779 = arith.mulf %770, %752 : vector<2x128xf32>
    %780 = arith.mulf %764, %772 : vector<2x128xf32>
    %781 = arith.addf %779, %780 : vector<2x128xf32>
    %782 = math.tanh %781 : vector<2x128xf32>
    %783 = arith.mulf %778, %782 : vector<2x128xf32>
    %c14_223 = arith.constant 14 : index
    %c0_224 = arith.constant 0 : index
    %784 = vector.load %arg26[%c14_223, %c0_224] : memref<16x128xf32, #tpu.memory_space<vmem>>, vector<2x128xf32>
    tpu.vector_store %arg26[%c14_223, %c0_224], %783 {strides = array<i32>} : memref<16x128xf32, #tpu.memory_space<vmem>>, vector<2x128xf32>,
    %785 = vector.extract_strided_slice %541 {offsets = [0, 512], sizes = [16, 512], strides = [1, 1]} : vector<16x1024xf32> to vector<16x512xf32>
    %c1_225 = arith.constant 1 : index
    %c0_226 = arith.constant 0 : index
    %c0_227 = arith.constant 0 : index
    %786 = vector.load %arg10[%c1_225, %c0_226, %c0_227] : memref<2x128x512xf32, #tpu.memory_space<vmem>>, vector<1x128x512xf32>
    %787 = vector.shape_cast %786 : vector<1x128x512xf32> to vector<128x512xf32>
    %c3_228 = arith.constant 3 : index
    %c0_229 = arith.constant 0 : index
    %c0_230 = arith.constant 0 : index
    %788 = vector.load %arg12[%c3_228, %c0_229, %c0_230] : memref<4x1x128xf32, #tpu.memory_space<vmem>>, vector<1x1x128xf32>
    %789 = vector.shape_cast %788 : vector<1x1x128xf32> to vector<1x128xf32>
    %c3_231 = arith.constant 3 : index
    %c0_232 = arith.constant 0 : index
    %c0_233 = arith.constant 0 : index
    %790 = vector.load %arg13[%c3_231, %c0_232, %c0_233] : memref<4x1x128xf32, #tpu.memory_space<vmem>>, vector<1x1x128xf32>
    %791 = vector.shape_cast %790 : vector<1x1x128xf32> to vector<1x128xf32>
    %792 = vector.shape_cast %789 : vector<1x128xf32> to vector<1x128xf32>
    %793 = vector.broadcast %792 : vector<1x128xf32> to vector<2x128xf32>
    %794 = vector.shape_cast %791 : vector<1x128xf32> to vector<1x128xf32>
    %795 = vector.broadcast %794 : vector<1x128xf32> to vector<2x128xf32>
    %796 = vector.extract_strided_slice %785 {offsets = [14, 0], sizes = [2, 512], strides = [1, 1]} : vector<16x512xf32> to vector<2x512xf32>
    %cst_234 = arith.constant dense<0.000000e+00> : vector<2x512xf32>
    %797 = tpu.matmul %793, %787, %cst_234 {dimension_numbers = #tpu.dot_dimension_numbers<[1], [0], [0], [1], [0, 0, 1, 1], [], []>} : vector<2x128xf32>, vector<128x512xf32>, vector<2x512xf32> -> vector<2x512xf32>
    %798 = arith.addf %796, %797 : vector<2x512xf32>
    %799 = vector.extract_strided_slice %798 {offsets = [0, 0], sizes = [2, 128], strides = [1, 1]} : vector<2x512xf32> to vector<2x128xf32>
    %800 = arith.negf %799 : vector<2x128xf32>
    %801 = math.exp %800 : vector<2x128xf32>
    %cst_235 = arith.constant 1.000000e+00 : f32
    %802 = vector.broadcast %cst_235 : f32 to vector<2x128xf32>
    %803 = arith.addf %802, %801 : vector<2x128xf32>
    %804 = arith.divf %802, %803 : vector<2x128xf32>
    %805 = vector.extract_strided_slice %798 {offsets = [0, 128], sizes = [2, 128], strides = [1, 1]} : vector<2x512xf32> to vector<2x128xf32>
    %806 = arith.negf %805 : vector<2x128xf32>
    %807 = math.exp %806 : vector<2x128xf32>
    %cst_236 = arith.constant 1.000000e+00 : f32
    %808 = vector.broadcast %cst_236 : f32 to vector<2x128xf32>
    %809 = arith.addf %808, %807 : vector<2x128xf32>
    %810 = arith.divf %808, %809 : vector<2x128xf32>
    %811 = vector.extract_strided_slice %798 {offsets = [0, 256], sizes = [2, 128], strides = [1, 1]} : vector<2x512xf32> to vector<2x128xf32>
    %812 = math.tanh %811 : vector<2x128xf32>
    %813 = vector.extract_strided_slice %798 {offsets = [0, 384], sizes = [2, 128], strides = [1, 1]} : vector<2x512xf32> to vector<2x128xf32>
    %814 = arith.negf %813 : vector<2x128xf32>
    %815 = math.exp %814 : vector<2x128xf32>
    %cst_237 = arith.constant 1.000000e+00 : f32
    %816 = vector.broadcast %cst_237 : f32 to vector<2x128xf32>
    %817 = arith.addf %816, %815 : vector<2x128xf32>
    %818 = arith.divf %816, %817 : vector<2x128xf32>
    %819 = arith.mulf %810, %795 : vector<2x128xf32>
    %820 = arith.mulf %804, %812 : vector<2x128xf32>
    %821 = arith.addf %819, %820 : vector<2x128xf32>
    %822 = math.tanh %821 : vector<2x128xf32>
    %823 = arith.mulf %818, %822 : vector<2x128xf32>
    %c14_238 = arith.constant 14 : index
    %c0_239 = arith.constant 0 : index
    %824 = vector.load %arg27[%c14_238, %c0_239] : memref<16x128xf32, #tpu.memory_space<vmem>>, vector<2x128xf32>
    tpu.vector_store %arg27[%c14_238, %c0_239], %823 {strides = array<i32>} : memref<16x128xf32, #tpu.memory_space<vmem>>, vector<2x128xf32>,
    %825 = vector.extract_strided_slice %785 {offsets = [12, 0], sizes = [2, 512], strides = [1, 1]} : vector<16x512xf32> to vector<2x512xf32>
    %cst_240 = arith.constant dense<0.000000e+00> : vector<2x512xf32>
    %826 = tpu.matmul %823, %787, %cst_240 {dimension_numbers = #tpu.dot_dimension_numbers<[1], [0], [0], [1], [0, 0, 1, 1], [], []>} : vector<2x128xf32>, vector<128x512xf32>, vector<2x512xf32> -> vector<2x512xf32>
    %827 = arith.addf %825, %826 : vector<2x512xf32>
    %828 = vector.extract_strided_slice %827 {offsets = [0, 0], sizes = [2, 128], strides = [1, 1]} : vector<2x512xf32> to vector<2x128xf32>
    %829 = arith.negf %828 : vector<2x128xf32>
    %830 = math.exp %829 : vector<2x128xf32>
    %cst_241 = arith.constant 1.000000e+00 : f32
    %831 = vector.broadcast %cst_241 : f32 to vector<2x128xf32>
    %832 = arith.addf %831, %830 : vector<2x128xf32>
    %833 = arith.divf %831, %832 : vector<2x128xf32>
    %834 = vector.extract_strided_slice %827 {offsets = [0, 128], sizes = [2, 128], strides = [1, 1]} : vector<2x512xf32> to vector<2x128xf32>
    %835 = arith.negf %834 : vector<2x128xf32>
    %836 = math.exp %835 : vector<2x128xf32>
    %cst_242 = arith.constant 1.000000e+00 : f32
    %837 = vector.broadcast %cst_242 : f32 to vector<2x128xf32>
    %838 = arith.addf %837, %836 : vector<2x128xf32>
    %839 = arith.divf %837, %838 : vector<2x128xf32>
    %840 = vector.extract_strided_slice %827 {offsets = [0, 256], sizes = [2, 128], strides = [1, 1]} : vector<2x512xf32> to vector<2x128xf32>
    %841 = math.tanh %840 : vector<2x128xf32>
    %842 = vector.extract_strided_slice %827 {offsets = [0, 384], sizes = [2, 128], strides = [1, 1]} : vector<2x512xf32> to vector<2x128xf32>
    %843 = arith.negf %842 : vector<2x128xf32>
    %844 = math.exp %843 : vector<2x128xf32>
    %cst_243 = arith.constant 1.000000e+00 : f32
    %845 = vector.broadcast %cst_243 : f32 to vector<2x128xf32>
    %846 = arith.addf %845, %844 : vector<2x128xf32>
    %847 = arith.divf %845, %846 : vector<2x128xf32>
    %848 = arith.mulf %839, %821 : vector<2x128xf32>
    %849 = arith.mulf %833, %841 : vector<2x128xf32>
    %850 = arith.addf %848, %849 : vector<2x128xf32>
    %851 = math.tanh %850 : vector<2x128xf32>
    %852 = arith.mulf %847, %851 : vector<2x128xf32>
    %c12_244 = arith.constant 12 : index
    %c0_245 = arith.constant 0 : index
    %853 = vector.load %arg27[%c12_244, %c0_245] : memref<16x128xf32, #tpu.memory_space<vmem>>, vector<2x128xf32>
    tpu.vector_store %arg27[%c12_244, %c0_245], %852 {strides = array<i32>} : memref<16x128xf32, #tpu.memory_space<vmem>>, vector<2x128xf32>,
    %854 = vector.extract_strided_slice %785 {offsets = [10, 0], sizes = [2, 512], strides = [1, 1]} : vector<16x512xf32> to vector<2x512xf32>
    %cst_246 = arith.constant dense<0.000000e+00> : vector<2x512xf32>
    %855 = tpu.matmul %852, %787, %cst_246 {dimension_numbers = #tpu.dot_dimension_numbers<[1], [0], [0], [1], [0, 0, 1, 1], [], []>} : vector<2x128xf32>, vector<128x512xf32>, vector<2x512xf32> -> vector<2x512xf32>
    %856 = arith.addf %854, %855 : vector<2x512xf32>
    %857 = vector.extract_strided_slice %856 {offsets = [0, 0], sizes = [2, 128], strides = [1, 1]} : vector<2x512xf32> to vector<2x128xf32>
    %858 = arith.negf %857 : vector<2x128xf32>
    %859 = math.exp %858 : vector<2x128xf32>
    %cst_247 = arith.constant 1.000000e+00 : f32
    %860 = vector.broadcast %cst_247 : f32 to vector<2x128xf32>
    %861 = arith.addf %860, %859 : vector<2x128xf32>
    %862 = arith.divf %860, %861 : vector<2x128xf32>
    %863 = vector.extract_strided_slice %856 {offsets = [0, 128], sizes = [2, 128], strides = [1, 1]} : vector<2x512xf32> to vector<2x128xf32>
    %864 = arith.negf %863 : vector<2x128xf32>
    %865 = math.exp %864 : vector<2x128xf32>
    %cst_248 = arith.constant 1.000000e+00 : f32
    %866 = vector.broadcast %cst_248 : f32 to vector<2x128xf32>
    %867 = arith.addf %866, %865 : vector<2x128xf32>
    %868 = arith.divf %866, %867 : vector<2x128xf32>
    %869 = vector.extract_strided_slice %856 {offsets = [0, 256], sizes = [2, 128], strides = [1, 1]} : vector<2x512xf32> to vector<2x128xf32>
    %870 = math.tanh %869 : vector<2x128xf32>
    %871 = vector.extract_strided_slice %856 {offsets = [0, 384], sizes = [2, 128], strides = [1, 1]} : vector<2x512xf32> to vector<2x128xf32>
    %872 = arith.negf %871 : vector<2x128xf32>
    %873 = math.exp %872 : vector<2x128xf32>
    %cst_249 = arith.constant 1.000000e+00 : f32
    %874 = vector.broadcast %cst_249 : f32 to vector<2x128xf32>
    %875 = arith.addf %874, %873 : vector<2x128xf32>
    %876 = arith.divf %874, %875 : vector<2x128xf32>
    %877 = arith.mulf %868, %850 : vector<2x128xf32>
    %878 = arith.mulf %862, %870 : vector<2x128xf32>
    %879 = arith.addf %877, %878 : vector<2x128xf32>
    %880 = math.tanh %879 : vector<2x128xf32>
    %881 = arith.mulf %876, %880 : vector<2x128xf32>
    %c10_250 = arith.constant 10 : index
    %c0_251 = arith.constant 0 : index
    %882 = vector.load %arg27[%c10_250, %c0_251] : memref<16x128xf32, #tpu.memory_space<vmem>>, vector<2x128xf32>
    tpu.vector_store %arg27[%c10_250, %c0_251], %881 {strides = array<i32>} : memref<16x128xf32, #tpu.memory_space<vmem>>, vector<2x128xf32>,
    %883 = vector.extract_strided_slice %785 {offsets = [8, 0], sizes = [2, 512], strides = [1, 1]} : vector<16x512xf32> to vector<2x512xf32>
    %cst_252 = arith.constant dense<0.000000e+00> : vector<2x512xf32>
    %884 = tpu.matmul %881, %787, %cst_252 {dimension_numbers = #tpu.dot_dimension_numbers<[1], [0], [0], [1], [0, 0, 1, 1], [], []>} : vector<2x128xf32>, vector<128x512xf32>, vector<2x512xf32> -> vector<2x512xf32>
    %885 = arith.addf %883, %884 : vector<2x512xf32>
    %886 = vector.extract_strided_slice %885 {offsets = [0, 0], sizes = [2, 128], strides = [1, 1]} : vector<2x512xf32> to vector<2x128xf32>
    %887 = arith.negf %886 : vector<2x128xf32>
    %888 = math.exp %887 : vector<2x128xf32>
    %cst_253 = arith.constant 1.000000e+00 : f32
    %889 = vector.broadcast %cst_253 : f32 to vector<2x128xf32>
    %890 = arith.addf %889, %888 : vector<2x128xf32>
    %891 = arith.divf %889, %890 : vector<2x128xf32>
    %892 = vector.extract_strided_slice %885 {offsets = [0, 128], sizes = [2, 128], strides = [1, 1]} : vector<2x512xf32> to vector<2x128xf32>
    %893 = arith.negf %892 : vector<2x128xf32>
    %894 = math.exp %893 : vector<2x128xf32>
    %cst_254 = arith.constant 1.000000e+00 : f32
    %895 = vector.broadcast %cst_254 : f32 to vector<2x128xf32>
    %896 = arith.addf %895, %894 : vector<2x128xf32>
    %897 = arith.divf %895, %896 : vector<2x128xf32>
    %898 = vector.extract_strided_slice %885 {offsets = [0, 256], sizes = [2, 128], strides = [1, 1]} : vector<2x512xf32> to vector<2x128xf32>
    %899 = math.tanh %898 : vector<2x128xf32>
    %900 = vector.extract_strided_slice %885 {offsets = [0, 384], sizes = [2, 128], strides = [1, 1]} : vector<2x512xf32> to vector<2x128xf32>
    %901 = arith.negf %900 : vector<2x128xf32>
    %902 = math.exp %901 : vector<2x128xf32>
    %cst_255 = arith.constant 1.000000e+00 : f32
    %903 = vector.broadcast %cst_255 : f32 to vector<2x128xf32>
    %904 = arith.addf %903, %902 : vector<2x128xf32>
    %905 = arith.divf %903, %904 : vector<2x128xf32>
    %906 = arith.mulf %897, %879 : vector<2x128xf32>
    %907 = arith.mulf %891, %899 : vector<2x128xf32>
    %908 = arith.addf %906, %907 : vector<2x128xf32>
    %909 = math.tanh %908 : vector<2x128xf32>
    %910 = arith.mulf %905, %909 : vector<2x128xf32>
    %c8_256 = arith.constant 8 : index
    %c0_257 = arith.constant 0 : index
    %911 = vector.load %arg27[%c8_256, %c0_257] : memref<16x128xf32, #tpu.memory_space<vmem>>, vector<2x128xf32>
    tpu.vector_store %arg27[%c8_256, %c0_257], %910 {strides = array<i32>} : memref<16x128xf32, #tpu.memory_space<vmem>>, vector<2x128xf32>,
    %912 = vector.extract_strided_slice %785 {offsets = [6, 0], sizes = [2, 512], strides = [1, 1]} : vector<16x512xf32> to vector<2x512xf32>
    %cst_258 = arith.constant dense<0.000000e+00> : vector<2x512xf32>
    %913 = tpu.matmul %910, %787, %cst_258 {dimension_numbers = #tpu.dot_dimension_numbers<[1], [0], [0], [1], [0, 0, 1, 1], [], []>} : vector<2x128xf32>, vector<128x512xf32>, vector<2x512xf32> -> vector<2x512xf32>
    %914 = arith.addf %912, %913 : vector<2x512xf32>
    %915 = vector.extract_strided_slice %914 {offsets = [0, 0], sizes = [2, 128], strides = [1, 1]} : vector<2x512xf32> to vector<2x128xf32>
    %916 = arith.negf %915 : vector<2x128xf32>
    %917 = math.exp %916 : vector<2x128xf32>
    %cst_259 = arith.constant 1.000000e+00 : f32
    %918 = vector.broadcast %cst_259 : f32 to vector<2x128xf32>
    %919 = arith.addf %918, %917 : vector<2x128xf32>
    %920 = arith.divf %918, %919 : vector<2x128xf32>
    %921 = vector.extract_strided_slice %914 {offsets = [0, 128], sizes = [2, 128], strides = [1, 1]} : vector<2x512xf32> to vector<2x128xf32>
    %922 = arith.negf %921 : vector<2x128xf32>
    %923 = math.exp %922 : vector<2x128xf32>
    %cst_260 = arith.constant 1.000000e+00 : f32
    %924 = vector.broadcast %cst_260 : f32 to vector<2x128xf32>
    %925 = arith.addf %924, %923 : vector<2x128xf32>
    %926 = arith.divf %924, %925 : vector<2x128xf32>
    %927 = vector.extract_strided_slice %914 {offsets = [0, 256], sizes = [2, 128], strides = [1, 1]} : vector<2x512xf32> to vector<2x128xf32>
    %928 = math.tanh %927 : vector<2x128xf32>
    %929 = vector.extract_strided_slice %914 {offsets = [0, 384], sizes = [2, 128], strides = [1, 1]} : vector<2x512xf32> to vector<2x128xf32>
    %930 = arith.negf %929 : vector<2x128xf32>
    %931 = math.exp %930 : vector<2x128xf32>
    %cst_261 = arith.constant 1.000000e+00 : f32
    %932 = vector.broadcast %cst_261 : f32 to vector<2x128xf32>
    %933 = arith.addf %932, %931 : vector<2x128xf32>
    %934 = arith.divf %932, %933 : vector<2x128xf32>
    %935 = arith.mulf %926, %908 : vector<2x128xf32>
    %936 = arith.mulf %920, %928 : vector<2x128xf32>
    %937 = arith.addf %935, %936 : vector<2x128xf32>
    %938 = math.tanh %937 : vector<2x128xf32>
    %939 = arith.mulf %934, %938 : vector<2x128xf32>
    %c6_262 = arith.constant 6 : index
    %c0_263 = arith.constant 0 : index
    %940 = vector.load %arg27[%c6_262, %c0_263] : memref<16x128xf32, #tpu.memory_space<vmem>>, vector<2x128xf32>
    tpu.vector_store %arg27[%c6_262, %c0_263], %939 {strides = array<i32>} : memref<16x128xf32, #tpu.memory_space<vmem>>, vector<2x128xf32>,
    %941 = vector.extract_strided_slice %785 {offsets = [4, 0], sizes = [2, 512], strides = [1, 1]} : vector<16x512xf32> to vector<2x512xf32>
    %cst_264 = arith.constant dense<0.000000e+00> : vector<2x512xf32>
    %942 = tpu.matmul %939, %787, %cst_264 {dimension_numbers = #tpu.dot_dimension_numbers<[1], [0], [0], [1], [0, 0, 1, 1], [], []>} : vector<2x128xf32>, vector<128x512xf32>, vector<2x512xf32> -> vector<2x512xf32>
    %943 = arith.addf %941, %942 : vector<2x512xf32>
    %944 = vector.extract_strided_slice %943 {offsets = [0, 0], sizes = [2, 128], strides = [1, 1]} : vector<2x512xf32> to vector<2x128xf32>
    %945 = arith.negf %944 : vector<2x128xf32>
    %946 = math.exp %945 : vector<2x128xf32>
    %cst_265 = arith.constant 1.000000e+00 : f32
    %947 = vector.broadcast %cst_265 : f32 to vector<2x128xf32>
    %948 = arith.addf %947, %946 : vector<2x128xf32>
    %949 = arith.divf %947, %948 : vector<2x128xf32>
    %950 = vector.extract_strided_slice %943 {offsets = [0, 128], sizes = [2, 128], strides = [1, 1]} : vector<2x512xf32> to vector<2x128xf32>
    %951 = arith.negf %950 : vector<2x128xf32>
    %952 = math.exp %951 : vector<2x128xf32>
    %cst_266 = arith.constant 1.000000e+00 : f32
    %953 = vector.broadcast %cst_266 : f32 to vector<2x128xf32>
    %954 = arith.addf %953, %952 : vector<2x128xf32>
    %955 = arith.divf %953, %954 : vector<2x128xf32>
    %956 = vector.extract_strided_slice %943 {offsets = [0, 256], sizes = [2, 128], strides = [1, 1]} : vector<2x512xf32> to vector<2x128xf32>
    %957 = math.tanh %956 : vector<2x128xf32>
    %958 = vector.extract_strided_slice %943 {offsets = [0, 384], sizes = [2, 128], strides = [1, 1]} : vector<2x512xf32> to vector<2x128xf32>
    %959 = arith.negf %958 : vector<2x128xf32>
    %960 = math.exp %959 : vector<2x128xf32>
    %cst_267 = arith.constant 1.000000e+00 : f32
    %961 = vector.broadcast %cst_267 : f32 to vector<2x128xf32>
    %962 = arith.addf %961, %960 : vector<2x128xf32>
    %963 = arith.divf %961, %962 : vector<2x128xf32>
    %964 = arith.mulf %955, %937 : vector<2x128xf32>
    %965 = arith.mulf %949, %957 : vector<2x128xf32>
    %966 = arith.addf %964, %965 : vector<2x128xf32>
    %967 = math.tanh %966 : vector<2x128xf32>
    %968 = arith.mulf %963, %967 : vector<2x128xf32>
    %c4_268 = arith.constant 4 : index
    %c0_269 = arith.constant 0 : index
    %969 = vector.load %arg27[%c4_268, %c0_269] : memref<16x128xf32, #tpu.memory_space<vmem>>, vector<2x128xf32>
    tpu.vector_store %arg27[%c4_268, %c0_269], %968 {strides = array<i32>} : memref<16x128xf32, #tpu.memory_space<vmem>>, vector<2x128xf32>,
    %970 = vector.extract_strided_slice %785 {offsets = [2, 0], sizes = [2, 512], strides = [1, 1]} : vector<16x512xf32> to vector<2x512xf32>
    %cst_270 = arith.constant dense<0.000000e+00> : vector<2x512xf32>
    %971 = tpu.matmul %968, %787, %cst_270 {dimension_numbers = #tpu.dot_dimension_numbers<[1], [0], [0], [1], [0, 0, 1, 1], [], []>} : vector<2x128xf32>, vector<128x512xf32>, vector<2x512xf32> -> vector<2x512xf32>
    %972 = arith.addf %970, %971 : vector<2x512xf32>
    %973 = vector.extract_strided_slice %972 {offsets = [0, 0], sizes = [2, 128], strides = [1, 1]} : vector<2x512xf32> to vector<2x128xf32>
    %974 = arith.negf %973 : vector<2x128xf32>
    %975 = math.exp %974 : vector<2x128xf32>
    %cst_271 = arith.constant 1.000000e+00 : f32
    %976 = vector.broadcast %cst_271 : f32 to vector<2x128xf32>
    %977 = arith.addf %976, %975 : vector<2x128xf32>
    %978 = arith.divf %976, %977 : vector<2x128xf32>
    %979 = vector.extract_strided_slice %972 {offsets = [0, 128], sizes = [2, 128], strides = [1, 1]} : vector<2x512xf32> to vector<2x128xf32>
    %980 = arith.negf %979 : vector<2x128xf32>
    %981 = math.exp %980 : vector<2x128xf32>
    %cst_272 = arith.constant 1.000000e+00 : f32
    %982 = vector.broadcast %cst_272 : f32 to vector<2x128xf32>
    %983 = arith.addf %982, %981 : vector<2x128xf32>
    %984 = arith.divf %982, %983 : vector<2x128xf32>
    %985 = vector.extract_strided_slice %972 {offsets = [0, 256], sizes = [2, 128], strides = [1, 1]} : vector<2x512xf32> to vector<2x128xf32>
    %986 = math.tanh %985 : vector<2x128xf32>
    %987 = vector.extract_strided_slice %972 {offsets = [0, 384], sizes = [2, 128], strides = [1, 1]} : vector<2x512xf32> to vector<2x128xf32>
    %988 = arith.negf %987 : vector<2x128xf32>
    %989 = math.exp %988 : vector<2x128xf32>
    %cst_273 = arith.constant 1.000000e+00 : f32
    %990 = vector.broadcast %cst_273 : f32 to vector<2x128xf32>
    %991 = arith.addf %990, %989 : vector<2x128xf32>
    %992 = arith.divf %990, %991 : vector<2x128xf32>
    %993 = arith.mulf %984, %966 : vector<2x128xf32>
    %994 = arith.mulf %978, %986 : vector<2x128xf32>
    %995 = arith.addf %993, %994 : vector<2x128xf32>
    %996 = math.tanh %995 : vector<2x128xf32>
    %997 = arith.mulf %992, %996 : vector<2x128xf32>
    %c2_274 = arith.constant 2 : index
    %c0_275 = arith.constant 0 : index
    %998 = vector.load %arg27[%c2_274, %c0_275] : memref<16x128xf32, #tpu.memory_space<vmem>>, vector<2x128xf32>
    tpu.vector_store %arg27[%c2_274, %c0_275], %997 {strides = array<i32>} : memref<16x128xf32, #tpu.memory_space<vmem>>, vector<2x128xf32>,
    %999 = vector.extract_strided_slice %785 {offsets = [0, 0], sizes = [2, 512], strides = [1, 1]} : vector<16x512xf32> to vector<2x512xf32>
    %cst_276 = arith.constant dense<0.000000e+00> : vector<2x512xf32>
    %1000 = tpu.matmul %997, %787, %cst_276 {dimension_numbers = #tpu.dot_dimension_numbers<[1], [0], [0], [1], [0, 0, 1, 1], [], []>} : vector<2x128xf32>, vector<128x512xf32>, vector<2x512xf32> -> vector<2x512xf32>
    %1001 = arith.addf %999, %1000 : vector<2x512xf32>
    %1002 = vector.extract_strided_slice %1001 {offsets = [0, 0], sizes = [2, 128], strides = [1, 1]} : vector<2x512xf32> to vector<2x128xf32>
    %1003 = arith.negf %1002 : vector<2x128xf32>
    %1004 = math.exp %1003 : vector<2x128xf32>
    %cst_277 = arith.constant 1.000000e+00 : f32
    %1005 = vector.broadcast %cst_277 : f32 to vector<2x128xf32>
    %1006 = arith.addf %1005, %1004 : vector<2x128xf32>
    %1007 = arith.divf %1005, %1006 : vector<2x128xf32>
    %1008 = vector.extract_strided_slice %1001 {offsets = [0, 128], sizes = [2, 128], strides = [1, 1]} : vector<2x512xf32> to vector<2x128xf32>
    %1009 = arith.negf %1008 : vector<2x128xf32>
    %1010 = math.exp %1009 : vector<2x128xf32>
    %cst_278 = arith.constant 1.000000e+00 : f32
    %1011 = vector.broadcast %cst_278 : f32 to vector<2x128xf32>
    %1012 = arith.addf %1011, %1010 : vector<2x128xf32>
    %1013 = arith.divf %1011, %1012 : vector<2x128xf32>
    %1014 = vector.extract_strided_slice %1001 {offsets = [0, 256], sizes = [2, 128], strides = [1, 1]} : vector<2x512xf32> to vector<2x128xf32>
    %1015 = math.tanh %1014 : vector<2x128xf32>
    %1016 = vector.extract_strided_slice %1001 {offsets = [0, 384], sizes = [2, 128], strides = [1, 1]} : vector<2x512xf32> to vector<2x128xf32>
    %1017 = arith.negf %1016 : vector<2x128xf32>
    %1018 = math.exp %1017 : vector<2x128xf32>
    %cst_279 = arith.constant 1.000000e+00 : f32
    %1019 = vector.broadcast %cst_279 : f32 to vector<2x128xf32>
    %1020 = arith.addf %1019, %1018 : vector<2x128xf32>
    %1021 = arith.divf %1019, %1020 : vector<2x128xf32>
    %1022 = arith.mulf %1013, %995 : vector<2x128xf32>
    %1023 = arith.mulf %1007, %1015 : vector<2x128xf32>
    %1024 = arith.addf %1022, %1023 : vector<2x128xf32>
    %1025 = math.tanh %1024 : vector<2x128xf32>
    %1026 = arith.mulf %1021, %1025 : vector<2x128xf32>
    %c0_280 = arith.constant 0 : index
    %c0_281 = arith.constant 0 : index
    %1027 = vector.load %arg27[%c0_280, %c0_281] : memref<16x128xf32, #tpu.memory_space<vmem>>, vector<2x128xf32>
    tpu.vector_store %arg27[%c0_280, %c0_281], %1026 {strides = array<i32>} : memref<16x128xf32, #tpu.memory_space<vmem>>, vector<2x128xf32>,
    %c0_282 = arith.constant 0 : index
    %c0_283 = arith.constant 0 : index
    %1028 = vector.load %arg26[%c0_282, %c0_283] : memref<16x128xf32, #tpu.memory_space<vmem>>, vector<16x128xf32>
    %c0_284 = arith.constant 0 : index
    %c0_285 = arith.constant 0 : index
    %1029 = vector.load %arg27[%c0_284, %c0_285] : memref<16x128xf32, #tpu.memory_space<vmem>>, vector<16x128xf32>
    %c0_286 = arith.constant 0 : index
    %c0_287 = arith.constant 0 : index
    %1030 = vector.load %arg14[%c0_286, %c0_287] : memref<128x1xf32, #tpu.memory_space<vmem>>, vector<128x1xf32>
    %cst_288 = arith.constant dense<0.000000e+00> : vector<16x1xf32>
    %1031 = tpu.matmul %1028, %1030, %cst_288 {dimension_numbers = #tpu.dot_dimension_numbers<[1], [0], [0], [1], [0, 0, 1, 1], [], []>} : vector<16x128xf32>, vector<128x1xf32>, vector<16x1xf32> -> vector<16x1xf32>
    %c0_289 = arith.constant 0 : index
    %c0_290 = arith.constant 0 : index
    %1032 = vector.load %arg15[%c0_289, %c0_290] : memref<128x1xf32, #tpu.memory_space<vmem>>, vector<128x1xf32>
    %cst_291 = arith.constant dense<0.000000e+00> : vector<16x1xf32>
    %1033 = tpu.matmul %1029, %1032, %cst_291 {dimension_numbers = #tpu.dot_dimension_numbers<[1], [0], [0], [1], [0, 0, 1, 1], [], []>} : vector<16x128xf32>, vector<128x1xf32>, vector<16x1xf32> -> vector<16x1xf32>
    %1034 = arith.addf %1031, %1033 : vector<16x1xf32>
    %c0_292 = arith.constant 0 : index
    %c0_293 = arith.constant 0 : index
    %1035 = vector.load %arg20[%c0_292, %c0_293] : memref<16x2xf32, #tpu.memory_space<vmem>>, vector<16x2xf32>
    %cst_294 = arith.constant 1.000000e+00 : f32
    %1036 = vector.broadcast %cst_294 : f32 to vector<16x2xf32>
    %1037 = arith.subf %1036, %1035 : vector<16x2xf32>
    %cst_295 = arith.constant 1.000000e+30 : f32
    %1038 = vector.broadcast %cst_295 : f32 to vector<16x2xf32>
    %1039 = arith.mulf %1037, %1038 : vector<16x2xf32>
    %1040 = vector.broadcast %1034 : vector<16x1xf32> to vector<16x2xf32>
    %1041 = arith.subf %1040, %1039 : vector<16x2xf32>
    %cst_296 = arith.constant dense<0xFF800000> : vector<2xf32>
    %1042 = vector.multi_reduction <maximumf>, %1041, %cst_296 [0] : vector<16x2xf32> to vector<2xf32>
    %1043 = vector.shape_cast %1042 : vector<2xf32> to vector<1x2xf32>
    %1044 = vector.broadcast %1043 : vector<1x2xf32> to vector<16x2xf32>
    %1045 = arith.subf %1041, %1044 : vector<16x2xf32>
    %1046 = math.exp %1045 : vector<16x2xf32>
    %1047 = arith.mulf %1046, %1035 : vector<16x2xf32>
    %cst_297 = arith.constant dense<0.000000e+00> : vector<2xf32>
    %1048 = vector.multi_reduction <add>, %1047, %cst_297 [0] : vector<16x2xf32> to vector<2xf32>
    %1049 = vector.shape_cast %1048 : vector<2xf32> to vector<1x2xf32>
    %1050 = tpu.reciprocal %1049 {approx = true} : vector<1x2xf32> -> vector<1x2xf32>
    %1051 = vector.broadcast %1050 : vector<1x2xf32> to vector<16x2xf32>
    %1052 = arith.mulf %1047, %1051 : vector<16x2xf32>
    %cst_298 = arith.constant dense<0.000000e+00> : vector<16xf32>
    %1053 = vector.multi_reduction <add>, %1052, %cst_298 [1] : vector<16x2xf32> to vector<16xf32>
    %1054 = vector.shape_cast %1053 : vector<16xf32> to vector<16x1xf32>
    %c0_299 = arith.constant 0 : index
    %c0_300 = arith.constant 0 : index
    %1055 = vector.load %arg21[%c0_299, %c0_300] : memref<2x16xf32, #tpu.memory_space<vmem>>, vector<2x16xf32>
    %1056 = vector.broadcast %1054 : vector<16x1xf32> to vector<16x128xf32>
    %1057 = arith.mulf %1056, %1028 : vector<16x128xf32>
    %cst_301 = arith.constant dense<0.000000e+00> : vector<2x128xf32>
    %1058 = tpu.matmul %1055, %1057, %cst_301 {dimension_numbers = #tpu.dot_dimension_numbers<[1], [0], [0], [1], [0, 0, 1, 1], [], []>} : vector<2x16xf32>, vector<16x128xf32>, vector<2x128xf32> -> vector<2x128xf32>
    %c0_302 = arith.constant 0 : index
    %c0_303 = arith.constant 0 : index
    %1059 = vector.load %arg21[%c0_302, %c0_303] : memref<2x16xf32, #tpu.memory_space<vmem>>, vector<2x16xf32>
    %1060 = vector.broadcast %1054 : vector<16x1xf32> to vector<16x128xf32>
    %1061 = arith.mulf %1060, %1029 : vector<16x128xf32>
    %cst_304 = arith.constant dense<0.000000e+00> : vector<2x128xf32>
    %1062 = tpu.matmul %1059, %1061, %cst_304 {dimension_numbers = #tpu.dot_dimension_numbers<[1], [0], [0], [1], [0, 0, 1, 1], [], []>} : vector<2x16xf32>, vector<16x128xf32>, vector<2x128xf32> -> vector<2x128xf32>
    %c0_305 = arith.constant 0 : index
    %c0_306 = arith.constant 0 : index
    %1063 = vector.load %arg16[%c0_305, %c0_306] : memref<128x64xf32, #tpu.memory_space<vmem>>, vector<128x64xf32>
    %cst_307 = arith.constant dense<0.000000e+00> : vector<2x64xf32>
    %1064 = tpu.matmul %1058, %1063, %cst_307 {dimension_numbers = #tpu.dot_dimension_numbers<[1], [0], [0], [1], [0, 0, 1, 1], [], []>} : vector<2x128xf32>, vector<128x64xf32>, vector<2x64xf32> -> vector<2x64xf32>
    %c0_308 = arith.constant 0 : index
    %c0_309 = arith.constant 0 : index
    %1065 = vector.load %arg17[%c0_308, %c0_309] : memref<128x64xf32, #tpu.memory_space<vmem>>, vector<128x64xf32>
    %cst_310 = arith.constant dense<0.000000e+00> : vector<2x64xf32>
    %1066 = tpu.matmul %1062, %1065, %cst_310 {dimension_numbers = #tpu.dot_dimension_numbers<[1], [0], [0], [1], [0, 0, 1, 1], [], []>} : vector<2x128xf32>, vector<128x64xf32>, vector<2x64xf32> -> vector<2x64xf32>
    %1067 = arith.addf %1064, %1066 : vector<2x64xf32>
    %c0_311 = arith.constant 0 : index
    %c0_312 = arith.constant 0 : index
    %1068 = vector.load %arg18[%c0_311, %c0_312] : memref<1x64xf32, #tpu.memory_space<vmem>>, vector<1x64xf32>
    %1069 = vector.broadcast %1068 : vector<1x64xf32> to vector<2x64xf32>
    %1070 = arith.addf %1067, %1069 : vector<2x64xf32>
    %c0_313 = arith.constant 0 : index
    %1071 = memref.load %arg22[%c0_313] : memref<2xf32, #tpu.memory_space<smem>>
    %cst_314 = arith.constant 0.000000e+00 : f32
    %1072 = vector.broadcast %cst_314 : f32 to vector<2x64xf32>
    %1073 = arith.cmpf oge, %1070, %1072 : vector<2x64xf32>
    %1074 = vector.broadcast %1071 : f32 to vector<2x64xf32>
    %1075 = arith.mulf %1074, %1070 : vector<2x64xf32>
    %1076 = arith.select %1073, %1070, %1075 : vector<2x64xi1>, vector<2x64xf32>
    %c0_315 = arith.constant 0 : index
    %c0_316 = arith.constant 0 : index
    %1077 = vector.load %arg19[%c0_315, %c0_316] : memref<64x1xf32, #tpu.memory_space<vmem>>, vector<64x1xf32>
    %cst_317 = arith.constant dense<0.000000e+00> : vector<2x1xf32>
    %1078 = tpu.matmul %1076, %1077, %cst_317 {dimension_numbers = #tpu.dot_dimension_numbers<[1], [0], [0], [1], [0, 0, 1, 1], [], []>} : vector<2x64xf32>, vector<64x1xf32>, vector<2x1xf32> -> vector<2x1xf32>
    %c1_318 = arith.constant 1 : index
    %1079 = memref.load %arg22[%c1_318] : memref<2xf32, #tpu.memory_space<smem>>
    %1080 = vector.broadcast %1079 : f32 to vector<2x1xf32>
    %1081 = arith.addf %1078, %1080 : vector<2x1xf32>
    %c0_319 = arith.constant 0 : index
    %c0_320 = arith.constant 0 : index
    %1082 = vector.load %arg23[%c0_319, %c0_320] : memref<2x1xf32, #tpu.memory_space<vmem>>, vector<2x1xf32>
    tpu.vector_store %arg23[%c0_319, %c0_320], %1081 {strides = array<i32>} : memref<2x1xf32, #tpu.memory_space<vmem>>, vector<2x1xf32>,
    return
  }
  func.func @transform_0(%arg0: i32) -> (i32, i32) {
    %c0_i32 = arith.constant 0 : i32
    %c0_i32_0 = arith.constant 0 : i32
    %c0_i32_1 = arith.constant 0 : i32
    return %c0_i32, %c0_i32_0 : i32, i32
  }
  func.func @transform_1(%arg0: i32) -> (i32, i32, i32) {
    %c0_i32 = arith.constant 0 : i32
    %c0_i32_0 = arith.constant 0 : i32
    %c0_i32_1 = arith.constant 0 : i32
    %c0_i32_2 = arith.constant 0 : i32
    return %c0_i32, %c0_i32_0, %c0_i32_1 : i32, i32, i32
  }
  func.func @transform_2(%arg0: i32) -> (i32, i32) {
    %c0_i32 = arith.constant 0 : i32
    %c0_i32_0 = arith.constant 0 : i32
    %c0_i32_1 = arith.constant 0 : i32
    return %c0_i32, %c0_i32_0 : i32, i32
  }
  func.func @transform_3(%arg0: i32) -> (i32, i32) {
    %c0_i32 = arith.constant 0 : i32
    %c0_i32_0 = arith.constant 0 : i32
    %c0_i32_1 = arith.constant 0 : i32
    return %c0_i32, %c0_i32_0 : i32, i32
  }
  func.func @transform_4(%arg0: i32) -> (i32, i32) {
    %c0_i32 = arith.constant 0 : i32
    %c0_i32_0 = arith.constant 0 : i32
    %c0_i32_1 = arith.constant 0 : i32
    return %c0_i32, %c0_i32_0 : i32, i32
  }
  func.func @transform_5(%arg0: i32) -> (i32, i32, i32) {
    %c0_i32 = arith.constant 0 : i32
    %c0_i32_0 = arith.constant 0 : i32
    %c0_i32_1 = arith.constant 0 : i32
    %c0_i32_2 = arith.constant 0 : i32
    return %c0_i32, %c0_i32_0, %c0_i32_1 : i32, i32, i32
  }
  func.func @transform_6(%arg0: i32) -> (i32, i32) {
    %c0_i32 = arith.constant 0 : i32
    %c0_i32_0 = arith.constant 0 : i32
    %c0_i32_1 = arith.constant 0 : i32
    return %c0_i32, %c0_i32_0 : i32, i32
  }
  func.func @transform_7(%arg0: i32) -> (i32, i32) {
    %c0_i32 = arith.constant 0 : i32
    %c0_i32_0 = arith.constant 0 : i32
    %c0_i32_1 = arith.constant 0 : i32
    return %c0_i32, %c0_i32_0 : i32, i32
  }
  func.func @transform_8(%arg0: i32) -> (i32, i32) {
    %c0_i32 = arith.constant 0 : i32
    %c0_i32_0 = arith.constant 0 : i32
    %c0_i32_1 = arith.constant 0 : i32
    return %c0_i32, %c0_i32_0 : i32, i32
  }
  func.func @transform_9(%arg0: i32) -> (i32, i32, i32) {
    %c0_i32 = arith.constant 0 : i32
    %c0_i32_0 = arith.constant 0 : i32
    %c0_i32_1 = arith.constant 0 : i32
    %c0_i32_2 = arith.constant 0 : i32
    return %c0_i32, %c0_i32_0, %c0_i32_1 : i32, i32, i32
  }
  func.func @transform_10(%arg0: i32) -> (i32, i32) {
    %c0_i32 = arith.constant 0 : i32
    %c0_i32_0 = arith.constant 0 : i32
    %c0_i32_1 = arith.constant 0 : i32
    return %c0_i32, %c0_i32_0 : i32, i32
  }
  func.func @transform_11(%arg0: i32) -> (i32, i32, i32) {
    %c0_i32 = arith.constant 0 : i32
    %c0_i32_0 = arith.constant 0 : i32
    %c0_i32_1 = arith.constant 0 : i32
    %c0_i32_2 = arith.constant 0 : i32
    return %c0_i32, %c0_i32_0, %c0_i32_1 : i32, i32, i32
  }
  func.func @transform_12(%arg0: i32) -> (i32, i32, i32) {
    %c0_i32 = arith.constant 0 : i32
    %c0_i32_0 = arith.constant 0 : i32
    %c0_i32_1 = arith.constant 0 : i32
    %c0_i32_2 = arith.constant 0 : i32
    return %c0_i32, %c0_i32_0, %c0_i32_1 : i32, i32, i32
  }
  func.func @transform_13(%arg0: i32) -> (i32, i32) {
    %c0_i32 = arith.constant 0 : i32
    %c0_i32_0 = arith.constant 0 : i32
    %c0_i32_1 = arith.constant 0 : i32
    return %c0_i32, %c0_i32_0 : i32, i32
  }
  func.func @transform_14(%arg0: i32) -> (i32, i32) {
    %c0_i32 = arith.constant 0 : i32
    %c0_i32_0 = arith.constant 0 : i32
    %c0_i32_1 = arith.constant 0 : i32
    return %c0_i32, %c0_i32_0 : i32, i32
  }
  func.func @transform_15(%arg0: i32) -> (i32, i32) {
    %c0_i32 = arith.constant 0 : i32
    %c0_i32_0 = arith.constant 0 : i32
    %c0_i32_1 = arith.constant 0 : i32
    return %c0_i32, %c0_i32_0 : i32, i32
  }
  func.func @transform_16(%arg0: i32) -> (i32, i32) {
    %c0_i32 = arith.constant 0 : i32
    %c0_i32_0 = arith.constant 0 : i32
    %c0_i32_1 = arith.constant 0 : i32
    return %c0_i32, %c0_i32_0 : i32, i32
  }
  func.func @transform_17(%arg0: i32) -> (i32, i32) {
    %c0_i32 = arith.constant 0 : i32
    %c0_i32_0 = arith.constant 0 : i32
    %c0_i32_1 = arith.constant 0 : i32
    return %c0_i32, %c0_i32_0 : i32, i32
  }
  func.func @transform_18(%arg0: i32) -> (i32, i32) {
    %c0_i32 = arith.constant 0 : i32
    %c0_i32_0 = arith.constant 0 : i32
    %c0_i32_1 = arith.constant 0 : i32
    return %c0_i32, %c0_i32_0 : i32, i32
  }
  func.func @transform_19(%arg0: i32) -> (i32, i32) {
    %c0_i32 = arith.constant 0 : i32
    %c0_i32_0 = arith.constant 0 : i32
    %c0_i32_1 = arith.constant 0 : i32
    return %c0_i32, %c0_i32_0 : i32, i32
  }
  func.func @transform_20(%arg0: i32) -> (i32, i32) {
    %c0_i32 = arith.constant 0 : i32
    %c0_i32_0 = arith.constant 0 : i32
    %c0_i32_1 = arith.constant 0 : i32
    return %c0_i32, %c0_i32_0 : i32, i32
  }
  func.func @transform_21(%arg0: i32) -> i32 {
    %c0_i32 = arith.constant 0 : i32
    %c0_i32_0 = arith.constant 0 : i32
    return %c0_i32 : i32
  }
  func.func @transform_22(%arg0: i32) -> (i32, i32) {
    %c0_i32 = arith.constant 0 : i32
    %c0_i32_0 = arith.constant 0 : i32
    %c0_i32_1 = arith.constant 0 : i32
    return %c0_i32, %c0_i32_0 : i32, i32
  }
}

</mosaic_0001>

<llo_original>
// kernel: tpu_custom_call.1
$region0: #{tpu_custom_call.1}
  #allocation0 [shape = 'u32[]', space=smem, size = 0x4, offset = 0x4, fixed_abs, tag = 'smem constant byte address 0x4 - core index']
  #allocation1 [shape = 'u32[72,128]{1,0:T(1,128)}', space=vmem, size = 0x9000, scoped, tag = 'internal scratch']
  #allocation2 [shape = 'f32[16,128]{1,0:T(8,128)}', space=vmem, size = 0x2000, scoped, tag = 'scratch operand']
  #allocation3 [shape = 'f32[16,128]{1,0:T(8,128)}', space=vmem, size = 0x2000, scoped, tag = 'scratch operand']
  #allocation4 [shape = 'f32[16,128]{1,0:T(8,128)}', space=vmem, size = 0x2000, scoped, tag = 'scratch operand']
  #allocation5 [shape = 'f32[16,128]{1,0:T(8,128)}', space=vmem, size = 0x2000, scoped, tag = 'scratch operand']
  %s0 = inlined_call_operand.vmem [shape: f32[28,64], index: 0, kind: input, shape index: {}]
  %s1 = inlined_call_operand.hbm [shape: f32[7,64,192], index: 1, kind: input, shape index: {}]
  %s2 = inlined_call_operand.vmem [shape: f32[1,192], index: 2, kind: input, shape index: {}]
  %s3 = inlined_call_operand.hbm [shape: f32[64,1024], index: 3, kind: input, shape index: {}]
  %s4 = inlined_call_operand.hbm [shape: f32[192,1024], index: 4, kind: input, shape index: {}]
  %s5 = inlined_call_operand.hbm [shape: f32[2,128,512], index: 5, kind: input, shape index: {}]
  %s6 = inlined_call_operand.vmem [shape: f32[1,1024], index: 6, kind: input, shape index: {}]
  %s7 = inlined_call_operand.hbm [shape: f32[128,1024], index: 7, kind: input, shape index: {}]
  %s8 = inlined_call_operand.hbm [shape: f32[128,1024], index: 8, kind: input, shape index: {}]
  %s9 = inlined_call_operand.hbm [shape: f32[2,128,512], index: 9, kind: input, shape index: {}]
  %s10 = inlined_call_operand.vmem [shape: f32[1,1024], index: 10, kind: input, shape index: {}]
  %s11 = inlined_call_operand.vmem [shape: f32[4,1,128], index: 11, kind: input, shape index: {}]
  %s12 = inlined_call_operand.vmem [shape: f32[4,1,128], index: 12, kind: input, shape index: {}]
  %s13 = inlined_call_operand.vmem [shape: f32[128,1], index: 13, kind: input, shape index: {}]
  %s14 = inlined_call_operand.vmem [shape: f32[128,1], index: 14, kind: input, shape index: {}]
  %s15 = inlined_call_operand.vmem [shape: f32[128,64], index: 15, kind: input, shape index: {}]
  %s16 = inlined_call_operand.vmem [shape: f32[128,64], index: 16, kind: input, shape index: {}]
  %s17 = inlined_call_operand.vmem [shape: f32[1,64], index: 17, kind: input, shape index: {}]
  %s18 = inlined_call_operand.vmem [shape: f32[64,1], index: 18, kind: input, shape index: {}]
  %s19 = inlined_call_operand.vmem [shape: f32[16,2], index: 19, kind: input, shape index: {}]
  %s20 = inlined_call_operand.vmem [shape: f32[2,16], index: 20, kind: input, shape index: {}]
  %s21 = inlined_call_operand.vmem [shape: f32[2], index: 21, kind: input, shape index: {}]
  %s22 = inlined_call_operand.vmem [shape: f32[2,1], index: 22, kind: output, shape index: {}]
  %s23 = sld [smem:[#allocation0]]
  $region130: #{tpu_custom_call.1} parent=0
    _
  %s25 = ssub.s32 1, %s23
  %s26 = scalar_select 0, %s25, %s23
  $region1: #{tpu_custom_call.1} parent=0
    #allocation6 [shape = 'u8[458752]{0}', space=vmem, size = 0x70000, scoped, tag = 'input window, operand 1, single buffered']
    #allocation7 [shape = 's32[1]{0}', space=sflag, size = 0x4, scoped, tag = 'scoped memory for tpu_custom_call.1']
    #allocation8 [shape = 's32[1]{0}', space=sflag, size = 0x4, scoped, tag = 'scoped memory for tpu_custom_call.1']
    #allocation9 [shape = 'u8[262144]{0}', space=vmem, size = 0x40000, scoped, tag = 'input window, operand 3, single buffered']
    #allocation10 [shape = 's32[1]{0}', space=sflag, size = 0x4, scoped, tag = 'scoped memory for tpu_custom_call.1']
    #allocation11 [shape = 'u8[786432]{0}', space=vmem, size = 0xc0000, scoped, tag = 'input window, operand 4, single buffered']
    #allocation12 [shape = 'u8[524288]{0}', space=vmem, size = 0x80000, scoped, tag = 'input window, operand 5, single buffered']
    #allocation13 [shape = 's32[1]{0}', space=sflag, size = 0x4, scoped, tag = 'scoped memory for tpu_custom_call.1']
    #allocation14 [shape = 'u8[524288]{0}', space=vmem, size = 0x80000, scoped, tag = 'input window, operand 7, single buffered']
    #allocation15 [shape = 'u8[524288]{0}', space=vmem, size = 0x80000, scoped, tag = 'input window, operand 8, single buffered']
    #allocation16 [shape = 's32[1]{0}', space=sflag, size = 0x4, scoped, tag = 'scoped memory for tpu_custom_call.1']
    #allocation17 [shape = 'u8[524288]{0}', space=vmem, size = 0x80000, scoped, tag = 'input window, operand 9, single buffered']
    #allocation18 [shape = 'u8[512]{0}', space=smem, size = 0x200, scoped, tag = 'input window, operand 21, single buffered']
    %27 = vsyncpa [#allocation7], 0
    %28 = vsyncpa [#allocation10], 0
    %29 = vsyncpa [#allocation13], 0
    %30 = vsyncpa [#allocation16], 0
    %31 = vsyncpa [#allocation8], 0
    // Predicated region
    $region2: #{tpu_custom_call.1} parent=1 // pred_check
      _
    $region3: #{tpu_custom_call.1} parent=1 // pred_check_branch
      %33 = sbr.rel (0) target = $region5
    $region4: #{tpu_custom_call.1} parent=1 // pred_region
      _
    $region5: #{tpu_custom_call.1} parent=1 // pred_fallthru
      _
    // Predicated region
    $region6: #{tpu_custom_call.1} parent=1 // pred_check
      _
    $region7: #{tpu_custom_call.1} parent=1 // pred_check_branch
      %35 = sbr.rel (0) target = $region9
    $region8: #{tpu_custom_call.1} parent=1 // pred_region
      %37 = vsyncadd [#allocation7], 0
      %s38 = sshll.u32 %s1, 4
      %s39 = int_to_ptr.hbm [resolvable:$true] %s38
      %s40 = sshll.u32 [#allocation6], 4
      %s41 = int_to_ptr.vmem [resolvable:$true] %s40
      %46 = dma.hbm_to_vmem [thread:$0]  %s39, 14336, %s41, [#allocation7], 256, 256, 16
    $region9: #{tpu_custom_call.1} parent=1 // pred_fallthru
      _
    // Predicated region
    $region10: #{tpu_custom_call.1} parent=1 // pred_check
      _
    $region11: #{tpu_custom_call.1} parent=1 // pred_check_branch
      %48 = sbr.rel (0) target = $region13
    $region12: #{tpu_custom_call.1} parent=1 // pred_region
      _
    $region13: #{tpu_custom_call.1} parent=1 // pred_fallthru
      _
    // Predicated region
    $region14: #{tpu_custom_call.1} parent=1 // pred_check
      _
    $region15: #{tpu_custom_call.1} parent=1 // pred_check_branch
      %50 = sbr.rel (0) target = $region17
    $region16: #{tpu_custom_call.1} parent=1 // pred_region
      %52 = vsyncadd [#allocation10], 0
      %s53 = sshll.u32 %s3, 4
      %s54 = int_to_ptr.hbm [resolvable:$true] %s53
      %s55 = sshll.u32 [#allocation9], 4
      %s56 = int_to_ptr.vmem [resolvable:$true] %s55
      %61 = dma.hbm_to_vmem [thread:$0]  %s54, 8192, %s56, [#allocation10], 1024, 1024, 64
    $region17: #{tpu_custom_call.1} parent=1 // pred_fallthru
      _
    // Predicated region
    $region18: #{tpu_custom_call.1} parent=1 // pred_check
      _
    $region19: #{tpu_custom_call.1} parent=1 // pred_check_branch
      %63 = sbr.rel (0) target = $region21
    $region20: #{tpu_custom_call.1} parent=1 // pred_region
      %65 = vsyncadd [#allocation10], 0
      %s66 = sshll.u32 %s4, 4
      %s67 = int_to_ptr.hbm [resolvable:$true] %s66
      %s68 = sshll.u32 [#allocation11], 4
      %s69 = int_to_ptr.vmem [resolvable:$true] %s68
      %74 = dma.hbm_to_vmem [thread:$0]  %s67, 24576, %s69, [#allocation10], 1024, 1024, 64
    $region21: #{tpu_custom_call.1} parent=1 // pred_fallthru
      _
    // Predicated region
    $region22: #{tpu_custom_call.1} parent=1 // pred_check
      _
    $region23: #{tpu_custom_call.1} parent=1 // pred_check_branch
      %76 = sbr.rel (0) target = $region25
    $region24: #{tpu_custom_call.1} parent=1 // pred_region
      %78 = vsyncadd [#allocation13], 0
      %s79 = sshll.u32 %s5, 4
      %s80 = int_to_ptr.hbm [resolvable:$true] %s79
      %s81 = sshll.u32 [#allocation12], 4
      %s82 = int_to_ptr.vmem [resolvable:$true] %s81
      %87 = dma.hbm_to_vmem [thread:$0]  %s80, 16384, %s82, [#allocation13], 512, 512, 32
    $region25: #{tpu_custom_call.1} parent=1 // pred_fallthru
      _
    // Predicated region
    $region26: #{tpu_custom_call.1} parent=1 // pred_check
      _
    $region27: #{tpu_custom_call.1} parent=1 // pred_check_branch
      %89 = sbr.rel (0) target = $region29
    $region28: #{tpu_custom_call.1} parent=1 // pred_region
      _
    $region29: #{tpu_custom_call.1} parent=1 // pred_fallthru
      _
    // Predicated region
    $region30: #{tpu_custom_call.1} parent=1 // pred_check
      _
    $region31: #{tpu_custom_call.1} parent=1 // pred_check_branch
      %91 = sbr.rel (0) target = $region33
    $region32: #{tpu_custom_call.1} parent=1 // pred_region
      %93 = vsyncadd [#allocation13], 0
      %s94 = sshll.u32 %s7, 4
      %s95 = int_to_ptr.hbm [resolvable:$true] %s94
      %s96 = sshll.u32 [#allocation14], 4
      %s97 = int_to_ptr.vmem [resolvable:$true] %s96
      %102 = dma.hbm_to_vmem [thread:$0]  %s95, 16384, %s97, [#allocation13], 1024, 1024, 64
    $region33: #{tpu_custom_call.1} parent=1 // pred_fallthru
      _
    // Predicated region
    $region34: #{tpu_custom_call.1} parent=1 // pred_check
      _
    $region35: #{tpu_custom_call.1} parent=1 // pred_check_branch
      %104 = sbr.rel (0) target = $region37
    $region36: #{tpu_custom_call.1} parent=1 // pred_region
      %106 = vsyncadd [#allocation16], 0
      %s107 = sshll.u32 %s8, 4
      %s108 = int_to_ptr.hbm [resolvable:$true] %s107
      %s109 = sshll.u32 [#allocation15], 4
      %s110 = int_to_ptr.vmem [resolvable:$true] %s109
      %115 = dma.hbm_to_vmem [thread:$0]  %s108, 16384, %s110, [#allocation16], 1024, 1024, 64
    $region37: #{tpu_custom_call.1} parent=1 // pred_fallthru
      _
    // Predicated region
    $region38: #{tpu_custom_call.1} parent=1 // pred_check
      _
    $region39: #{tpu_custom_call.1} parent=1 // pred_check_branch
      %117 = sbr.rel (0) target = $region41
    $region40: #{tpu_custom_call.1} parent=1 // pred_region
      %119 = vsyncadd [#allocation16], 0
      %s120 = sshll.u32 %s9, 4
      %s121 = int_to_ptr.hbm [resolvable:$true] %s120
      %s122 = sshll.u32 [#allocation17], 4
      %s123 = int_to_ptr.vmem [resolvable:$true] %s122
      %128 = dma.hbm_to_vmem [thread:$0]  %s121, 16384, %s123, [#allocation16], 512, 512, 32
    $region41: #{tpu_custom_call.1} parent=1 // pred_fallthru
      _
    // Predicated region
    $region42: #{tpu_custom_call.1} parent=1 // pred_check
      _
    $region43: #{tpu_custom_call.1} parent=1 // pred_check_branch
      %130 = sbr.rel (0) target = $region45
    $region44: #{tpu_custom_call.1} parent=1 // pred_region
      _
    $region45: #{tpu_custom_call.1} parent=1 // pred_fallthru
      _
    // Predicated region
    $region46: #{tpu_custom_call.1} parent=1 // pred_check
      _
    $region47: #{tpu_custom_call.1} parent=1 // pred_check_branch
      %132 = sbr.rel (0) target = $region49
    $region48: #{tpu_custom_call.1} parent=1 // pred_region
      _
    $region49: #{tpu_custom_call.1} parent=1 // pred_fallthru
      _
    // Predicated region
    $region50: #{tpu_custom_call.1} parent=1 // pred_check
      _
    $region51: #{tpu_custom_call.1} parent=1 // pred_check_branch
      %134 = sbr.rel (0) target = $region53
    $region52: #{tpu_custom_call.1} parent=1 // pred_region
      _
    $region53: #{tpu_custom_call.1} parent=1 // pred_fallthru
      _
    // Predicated region
    $region54: #{tpu_custom_call.1} parent=1 // pred_check
      _
    $region55: #{tpu_custom_call.1} parent=1 // pred_check_branch
      %136 = sbr.rel (0) target = $region57
    $region56: #{tpu_custom_call.1} parent=1 // pred_region
      _
    $region57: #{tpu_custom_call.1} parent=1 // pred_fallthru
      _
    // Predicated region
    $region58: #{tpu_custom_call.1} parent=1 // pred_check
      _
    $region59: #{tpu_custom_call.1} parent=1 // pred_check_branch
      %138 = sbr.rel (0) target = $region61
    $region60: #{tpu_custom_call.1} parent=1 // pred_region
      _
    $region61: #{tpu_custom_call.1} parent=1 // pred_fallthru
      _
    // Predicated region
    $region62: #{tpu_custom_call.1} parent=1 // pred_check
      _
    $region63: #{tpu_custom_call.1} parent=1 // pred_check_branch
      %140 = sbr.rel (0) target = $region65
    $region64: #{tpu_custom_call.1} parent=1 // pred_region
      _
    $region65: #{tpu_custom_call.1} parent=1 // pred_fallthru
      _
    // Predicated region
    $region66: #{tpu_custom_call.1} parent=1 // pred_check
      _
    $region67: #{tpu_custom_call.1} parent=1 // pred_check_branch
      %142 = sbr.rel (0) target = $region69
    $region68: #{tpu_custom_call.1} parent=1 // pred_region
      _
    $region69: #{tpu_custom_call.1} parent=1 // pred_fallthru
      _
    // Predicated region
    $region70: #{tpu_custom_call.1} parent=1 // pred_check
      _
    $region71: #{tpu_custom_call.1} parent=1 // pred_check_branch
      %144 = sbr.rel (0) target = $region73
    $region72: #{tpu_custom_call.1} parent=1 // pred_region
      _
    $region73: #{tpu_custom_call.1} parent=1 // pred_fallthru
      _
    // Predicated region
    $region74: #{tpu_custom_call.1} parent=1 // pred_check
      _
    $region75: #{tpu_custom_call.1} parent=1 // pred_check_branch
      %146 = sbr.rel (0) target = $region77
    $region76: #{tpu_custom_call.1} parent=1 // pred_region
      _
    $region77: #{tpu_custom_call.1} parent=1 // pred_fallthru
      _
    // Predicated region
    $region78: #{tpu_custom_call.1} parent=1 // pred_check
      _
    $region79: #{tpu_custom_call.1} parent=1 // pred_check_branch
      %148 = sbr.rel (0) target = $region81
    $region80: #{tpu_custom_call.1} parent=1 // pred_region
      _
    $region81: #{tpu_custom_call.1} parent=1 // pred_fallthru
      _
    // Predicated region
    $region82: #{tpu_custom_call.1} parent=1 // pred_check
      _
    $region83: #{tpu_custom_call.1} parent=1 // pred_check_branch
      %150 = sbr.rel (0) target = $region85
    $region84: #{tpu_custom_call.1} parent=1 // pred_region
      _
    $region85: #{tpu_custom_call.1} parent=1 // pred_fallthru
      _
    // Predicated region
    $region86: #{tpu_custom_call.1} parent=1 // pred_check
      _
    $region87: #{tpu_custom_call.1} parent=1 // pred_check_branch
      %152 = sbr.rel (0) target = $region89
    $region88: #{tpu_custom_call.1} parent=1 // pred_region
      %154 = vsyncadd [#allocation8], 0
      %s156 = sshll.u32 %s21, 4
      %s157 = int_to_ptr.vmem [resolvable:$true] %s156
      %159 = dma.vmem_to_smem %s157, 16, [#allocation18], [#allocation8]
    $region89: #{tpu_custom_call.1} parent=1 // pred_fallthru
      _
    // Predicated region
    $region90: #{tpu_custom_call.1} parent=1 // pred_check
      _
    $region91: #{tpu_custom_call.1} parent=1 // pred_check_branch
      %161 = sbr.rel (0) target = $region93
    $region92: #{tpu_custom_call.1} parent=1 // pred_region
      %163 = dma.done [#allocation7], 14336
    $region93: #{tpu_custom_call.1} parent=1 // pred_fallthru
      _
    // Predicated region
    $region94: #{tpu_custom_call.1} parent=1 // pred_check
      _
    $region95: #{tpu_custom_call.1} parent=1 // pred_check_branch
      %165 = sbr.rel (0) target = $region97
    $region96: #{tpu_custom_call.1} parent=1 // pred_region
      %167 = dma.done [#allocation10], 8192
    $region97: #{tpu_custom_call.1} parent=1 // pred_fallthru
      _
    // Predicated region
    $region98: #{tpu_custom_call.1} parent=1 // pred_check
      _
    $region99: #{tpu_custom_call.1} parent=1 // pred_check_branch
      %169 = sbr.rel (0) target = $region101
    $region100: #{tpu_custom_call.1} parent=1 // pred_region
      %171 = dma.done [#allocation10], 24576
    $region101: #{tpu_custom_call.1} parent=1 // pred_fallthru
      _
    // Predicated region
    $region102: #{tpu_custom_call.1} parent=1 // pred_check
      _
    $region103: #{tpu_custom_call.1} parent=1 // pred_check_branch
      %173 = sbr.rel (0) target = $region105
    $region104: #{tpu_custom_call.1} parent=1 // pred_region
      %175 = dma.done [#allocation13], 16384
    $region105: #{tpu_custom_call.1} parent=1 // pred_fallthru
      _
    // Predicated region
    $region106: #{tpu_custom_call.1} parent=1 // pred_check
      _
    $region107: #{tpu_custom_call.1} parent=1 // pred_check_branch
      %177 = sbr.rel (0) target = $region109
    $region108: #{tpu_custom_call.1} parent=1 // pred_region
      %179 = dma.done [#allocation13], 16384
    $region109: #{tpu_custom_call.1} parent=1 // pred_fallthru
      _
    // Predicated region
    $region110: #{tpu_custom_call.1} parent=1 // pred_check
      _
    $region111: #{tpu_custom_call.1} parent=1 // pred_check_branch
      %181 = sbr.rel (0) target = $region113
    $region112: #{tpu_custom_call.1} parent=1 // pred_region
      %183 = dma.done [#allocation16], 16384
    $region113: #{tpu_custom_call.1} parent=1 // pred_fallthru
      _
    // Predicated region
    $region114: #{tpu_custom_call.1} parent=1 // pred_check
      _
    $region115: #{tpu_custom_call.1} parent=1 // pred_check_branch
      %185 = sbr.rel (0) target = $region117
    $region116: #{tpu_custom_call.1} parent=1 // pred_region
      %187 = dma.done [#allocation16], 16384
    $region117: #{tpu_custom_call.1} parent=1 // pred_fallthru
      _
    // Predicated region
    $region118: #{tpu_custom_call.1} parent=1 // pred_check
      _
    $region119: #{tpu_custom_call.1} parent=1 // pred_check_branch
      %189 = sbr.rel (0) target = $region121
    $region120: #{tpu_custom_call.1} parent=1 // pred_region
      %191 = dma.done [#allocation8], 16
    $region121: #{tpu_custom_call.1} parent=1 // pred_fallthru
      _
    %192 = sfence
    %v193 = vld [vmem:[%s0 + $0x6] sm:$0xff]
    %v194 = vld [vmem:[%s0 + $0xe] sm:$0xff]
    %v195 = vld [vmem:[%s0] sm:$0xff]
    %v196 = vld [vmem:[%s0 + $0x8] sm:$0xff]
    %v197 = vld [vmem:[#allocation6] sm:$0xff]
    %v198 = vld [vmem:[#allocation6 + $0x8] sm:$0xff]
    %v199 = vld [vmem:[#allocation6 + $0x10] sm:$0xff]
    %v200 = vld [vmem:[#allocation6 + $0x18] sm:$0xff]
    %v201 = vld [vmem:[#allocation6 + $0x20] sm:$0xff]
    %v202 = vld [vmem:[#allocation6 + $0x28] sm:$0xff]
    %v203 = vld [vmem:[#allocation6 + $0x30] sm:$0xff]
    %v204 = vld [vmem:[#allocation6 + $0x38] sm:$0xff]
    %v205 = vld [vmem:[#allocation6 + $0x40] sm:$0xff]
    %v206 = vld [vmem:[#allocation6 + $0x48] sm:$0xff]
    %v207 = vld [vmem:[#allocation6 + $0x50] sm:$0xff]
    %v208 = vld [vmem:[#allocation6 + $0x58] sm:$0xff]
    %v209 = vld [vmem:[#allocation6 + $0x60] sm:$0xff]
    %v210 = vld [vmem:[#allocation6 + $0x68] sm:$0xff]
    %v211 = vld [vmem:[#allocation6 + $0x70] sm:$0xff]
    %v212 = vld [vmem:[#allocation6 + $0x78] sm:$0xff]
    %v213 = vld [vmem:[%s2] sm:$0x3]
    %v215 = vperm.slane %v213, 0
    %v216 = vperm.slane %v213, 1
    %vm219 = vcmask 523264
    %v221 = vsel %vm219, %v195, 0
    %v224 = vsel %vm219, %v196, 0
    %226 = vmatpush.msra.mxu0 0.0
    %227 = vmatpush.msra.mxu0 0.0
    %228 = vmatpush.msra.mxu0 0.0
    %229 = vmatpush.msra.mxu0 0.0
    %230 = vmatpush.msra.mxu0 0.0
    %231 = vmatpush.msra.mxu0 0.0
    %232 = vmatpush.msra.mxu0 0.0
    %233 = vmatpush.msra.mxu0 0.0
    %234 = vmatpush.msra.mxu0 %v211
    %235 = vmatpush.msra.mxu0 %v209
    %236 = vmatpush.msra.mxu0 %v207
    %237 = vmatpush.msra.mxu0 %v205
    %238 = vmatpush.msra.mxu0 %v203
    %239 = vmatpush.msra.mxu0 %v201
    %240 = vmatpush.msra.mxu0 %v199
    %241 = vmatpush.msra.mxu0 %v197
    %242 = vmatmul.f32.gmra.mxu0 %v221
    %v243 = vpop.f32.mrf.mxu0
    %v244 = vadd.f32 %v215, %v243
    %245 = vmatmul.f32.gmra.mxu0 %v224
    %v246 = vpop.f32.mrf.mxu0
    %v247 = vadd.f32 %v215, %v246
    %248 = vdwg.mxu0
    %249 = vmatpush.msra.mxu0 0.0
    %250 = vmatpush.msra.mxu0 0.0
    %251 = vmatpush.msra.mxu0 0.0
    %252 = vmatpush.msra.mxu0 0.0
    %253 = vmatpush.msra.mxu0 0.0
    %254 = vmatpush.msra.mxu0 0.0
    %255 = vmatpush.msra.mxu0 0.0
    %256 = vmatpush.msra.mxu0 0.0
    %257 = vmatpush.msra.mxu0 %v212
    %258 = vmatpush.msra.mxu0 %v210
    %259 = vmatpush.msra.mxu0 %v208
    %260 = vmatpush.msra.mxu0 %v206
    %261 = vmatpush.msra.mxu0 %v204
    %262 = vmatpush.msra.mxu0 %v202
    %263 = vmatpush.msra.mxu0 %v200
    %264 = vmatpush.msra.mxu0 %v198
    %265 = vmatmul.f32.gmra.mxu0 %v221
    %v266 = vpop.f32.mrf.mxu0
    %v267 = vadd.f32 %v216, %v266
    %268 = vmatmul.f32.gmra.mxu0 %v224
    %v269 = vpop.f32.mrf.mxu0
    %v270 = vadd.f32 %v216, %v269
    %271 = vdwg.mxu0
    %v272 = vld [vmem:[%s0 + $0x2] sm:$0xff]
    %v273 = vld [vmem:[%s0 + $0xa] sm:$0xff]
    %s274 = scalar_lea.vmem [#allocation6], 128
    %v275 = vld [vmem:[%s274] sm:$0xff]
    %v276 = vld [vmem:[%s274 + $0x8] sm:$0xff]
    %v277 = vld [vmem:[%s274 + $0x10] sm:$0xff]
    %v278 = vld [vmem:[%s274 + $0x18] sm:$0xff]
    %v279 = vld [vmem:[%s274 + $0x20] sm:$0xff]
    %v280 = vld [vmem:[%s274 + $0x28] sm:$0xff]
    %v281 = vld [vmem:[%s274 + $0x30] sm:$0xff]
    %v282 = vld [vmem:[%s274 + $0x38] sm:$0xff]
    %v283 = vld [vmem:[%s274 + $0x40] sm:$0xff]
    %v284 = vld [vmem:[%s274 + $0x48] sm:$0xff]
    %v285 = vld [vmem:[%s274 + $0x50] sm:$0xff]
    %v286 = vld [vmem:[%s274 + $0x58] sm:$0xff]
    %v287 = vld [vmem:[%s274 + $0x60] sm:$0xff]
    %v288 = vld [vmem:[%s274 + $0x68] sm:$0xff]
    %v289 = vld [vmem:[%s274 + $0x70] sm:$0xff]
    %v290 = vld [vmem:[%s274 + $0x78] sm:$0xff]
    %v292 = vsel %vm219, %v272, 0
    %v295 = vsel %vm219, %v273, 0
    %297 = vmatpush.msra.mxu0 0.0
    %298 = vmatpush.msra.mxu0 0.0
    %299 = vmatpush.msra.mxu0 0.0
    %300 = vmatpush.msra.mxu0 0.0
    %301 = vmatpush.msra.mxu0 0.0
    %302 = vmatpush.msra.mxu0 0.0
    %303 = vmatpush.msra.mxu0 0.0
    %304 = vmatpush.msra.mxu0 0.0
    %305 = vmatpush.msra.mxu0 %v289
    %306 = vmatpush.msra.mxu0 %v287
    %307 = vmatpush.msra.mxu0 %v285
    %308 = vmatpush.msra.mxu0 %v283
    %309 = vmatpush.msra.mxu0 %v281
    %310 = vmatpush.msra.mxu0 %v279
    %311 = vmatpush.msra.mxu0 %v277
    %312 = vmatpush.msra.mxu0 %v275
    %313 = vmatmul.f32.gmra.mxu0 %v292
    %v314 = vpop.f32.mrf.mxu0
    %v315 = vadd.f32 0.0, %v314
    %316 = vmatmul.f32.gmra.mxu0 %v295
    %v317 = vpop.f32.mrf.mxu0
    %v318 = vadd.f32 0.0, %v317
    %319 = vdwg.mxu0
    %320 = vmatpush.msra.mxu0 0.0
    %321 = vmatpush.msra.mxu0 0.0
    %322 = vmatpush.msra.mxu0 0.0
    %323 = vmatpush.msra.mxu0 0.0
    %324 = vmatpush.msra.mxu0 0.0
    %325 = vmatpush.msra.mxu0 0.0
    %326 = vmatpush.msra.mxu0 0.0
    %327 = vmatpush.msra.mxu0 0.0
    %328 = vmatpush.msra.mxu0 %v290
    %329 = vmatpush.msra.mxu0 %v288
    %330 = vmatpush.msra.mxu0 %v286
    %331 = vmatpush.msra.mxu0 %v284
    %332 = vmatpush.msra.mxu0 %v282
    %333 = vmatpush.msra.mxu0 %v280
    %334 = vmatpush.msra.mxu0 %v278
    %335 = vmatpush.msra.mxu0 %v276
    %336 = vmatmul.f32.gmra.mxu0 %v292
    %v337 = vpop.f32.mrf.mxu0
    %v338 = vadd.f32 0.0, %v337
    %339 = vmatmul.f32.gmra.mxu0 %v295
    %v340 = vpop.f32.mrf.mxu0
    %v341 = vadd.f32 0.0, %v340
    %342 = vdwg.mxu0
    %v343 = vadd.f32 %v244, %v315
    %v344 = vadd.f32 %v267, %v338
    %v345 = vadd.f32 %v247, %v318
    %v346 = vadd.f32 %v270, %v341
    %v347 = vld [vmem:[%s0 + $0x4] sm:$0xff]
    %v348 = vld [vmem:[%s0 + $0xc] sm:$0xff]
    %s349 = scalar_lea.vmem [#allocation6], 256
    %v350 = vld [vmem:[%s349] sm:$0xff]
    %v351 = vld [vmem:[%s349 + $0x8] sm:$0xff]
    %v352 = vld [vmem:[%s349 + $0x10] sm:$0xff]
    %v353 = vld [vmem:[%s349 + $0x18] sm:$0xff]
    %v354 = vld [vmem:[%s349 + $0x20] sm:$0xff]
    %v355 = vld [vmem:[%s349 + $0x28] sm:$0xff]
    %v356 = vld [vmem:[%s349 + $0x30] sm:$0xff]
    %v357 = vld [vmem:[%s349 + $0x38] sm:$0xff]
    %v358 = vld [vmem:[%s349 + $0x40] sm:$0xff]
    %v359 = vld [vmem:[%s349 + $0x48] sm:$0xff]
    %v360 = vld [vmem:[%s349 + $0x50] sm:$0xff]
    %v361 = vld [vmem:[%s349 + $0x58] sm:$0xff]
    %v362 = vld [vmem:[%s349 + $0x60] sm:$0xff]
    %v363 = vld [vmem:[%s349 + $0x68] sm:$0xff]
    %v364 = vld [vmem:[%s349 + $0x70] sm:$0xff]
    %v365 = vld [vmem:[%s349 + $0x78] sm:$0xff]
    %v367 = vsel %vm219, %v347, 0
    %v370 = vsel %vm219, %v348, 0
    %372 = vmatpush.msra.mxu0 0.0
    %373 = vmatpush.msra.mxu0 0.0
    %374 = vmatpush.msra.mxu0 0.0
    %375 = vmatpush.msra.mxu0 0.0
    %376 = vmatpush.msra.mxu0 0.0
    %377 = vmatpush.msra.mxu0 0.0
    %378 = vmatpush.msra.mxu0 0.0
    %379 = vmatpush.msra.mxu0 0.0
    %380 = vmatpush.msra.mxu0 %v364
    %381 = vmatpush.msra.mxu0 %v362
    %382 = vmatpush.msra.mxu0 %v360
    %383 = vmatpush.msra.mxu0 %v358
    %384 = vmatpush.msra.mxu0 %v356
    %385 = vmatpush.msra.mxu0 %v354
    %386 = vmatpush.msra.mxu0 %v352
    %387 = vmatpush.msra.mxu0 %v350
    %388 = vmatmul.f32.gmra.mxu0 %v367
    %v389 = vpop.f32.mrf.mxu0
    %v390 = vadd.f32 0.0, %v389
    %391 = vmatmul.f32.gmra.mxu0 %v370
    %v392 = vpop.f32.mrf.mxu0
    %v393 = vadd.f32 0.0, %v392
    %394 = vdwg.mxu0
    %395 = vmatpush.msra.mxu0 0.0
    %396 = vmatpush.msra.mxu0 0.0
    %397 = vmatpush.msra.mxu0 0.0
    %398 = vmatpush.msra.mxu0 0.0
    %399 = vmatpush.msra.mxu0 0.0
    %400 = vmatpush.msra.mxu0 0.0
    %401 = vmatpush.msra.mxu0 0.0
    %402 = vmatpush.msra.mxu0 0.0
    %403 = vmatpush.msra.mxu0 %v365
    %404 = vmatpush.msra.mxu0 %v363
    %405 = vmatpush.msra.mxu0 %v361
    %406 = vmatpush.msra.mxu0 %v359
    %407 = vmatpush.msra.mxu0 %v357
    %408 = vmatpush.msra.mxu0 %v355
    %409 = vmatpush.msra.mxu0 %v353
    %410 = vmatpush.msra.mxu0 %v351
    %411 = vmatmul.f32.gmra.mxu0 %v367
    %v412 = vpop.f32.mrf.mxu0
    %v413 = vadd.f32 0.0, %v412
    %414 = vmatmul.f32.gmra.mxu0 %v370
    %v415 = vpop.f32.mrf.mxu0
    %v416 = vadd.f32 0.0, %v415
    %417 = vdwg.mxu0
    %v418 = vadd.f32 %v343, %v390
    %v419 = vadd.f32 %v344, %v413
    %v420 = vadd.f32 %v345, %v393
    %v421 = vadd.f32 %v346, %v416
    %s422 = scalar_lea.vmem [#allocation6], 384
    %v423 = vld [vmem:[%s422] sm:$0xff]
    %v424 = vld [vmem:[%s422 + $0x8] sm:$0xff]
    %v425 = vld [vmem:[%s422 + $0x10] sm:$0xff]
    %v426 = vld [vmem:[%s422 + $0x18] sm:$0xff]
    %v427 = vld [vmem:[%s422 + $0x20] sm:$0xff]
    %v428 = vld [vmem:[%s422 + $0x28] sm:$0xff]
    %v429 = vld [vmem:[%s422 + $0x30] sm:$0xff]
    %v430 = vld [vmem:[%s422 + $0x38] sm:$0xff]
    %v431 = vld [vmem:[%s422 + $0x40] sm:$0xff]
    %v432 = vld [vmem:[%s422 + $0x48] sm:$0xff]
    %v433 = vld [vmem:[%s422 + $0x50] sm:$0xff]
    %v434 = vld [vmem:[%s422 + $0x58] sm:$0xff]
    %v435 = vld [vmem:[%s422 + $0x60] sm:$0xff]
    %v436 = vld [vmem:[%s422 + $0x68] sm:$0xff]
    %v437 = vld [vmem:[%s422 + $0x70] sm:$0xff]
    %v438 = vld [vmem:[%s422 + $0x78] sm:$0xff]
    %v440 = vsel %vm219, %v193, 0
    %v443 = vsel %vm219, %v194, 0
    %445 = vmatpush.msra.mxu0 0.0
    %446 = vmatpush.msra.mxu0 0.0
    %447 = vmatpush.msra.mxu0 0.0
    %448 = vmatpush.msra.mxu0 0.0
    %449 = vmatpush.msra.mxu0 0.0
    %450 = vmatpush.msra.mxu0 0.0
    %451 = vmatpush.msra.mxu0 0.0
    %452 = vmatpush.msra.mxu0 0.0
    %453 = vmatpush.msra.mxu0 %v437
    %454 = vmatpush.msra.mxu0 %v435
    %455 = vmatpush.msra.mxu0 %v433
    %456 = vmatpush.msra.mxu0 %v431
    %457 = vmatpush.msra.mxu0 %v429
    %458 = vmatpush.msra.mxu0 %v427
    %459 = vmatpush.msra.mxu0 %v425
    %460 = vmatpush.msra.mxu0 %v423
    %461 = vmatmul.f32.gmra.mxu0 %v440
    %v462 = vpop.f32.mrf.mxu0
    %v463 = vadd.f32 0.0, %v462
    %464 = vmatmul.f32.gmra.mxu0 %v443
    %v465 = vpop.f32.mrf.mxu0
    %v466 = vadd.f32 0.0, %v465
    %467 = vdwg.mxu0
    %468 = vmatpush.msra.mxu0 0.0
    %469 = vmatpush.msra.mxu0 0.0
    %470 = vmatpush.msra.mxu0 0.0
    %471 = vmatpush.msra.mxu0 0.0
    %472 = vmatpush.msra.mxu0 0.0
    %473 = vmatpush.msra.mxu0 0.0
    %474 = vmatpush.msra.mxu0 0.0
    %475 = vmatpush.msra.mxu0 0.0
    %476 = vmatpush.msra.mxu0 %v438
    %477 = vmatpush.msra.mxu0 %v436
    %478 = vmatpush.msra.mxu0 %v434
    %479 = vmatpush.msra.mxu0 %v432
    %480 = vmatpush.msra.mxu0 %v430
    %481 = vmatpush.msra.mxu0 %v428
    %482 = vmatpush.msra.mxu0 %v426
    %483 = vmatpush.msra.mxu0 %v424
    %484 = vmatmul.f32.gmra.mxu0 %v440
    %v485 = vpop.f32.mrf.mxu0
    %v486 = vadd.f32 0.0, %v485
    %487 = vmatmul.f32.gmra.mxu0 %v443
    %v488 = vpop.f32.mrf.mxu0
    %v489 = vadd.f32 0.0, %v488
    %490 = vdwg.mxu0
    %v491 = vadd.f32 %v418, %v463
    %v492 = vadd.f32 %v419, %v486
    %v493 = vadd.f32 %v420, %v466
    %v494 = vadd.f32 %v421, %v489
    %v495 = vld [vmem:[%s0 + $0x8] sm:$0xff]
    %v496 = vld [vmem:[%s0 + $0x10] sm:$0xff]
    %s497 = scalar_lea.vmem [#allocation6], 512
    %v498 = vld [vmem:[%s497] sm:$0xff]
    %v499 = vld [vmem:[%s497 + $0x8] sm:$0xff]
    %v500 = vld [vmem:[%s497 + $0x10] sm:$0xff]
    %v501 = vld [vmem:[%s497 + $0x18] sm:$0xff]
    %v502 = vld [vmem:[%s497 + $0x20] sm:$0xff]
    %v503 = vld [vmem:[%s497 + $0x28] sm:$0xff]
    %v504 = vld [vmem:[%s497 + $0x30] sm:$0xff]
    %v505 = vld [vmem:[%s497 + $0x38] sm:$0xff]
    %v506 = vld [vmem:[%s497 + $0x40] sm:$0xff]
    %v507 = vld [vmem:[%s497 + $0x48] sm:$0xff]
    %v508 = vld [vmem:[%s497 + $0x50] sm:$0xff]
    %v509 = vld [vmem:[%s497 + $0x58] sm:$0xff]
    %v510 = vld [vmem:[%s497 + $0x60] sm:$0xff]
    %v511 = vld [vmem:[%s497 + $0x68] sm:$0xff]
    %v512 = vld [vmem:[%s497 + $0x70] sm:$0xff]
    %v513 = vld [vmem:[%s497 + $0x78] sm:$0xff]
    %v515 = vsel %vm219, %v495, 0
    %v518 = vsel %vm219, %v496, 0
    %520 = vmatpush.msra.mxu0 0.0
    %521 = vmatpush.msra.mxu0 0.0
    %522 = vmatpush.msra.mxu0 0.0
    %523 = vmatpush.msra.mxu0 0.0
    %524 = vmatpush.msra.mxu0 0.0
    %525 = vmatpush.msra.mxu0 0.0
    %526 = vmatpush.msra.mxu0 0.0
    %527 = vmatpush.msra.mxu0 0.0
    %528 = vmatpush.msra.mxu0 %v512
    %529 = vmatpush.msra.mxu0 %v510
    %530 = vmatpush.msra.mxu0 %v508
    %531 = vmatpush.msra.mxu0 %v506
    %532 = vmatpush.msra.mxu0 %v504
    %533 = vmatpush.msra.mxu0 %v502
    %534 = vmatpush.msra.mxu0 %v500
    %535 = vmatpush.msra.mxu0 %v498
    %536 = vmatmul.f32.gmra.mxu0 %v515
    %v537 = vpop.f32.mrf.mxu0
    %v538 = vadd.f32 0.0, %v537
    %539 = vmatmul.f32.gmra.mxu0 %v518
    %v540 = vpop.f32.mrf.mxu0
    %v541 = vadd.f32 0.0, %v540
    %542 = vdwg.mxu0
    %543 = vmatpush.msra.mxu0 0.0
    %544 = vmatpush.msra.mxu0 0.0
    %545 = vmatpush.msra.mxu0 0.0
    %546 = vmatpush.msra.mxu0 0.0
    %547 = vmatpush.msra.mxu0 0.0
    %548 = vmatpush.msra.mxu0 0.0
    %549 = vmatpush.msra.mxu0 0.0
    %550 = vmatpush.msra.mxu0 0.0
    %551 = vmatpush.msra.mxu0 %v513
    %552 = vmatpush.msra.mxu0 %v511
    %553 = vmatpush.msra.mxu0 %v509
    %554 = vmatpush.msra.mxu0 %v507
    %555 = vmatpush.msra.mxu0 %v505
    %556 = vmatpush.msra.mxu0 %v503
    %557 = vmatpush.msra.mxu0 %v501
    %558 = vmatpush.msra.mxu0 %v499
    %559 = vmatmul.f32.gmra.mxu0 %v515
    %v560 = vpop.f32.mrf.mxu0
    %v561 = vadd.f32 0.0, %v560
    %562 = vmatmul.f32.gmra.mxu0 %v518
    %v563 = vpop.f32.mrf.mxu0
    %v564 = vadd.f32 0.0, %v563
    %565 = vdwg.mxu0
    %v566 = vadd.f32 %v491, %v538
    %v567 = vadd.f32 %v492, %v561
    %v568 = vadd.f32 %v493, %v541
    %v569 = vadd.f32 %v494, %v564
    %v570 = vld [vmem:[%s0 + $0xa] sm:$0xff]
    %v571 = vld [vmem:[%s0 + $0x12] sm:$0xff]
    %s572 = scalar_lea.vmem [#allocation6], 640
    %v573 = vld [vmem:[%s572] sm:$0xff]
    %v574 = vld [vmem:[%s572 + $0x8] sm:$0xff]
    %v575 = vld [vmem:[%s572 + $0x10] sm:$0xff]
    %v576 = vld [vmem:[%s572 + $0x18] sm:$0xff]
    %v577 = vld [vmem:[%s572 + $0x20] sm:$0xff]
    %v578 = vld [vmem:[%s572 + $0x28] sm:$0xff]
    %v579 = vld [vmem:[%s572 + $0x30] sm:$0xff]
    %v580 = vld [vmem:[%s572 + $0x38] sm:$0xff]
    %v581 = vld [vmem:[%s572 + $0x40] sm:$0xff]
    %v582 = vld [vmem:[%s572 + $0x48] sm:$0xff]
    %v583 = vld [vmem:[%s572 + $0x50] sm:$0xff]
    %v584 = vld [vmem:[%s572 + $0x58] sm:$0xff]
    %v585 = vld [vmem:[%s572 + $0x60] sm:$0xff]
    %v586 = vld [vmem:[%s572 + $0x68] sm:$0xff]
    %v587 = vld [vmem:[%s572 + $0x70] sm:$0xff]
    %v588 = vld [vmem:[%s572 + $0x78] sm:$0xff]
    %v590 = vsel %vm219, %v570, 0
    %v593 = vsel %vm219, %v571, 0
    %595 = vmatpush.msra.mxu0 0.0
    %596 = vmatpush.msra.mxu0 0.0
    %597 = vmatpush.msra.mxu0 0.0
    %598 = vmatpush.msra.mxu0 0.0
    %599 = vmatpush.msra.mxu0 0.0
    %600 = vmatpush.msra.mxu0 0.0
    %601 = vmatpush.msra.mxu0 0.0
    %602 = vmatpush.msra.mxu0 0.0
    %603 = vmatpush.msra.mxu0 %v587
    %604 = vmatpush.msra.mxu0 %v585
    %605 = vmatpush.msra.mxu0 %v583
    %606 = vmatpush.msra.mxu0 %v581
    %607 = vmatpush.msra.mxu0 %v579
    %608 = vmatpush.msra.mxu0 %v577
    %609 = vmatpush.msra.mxu0 %v575
    %610 = vmatpush.msra.mxu0 %v573
    %611 = vmatmul.f32.gmra.mxu0 %v590
    %v612 = vpop.f32.mrf.mxu0
    %v613 = vadd.f32 0.0, %v612
    %614 = vmatmul.f32.gmra.mxu0 %v593
    %v615 = vpop.f32.mrf.mxu0
    %v616 = vadd.f32 0.0, %v615
    %617 = vdwg.mxu0
    %618 = vmatpush.msra.mxu0 0.0
    %619 = vmatpush.msra.mxu0 0.0
    %620 = vmatpush.msra.mxu0 0.0
    %621 = vmatpush.msra.mxu0 0.0
    %622 = vmatpush.msra.mxu0 0.0
    %623 = vmatpush.msra.mxu0 0.0
    %624 = vmatpush.msra.mxu0 0.0
    %625 = vmatpush.msra.mxu0 0.0
    %626 = vmatpush.msra.mxu0 %v588
    %627 = vmatpush.msra.mxu0 %v586
    %628 = vmatpush.msra.mxu0 %v584
    %629 = vmatpush.msra.mxu0 %v582
    %630 = vmatpush.msra.mxu0 %v580
    %631 = vmatpush.msra.mxu0 %v578
    %632 = vmatpush.msra.mxu0 %v576
    %633 = vmatpush.msra.mxu0 %v574
    %634 = vmatmul.f32.gmra.mxu0 %v590
    %v635 = vpop.f32.mrf.mxu0
    %v636 = vadd.f32 0.0, %v635
    %637 = vmatmul.f32.gmra.mxu0 %v593
    %v638 = vpop.f32.mrf.mxu0
    %v639 = vadd.f32 0.0, %v638
    %640 = vdwg.mxu0
    %v641 = vadd.f32 %v566, %v613
    %v642 = vadd.f32 %v567, %v636
    %v643 = vadd.f32 %v568, %v616
    %v644 = vadd.f32 %v569, %v639
    %v645 = vld [vmem:[%s0 + $0xc] sm:$0xff]
    %v646 = vld [vmem:[%s0 + $0x14] sm:$0xff]
    %s647 = scalar_lea.vmem [#allocation6], 768
    %v648 = vld [vmem:[%s647] sm:$0xff]
    %v649 = vld [vmem:[%s647 + $0x8] sm:$0xff]
    %v650 = vld [vmem:[%s647 + $0x10] sm:$0xff]
    %v651 = vld [vmem:[%s647 + $0x18] sm:$0xff]
    %v652 = vld [vmem:[%s647 + $0x20] sm:$0xff]
    %v653 = vld [vmem:[%s647 + $0x28] sm:$0xff]
    %v654 = vld [vmem:[%s647 + $0x30] sm:$0xff]
    %v655 = vld [vmem:[%s647 + $0x38] sm:$0xff]
    %v656 = vld [vmem:[%s647 + $0x40] sm:$0xff]
    %v657 = vld [vmem:[%s647 + $0x48] sm:$0xff]
    %v658 = vld [vmem:[%s647 + $0x50] sm:$0xff]
    %v659 = vld [vmem:[%s647 + $0x58] sm:$0xff]
    %v660 = vld [vmem:[%s647 + $0x60] sm:$0xff]
    %v661 = vld [vmem:[%s647 + $0x68] sm:$0xff]
    %v662 = vld [vmem:[%s647 + $0x70] sm:$0xff]
    %v663 = vld [vmem:[%s647 + $0x78] sm:$0xff]
    %v665 = vsel %vm219, %v645, 0
    %v668 = vsel %vm219, %v646, 0
    %670 = vmatpush.msra.mxu0 0.0
    %671 = vmatpush.msra.mxu0 0.0
    %672 = vmatpush.msra.mxu0 0.0
    %673 = vmatpush.msra.mxu0 0.0
    %674 = vmatpush.msra.mxu0 0.0
    %675 = vmatpush.msra.mxu0 0.0
    %676 = vmatpush.msra.mxu0 0.0
    %677 = vmatpush.msra.mxu0 0.0
    %678 = vmatpush.msra.mxu0 %v662
    %679 = vmatpush.msra.mxu0 %v660
    %680 = vmatpush.msra.mxu0 %v658
    %681 = vmatpush.msra.mxu0 %v656
    %682 = vmatpush.msra.mxu0 %v654
    %683 = vmatpush.msra.mxu0 %v652
    %684 = vmatpush.msra.mxu0 %v650
    %685 = vmatpush.msra.mxu0 %v648
    %686 = vmatmul.f32.gmra.mxu0 %v665
    %v687 = vpop.f32.mrf.mxu0
    %v688 = vadd.f32 0.0, %v687
    %689 = vmatmul.f32.gmra.mxu0 %v668
    %v690 = vpop.f32.mrf.mxu0
    %v691 = vadd.f32 0.0, %v690
    %692 = vdwg.mxu0
    %693 = vmatpush.msra.mxu0 0.0
    %694 = vmatpush.msra.mxu0 0.0
    %695 = vmatpush.msra.mxu0 0.0
    %696 = vmatpush.msra.mxu0 0.0
    %697 = vmatpush.msra.mxu0 0.0
    %698 = vmatpush.msra.mxu0 0.0
    %699 = vmatpush.msra.mxu0 0.0
    %700 = vmatpush.msra.mxu0 0.0
    %701 = vmatpush.msra.mxu0 %v663
    %702 = vmatpush.msra.mxu0 %v661
    %703 = vmatpush.msra.mxu0 %v659
    %704 = vmatpush.msra.mxu0 %v657
    %705 = vmatpush.msra.mxu0 %v655
    %706 = vmatpush.msra.mxu0 %v653
    %707 = vmatpush.msra.mxu0 %v651
    %708 = vmatpush.msra.mxu0 %v649
    %709 = vmatmul.f32.gmra.mxu0 %v665
    %v710 = vpop.f32.mrf.mxu0
    %v711 = vadd.f32 0.0, %v710
    %712 = vmatmul.f32.gmra.mxu0 %v668
    %v713 = vpop.f32.mrf.mxu0
    %v714 = vadd.f32 0.0, %v713
    %715 = vdwg.mxu0
    %v716 = vadd.f32 %v641, %v688
    %v717 = vadd.f32 %v642, %v711
    %v718 = vadd.f32 %v643, %v691
    %v719 = vadd.f32 %v644, %v714
    %v720 = vld [vmem:[#allocation9] sm:$0xff]
    %v721 = vld [vmem:[#allocation9 + $0x8] sm:$0xff]
    %v722 = vld [vmem:[#allocation9 + $0x10] sm:$0xff]
    %v723 = vld [vmem:[#allocation9 + $0x18] sm:$0xff]
    %v724 = vld [vmem:[#allocation9 + $0x20] sm:$0xff]
    %v725 = vld [vmem:[#allocation9 + $0x28] sm:$0xff]
    %v726 = vld [vmem:[#allocation9 + $0x30] sm:$0xff]
    %v727 = vld [vmem:[#allocation9 + $0x38] sm:$0xff]
    %v728 = vld [vmem:[#allocation9 + $0x40] sm:$0xff]
    %v729 = vld [vmem:[#allocation9 + $0x48] sm:$0xff]
    %v730 = vld [vmem:[#allocation9 + $0x50] sm:$0xff]
    %v731 = vld [vmem:[#allocation9 + $0x58] sm:$0xff]
    %v732 = vld [vmem:[#allocation9 + $0x60] sm:$0xff]
    %v733 = vld [vmem:[#allocation9 + $0x68] sm:$0xff]
    %v734 = vld [vmem:[#allocation9 + $0x70] sm:$0xff]
    %v735 = vld [vmem:[#allocation9 + $0x78] sm:$0xff]
    %v736 = vld [vmem:[#allocation9 + $0x80] sm:$0xff]
    %v737 = vld [vmem:[#allocation9 + $0x88] sm:$0xff]
    %v738 = vld [vmem:[#allocation9 + $0x90] sm:$0xff]
    %v739 = vld [vmem:[#allocation9 + $0x98] sm:$0xff]
    %v740 = vld [vmem:[#allocation9 + $0xa0] sm:$0xff]
    %v741 = vld [vmem:[#allocation9 + $0xa8] sm:$0xff]
    %v742 = vld [vmem:[#allocation9 + $0xb0] sm:$0xff]
    %v743 = vld [vmem:[#allocation9 + $0xb8] sm:$0xff]
    %v744 = vld [vmem:[#allocation9 + $0xc0] sm:$0xff]
    %v745 = vld [vmem:[#allocation9 + $0xc8] sm:$0xff]
    %v746 = vld [vmem:[#allocation9 + $0xd0] sm:$0xff]
    %v747 = vld [vmem:[#allocation9 + $0xd8] sm:$0xff]
    %v748 = vld [vmem:[#allocation9 + $0xe0] sm:$0xff]
    %v749 = vld [vmem:[#allocation9 + $0xe8] sm:$0xff]
    %v750 = vld [vmem:[#allocation9 + $0xf0] sm:$0xff]
    %v751 = vld [vmem:[#allocation9 + $0xf8] sm:$0xff]
    %v752 = vld [vmem:[#allocation9 + $0x100] sm:$0xff]
    %v753 = vld [vmem:[#allocation9 + $0x108] sm:$0xff]
    %v754 = vld [vmem:[#allocation9 + $0x110] sm:$0xff]
    %v755 = vld [vmem:[#allocation9 + $0x118] sm:$0xff]
    %v756 = vld [vmem:[#allocation9 + $0x120] sm:$0xff]
    %v757 = vld [vmem:[#allocation9 + $0x128] sm:$0xff]
    %v758 = vld [vmem:[#allocation9 + $0x130] sm:$0xff]
    %v759 = vld [vmem:[#allocation9 + $0x138] sm:$0xff]
    %v760 = vld [vmem:[#allocation9 + $0x140] sm:$0xff]
    %v761 = vld [vmem:[#allocation9 + $0x148] sm:$0xff]
    %v762 = vld [vmem:[#allocation9 + $0x150] sm:$0xff]
    %v763 = vld [vmem:[#allocation9 + $0x158] sm:$0xff]
    %v764 = vld [vmem:[#allocation9 + $0x160] sm:$0xff]
    %v765 = vld [vmem:[#allocation9 + $0x168] sm:$0xff]
    %v766 = vld [vmem:[#allocation9 + $0x170] sm:$0xff]
    %v767 = vld [vmem:[#allocation9 + $0x178] sm:$0xff]
    %v768 = vld [vmem:[#allocation9 + $0x180] sm:$0xff]
    %v769 = vld [vmem:[#allocation9 + $0x188] sm:$0xff]
    %v770 = vld [vmem:[#allocation9 + $0x190] sm:$0xff]
    %v771 = vld [vmem:[#allocation9 + $0x198] sm:$0xff]
    %v772 = vld [vmem:[#allocation9 + $0x1a0] sm:$0xff]
    %v773 = vld [vmem:[#allocation9 + $0x1a8] sm:$0xff]
    %v774 = vld [vmem:[#allocation9 + $0x1b0] sm:$0xff]
    %v775 = vld [vmem:[#allocation9 + $0x1b8] sm:$0xff]
    %v776 = vld [vmem:[#allocation9 + $0x1c0] sm:$0xff]
    %v777 = vld [vmem:[#allocation9 + $0x1c8] sm:$0xff]
    %v778 = vld [vmem:[#allocation9 + $0x1d0] sm:$0xff]
    %v779 = vld [vmem:[#allocation9 + $0x1d8] sm:$0xff]
    %v780 = vld [vmem:[#allocation9 + $0x1e0] sm:$0xff]
    %v781 = vld [vmem:[#allocation9 + $0x1e8] sm:$0xff]
    %v782 = vld [vmem:[#allocation9 + $0x1f0] sm:$0xff]
    %v783 = vld [vmem:[#allocation9 + $0x1f8] sm:$0xff]
    %v784 = vld [vmem:[#allocation11] sm:$0xff]
    %v785 = vld [vmem:[#allocation11 + $0x8] sm:$0xff]
    %v786 = vld [vmem:[#allocation11 + $0x10] sm:$0xff]
    %v787 = vld [vmem:[#allocation11 + $0x18] sm:$0xff]
    %v788 = vld [vmem:[#allocation11 + $0x20] sm:$0xff]
    %v789 = vld [vmem:[#allocation11 + $0x28] sm:$0xff]
    %v790 = vld [vmem:[#allocation11 + $0x30] sm:$0xff]
    %v791 = vld [vmem:[#allocation11 + $0x38] sm:$0xff]
    %v792 = vld [vmem:[#allocation11 + $0x40] sm:$0xff]
    %v793 = vld [vmem:[#allocation11 + $0x48] sm:$0xff]
    %v794 = vld [vmem:[#allocation11 + $0x50] sm:$0xff]
    %v795 = vld [vmem:[#allocation11 + $0x58] sm:$0xff]
    %v796 = vld [vmem:[#allocation11 + $0x60] sm:$0xff]
    %v797 = vld [vmem:[#allocation11 + $0x68] sm:$0xff]
    %v798 = vld [vmem:[#allocation11 + $0x70] sm:$0xff]
    %v799 = vld [vmem:[#allocation11 + $0x78] sm:$0xff]
    %v800 = vld [vmem:[#allocation11 + $0x80] sm:$0xff]
    %v801 = vld [vmem:[#allocation11 + $0x88] sm:$0xff]
    %v802 = vld [vmem:[#allocation11 + $0x90] sm:$0xff]
    %v803 = vld [vmem:[#allocation11 + $0x98] sm:$0xff]
    %v804 = vld [vmem:[#allocation11 + $0xa0] sm:$0xff]
    %v805 = vld [vmem:[#allocation11 + $0xa8] sm:$0xff]
    %v806 = vld [vmem:[#allocation11 + $0xb0] sm:$0xff]
    %v807 = vld [vmem:[#allocation11 + $0xb8] sm:$0xff]
    %v808 = vld [vmem:[#allocation11 + $0xc0] sm:$0xff]
    %v809 = vld [vmem:[#allocation11 + $0xc8] sm:$0xff]
    %v810 = vld [vmem:[#allocation11 + $0xd0] sm:$0xff]
    %v811 = vld [vmem:[#allocation11 + $0xd8] sm:$0xff]
    %v812 = vld [vmem:[#allocation11 + $0xe0] sm:$0xff]
    %v813 = vld [vmem:[#allocation11 + $0xe8] sm:$0xff]
    %v814 = vld [vmem:[#allocation11 + $0xf0] sm:$0xff]
    %v815 = vld [vmem:[#allocation11 + $0xf8] sm:$0xff]
    %v816 = vld [vmem:[#allocation11 + $0x100] sm:$0xff]
    %v817 = vld [vmem:[#allocation11 + $0x108] sm:$0xff]
    %v818 = vld [vmem:[#allocation11 + $0x110] sm:$0xff]
    %v819 = vld [vmem:[#allocation11 + $0x118] sm:$0xff]
    %v820 = vld [vmem:[#allocation11 + $0x120] sm:$0xff]
    %v821 = vld [vmem:[#allocation11 + $0x128] sm:$0xff]
    %v822 = vld [vmem:[#allocation11 + $0x130] sm:$0xff]
    %v823 = vld [vmem:[#allocation11 + $0x138] sm:$0xff]
    %v824 = vld [vmem:[#allocation11 + $0x140] sm:$0xff]
    %v825 = vld [vmem:[#allocation11 + $0x148] sm:$0xff]
    %v826 = vld [vmem:[#allocation11 + $0x150] sm:$0xff]
    %v827 = vld [vmem:[#allocation11 + $0x158] sm:$0xff]
    %v828 = vld [vmem:[#allocation11 + $0x160] sm:$0xff]
    %v829 = vld [vmem:[#allocation11 + $0x168] sm:$0xff]
    %v830 = vld [vmem:[#allocation11 + $0x170] sm:$0xff]
    %v831 = vld [vmem:[#allocation11 + $0x178] sm:$0xff]
    %v832 = vld [vmem:[#allocation11 + $0x180] sm:$0xff]
    %v833 = vld [vmem:[#allocation11 + $0x188] sm:$0xff]
    %v834 = vld [vmem:[#allocation11 + $0x190] sm:$0xff]
    %v835 = vld [vmem:[#allocation11 + $0x198] sm:$0xff]
    %v836 = vld [vmem:[#allocation11 + $0x1a0] sm:$0xff]
    %v837 = vld [vmem:[#allocation11 + $0x1a8] sm:$0xff]
    %v838 = vld [vmem:[#allocation11 + $0x1b0] sm:$0xff]
    %v839 = vld [vmem:[#allocation11 + $0x1b8] sm:$0xff]
    %v840 = vld [vmem:[#allocation11 + $0x1c0] sm:$0xff]
    %v841 = vld [vmem:[#allocation11 + $0x1c8] sm:$0xff]
    %v842 = vld [vmem:[#allocation11 + $0x1d0] sm:$0xff]
    %v843 = vld [vmem:[#allocation11 + $0x1d8] sm:$0xff]
    %v844 = vld [vmem:[#allocation11 + $0x1e0] sm:$0xff]
    %v845 = vld [vmem:[#allocation11 + $0x1e8] sm:$0xff]
    %v846 = vld [vmem:[#allocation11 + $0x1f0] sm:$0xff]
    %v847 = vld [vmem:[#allocation11 + $0x1f8] sm:$0xff]
    %v848 = vld [vmem:[#allocation11 + $0x200] sm:$0xff]
    %v849 = vld [vmem:[#allocation11 + $0x208] sm:$0xff]
    %v850 = vld [vmem:[#allocation11 + $0x210] sm:$0xff]
    %v851 = vld [vmem:[#allocation11 + $0x218] sm:$0xff]
    %v852 = vld [vmem:[#allocation11 + $0x220] sm:$0xff]
    %v853 = vld [vmem:[#allocation11 + $0x228] sm:$0xff]
    %v854 = vld [vmem:[#allocation11 + $0x230] sm:$0xff]
    %v855 = vld [vmem:[#allocation11 + $0x238] sm:$0xff]
    %v856 = vld [vmem:[#allocation11 + $0x240] sm:$0xff]
    %v857 = vld [vmem:[#allocation11 + $0x248] sm:$0xff]
    %v858 = vld [vmem:[#allocation11 + $0x250] sm:$0xff]
    %v859 = vld [vmem:[#allocation11 + $0x258] sm:$0xff]
    %v860 = vld [vmem:[#allocation11 + $0x260] sm:$0xff]
    %v861 = vld [vmem:[#allocation11 + $0x268] sm:$0xff]
    %v862 = vld [vmem:[#allocation11 + $0x270] sm:$0xff]
    %v863 = vld [vmem:[#allocation11 + $0x278] sm:$0xff]
    %v864 = vld [vmem:[#allocation11 + $0x280] sm:$0xff]
    %v865 = vld [vmem:[#allocation11 + $0x288] sm:$0xff]
    %v866 = vld [vmem:[#allocation11 + $0x290] sm:$0xff]
    %v867 = vld [vmem:[#allocation11 + $0x298] sm:$0xff]
    %v868 = vld [vmem:[#allocation11 + $0x2a0] sm:$0xff]
    %v869 = vld [vmem:[#allocation11 + $0x2a8] sm:$0xff]
    %v870 = vld [vmem:[#allocation11 + $0x2b0] sm:$0xff]
    %v871 = vld [vmem:[#allocation11 + $0x2b8] sm:$0xff]
    %v872 = vld [vmem:[#allocation11 + $0x2c0] sm:$0xff]
    %v873 = vld [vmem:[#allocation11 + $0x2c8] sm:$0xff]
    %v874 = vld [vmem:[#allocation11 + $0x2d0] sm:$0xff]
    %v875 = vld [vmem:[#allocation11 + $0x2d8] sm:$0xff]
    %v876 = vld [vmem:[#allocation11 + $0x2e0] sm:$0xff]
    %v877 = vld [vmem:[#allocation11 + $0x2e8] sm:$0xff]
    %v878 = vld [vmem:[#allocation11 + $0x2f0] sm:$0xff]
    %v879 = vld [vmem:[#allocation11 + $0x2f8] sm:$0xff]
    %v880 = vld [vmem:[#allocation11 + $0x300] sm:$0xff]
    %v881 = vld [vmem:[#allocation11 + $0x308] sm:$0xff]
    %v882 = vld [vmem:[#allocation11 + $0x310] sm:$0xff]
    %v883 = vld [vmem:[#allocation11 + $0x318] sm:$0xff]
    %v884 = vld [vmem:[#allocation11 + $0x320] sm:$0xff]
    %v885 = vld [vmem:[#allocation11 + $0x328] sm:$0xff]
    %v886 = vld [vmem:[#allocation11 + $0x330] sm:$0xff]
    %v887 = vld [vmem:[#allocation11 + $0x338] sm:$0xff]
    %v888 = vld [vmem:[#allocation11 + $0x340] sm:$0xff]
    %v889 = vld [vmem:[#allocation11 + $0x348] sm:$0xff]
    %v890 = vld [vmem:[#allocation11 + $0x350] sm:$0xff]
    %v891 = vld [vmem:[#allocation11 + $0x358] sm:$0xff]
    %v892 = vld [vmem:[#allocation11 + $0x360] sm:$0xff]
    %v893 = vld [vmem:[#allocation11 + $0x368] sm:$0xff]
    %v894 = vld [vmem:[#allocation11 + $0x370] sm:$0xff]
    %v895 = vld [vmem:[#allocation11 + $0x378] sm:$0xff]
    %v896 = vld [vmem:[#allocation11 + $0x380] sm:$0xff]
    %v897 = vld [vmem:[#allocation11 + $0x388] sm:$0xff]
    %v898 = vld [vmem:[#allocation11 + $0x390] sm:$0xff]
    %v899 = vld [vmem:[#allocation11 + $0x398] sm:$0xff]
    %v900 = vld [vmem:[#allocation11 + $0x3a0] sm:$0xff]
    %v901 = vld [vmem:[#allocation11 + $0x3a8] sm:$0xff]
    %v902 = vld [vmem:[#allocation11 + $0x3b0] sm:$0xff]
    %v903 = vld [vmem:[#allocation11 + $0x3b8] sm:$0xff]
    %v904 = vld [vmem:[#allocation11 + $0x3c0] sm:$0xff]
    %v905 = vld [vmem:[#allocation11 + $0x3c8] sm:$0xff]
    %v906 = vld [vmem:[#allocation11 + $0x3d0] sm:$0xff]
    %v907 = vld [vmem:[#allocation11 + $0x3d8] sm:$0xff]
    %v908 = vld [vmem:[#allocation11 + $0x3e0] sm:$0xff]
    %v909 = vld [vmem:[#allocation11 + $0x3e8] sm:$0xff]
    %v910 = vld [vmem:[#allocation11 + $0x3f0] sm:$0xff]
    %v911 = vld [vmem:[#allocation11 + $0x3f8] sm:$0xff]
    %v912 = vld [vmem:[#allocation11 + $0x400] sm:$0xff]
    %v913 = vld [vmem:[#allocation11 + $0x408] sm:$0xff]
    %v914 = vld [vmem:[#allocation11 + $0x410] sm:$0xff]
    %v915 = vld [vmem:[#allocation11 + $0x418] sm:$0xff]
    %v916 = vld [vmem:[#allocation11 + $0x420] sm:$0xff]
    %v917 = vld [vmem:[#allocation11 + $0x428] sm:$0xff]
    %v918 = vld [vmem:[#allocation11 + $0x430] sm:$0xff]
    %v919 = vld [vmem:[#allocation11 + $0x438] sm:$0xff]
    %v920 = vld [vmem:[#allocation11 + $0x440] sm:$0xff]
    %v921 = vld [vmem:[#allocation11 + $0x448] sm:$0xff]
    %v922 = vld [vmem:[#allocation11 + $0x450] sm:$0xff]
    %v923 = vld [vmem:[#allocation11 + $0x458] sm:$0xff]
    %v924 = vld [vmem:[#allocation11 + $0x460] sm:$0xff]
    %v925 = vld [vmem:[#allocation11 + $0x468] sm:$0xff]
    %v926 = vld [vmem:[#allocation11 + $0x470] sm:$0xff]
    %v927 = vld [vmem:[#allocation11 + $0x478] sm:$0xff]
    %v928 = vld [vmem:[#allocation11 + $0x480] sm:$0xff]
    %v929 = vld [vmem:[#allocation11 + $0x488] sm:$0xff]
    %v930 = vld [vmem:[#allocation11 + $0x490] sm:$0xff]
    %v931 = vld [vmem:[#allocation11 + $0x498] sm:$0xff]
    %v932 = vld [vmem:[#allocation11 + $0x4a0] sm:$0xff]
    %v933 = vld [vmem:[#allocation11 + $0x4a8] sm:$0xff]
    %v934 = vld [vmem:[#allocation11 + $0x4b0] sm:$0xff]
    %v935 = vld [vmem:[#allocation11 + $0x4b8] sm:$0xff]
    %v936 = vld [vmem:[#allocation11 + $0x4c0] sm:$0xff]
    %v937 = vld [vmem:[#allocation11 + $0x4c8] sm:$0xff]
    %v938 = vld [vmem:[#allocation11 + $0x4d0] sm:$0xff]
    %v939 = vld [vmem:[#allocation11 + $0x4d8] sm:$0xff]
    %v940 = vld [vmem:[#allocation11 + $0x4e0] sm:$0xff]
    %v941 = vld [vmem:[#allocation11 + $0x4e8] sm:$0xff]
    %v942 = vld [vmem:[#allocation11 + $0x4f0] sm:$0xff]
    %v943 = vld [vmem:[#allocation11 + $0x4f8] sm:$0xff]
    %v944 = vld [vmem:[#allocation11 + $0x500] sm:$0xff]
    %v945 = vld [vmem:[#allocation11 + $0x508] sm:$0xff]
    %v946 = vld [vmem:[#allocation11 + $0x510] sm:$0xff]
    %v947 = vld [vmem:[#allocation11 + $0x518] sm:$0xff]
    %v948 = vld [vmem:[#allocation11 + $0x520] sm:$0xff]
    %v949 = vld [vmem:[#allocation11 + $0x528] sm:$0xff]
    %v950 = vld [vmem:[#allocation11 + $0x530] sm:$0xff]
    %v951 = vld [vmem:[#allocation11 + $0x538] sm:$0xff]
    %v952 = vld [vmem:[#allocation11 + $0x540] sm:$0xff]
    %v953 = vld [vmem:[#allocation11 + $0x548] sm:$0xff]
    %v954 = vld [vmem:[#allocation11 + $0x550] sm:$0xff]
    %v955 = vld [vmem:[#allocation11 + $0x558] sm:$0xff]
    %v956 = vld [vmem:[#allocation11 + $0x560] sm:$0xff]
    %v957 = vld [vmem:[#allocation11 + $0x568] sm:$0xff]
    %v958 = vld [vmem:[#allocation11 + $0x570] sm:$0xff]
    %v959 = vld [vmem:[#allocation11 + $0x578] sm:$0xff]
    %v960 = vld [vmem:[#allocation11 + $0x580] sm:$0xff]
    %v961 = vld [vmem:[#allocation11 + $0x588] sm:$0xff]
    %v962 = vld [vmem:[#allocation11 + $0x590] sm:$0xff]
    %v963 = vld [vmem:[#allocation11 + $0x598] sm:$0xff]
    %v964 = vld [vmem:[#allocation11 + $0x5a0] sm:$0xff]
    %v965 = vld [vmem:[#allocation11 + $0x5a8] sm:$0xff]
    %v966 = vld [vmem:[#allocation11 + $0x5b0] sm:$0xff]
    %v967 = vld [vmem:[#allocation11 + $0x5b8] sm:$0xff]
    %v968 = vld [vmem:[#allocation11 + $0x5c0] sm:$0xff]
    %v969 = vld [vmem:[#allocation11 + $0x5c8] sm:$0xff]
    %v970 = vld [vmem:[#allocation11 + $0x5d0] sm:$0xff]
    %v971 = vld [vmem:[#allocation11 + $0x5d8] sm:$0xff]
    %v972 = vld [vmem:[#allocation11 + $0x5e0] sm:$0xff]
    %v973 = vld [vmem:[#allocation11 + $0x5e8] sm:$0xff]
    %v974 = vld [vmem:[#allocation11 + $0x5f0] sm:$0xff]
    %v975 = vld [vmem:[#allocation11 + $0x5f8] sm:$0xff]
    %v977 = vsel %vm219, %v717, 0
    %v980 = vsel %vm219, %v719, 0
    %982 = vmatpush.msra.mxu0 %v904
    %983 = vmatpush.msra.mxu0 %v896
    %984 = vmatpush.msra.mxu0 %v888
    %985 = vmatpush.msra.mxu0 %v880
    %986 = vmatpush.msra.mxu0 %v872
    %987 = vmatpush.msra.mxu0 %v864
    %988 = vmatpush.msra.mxu0 %v856
    %989 = vmatpush.msra.mxu0 %v848
    %990 = vmatpush.msra.mxu0 %v840
    %991 = vmatpush.msra.mxu0 %v832
    %992 = vmatpush.msra.mxu0 %v824
    %993 = vmatpush.msra.mxu0 %v816
    %994 = vmatpush.msra.mxu0 %v808
    %995 = vmatpush.msra.mxu0 %v800
    %996 = vmatpush.msra.mxu0 %v792
    %997 = vmatpush.msra.mxu0 %v784
    %998 = vmatmul.f32.gmra.mxu0 %v716
    %v999 = vpop.f32.mrf.mxu0
    %v1000 = vadd.f32 0.0, %v999
    %1001 = vmatmul.f32.gmra.mxu0 %v718
    %v1002 = vpop.f32.mrf.mxu0
    %v1003 = vadd.f32 0.0, %v1002
    %1004 = vdwg.mxu0
    %1005 = vmatpush.msra.mxu0 0.0
    %1006 = vmatpush.msra.mxu0 0.0
    %1007 = vmatpush.msra.mxu0 0.0
    %1008 = vmatpush.msra.mxu0 0.0
    %1009 = vmatpush.msra.mxu0 0.0
    %1010 = vmatpush.msra.mxu0 0.0
    %1011 = vmatpush.msra.mxu0 0.0
    %1012 = vmatpush.msra.mxu0 0.0
    %1013 = vmatpush.msra.mxu0 %v968
    %1014 = vmatpush.msra.mxu0 %v960
    %1015 = vmatpush.msra.mxu0 %v952
    %1016 = vmatpush.msra.mxu0 %v944
    %1017 = vmatpush.msra.mxu0 %v936
    %1018 = vmatpush.msra.mxu0 %v928
    %1019 = vmatpush.msra.mxu0 %v920
    %1020 = vmatpush.msra.mxu0 %v912
    %1021 = vmatmul.f32.gmra.mxu0 %v977
    %v1022 = vpop.f32.mrf.mxu0
    %v1023 = vadd.f32 %v1000, %v1022
    %1024 = vmatmul.f32.gmra.mxu0 %v980
    %v1025 = vpop.f32.mrf.mxu0
    %v1026 = vadd.f32 %v1003, %v1025
    %1027 = vdwg.mxu0
    %1028 = vmatpush.msra.mxu0 %v905
    %1029 = vmatpush.msra.mxu0 %v897
    %1030 = vmatpush.msra.mxu0 %v889
    %1031 = vmatpush.msra.mxu0 %v881
    %1032 = vmatpush.msra.mxu0 %v873
    %1033 = vmatpush.msra.mxu0 %v865
    %1034 = vmatpush.msra.mxu0 %v857
    %1035 = vmatpush.msra.mxu0 %v849
    %1036 = vmatpush.msra.mxu0 %v841
    %1037 = vmatpush.msra.mxu0 %v833
    %1038 = vmatpush.msra.mxu0 %v825
    %1039 = vmatpush.msra.mxu0 %v817
    %1040 = vmatpush.msra.mxu0 %v809
    %1041 = vmatpush.msra.mxu0 %v801
    %1042 = vmatpush.msra.mxu0 %v793
    %1043 = vmatpush.msra.mxu0 %v785
    %1044 = vmatmul.f32.gmra.mxu0 %v716
    %v1045 = vpop.f32.mrf.mxu0
    %v1046 = vadd.f32 0.0, %v1045
    %1047 = vmatmul.f32.gmra.mxu0 %v718
    %v1048 = vpop.f32.mrf.mxu0
    %v1049 = vadd.f32 0.0, %v1048
    %1050 = vdwg.mxu0
    %1051 = vmatpush.msra.mxu0 0.0
    %1052 = vmatpush.msra.mxu0 0.0
    %1053 = vmatpush.msra.mxu0 0.0
    %1054 = vmatpush.msra.mxu0 0.0
    %1055 = vmatpush.msra.mxu0 0.0
    %1056 = vmatpush.msra.mxu0 0.0
    %1057 = vmatpush.msra.mxu0 0.0
    %1058 = vmatpush.msra.mxu0 0.0
    %1059 = vmatpush.msra.mxu0 %v969
    %1060 = vmatpush.msra.mxu0 %v961
    %1061 = vmatpush.msra.mxu0 %v953
    %1062 = vmatpush.msra.mxu0 %v945
    %1063 = vmatpush.msra.mxu0 %v937
    %1064 = vmatpush.msra.mxu0 %v929
    %1065 = vmatpush.msra.mxu0 %v921
    %1066 = vmatpush.msra.mxu0 %v913
    %1067 = vmatmul.f32.gmra.mxu0 %v977
    %v1068 = vpop.f32.mrf.mxu0
    %v1069 = vadd.f32 %v1046, %v1068
    %1070 = vmatmul.f32.gmra.mxu0 %v980
    %v1071 = vpop.f32.mrf.mxu0
    %v1072 = vadd.f32 %v1049, %v1071
    %1073 = vdwg.mxu0
    %1074 = vmatpush.msra.mxu0 %v906
    %1075 = vmatpush.msra.mxu0 %v898
    %1076 = vmatpush.msra.mxu0 %v890
    %1077 = vmatpush.msra.mxu0 %v882
    %1078 = vmatpush.msra.mxu0 %v874
    %1079 = vmatpush.msra.mxu0 %v866
    %1080 = vmatpush.msra.mxu0 %v858
    %1081 = vmatpush.msra.mxu0 %v850
    %1082 = vmatpush.msra.mxu0 %v842
    %1083 = vmatpush.msra.mxu0 %v834
    %1084 = vmatpush.msra.mxu0 %v826
    %1085 = vmatpush.msra.mxu0 %v818
    %1086 = vmatpush.msra.mxu0 %v810
    %1087 = vmatpush.msra.mxu0 %v802
    %1088 = vmatpush.msra.mxu0 %v794
    %1089 = vmatpush.msra.mxu0 %v786
    %1090 = vmatmul.f32.gmra.mxu0 %v716
    %v1091 = vpop.f32.mrf.mxu0
    %v1092 = vadd.f32 0.0, %v1091
    %1093 = vmatmul.f32.gmra.mxu0 %v718
    %v1094 = vpop.f32.mrf.mxu0
    %v1095 = vadd.f32 0.0, %v1094
    %1096 = vdwg.mxu0
    %1097 = vmatpush.msra.mxu0 0.0
    %1098 = vmatpush.msra.mxu0 0.0
    %1099 = vmatpush.msra.mxu0 0.0
    %1100 = vmatpush.msra.mxu0 0.0
    %1101 = vmatpush.msra.mxu0 0.0
    %1102 = vmatpush.msra.mxu0 0.0
    %1103 = vmatpush.msra.mxu0 0.0
    %1104 = vmatpush.msra.mxu0 0.0
    %1105 = vmatpush.msra.mxu0 %v970
    %1106 = vmatpush.msra.mxu0 %v962
    %1107 = vmatpush.msra.mxu0 %v954
    %1108 = vmatpush.msra.mxu0 %v946
    %1109 = vmatpush.msra.mxu0 %v938
    %1110 = vmatpush.msra.mxu0 %v930
    %1111 = vmatpush.msra.mxu0 %v922
    %1112 = vmatpush.msra.mxu0 %v914
    %1113 = vmatmul.f32.gmra.mxu0 %v977
    %v1114 = vpop.f32.mrf.mxu0
    %v1115 = vadd.f32 %v1092, %v1114
    %1116 = vmatmul.f32.gmra.mxu0 %v980
    %v1117 = vpop.f32.mrf.mxu0
    %v1118 = vadd.f32 %v1095, %v1117
    %1119 = vdwg.mxu0
    %1120 = vmatpush.msra.mxu0 %v907
    %1121 = vmatpush.msra.mxu0 %v899
    %1122 = vmatpush.msra.mxu0 %v891
    %1123 = vmatpush.msra.mxu0 %v883
    %1124 = vmatpush.msra.mxu0 %v875
    %1125 = vmatpush.msra.mxu0 %v867
    %1126 = vmatpush.msra.mxu0 %v859
    %1127 = vmatpush.msra.mxu0 %v851
    %1128 = vmatpush.msra.mxu0 %v843
    %1129 = vmatpush.msra.mxu0 %v835
    %1130 = vmatpush.msra.mxu0 %v827
    %1131 = vmatpush.msra.mxu0 %v819
    %1132 = vmatpush.msra.mxu0 %v811
    %1133 = vmatpush.msra.mxu0 %v803
    %1134 = vmatpush.msra.mxu0 %v795
    %1135 = vmatpush.msra.mxu0 %v787
    %1136 = vmatmul.f32.gmra.mxu0 %v716
    %v1137 = vpop.f32.mrf.mxu0
    %v1138 = vadd.f32 0.0, %v1137
    %1139 = vmatmul.f32.gmra.mxu0 %v718
    %v1140 = vpop.f32.mrf.mxu0
    %v1141 = vadd.f32 0.0, %v1140
    %1142 = vdwg.mxu0
    %1143 = vmatpush.msra.mxu0 0.0
    %1144 = vmatpush.msra.mxu0 0.0
    %1145 = vmatpush.msra.mxu0 0.0
    %1146 = vmatpush.msra.mxu0 0.0
    %1147 = vmatpush.msra.mxu0 0.0
    %1148 = vmatpush.msra.mxu0 0.0
    %1149 = vmatpush.msra.mxu0 0.0
    %1150 = vmatpush.msra.mxu0 0.0
    %1151 = vmatpush.msra.mxu0 %v971
    %1152 = vmatpush.msra.mxu0 %v963
    %1153 = vmatpush.msra.mxu0 %v955
    %1154 = vmatpush.msra.mxu0 %v947
    %1155 = vmatpush.msra.mxu0 %v939
    %1156 = vmatpush.msra.mxu0 %v931
    %1157 = vmatpush.msra.mxu0 %v923
    %1158 = vmatpush.msra.mxu0 %v915
    %1159 = vmatmul.f32.gmra.mxu0 %v977
    %v1160 = vpop.f32.mrf.mxu0
    %v1161 = vadd.f32 %v1138, %v1160
    %1162 = vmatmul.f32.gmra.mxu0 %v980
    %v1163 = vpop.f32.mrf.mxu0
    %v1164 = vadd.f32 %v1141, %v1163
    %1165 = vdwg.mxu0
    %1166 = vmatpush.msra.mxu0 %v908
    %1167 = vmatpush.msra.mxu0 %v900
    %1168 = vmatpush.msra.mxu0 %v892
    %1169 = vmatpush.msra.mxu0 %v884
    %1170 = vmatpush.msra.mxu0 %v876
    %1171 = vmatpush.msra.mxu0 %v868
    %1172 = vmatpush.msra.mxu0 %v860
    %1173 = vmatpush.msra.mxu0 %v852
    %1174 = vmatpush.msra.mxu0 %v844
    %1175 = vmatpush.msra.mxu0 %v836
    %1176 = vmatpush.msra.mxu0 %v828
    %1177 = vmatpush.msra.mxu0 %v820
    %1178 = vmatpush.msra.mxu0 %v812
    %1179 = vmatpush.msra.mxu0 %v804
    %1180 = vmatpush.msra.mxu0 %v796
    %1181 = vmatpush.msra.mxu0 %v788
    %1182 = vmatmul.f32.gmra.mxu0 %v716
    %v1183 = vpop.f32.mrf.mxu0
    %v1184 = vadd.f32 0.0, %v1183
    %1185 = vmatmul.f32.gmra.mxu0 %v718
    %v1186 = vpop.f32.mrf.mxu0
    %v1187 = vadd.f32 0.0, %v1186
    %1188 = vdwg.mxu0
    %1189 = vmatpush.msra.mxu0 0.0
    %1190 = vmatpush.msra.mxu0 0.0
    %1191 = vmatpush.msra.mxu0 0.0
    %1192 = vmatpush.msra.mxu0 0.0
    %1193 = vmatpush.msra.mxu0 0.0
    %1194 = vmatpush.msra.mxu0 0.0
    %1195 = vmatpush.msra.mxu0 0.0
    %1196 = vmatpush.msra.mxu0 0.0
    %1197 = vmatpush.msra.mxu0 %v972
    %1198 = vmatpush.msra.mxu0 %v964
    %1199 = vmatpush.msra.mxu0 %v956
    %1200 = vmatpush.msra.mxu0 %v948
    %1201 = vmatpush.msra.mxu0 %v940
    %1202 = vmatpush.msra.mxu0 %v932
    %1203 = vmatpush.msra.mxu0 %v924
    %1204 = vmatpush.msra.mxu0 %v916
    %1205 = vmatmul.f32.gmra.mxu0 %v977
    %v1206 = vpop.f32.mrf.mxu0
    %v1207 = vadd.f32 %v1184, %v1206
    %1208 = vmatmul.f32.gmra.mxu0 %v980
    %v1209 = vpop.f32.mrf.mxu0
    %v1210 = vadd.f32 %v1187, %v1209
    %1211 = vdwg.mxu0
    %1212 = vmatpush.msra.mxu0 %v909
    %1213 = vmatpush.msra.mxu0 %v901
    %1214 = vmatpush.msra.mxu0 %v893
    %1215 = vmatpush.msra.mxu0 %v885
    %1216 = vmatpush.msra.mxu0 %v877
    %1217 = vmatpush.msra.mxu0 %v869
    %1218 = vmatpush.msra.mxu0 %v861
    %1219 = vmatpush.msra.mxu0 %v853
    %1220 = vmatpush.msra.mxu0 %v845
    %1221 = vmatpush.msra.mxu0 %v837
    %1222 = vmatpush.msra.mxu0 %v829
    %1223 = vmatpush.msra.mxu0 %v821
    %1224 = vmatpush.msra.mxu0 %v813
    %1225 = vmatpush.msra.mxu0 %v805
    %1226 = vmatpush.msra.mxu0 %v797
    %1227 = vmatpush.msra.mxu0 %v789
    %1228 = vmatmul.f32.gmra.mxu0 %v716
    %v1229 = vpop.f32.mrf.mxu0
    %v1230 = vadd.f32 0.0, %v1229
    %1231 = vmatmul.f32.gmra.mxu0 %v718
    %v1232 = vpop.f32.mrf.mxu0
    %v1233 = vadd.f32 0.0, %v1232
    %1234 = vdwg.mxu0
    %1235 = vmatpush.msra.mxu0 0.0
    %1236 = vmatpush.msra.mxu0 0.0
    %1237 = vmatpush.msra.mxu0 0.0
    %1238 = vmatpush.msra.mxu0 0.0
    %1239 = vmatpush.msra.mxu0 0.0
    %1240 = vmatpush.msra.mxu0 0.0
    %1241 = vmatpush.msra.mxu0 0.0
    %1242 = vmatpush.msra.mxu0 0.0
    %1243 = vmatpush.msra.mxu0 %v973
    %1244 = vmatpush.msra.mxu0 %v965
    %1245 = vmatpush.msra.mxu0 %v957
    %1246 = vmatpush.msra.mxu0 %v949
    %1247 = vmatpush.msra.mxu0 %v941
    %1248 = vmatpush.msra.mxu0 %v933
    %1249 = vmatpush.msra.mxu0 %v925
    %1250 = vmatpush.msra.mxu0 %v917
    %1251 = vmatmul.f32.gmra.mxu0 %v977
    %v1252 = vpop.f32.mrf.mxu0
    %v1253 = vadd.f32 %v1230, %v1252
    %1254 = vmatmul.f32.gmra.mxu0 %v980
    %v1255 = vpop.f32.mrf.mxu0
    %v1256 = vadd.f32 %v1233, %v1255
    %1257 = vdwg.mxu0
    %1258 = vmatpush.msra.mxu0 %v910
    %1259 = vmatpush.msra.mxu0 %v902
    %1260 = vmatpush.msra.mxu0 %v894
    %1261 = vmatpush.msra.mxu0 %v886
    %1262 = vmatpush.msra.mxu0 %v878
    %1263 = vmatpush.msra.mxu0 %v870
    %1264 = vmatpush.msra.mxu0 %v862
    %1265 = vmatpush.msra.mxu0 %v854
    %1266 = vmatpush.msra.mxu0 %v846
    %1267 = vmatpush.msra.mxu0 %v838
    %1268 = vmatpush.msra.mxu0 %v830
    %1269 = vmatpush.msra.mxu0 %v822
    %1270 = vmatpush.msra.mxu0 %v814
    %1271 = vmatpush.msra.mxu0 %v806
    %1272 = vmatpush.msra.mxu0 %v798
    %1273 = vmatpush.msra.mxu0 %v790
    %1274 = vmatmul.f32.gmra.mxu0 %v716
    %v1275 = vpop.f32.mrf.mxu0
    %v1276 = vadd.f32 0.0, %v1275
    %1277 = vmatmul.f32.gmra.mxu0 %v718
    %v1278 = vpop.f32.mrf.mxu0
    %v1279 = vadd.f32 0.0, %v1278
    %1280 = vdwg.mxu0
    %1281 = vmatpush.msra.mxu0 0.0
    %1282 = vmatpush.msra.mxu0 0.0
    %1283 = vmatpush.msra.mxu0 0.0
    %1284 = vmatpush.msra.mxu0 0.0
    %1285 = vmatpush.msra.mxu0 0.0
    %1286 = vmatpush.msra.mxu0 0.0
    %1287 = vmatpush.msra.mxu0 0.0
    %1288 = vmatpush.msra.mxu0 0.0
    %1289 = vmatpush.msra.mxu0 %v974
    %1290 = vmatpush.msra.mxu0 %v966
    %1291 = vmatpush.msra.mxu0 %v958
    %1292 = vmatpush.msra.mxu0 %v950
    %1293 = vmatpush.msra.mxu0 %v942
    %1294 = vmatpush.msra.mxu0 %v934
    %1295 = vmatpush.msra.mxu0 %v926
    %1296 = vmatpush.msra.mxu0 %v918
    %1297 = vmatmul.f32.gmra.mxu0 %v977
    %v1298 = vpop.f32.mrf.mxu0
    %v1299 = vadd.f32 %v1276, %v1298
    %1300 = vmatmul.f32.gmra.mxu0 %v980
    %v1301 = vpop.f32.mrf.mxu0
    %v1302 = vadd.f32 %v1279, %v1301
    %1303 = vdwg.mxu0
    %1304 = vmatpush.msra.mxu0 %v911
    %1305 = vmatpush.msra.mxu0 %v903
    %1306 = vmatpush.msra.mxu0 %v895
    %1307 = vmatpush.msra.mxu0 %v887
    %1308 = vmatpush.msra.mxu0 %v879
    %1309 = vmatpush.msra.mxu0 %v871
    %1310 = vmatpush.msra.mxu0 %v863
    %1311 = vmatpush.msra.mxu0 %v855
    %1312 = vmatpush.msra.mxu0 %v847
    %1313 = vmatpush.msra.mxu0 %v839
    %1314 = vmatpush.msra.mxu0 %v831
    %1315 = vmatpush.msra.mxu0 %v823
    %1316 = vmatpush.msra.mxu0 %v815
    %1317 = vmatpush.msra.mxu0 %v807
    %1318 = vmatpush.msra.mxu0 %v799
    %1319 = vmatpush.msra.mxu0 %v791
    %1320 = vmatmul.f32.gmra.mxu0 %v716
    %v1321 = vpop.f32.mrf.mxu0
    %v1322 = vadd.f32 0.0, %v1321
    %1323 = vmatmul.f32.gmra.mxu0 %v718
    %v1324 = vpop.f32.mrf.mxu0
    %v1325 = vadd.f32 0.0, %v1324
    %1326 = vdwg.mxu0
    %1327 = vmatpush.msra.mxu0 0.0
    %1328 = vmatpush.msra.mxu0 0.0
    %1329 = vmatpush.msra.mxu0 0.0
    %1330 = vmatpush.msra.mxu0 0.0
    %1331 = vmatpush.msra.mxu0 0.0
    %1332 = vmatpush.msra.mxu0 0.0
    %1333 = vmatpush.msra.mxu0 0.0
    %1334 = vmatpush.msra.mxu0 0.0
    %1335 = vmatpush.msra.mxu0 %v975
    %1336 = vmatpush.msra.mxu0 %v967
    %1337 = vmatpush.msra.mxu0 %v959
    %1338 = vmatpush.msra.mxu0 %v951
    %1339 = vmatpush.msra.mxu0 %v943
    %1340 = vmatpush.msra.mxu0 %v935
    %1341 = vmatpush.msra.mxu0 %v927
    %1342 = vmatpush.msra.mxu0 %v919
    %1343 = vmatmul.f32.gmra.mxu0 %v977
    %v1344 = vpop.f32.mrf.mxu0
    %v1345 = vadd.f32 %v1322, %v1344
    %1346 = vmatmul.f32.gmra.mxu0 %v980
    %v1347 = vpop.f32.mrf.mxu0
    %v1348 = vadd.f32 %v1325, %v1347
    %1349 = vdwg.mxu0
    %1350 = vmatpush.msra.mxu0 0.0
    %1351 = vmatpush.msra.mxu0 0.0
    %1352 = vmatpush.msra.mxu0 0.0
    %1353 = vmatpush.msra.mxu0 0.0
    %1354 = vmatpush.msra.mxu0 0.0
    %1355 = vmatpush.msra.mxu0 0.0
    %1356 = vmatpush.msra.mxu0 0.0
    %1357 = vmatpush.msra.mxu0 0.0
    %1358 = vmatpush.msra.mxu0 %v776
    %1359 = vmatpush.msra.mxu0 %v768
    %1360 = vmatpush.msra.mxu0 %v760
    %1361 = vmatpush.msra.mxu0 %v752
    %1362 = vmatpush.msra.mxu0 %v744
    %1363 = vmatpush.msra.mxu0 %v736
    %1364 = vmatpush.msra.mxu0 %v728
    %1365 = vmatpush.msra.mxu0 %v720
    %1366 = vmatmul.f32.gmra.mxu0 %v440
    %v1367 = vpop.f32.mrf.mxu0
    %v1368 = vadd.f32 %v1023, %v1367
    %1369 = vmatmul.f32.gmra.mxu0 %v443
    %v1370 = vpop.f32.mrf.mxu0
    %v1371 = vadd.f32 %v1026, %v1370
    %1372 = vdwg.mxu0
    %1373 = vmatpush.msra.mxu0 0.0
    %1374 = vmatpush.msra.mxu0 0.0
    %1375 = vmatpush.msra.mxu0 0.0
    %1376 = vmatpush.msra.mxu0 0.0
    %1377 = vmatpush.msra.mxu0 0.0
    %1378 = vmatpush.msra.mxu0 0.0
    %1379 = vmatpush.msra.mxu0 0.0
    %1380 = vmatpush.msra.mxu0 0.0
    %1381 = vmatpush.msra.mxu0 %v777
    %1382 = vmatpush.msra.mxu0 %v769
    %1383 = vmatpush.msra.mxu0 %v761
    %1384 = vmatpush.msra.mxu0 %v753
    %1385 = vmatpush.msra.mxu0 %v745
    %1386 = vmatpush.msra.mxu0 %v737
    %1387 = vmatpush.msra.mxu0 %v729
    %1388 = vmatpush.msra.mxu0 %v721
    %1389 = vmatmul.f32.gmra.mxu0 %v440
    %v1390 = vpop.f32.mrf.mxu0
    %v1391 = vadd.f32 %v1069, %v1390
    %1392 = vmatmul.f32.gmra.mxu0 %v443
    %v1393 = vpop.f32.mrf.mxu0
    %v1394 = vadd.f32 %v1072, %v1393
    %1395 = vdwg.mxu0
    %1396 = vmatpush.msra.mxu0 0.0
    %1397 = vmatpush.msra.mxu0 0.0
    %1398 = vmatpush.msra.mxu0 0.0
    %1399 = vmatpush.msra.mxu0 0.0
    %1400 = vmatpush.msra.mxu0 0.0
    %1401 = vmatpush.msra.mxu0 0.0
    %1402 = vmatpush.msra.mxu0 0.0
    %1403 = vmatpush.msra.mxu0 0.0
    %1404 = vmatpush.msra.mxu0 %v778
    %1405 = vmatpush.msra.mxu0 %v770
    %1406 = vmatpush.msra.mxu0 %v762
    %1407 = vmatpush.msra.mxu0 %v754
    %1408 = vmatpush.msra.mxu0 %v746
    %1409 = vmatpush.msra.mxu0 %v738
    %1410 = vmatpush.msra.mxu0 %v730
    %1411 = vmatpush.msra.mxu0 %v722
    %1412 = vmatmul.f32.gmra.mxu0 %v440
    %v1413 = vpop.f32.mrf.mxu0
    %v1414 = vadd.f32 %v1115, %v1413
    %1415 = vmatmul.f32.gmra.mxu0 %v443
    %v1416 = vpop.f32.mrf.mxu0
    %v1417 = vadd.f32 %v1118, %v1416
    %1418 = vdwg.mxu0
    %1419 = vmatpush.msra.mxu0 0.0
    %1420 = vmatpush.msra.mxu0 0.0
    %1421 = vmatpush.msra.mxu0 0.0
    %1422 = vmatpush.msra.mxu0 0.0
    %1423 = vmatpush.msra.mxu0 0.0
    %1424 = vmatpush.msra.mxu0 0.0
    %1425 = vmatpush.msra.mxu0 0.0
    %1426 = vmatpush.msra.mxu0 0.0
    %1427 = vmatpush.msra.mxu0 %v779
    %1428 = vmatpush.msra.mxu0 %v771
    %1429 = vmatpush.msra.mxu0 %v763
    %1430 = vmatpush.msra.mxu0 %v755
    %1431 = vmatpush.msra.mxu0 %v747
    %1432 = vmatpush.msra.mxu0 %v739
    %1433 = vmatpush.msra.mxu0 %v731
    %1434 = vmatpush.msra.mxu0 %v723
    %1435 = vmatmul.f32.gmra.mxu0 %v440
    %v1436 = vpop.f32.mrf.mxu0
    %v1437 = vadd.f32 %v1161, %v1436
    %1438 = vmatmul.f32.gmra.mxu0 %v443
    %v1439 = vpop.f32.mrf.mxu0
    %v1440 = vadd.f32 %v1164, %v1439
    %1441 = vdwg.mxu0
    %1442 = vmatpush.msra.mxu0 0.0
    %1443 = vmatpush.msra.mxu0 0.0
    %1444 = vmatpush.msra.mxu0 0.0
    %1445 = vmatpush.msra.mxu0 0.0
    %1446 = vmatpush.msra.mxu0 0.0
    %1447 = vmatpush.msra.mxu0 0.0
    %1448 = vmatpush.msra.mxu0 0.0
    %1449 = vmatpush.msra.mxu0 0.0
    %1450 = vmatpush.msra.mxu0 %v780
    %1451 = vmatpush.msra.mxu0 %v772
    %1452 = vmatpush.msra.mxu0 %v764
    %1453 = vmatpush.msra.mxu0 %v756
    %1454 = vmatpush.msra.mxu0 %v748
    %1455 = vmatpush.msra.mxu0 %v740
    %1456 = vmatpush.msra.mxu0 %v732
    %1457 = vmatpush.msra.mxu0 %v724
    %1458 = vmatmul.f32.gmra.mxu0 %v440
    %v1459 = vpop.f32.mrf.mxu0
    %v1460 = vadd.f32 %v1207, %v1459
    %1461 = vmatmul.f32.gmra.mxu0 %v443
    %v1462 = vpop.f32.mrf.mxu0
    %v1463 = vadd.f32 %v1210, %v1462
    %1464 = vdwg.mxu0
    %1465 = vmatpush.msra.mxu0 0.0
    %1466 = vmatpush.msra.mxu0 0.0
    %1467 = vmatpush.msra.mxu0 0.0
    %1468 = vmatpush.msra.mxu0 0.0
    %1469 = vmatpush.msra.mxu0 0.0
    %1470 = vmatpush.msra.mxu0 0.0
    %1471 = vmatpush.msra.mxu0 0.0
    %1472 = vmatpush.msra.mxu0 0.0
    %1473 = vmatpush.msra.mxu0 %v781
    %1474 = vmatpush.msra.mxu0 %v773
    %1475 = vmatpush.msra.mxu0 %v765
    %1476 = vmatpush.msra.mxu0 %v757
    %1477 = vmatpush.msra.mxu0 %v749
    %1478 = vmatpush.msra.mxu0 %v741
    %1479 = vmatpush.msra.mxu0 %v733
    %1480 = vmatpush.msra.mxu0 %v725
    %1481 = vmatmul.f32.gmra.mxu0 %v440
    %v1482 = vpop.f32.mrf.mxu0
    %v1483 = vadd.f32 %v1253, %v1482
    %1484 = vmatmul.f32.gmra.mxu0 %v443
    %v1485 = vpop.f32.mrf.mxu0
    %v1486 = vadd.f32 %v1256, %v1485
    %1487 = vdwg.mxu0
    %1488 = vmatpush.msra.mxu0 0.0
    %1489 = vmatpush.msra.mxu0 0.0
    %1490 = vmatpush.msra.mxu0 0.0
    %1491 = vmatpush.msra.mxu0 0.0
    %1492 = vmatpush.msra.mxu0 0.0
    %1493 = vmatpush.msra.mxu0 0.0
    %1494 = vmatpush.msra.mxu0 0.0
    %1495 = vmatpush.msra.mxu0 0.0
    %1496 = vmatpush.msra.mxu0 %v782
    %1497 = vmatpush.msra.mxu0 %v774
    %1498 = vmatpush.msra.mxu0 %v766
    %1499 = vmatpush.msra.mxu0 %v758
    %1500 = vmatpush.msra.mxu0 %v750
    %1501 = vmatpush.msra.mxu0 %v742
    %1502 = vmatpush.msra.mxu0 %v734
    %1503 = vmatpush.msra.mxu0 %v726
    %1504 = vmatmul.f32.gmra.mxu0 %v440
    %v1505 = vpop.f32.mrf.mxu0
    %v1506 = vadd.f32 %v1299, %v1505
    %1507 = vmatmul.f32.gmra.mxu0 %v443
    %v1508 = vpop.f32.mrf.mxu0
    %v1509 = vadd.f32 %v1302, %v1508
    %1510 = vdwg.mxu0
    %1511 = vmatpush.msra.mxu0 0.0
    %1512 = vmatpush.msra.mxu0 0.0
    %1513 = vmatpush.msra.mxu0 0.0
    %1514 = vmatpush.msra.mxu0 0.0
    %1515 = vmatpush.msra.mxu0 0.0
    %1516 = vmatpush.msra.mxu0 0.0
    %1517 = vmatpush.msra.mxu0 0.0
    %1518 = vmatpush.msra.mxu0 0.0
    %1519 = vmatpush.msra.mxu0 %v783
    %1520 = vmatpush.msra.mxu0 %v775
    %1521 = vmatpush.msra.mxu0 %v767
    %1522 = vmatpush.msra.mxu0 %v759
    %1523 = vmatpush.msra.mxu0 %v751
    %1524 = vmatpush.msra.mxu0 %v743
    %1525 = vmatpush.msra.mxu0 %v735
    %1526 = vmatpush.msra.mxu0 %v727
    %1527 = vmatmul.f32.gmra.mxu0 %v440
    %v1528 = vpop.f32.mrf.mxu0
    %v1529 = vadd.f32 %v1345, %v1528
    %1530 = vmatmul.f32.gmra.mxu0 %v443
    %v1531 = vpop.f32.mrf.mxu0
    %v1532 = vadd.f32 %v1348, %v1531
    %1533 = vdwg.mxu0
    %v1534 = vld [vmem:[%s6] sm:$0xff]
    %v1536 = vperm.slane %v1534, 0
    %v1537 = vperm.slane %v1534, 1
    %v1538 = vperm.slane %v1534, 2
    %v1539 = vperm.slane %v1534, 3
    %v1540 = vperm.slane %v1534, 4
    %v1541 = vperm.slane %v1534, 5
    %v1542 = vperm.slane %v1534, 6
    %v1543 = vperm.slane %v1534, 7
    %v1552 = vadd.f32 %v1368, %v1536
    %v1553 = vadd.f32 %v1391, %v1537
    %v1554 = vadd.f32 %v1414, %v1538
    %v1555 = vadd.f32 %v1437, %v1539
    %v1556 = vadd.f32 %v1460, %v1540
    %v1557 = vadd.f32 %v1483, %v1541
    %v1558 = vadd.f32 %v1506, %v1542
    %v1559 = vadd.f32 %v1529, %v1543
    %v1560 = vadd.f32 %v1371, %v1536
    %v1561 = vadd.f32 %v1394, %v1537
    %v1562 = vadd.f32 %v1417, %v1538
    %v1563 = vadd.f32 %v1440, %v1539
    %v1564 = vadd.f32 %v1463, %v1540
    %v1565 = vadd.f32 %v1486, %v1541
    %v1566 = vadd.f32 %v1509, %v1542
    %v1567 = vadd.f32 %v1532, %v1543
    %v1568 = vld [vmem:[#allocation12] sm:$0xff]
    %v1569 = vld [vmem:[#allocation12 + $0x8] sm:$0xff]
    %v1570 = vld [vmem:[#allocation12 + $0x10] sm:$0xff]
    %v1571 = vld [vmem:[#allocation12 + $0x18] sm:$0xff]
    %v1572 = vld [vmem:[#allocation12 + $0x20] sm:$0xff]
    %v1573 = vld [vmem:[#allocation12 + $0x28] sm:$0xff]
    %v1574 = vld [vmem:[#allocation12 + $0x30] sm:$0xff]
    %v1575 = vld [vmem:[#allocation12 + $0x38] sm:$0xff]
    %v1576 = vld [vmem:[#allocation12 + $0x40] sm:$0xff]
    %v1577 = vld [vmem:[#allocation12 + $0x48] sm:$0xff]
    %v1578 = vld [vmem:[#allocation12 + $0x50] sm:$0xff]
    %v1579 = vld [vmem:[#allocation12 + $0x58] sm:$0xff]
    %v1580 = vld [vmem:[#allocation12 + $0x60] sm:$0xff]
    %v1581 = vld [vmem:[#allocation12 + $0x68] sm:$0xff]
    %v1582 = vld [vmem:[#allocation12 + $0x70] sm:$0xff]
    %v1583 = vld [vmem:[#allocation12 + $0x78] sm:$0xff]
    %v1584 = vld [vmem:[#allocation12 + $0x80] sm:$0xff]
    %v1585 = vld [vmem:[#allocation12 + $0x88] sm:$0xff]
    %v1586 = vld [vmem:[#allocation12 + $0x90] sm:$0xff]
    %v1587 = vld [vmem:[#allocation12 + $0x98] sm:$0xff]
    %v1588 = vld [vmem:[#allocation12 + $0xa0] sm:$0xff]
    %v1589 = vld [vmem:[#allocation12 + $0xa8] sm:$0xff]
    %v1590 = vld [vmem:[#allocation12 + $0xb0] sm:$0xff]
    %v1591 = vld [vmem:[#allocation12 + $0xb8] sm:$0xff]
    %v1592 = vld [vmem:[#allocation12 + $0xc0] sm:$0xff]
    %v1593 = vld [vmem:[#allocation12 + $0xc8] sm:$0xff]
    %v1594 = vld [vmem:[#allocation12 + $0xd0] sm:$0xff]
    %v1595 = vld [vmem:[#allocation12 + $0xd8] sm:$0xff]
    %v1596 = vld [vmem:[#allocation12 + $0xe0] sm:$0xff]
    %v1597 = vld [vmem:[#allocation12 + $0xe8] sm:$0xff]
    %v1598 = vld [vmem:[#allocation12 + $0xf0] sm:$0xff]
    %v1599 = vld [vmem:[#allocation12 + $0xf8] sm:$0xff]
    %v1600 = vld [vmem:[#allocation12 + $0x100] sm:$0xff]
    %v1601 = vld [vmem:[#allocation12 + $0x108] sm:$0xff]
    %v1602 = vld [vmem:[#allocation12 + $0x110] sm:$0xff]
    %v1603 = vld [vmem:[#allocation12 + $0x118] sm:$0xff]
    %v1604 = vld [vmem:[#allocation12 + $0x120] sm:$0xff]
    %v1605 = vld [vmem:[#allocation12 + $0x128] sm:$0xff]
    %v1606 = vld [vmem:[#allocation12 + $0x130] sm:$0xff]
    %v1607 = vld [vmem:[#allocation12 + $0x138] sm:$0xff]
    %v1608 = vld [vmem:[#allocation12 + $0x140] sm:$0xff]
    %v1609 = vld [vmem:[#allocation12 + $0x148] sm:$0xff]
    %v1610 = vld [vmem:[#allocation12 + $0x150] sm:$0xff]
    %v1611 = vld [vmem:[#allocation12 + $0x158] sm:$0xff]
    %v1612 = vld [vmem:[#allocation12 + $0x160] sm:$0xff]
    %v1613 = vld [vmem:[#allocation12 + $0x168] sm:$0xff]
    %v1614 = vld [vmem:[#allocation12 + $0x170] sm:$0xff]
    %v1615 = vld [vmem:[#allocation12 + $0x178] sm:$0xff]
    %v1616 = vld [vmem:[#allocation12 + $0x180] sm:$0xff]
    %v1617 = vld [vmem:[#allocation12 + $0x188] sm:$0xff]
    %v1618 = vld [vmem:[#allocation12 + $0x190] sm:$0xff]
    %v1619 = vld [vmem:[#allocation12 + $0x198] sm:$0xff]
    %v1620 = vld [vmem:[#allocation12 + $0x1a0] sm:$0xff]
    %v1621 = vld [vmem:[#allocation12 + $0x1a8] sm:$0xff]
    %v1622 = vld [vmem:[#allocation12 + $0x1b0] sm:$0xff]
    %v1623 = vld [vmem:[#allocation12 + $0x1b8] sm:$0xff]
    %v1624 = vld [vmem:[#allocation12 + $0x1c0] sm:$0xff]
    %v1625 = vld [vmem:[#allocation12 + $0x1c8] sm:$0xff]
    %v1626 = vld [vmem:[#allocation12 + $0x1d0] sm:$0xff]
    %v1627 = vld [vmem:[#allocation12 + $0x1d8] sm:$0xff]
    %v1628 = vld [vmem:[#allocation12 + $0x1e0] sm:$0xff]
    %v1629 = vld [vmem:[#allocation12 + $0x1e8] sm:$0xff]
    %v1630 = vld [vmem:[#allocation12 + $0x1f0] sm:$0xff]
    %v1631 = vld [vmem:[#allocation12 + $0x1f8] sm:$0xff]
    %v1632 = vld [vmem:[%s11] sm:$0x1]
    %v1633 = vld [vmem:[%s12] sm:$0x1]
    %v1635 = vperm.slane %v1632, 0
    %v1638 = vperm.slane %v1633, 0
    %1640 = vmatpush.msra.mxu0 %v1628
    %1641 = vmatpush.msra.mxu0 %v1624
    %1642 = vmatpush.msra.mxu0 %v1620
    %1643 = vmatpush.msra.mxu0 %v1616
    %1644 = vmatpush.msra.mxu0 %v1612
    %1645 = vmatpush.msra.mxu0 %v1608
    %1646 = vmatpush.msra.mxu0 %v1604
    %1647 = vmatpush.msra.mxu0 %v1600
    %1648 = vmatpush.msra.mxu0 %v1596
    %1649 = vmatpush.msra.mxu0 %v1592
    %1650 = vmatpush.msra.mxu0 %v1588
    %1651 = vmatpush.msra.mxu0 %v1584
    %1652 = vmatpush.msra.mxu0 %v1580
    %1653 = vmatpush.msra.mxu0 %v1576
    %1654 = vmatpush.msra.mxu0 %v1572
    %1655 = vmatpush.msra.mxu0 %v1568
    %1656 = vmatmul.f32.gmra.mxu0 %v1635
    %v1657 = vpop.f32.mrf.mxu0
    %v1658 = vadd.f32 0.0, %v1657
    %1659 = vdwg.mxu0
    %1660 = vmatpush.msra.mxu0 %v1629
    %1661 = vmatpush.msra.mxu0 %v1625
    %1662 = vmatpush.msra.mxu0 %v1621
    %1663 = vmatpush.msra.mxu0 %v1617
    %1664 = vmatpush.msra.mxu0 %v1613
    %1665 = vmatpush.msra.mxu0 %v1609
    %1666 = vmatpush.msra.mxu0 %v1605
    %1667 = vmatpush.msra.mxu0 %v1601
    %1668 = vmatpush.msra.mxu0 %v1597
    %1669 = vmatpush.msra.mxu0 %v1593
    %1670 = vmatpush.msra.mxu0 %v1589
    %1671 = vmatpush.msra.mxu0 %v1585
    %1672 = vmatpush.msra.mxu0 %v1581
    %1673 = vmatpush.msra.mxu0 %v1577
    %1674 = vmatpush.msra.mxu0 %v1573
    %1675 = vmatpush.msra.mxu0 %v1569
    %1676 = vmatmul.f32.gmra.mxu0 %v1635
    %v1677 = vpop.f32.mrf.mxu0
    %v1678 = vadd.f32 0.0, %v1677
    %1679 = vdwg.mxu0
    %1680 = vmatpush.msra.mxu0 %v1630
    %1681 = vmatpush.msra.mxu0 %v1626
    %1682 = vmatpush.msra.mxu0 %v1622
    %1683 = vmatpush.msra.mxu0 %v1618
    %1684 = vmatpush.msra.mxu0 %v1614
    %1685 = vmatpush.msra.mxu0 %v1610
    %1686 = vmatpush.msra.mxu0 %v1606
    %1687 = vmatpush.msra.mxu0 %v1602
    %1688 = vmatpush.msra.mxu0 %v1598
    %1689 = vmatpush.msra.mxu0 %v1594
    %1690 = vmatpush.msra.mxu0 %v1590
    %1691 = vmatpush.msra.mxu0 %v1586
    %1692 = vmatpush.msra.mxu0 %v1582
    %1693 = vmatpush.msra.mxu0 %v1578
    %1694 = vmatpush.msra.mxu0 %v1574
    %1695 = vmatpush.msra.mxu0 %v1570
    %1696 = vmatmul.f32.gmra.mxu0 %v1635
    %v1697 = vpop.f32.mrf.mxu0
    %v1698 = vadd.f32 0.0, %v1697
    %1699 = vdwg.mxu0
    %1700 = vmatpush.msra.mxu0 %v1631
    %1701 = vmatpush.msra.mxu0 %v1627
    %1702 = vmatpush.msra.mxu0 %v1623
    %1703 = vmatpush.msra.mxu0 %v1619
    %1704 = vmatpush.msra.mxu0 %v1615
    %1705 = vmatpush.msra.mxu0 %v1611
    %1706 = vmatpush.msra.mxu0 %v1607
    %1707 = vmatpush.msra.mxu0 %v1603
    %1708 = vmatpush.msra.mxu0 %v1599
    %1709 = vmatpush.msra.mxu0 %v1595
    %1710 = vmatpush.msra.mxu0 %v1591
    %1711 = vmatpush.msra.mxu0 %v1587
    %1712 = vmatpush.msra.mxu0 %v1583
    %1713 = vmatpush.msra.mxu0 %v1579
    %1714 = vmatpush.msra.mxu0 %v1575
    %1715 = vmatpush.msra.mxu0 %v1571
    %1716 = vmatmul.f32.gmra.mxu0 %v1635
    %v1717 = vpop.f32.mrf.mxu0
    %v1718 = vadd.f32 0.0, %v1717
    %1719 = vdwg.mxu0
    %v1720 = vadd.f32 %v1552, %v1658
    %v1721 = vadd.f32 %v1553, %v1678
    %v1722 = vadd.f32 %v1554, %v1698
    %v1723 = vadd.f32 %v1555, %v1718
    %v1724 = vxor.u32 %v1720, 2147483648
    %v1725 = vmul.f32 %v1724, 1.442695
    %v1726 = vpow.pop %v1725
    %v1727 = vadd.f32 %v1726, 1.0
    %v1728 = vrcp.pop %v1727
    %v1729 = vmul.f32 %v1727, %v1728
    %v1730 = vsub.f32 1.0, %v1729
    %v1731 = vmul.f32 %v1728, %v1730
    %v1732 = vadd.f32 %v1728, %v1731
    %vm1733 = vweird.f32 %v1727
    %vm1734 = vweird.f32 %v1728
    %vm1735 = vmor %vm1733, %vm1734
    %v1736 = vsel %vm1735, %v1728, %v1732
    %v1737 = vand.u32 2147483647, %v1727
    %vm1738 = vcmp.eq.f32.partialorder %v1737, 8.507059e+37
    %v1739 = vand.u32 %v1727, 2147483648
    %v1740 = vor.u32 1.1754944e-38, %v1739
    %v1741 = vsel %vm1738, %v1740, %v1736
    %v1742 = vmul.f32 1.0, %v1741
    %v1743 = vxor.u32 %v1721, 2147483648
    %v1744 = vmul.f32 %v1743, 1.442695
    %v1745 = vpow.pop %v1744
    %v1746 = vadd.f32 %v1745, 1.0
    %v1747 = vrcp.pop %v1746
    %v1748 = vmul.f32 %v1746, %v1747
    %v1749 = vsub.f32 1.0, %v1748
    %v1750 = vmul.f32 %v1747, %v1749
    %v1751 = vadd.f32 %v1747, %v1750
    %vm1752 = vweird.f32 %v1746
    %vm1753 = vweird.f32 %v1747
    %vm1754 = vmor %vm1752, %vm1753
    %v1755 = vsel %vm1754, %v1747, %v1751
    %v1756 = vand.u32 2147483647, %v1746
    %vm1757 = vcmp.eq.f32.partialorder %v1756, 8.507059e+37
    %v1758 = vand.u32 %v1746, 2147483648
    %v1759 = vor.u32 1.1754944e-38, %v1758
    %v1760 = vsel %vm1757, %v1759, %v1755
    %v1761 = vmul.f32 1.0, %v1760
    %v1762 = vtanh.pop %v1722
    %v1763 = vxor.u32 %v1723, 2147483648
    %v1764 = vmul.f32 %v1763, 1.442695
    %v1765 = vpow.pop %v1764
    %v1766 = vadd.f32 %v1765, 1.0
    %v1767 = vrcp.pop %v1766
    %v1768 = vmul.f32 %v1766, %v1767
    %v1769 = vsub.f32 1.0, %v1768
    %v1770 = vmul.f32 %v1767, %v1769
    %v1771 = vadd.f32 %v1767, %v1770
    %vm1772 = vweird.f32 %v1766
    %vm1773 = vweird.f32 %v1767
    %vm1774 = vmor %vm1772, %vm1773
    %v1775 = vsel %vm1774, %v1767, %v1771
    %v1776 = vand.u32 2147483647, %v1766
    %vm1777 = vcmp.eq.f32.partialorder %v1776, 8.507059e+37
    %v1778 = vand.u32 %v1766, 2147483648
    %v1779 = vor.u32 1.1754944e-38, %v1778
    %v1780 = vsel %vm1777, %v1779, %v1775
    %v1781 = vmul.f32 1.0, %v1780
    %v1782 = vmul.f32 %v1761, %v1638
    %v1783 = vmul.f32 %v1742, %v1762
    %v1784 = vadd.f32 %v1782, %v1783
    %v1785 = vtanh.pop %v1784
    %v1786 = vmul.f32 %v1781, %v1785
    %1787 = vst [vmem:[#allocation2] sm:$0x3] %v1786
    %1788 = vmatpush.msra.mxu0 %v1628
    %1789 = vmatpush.msra.mxu0 %v1624
    %1790 = vmatpush.msra.mxu0 %v1620
    %1791 = vmatpush.msra.mxu0 %v1616
    %1792 = vmatpush.msra.mxu0 %v1612
    %1793 = vmatpush.msra.mxu0 %v1608
    %1794 = vmatpush.msra.mxu0 %v1604
    %1795 = vmatpush.msra.mxu0 %v1600
    %1796 = vmatpush.msra.mxu0 %v1596
    %1797 = vmatpush.msra.mxu0 %v1592
    %1798 = vmatpush.msra.mxu0 %v1588
    %1799 = vmatpush.msra.mxu0 %v1584
    %1800 = vmatpush.msra.mxu0 %v1580
    %1801 = vmatpush.msra.mxu0 %v1576
    %1802 = vmatpush.msra.mxu0 %v1572
    %1803 = vmatpush.msra.mxu0 %v1568
    %1804 = vmatmul.f32.gmra.mxu0 %v1786
    %v1805 = vpop.f32.mrf.mxu0
    %v1806 = vadd.f32 0.0, %v1805
    %1807 = vdwg.mxu0
    %1808 = vmatpush.msra.mxu0 %v1629
    %1809 = vmatpush.msra.mxu0 %v1625
    %1810 = vmatpush.msra.mxu0 %v1621
    %1811 = vmatpush.msra.mxu0 %v1617
    %1812 = vmatpush.msra.mxu0 %v1613
    %1813 = vmatpush.msra.mxu0 %v1609
    %1814 = vmatpush.msra.mxu0 %v1605
    %1815 = vmatpush.msra.mxu0 %v1601
    %1816 = vmatpush.msra.mxu0 %v1597
    %1817 = vmatpush.msra.mxu0 %v1593
    %1818 = vmatpush.msra.mxu0 %v1589
    %1819 = vmatpush.msra.mxu0 %v1585
    %1820 = vmatpush.msra.mxu0 %v1581
    %1821 = vmatpush.msra.mxu0 %v1577
    %1822 = vmatpush.msra.mxu0 %v1573
    %1823 = vmatpush.msra.mxu0 %v1569
    %1824 = vmatmul.f32.gmra.mxu0 %v1786
    %v1825 = vpop.f32.mrf.mxu0
    %v1826 = vadd.f32 0.0, %v1825
    %1827 = vdwg.mxu0
    %1828 = vmatpush.msra.mxu0 %v1630
    %1829 = vmatpush.msra.mxu0 %v1626
    %1830 = vmatpush.msra.mxu0 %v1622
    %1831 = vmatpush.msra.mxu0 %v1618
    %1832 = vmatpush.msra.mxu0 %v1614
    %1833 = vmatpush.msra.mxu0 %v1610
    %1834 = vmatpush.msra.mxu0 %v1606
    %1835 = vmatpush.msra.mxu0 %v1602
    %1836 = vmatpush.msra.mxu0 %v1598
    %1837 = vmatpush.msra.mxu0 %v1594
    %1838 = vmatpush.msra.mxu0 %v1590
    %1839 = vmatpush.msra.mxu0 %v1586
    %1840 = vmatpush.msra.mxu0 %v1582
    %1841 = vmatpush.msra.mxu0 %v1578
    %1842 = vmatpush.msra.mxu0 %v1574
    %1843 = vmatpush.msra.mxu0 %v1570
    %1844 = vmatmul.f32.gmra.mxu0 %v1786
    %v1845 = vpop.f32.mrf.mxu0
    %v1846 = vadd.f32 0.0, %v1845
    %1847 = vdwg.mxu0
    %1848 = vmatpush.msra.mxu0 %v1631
    %1849 = vmatpush.msra.mxu0 %v1627
    %1850 = vmatpush.msra.mxu0 %v1623
    %1851 = vmatpush.msra.mxu0 %v1619
    %1852 = vmatpush.msra.mxu0 %v1615
    %1853 = vmatpush.msra.mxu0 %v1611
    %1854 = vmatpush.msra.mxu0 %v1607
    %1855 = vmatpush.msra.mxu0 %v1603
    %1856 = vmatpush.msra.mxu0 %v1599
    %1857 = vmatpush.msra.mxu0 %v1595
    %1858 = vmatpush.msra.mxu0 %v1591
    %1859 = vmatpush.msra.mxu0 %v1587
    %1860 = vmatpush.msra.mxu0 %v1583
    %1861 = vmatpush.msra.mxu0 %v1579
    %1862 = vmatpush.msra.mxu0 %v1575
    %1863 = vmatpush.msra.mxu0 %v1571
    %1864 = vmatmul.f32.gmra.mxu0 %v1786
    %v1865 = vpop.f32.mrf.mxu0
    %v1866 = vadd.f32 0.0, %v1865
    %1867 = vdwg.mxu0
    %v1872 = vrot.slane %v1806, 6
    %v1873 = vrot.slane %v1826, 6
    %v1874 = vrot.slane %v1846, 6
    %v1875 = vrot.slane %v1866, 6
    %v1880 = vadd.f32 %v1552, %v1872
    %v1881 = vadd.f32 %v1553, %v1873
    %v1882 = vadd.f32 %v1554, %v1874
    %v1883 = vadd.f32 %v1555, %v1875
    %v1884 = vxor.u32 %v1880, 2147483648
    %v1885 = vmul.f32 %v1884, 1.442695
    %v1886 = vpow.pop %v1885
    %v1887 = vadd.f32 %v1886, 1.0
    %v1888 = vrcp.pop %v1887
    %v1889 = vmul.f32 %v1887, %v1888
    %v1890 = vsub.f32 1.0, %v1889
    %v1891 = vmul.f32 %v1888, %v1890
    %v1892 = vadd.f32 %v1888, %v1891
    %vm1893 = vweird.f32 %v1887
    %vm1894 = vweird.f32 %v1888
    %vm1895 = vmor %vm1893, %vm1894
    %v1896 = vsel %vm1895, %v1888, %v1892
    %v1897 = vand.u32 2147483647, %v1887
    %vm1898 = vcmp.eq.f32.partialorder %v1897, 8.507059e+37
    %v1899 = vand.u32 %v1887, 2147483648
    %v1900 = vor.u32 1.1754944e-38, %v1899
    %v1901 = vsel %vm1898, %v1900, %v1896
    %v1902 = vmul.f32 1.0, %v1901
    %v1903 = vxor.u32 %v1881, 2147483648
    %v1904 = vmul.f32 %v1903, 1.442695
    %v1905 = vpow.pop %v1904
    %v1906 = vadd.f32 %v1905, 1.0
    %v1907 = vrcp.pop %v1906
    %v1908 = vmul.f32 %v1906, %v1907
    %v1909 = vsub.f32 1.0, %v1908
    %v1910 = vmul.f32 %v1907, %v1909
    %v1911 = vadd.f32 %v1907, %v1910
    %vm1912 = vweird.f32 %v1906
    %vm1913 = vweird.f32 %v1907
    %vm1914 = vmor %vm1912, %vm1913
    %v1915 = vsel %vm1914, %v1907, %v1911
    %v1916 = vand.u32 2147483647, %v1906
    %vm1917 = vcmp.eq.f32.partialorder %v1916, 8.507059e+37
    %v1918 = vand.u32 %v1906, 2147483648
    %v1919 = vor.u32 1.1754944e-38, %v1918
    %v1920 = vsel %vm1917, %v1919, %v1915
    %v1921 = vmul.f32 1.0, %v1920
    %v1922 = vtanh.pop %v1882
    %v1923 = vxor.u32 %v1883, 2147483648
    %v1924 = vmul.f32 %v1923, 1.442695
    %v1925 = vpow.pop %v1924
    %v1926 = vadd.f32 %v1925, 1.0
    %v1927 = vrcp.pop %v1926
    %v1928 = vmul.f32 %v1926, %v1927
    %v1929 = vsub.f32 1.0, %v1928
    %v1930 = vmul.f32 %v1927, %v1929
    %v1931 = vadd.f32 %v1927, %v1930
    %vm1932 = vweird.f32 %v1926
    %vm1933 = vweird.f32 %v1927
    %vm1934 = vmor %vm1932, %vm1933
    %v1935 = vsel %vm1934, %v1927, %v1931
    %v1936 = vand.u32 2147483647, %v1926
    %vm1937 = vcmp.eq.f32.partialorder %v1936, 8.507059e+37
    %v1938 = vand.u32 %v1926, 2147483648
    %v1939 = vor.u32 1.1754944e-38, %v1938
    %v1940 = vsel %vm1937, %v1939, %v1935
    %v1941 = vmul.f32 1.0, %v1940
    %v1943 = vrot.slane %v1784, 6
    %v1945 = vmul.f32 %v1921, %v1943
    %v1946 = vmul.f32 %v1902, %v1922
    %v1947 = vadd.f32 %v1945, %v1946
    %v1948 = vtanh.pop %v1947
    %v1949 = vmul.f32 %v1941, %v1948
    %1950 = vst [vmem:[#allocation2] sm:$0xc] %v1949
    %v1952 = vrot.slane %v1949, 2
    %1954 = vmatpush.msra.mxu0 %v1628
    %1955 = vmatpush.msra.mxu0 %v1624
    %1956 = vmatpush.msra.mxu0 %v1620
    %1957 = vmatpush.msra.mxu0 %v1616
    %1958 = vmatpush.msra.mxu0 %v1612
    %1959 = vmatpush.msra.mxu0 %v1608
    %1960 = vmatpush.msra.mxu0 %v1604
    %1961 = vmatpush.msra.mxu0 %v1600
    %1962 = vmatpush.msra.mxu0 %v1596
    %1963 = vmatpush.msra.mxu0 %v1592
    %1964 = vmatpush.msra.mxu0 %v1588
    %1965 = vmatpush.msra.mxu0 %v1584
    %1966 = vmatpush.msra.mxu0 %v1580
    %1967 = vmatpush.msra.mxu0 %v1576
    %1968 = vmatpush.msra.mxu0 %v1572
    %1969 = vmatpush.msra.mxu0 %v1568
    %1970 = vmatmul.f32.gmra.mxu0 %v1952
    %v1971 = vpop.f32.mrf.mxu0
    %v1972 = vadd.f32 0.0, %v1971
    %1973 = vdwg.mxu0
    %1974 = vmatpush.msra.mxu0 %v1629
    %1975 = vmatpush.msra.mxu0 %v1625
    %1976 = vmatpush.msra.mxu0 %v1621
    %1977 = vmatpush.msra.mxu0 %v1617
    %1978 = vmatpush.msra.mxu0 %v1613
    %1979 = vmatpush.msra.mxu0 %v1609
    %1980 = vmatpush.msra.mxu0 %v1605
    %1981 = vmatpush.msra.mxu0 %v1601
    %1982 = vmatpush.msra.mxu0 %v1597
    %1983 = vmatpush.msra.mxu0 %v1593
    %1984 = vmatpush.msra.mxu0 %v1589
    %1985 = vmatpush.msra.mxu0 %v1585
    %1986 = vmatpush.msra.mxu0 %v1581
    %1987 = vmatpush.msra.mxu0 %v1577
    %1988 = vmatpush.msra.mxu0 %v1573
    %1989 = vmatpush.msra.mxu0 %v1569
    %1990 = vmatmul.f32.gmra.mxu0 %v1952
    %v1991 = vpop.f32.mrf.mxu0
    %v1992 = vadd.f32 0.0, %v1991
    %1993 = vdwg.mxu0
    %1994 = vmatpush.msra.mxu0 %v1630
    %1995 = vmatpush.msra.mxu0 %v1626
    %1996 = vmatpush.msra.mxu0 %v1622
    %1997 = vmatpush.msra.mxu0 %v1618
    %1998 = vmatpush.msra.mxu0 %v1614
    %1999 = vmatpush.msra.mxu0 %v1610
    %2000 = vmatpush.msra.mxu0 %v1606
    %2001 = vmatpush.msra.mxu0 %v1602
    %2002 = vmatpush.msra.mxu0 %v1598
    %2003 = vmatpush.msra.mxu0 %v1594
    %2004 = vmatpush.msra.mxu0 %v1590
    %2005 = vmatpush.msra.mxu0 %v1586
    %2006 = vmatpush.msra.mxu0 %v1582
    %2007 = vmatpush.msra.mxu0 %v1578
    %2008 = vmatpush.msra.mxu0 %v1574
    %2009 = vmatpush.msra.mxu0 %v1570
    %2010 = vmatmul.f32.gmra.mxu0 %v1952
    %v2011 = vpop.f32.mrf.mxu0
    %v2012 = vadd.f32 0.0, %v2011
    %2013 = vdwg.mxu0
    %2014 = vmatpush.msra.mxu0 %v1631
    %2015 = vmatpush.msra.mxu0 %v1627
    %2016 = vmatpush.msra.mxu0 %v1623
    %2017 = vmatpush.msra.mxu0 %v1619
    %2018 = vmatpush.msra.mxu0 %v1615
    %2019 = vmatpush.msra.mxu0 %v1611
    %2020 = vmatpush.msra.mxu0 %v1607
    %2021 = vmatpush.msra.mxu0 %v1603
    %2022 = vmatpush.msra.mxu0 %v1599
    %2023 = vmatpush.msra.mxu0 %v1595
    %2024 = vmatpush.msra.mxu0 %v1591
    %2025 = vmatpush.msra.mxu0 %v1587
    %2026 = vmatpush.msra.mxu0 %v1583
    %2027 = vmatpush.msra.mxu0 %v1579
    %2028 = vmatpush.msra.mxu0 %v1575
    %2029 = vmatpush.msra.mxu0 %v1571
    %2030 = vmatmul.f32.gmra.mxu0 %v1952
    %v2031 = vpop.f32.mrf.mxu0
    %v2032 = vadd.f32 0.0, %v2031
    %2033 = vdwg.mxu0
    %v2038 = vrot.slane %v1972, 4
    %v2039 = vrot.slane %v1992, 4
    %v2040 = vrot.slane %v2012, 4
    %v2041 = vrot.slane %v2032, 4
    %v2046 = vadd.f32 %v1552, %v2038
    %v2047 = vadd.f32 %v1553, %v2039
    %v2048 = vadd.f32 %v1554, %v2040
    %v2049 = vadd.f32 %v1555, %v2041
    %v2050 = vxor.u32 %v2046, 2147483648
    %v2051 = vmul.f32 %v2050, 1.442695
    %v2052 = vpow.pop %v2051
    %v2053 = vadd.f32 %v2052, 1.0
    %v2054 = vrcp.pop %v2053
    %v2055 = vmul.f32 %v2053, %v2054
    %v2056 = vsub.f32 1.0, %v2055
    %v2057 = vmul.f32 %v2054, %v2056
    %v2058 = vadd.f32 %v2054, %v2057
    %vm2059 = vweird.f32 %v2053
    %vm2060 = vweird.f32 %v2054
    %vm2061 = vmor %vm2059, %vm2060
    %v2062 = vsel %vm2061, %v2054, %v2058
    %v2063 = vand.u32 2147483647, %v2053
    %vm2064 = vcmp.eq.f32.partialorder %v2063, 8.507059e+37
    %v2065 = vand.u32 %v2053, 2147483648
    %v2066 = vor.u32 1.1754944e-38, %v2065
    %v2067 = vsel %vm2064, %v2066, %v2062
    %v2068 = vmul.f32 1.0, %v2067
    %v2069 = vxor.u32 %v2047, 2147483648
    %v2070 = vmul.f32 %v2069, 1.442695
    %v2071 = vpow.pop %v2070
    %v2072 = vadd.f32 %v2071, 1.0
    %v2073 = vrcp.pop %v2072
    %v2074 = vmul.f32 %v2072, %v2073
    %v2075 = vsub.f32 1.0, %v2074
    %v2076 = vmul.f32 %v2073, %v2075
    %v2077 = vadd.f32 %v2073, %v2076
    %vm2078 = vweird.f32 %v2072
    %vm2079 = vweird.f32 %v2073
    %vm2080 = vmor %vm2078, %vm2079
    %v2081 = vsel %vm2080, %v2073, %v2077
    %v2082 = vand.u32 2147483647, %v2072
    %vm2083 = vcmp.eq.f32.partialorder %v2082, 8.507059e+37
    %v2084 = vand.u32 %v2072, 2147483648
    %v2085 = vor.u32 1.1754944e-38, %v2084
    %v2086 = vsel %vm2083, %v2085, %v2081
    %v2087 = vmul.f32 1.0, %v2086
    %v2088 = vtanh.pop %v2048
    %v2089 = vxor.u32 %v2049, 2147483648
    %v2090 = vmul.f32 %v2089, 1.442695
    %v2091 = vpow.pop %v2090
    %v2092 = vadd.f32 %v2091, 1.0
    %v2093 = vrcp.pop %v2092
    %v2094 = vmul.f32 %v2092, %v2093
    %v2095 = vsub.f32 1.0, %v2094
    %v2096 = vmul.f32 %v2093, %v2095
    %v2097 = vadd.f32 %v2093, %v2096
    %vm2098 = vweird.f32 %v2092
    %vm2099 = vweird.f32 %v2093
    %vm2100 = vmor %vm2098, %vm2099
    %v2101 = vsel %vm2100, %v2093, %v2097
    %v2102 = vand.u32 2147483647, %v2092
    %vm2103 = vcmp.eq.f32.partialorder %v2102, 8.507059e+37
    %v2104 = vand.u32 %v2092, 2147483648
    %v2105 = vor.u32 1.1754944e-38, %v2104
    %v2106 = vsel %vm2103, %v2105, %v2101
    %v2107 = vmul.f32 1.0, %v2106
    %v2109 = vrot.slane %v1947, 6
    %v2111 = vmul.f32 %v2087, %v2109
    %v2112 = vmul.f32 %v2068, %v2088
    %v2113 = vadd.f32 %v2111, %v2112
    %v2114 = vtanh.pop %v2113
    %v2115 = vmul.f32 %v2107, %v2114
    %2116 = vst [vmem:[#allocation2] sm:$0x30] %v2115
    %v2118 = vrot.slane %v2115, 4
    %2120 = vmatpush.msra.mxu0 %v1628
    %2121 = vmatpush.msra.mxu0 %v1624
    %2122 = vmatpush.msra.mxu0 %v1620
    %2123 = vmatpush.msra.mxu0 %v1616
    %2124 = vmatpush.msra.mxu0 %v1612
    %2125 = vmatpush.msra.mxu0 %v1608
    %2126 = vmatpush.msra.mxu0 %v1604
    %2127 = vmatpush.msra.mxu0 %v1600
    %2128 = vmatpush.msra.mxu0 %v1596
    %2129 = vmatpush.msra.mxu0 %v1592
    %2130 = vmatpush.msra.mxu0 %v1588
    %2131 = vmatpush.msra.mxu0 %v1584
    %2132 = vmatpush.msra.mxu0 %v1580
    %2133 = vmatpush.msra.mxu0 %v1576
    %2134 = vmatpush.msra.mxu0 %v1572
    %2135 = vmatpush.msra.mxu0 %v1568
    %2136 = vmatmul.f32.gmra.mxu0 %v2118
    %v2137 = vpop.f32.mrf.mxu0
    %v2138 = vadd.f32 0.0, %v2137
    %2139 = vdwg.mxu0
    %2140 = vmatpush.msra.mxu0 %v1629
    %2141 = vmatpush.msra.mxu0 %v1625
    %2142 = vmatpush.msra.mxu0 %v1621
    %2143 = vmatpush.msra.mxu0 %v1617
    %2144 = vmatpush.msra.mxu0 %v1613
    %2145 = vmatpush.msra.mxu0 %v1609
    %2146 = vmatpush.msra.mxu0 %v1605
    %2147 = vmatpush.msra.mxu0 %v1601
    %2148 = vmatpush.msra.mxu0 %v1597
    %2149 = vmatpush.msra.mxu0 %v1593
    %2150 = vmatpush.msra.mxu0 %v1589
    %2151 = vmatpush.msra.mxu0 %v1585
    %2152 = vmatpush.msra.mxu0 %v1581
    %2153 = vmatpush.msra.mxu0 %v1577
    %2154 = vmatpush.msra.mxu0 %v1573
    %2155 = vmatpush.msra.mxu0 %v1569
    %2156 = vmatmul.f32.gmra.mxu0 %v2118
    %v2157 = vpop.f32.mrf.mxu0
    %v2158 = vadd.f32 0.0, %v2157
    %2159 = vdwg.mxu0
    %2160 = vmatpush.msra.mxu0 %v1630
    %2161 = vmatpush.msra.mxu0 %v1626
    %2162 = vmatpush.msra.mxu0 %v1622
    %2163 = vmatpush.msra.mxu0 %v1618
    %2164 = vmatpush.msra.mxu0 %v1614
    %2165 = vmatpush.msra.mxu0 %v1610
    %2166 = vmatpush.msra.mxu0 %v1606
    %2167 = vmatpush.msra.mxu0 %v1602
    %2168 = vmatpush.msra.mxu0 %v1598
    %2169 = vmatpush.msra.mxu0 %v1594
    %2170 = vmatpush.msra.mxu0 %v1590
    %2171 = vmatpush.msra.mxu0 %v1586
    %2172 = vmatpush.msra.mxu0 %v1582
    %2173 = vmatpush.msra.mxu0 %v1578
    %2174 = vmatpush.msra.mxu0 %v1574
    %2175 = vmatpush.msra.mxu0 %v1570
    %2176 = vmatmul.f32.gmra.mxu0 %v2118
    %v2177 = vpop.f32.mrf.mxu0
    %v2178 = vadd.f32 0.0, %v2177
    %2179 = vdwg.mxu0
    %2180 = vmatpush.msra.mxu0 %v1631
    %2181 = vmatpush.msra.mxu0 %v1627
    %2182 = vmatpush.msra.mxu0 %v1623
    %2183 = vmatpush.msra.mxu0 %v1619
    %2184 = vmatpush.msra.mxu0 %v1615
    %2185 = vmatpush.msra.mxu0 %v1611
    %2186 = vmatpush.msra.mxu0 %v1607
    %2187 = vmatpush.msra.mxu0 %v1603
    %2188 = vmatpush.msra.mxu0 %v1599
    %2189 = vmatpush.msra.mxu0 %v1595
    %2190 = vmatpush.msra.mxu0 %v1591
    %2191 = vmatpush.msra.mxu0 %v1587
    %2192 = vmatpush.msra.mxu0 %v1583
    %2193 = vmatpush.msra.mxu0 %v1579
    %2194 = vmatpush.msra.mxu0 %v1575
    %2195 = vmatpush.msra.mxu0 %v1571
    %2196 = vmatmul.f32.gmra.mxu0 %v2118
    %v2197 = vpop.f32.mrf.mxu0
    %v2198 = vadd.f32 0.0, %v2197
    %2199 = vdwg.mxu0
    %v2204 = vrot.slane %v2138, 2
    %v2205 = vrot.slane %v2158, 2
    %v2206 = vrot.slane %v2178, 2
    %v2207 = vrot.slane %v2198, 2
    %v2212 = vadd.f32 %v1552, %v2204
    %v2213 = vadd.f32 %v1553, %v2205
    %v2214 = vadd.f32 %v1554, %v2206
    %v2215 = vadd.f32 %v1555, %v2207
    %v2216 = vxor.u32 %v2212, 2147483648
    %v2217 = vmul.f32 %v2216, 1.442695
    %v2218 = vpow.pop %v2217
    %v2219 = vadd.f32 %v2218, 1.0
    %v2220 = vrcp.pop %v2219
    %v2221 = vmul.f32 %v2219, %v2220
    %v2222 = vsub.f32 1.0, %v2221
    %v2223 = vmul.f32 %v2220, %v2222
    %v2224 = vadd.f32 %v2220, %v2223
    %vm2225 = vweird.f32 %v2219
    %vm2226 = vweird.f32 %v2220
    %vm2227 = vmor %vm2225, %vm2226
    %v2228 = vsel %vm2227, %v2220, %v2224
    %v2229 = vand.u32 2147483647, %v2219
    %vm2230 = vcmp.eq.f32.partialorder %v2229, 8.507059e+37
    %v2231 = vand.u32 %v2219, 2147483648
    %v2232 = vor.u32 1.1754944e-38, %v2231
    %v2233 = vsel %vm2230, %v2232, %v2228
    %v2234 = vmul.f32 1.0, %v2233
    %v2235 = vxor.u32 %v2213, 2147483648
    %v2236 = vmul.f32 %v2235, 1.442695
    %v2237 = vpow.pop %v2236
    %v2238 = vadd.f32 %v2237, 1.0
    %v2239 = vrcp.pop %v2238
    %v2240 = vmul.f32 %v2238, %v2239
    %v2241 = vsub.f32 1.0, %v2240
    %v2242 = vmul.f32 %v2239, %v2241
    %v2243 = vadd.f32 %v2239, %v2242
    %vm2244 = vweird.f32 %v2238
    %vm2245 = vweird.f32 %v2239
    %vm2246 = vmor %vm2244, %vm2245
    %v2247 = vsel %vm2246, %v2239, %v2243
    %v2248 = vand.u32 2147483647, %v2238
    %vm2249 = vcmp.eq.f32.partialorder %v2248, 8.507059e+37
    %v2250 = vand.u32 %v2238, 2147483648
    %v2251 = vor.u32 1.1754944e-38, %v2250
    %v2252 = vsel %vm2249, %v2251, %v2247
    %v2253 = vmul.f32 1.0, %v2252
    %v2254 = vtanh.pop %v2214
    %v2255 = vxor.u32 %v2215, 2147483648
    %v2256 = vmul.f32 %v2255, 1.442695
    %v2257 = vpow.pop %v2256
    %v2258 = vadd.f32 %v2257, 1.0
    %v2259 = vrcp.pop %v2258
    %v2260 = vmul.f32 %v2258, %v2259
    %v2261 = vsub.f32 1.0, %v2260
    %v2262 = vmul.f32 %v2259, %v2261
    %v2263 = vadd.f32 %v2259, %v2262
    %vm2264 = vweird.f32 %v2258
    %vm2265 = vweird.f32 %v2259
    %vm2266 = vmor %vm2264, %vm2265
    %v2267 = vsel %vm2266, %v2259, %v2263
    %v2268 = vand.u32 2147483647, %v2258
    %vm2269 = vcmp.eq.f32.partialorder %v2268, 8.507059e+37
    %v2270 = vand.u32 %v2258, 2147483648
    %v2271 = vor.u32 1.1754944e-38, %v2270
    %v2272 = vsel %vm2269, %v2271, %v2267
    %v2273 = vmul.f32 1.0, %v2272
    %v2275 = vrot.slane %v2113, 6
    %v2277 = vmul.f32 %v2253, %v2275
    %v2278 = vmul.f32 %v2234, %v2254
    %v2279 = vadd.f32 %v2277, %v2278
    %v2280 = vtanh.pop %v2279
    %v2281 = vmul.f32 %v2273, %v2280
    %2282 = vst [vmem:[#allocation2] sm:$0xc0] %v2281
    %v2284 = vrot.slane %v2281, 6
    %2286 = vmatpush.msra.mxu0 %v1628
    %2287 = vmatpush.msra.mxu0 %v1624
    %2288 = vmatpush.msra.mxu0 %v1620
    %2289 = vmatpush.msra.mxu0 %v1616
    %2290 = vmatpush.msra.mxu0 %v1612
    %2291 = vmatpush.msra.mxu0 %v1608
    %2292 = vmatpush.msra.mxu0 %v1604
    %2293 = vmatpush.msra.mxu0 %v1600
    %2294 = vmatpush.msra.mxu0 %v1596
    %2295 = vmatpush.msra.mxu0 %v1592
    %2296 = vmatpush.msra.mxu0 %v1588
    %2297 = vmatpush.msra.mxu0 %v1584
    %2298 = vmatpush.msra.mxu0 %v1580
    %2299 = vmatpush.msra.mxu0 %v1576
    %2300 = vmatpush.msra.mxu0 %v1572
    %2301 = vmatpush.msra.mxu0 %v1568
    %2302 = vmatmul.f32.gmra.mxu0 %v2284
    %v2303 = vpop.f32.mrf.mxu0
    %v2304 = vadd.f32 0.0, %v2303
    %2305 = vdwg.mxu0
    %2306 = vmatpush.msra.mxu0 %v1629
    %2307 = vmatpush.msra.mxu0 %v1625
    %2308 = vmatpush.msra.mxu0 %v1621
    %2309 = vmatpush.msra.mxu0 %v1617
    %2310 = vmatpush.msra.mxu0 %v1613
    %2311 = vmatpush.msra.mxu0 %v1609
    %2312 = vmatpush.msra.mxu0 %v1605
    %2313 = vmatpush.msra.mxu0 %v1601
    %2314 = vmatpush.msra.mxu0 %v1597
    %2315 = vmatpush.msra.mxu0 %v1593
    %2316 = vmatpush.msra.mxu0 %v1589
    %2317 = vmatpush.msra.mxu0 %v1585
    %2318 = vmatpush.msra.mxu0 %v1581
    %2319 = vmatpush.msra.mxu0 %v1577
    %2320 = vmatpush.msra.mxu0 %v1573
    %2321 = vmatpush.msra.mxu0 %v1569
    %2322 = vmatmul.f32.gmra.mxu0 %v2284
    %v2323 = vpop.f32.mrf.mxu0
    %v2324 = vadd.f32 0.0, %v2323
    %2325 = vdwg.mxu0
    %2326 = vmatpush.msra.mxu0 %v1630
    %2327 = vmatpush.msra.mxu0 %v1626
    %2328 = vmatpush.msra.mxu0 %v1622
    %2329 = vmatpush.msra.mxu0 %v1618
    %2330 = vmatpush.msra.mxu0 %v1614
    %2331 = vmatpush.msra.mxu0 %v1610
    %2332 = vmatpush.msra.mxu0 %v1606
    %2333 = vmatpush.msra.mxu0 %v1602
    %2334 = vmatpush.msra.mxu0 %v1598
    %2335 = vmatpush.msra.mxu0 %v1594
    %2336 = vmatpush.msra.mxu0 %v1590
    %2337 = vmatpush.msra.mxu0 %v1586
    %2338 = vmatpush.msra.mxu0 %v1582
    %2339 = vmatpush.msra.mxu0 %v1578
    %2340 = vmatpush.msra.mxu0 %v1574
    %2341 = vmatpush.msra.mxu0 %v1570
    %2342 = vmatmul.f32.gmra.mxu0 %v2284
    %v2343 = vpop.f32.mrf.mxu0
    %v2344 = vadd.f32 0.0, %v2343
    %2345 = vdwg.mxu0
    %2346 = vmatpush.msra.mxu0 %v1631
    %2347 = vmatpush.msra.mxu0 %v1627
    %2348 = vmatpush.msra.mxu0 %v1623
    %2349 = vmatpush.msra.mxu0 %v1619
    %2350 = vmatpush.msra.mxu0 %v1615
    %2351 = vmatpush.msra.mxu0 %v1611
    %2352 = vmatpush.msra.mxu0 %v1607
    %2353 = vmatpush.msra.mxu0 %v1603
    %2354 = vmatpush.msra.mxu0 %v1599
    %2355 = vmatpush.msra.mxu0 %v1595
    %2356 = vmatpush.msra.mxu0 %v1591
    %2357 = vmatpush.msra.mxu0 %v1587
    %2358 = vmatpush.msra.mxu0 %v1583
    %2359 = vmatpush.msra.mxu0 %v1579
    %2360 = vmatpush.msra.mxu0 %v1575
    %2361 = vmatpush.msra.mxu0 %v1571
    %2362 = vmatmul.f32.gmra.mxu0 %v2284
    %v2363 = vpop.f32.mrf.mxu0
    %v2364 = vadd.f32 0.0, %v2363
    %2365 = vdwg.mxu0
    %v2366 = vadd.f32 %v1560, %v2304
    %v2367 = vadd.f32 %v1561, %v2324
    %v2368 = vadd.f32 %v1562, %v2344
    %v2369 = vadd.f32 %v1563, %v2364
    %v2370 = vxor.u32 %v2366, 2147483648
    %v2371 = vmul.f32 %v2370, 1.442695
    %v2372 = vpow.pop %v2371
    %v2373 = vadd.f32 %v2372, 1.0
    %v2374 = vrcp.pop %v2373
    %v2375 = vmul.f32 %v2373, %v2374
    %v2376 = vsub.f32 1.0, %v2375
    %v2377 = vmul.f32 %v2374, %v2376
    %v2378 = vadd.f32 %v2374, %v2377
    %vm2379 = vweird.f32 %v2373
    %vm2380 = vweird.f32 %v2374
    %vm2381 = vmor %vm2379, %vm2380
    %v2382 = vsel %vm2381, %v2374, %v2378
    %v2383 = vand.u32 2147483647, %v2373
    %vm2384 = vcmp.eq.f32.partialorder %v2383, 8.507059e+37
    %v2385 = vand.u32 %v2373, 2147483648
    %v2386 = vor.u32 1.1754944e-38, %v2385
    %v2387 = vsel %vm2384, %v2386, %v2382
    %v2388 = vmul.f32 1.0, %v2387
    %v2389 = vxor.u32 %v2367, 2147483648
    %v2390 = vmul.f32 %v2389, 1.442695
    %v2391 = vpow.pop %v2390
    %v2392 = vadd.f32 %v2391, 1.0
    %v2393 = vrcp.pop %v2392
    %v2394 = vmul.f32 %v2392, %v2393
    %v2395 = vsub.f32 1.0, %v2394
    %v2396 = vmul.f32 %v2393, %v2395
    %v2397 = vadd.f32 %v2393, %v2396
    %vm2398 = vweird.f32 %v2392
    %vm2399 = vweird.f32 %v2393
    %vm2400 = vmor %vm2398, %vm2399
    %v2401 = vsel %vm2400, %v2393, %v2397
    %v2402 = vand.u32 2147483647, %v2392
    %vm2403 = vcmp.eq.f32.partialorder %v2402, 8.507059e+37
    %v2404 = vand.u32 %v2392, 2147483648
    %v2405 = vor.u32 1.1754944e-38, %v2404
    %v2406 = vsel %vm2403, %v2405, %v2401
    %v2407 = vmul.f32 1.0, %v2406
    %v2408 = vtanh.pop %v2368
    %v2409 = vxor.u32 %v2369, 2147483648
    %v2410 = vmul.f32 %v2409, 1.442695
    %v2411 = vpow.pop %v2410
    %v2412 = vadd.f32 %v2411, 1.0
    %v2413 = vrcp.pop %v2412
    %v2414 = vmul.f32 %v2412, %v2413
    %v2415 = vsub.f32 1.0, %v2414
    %v2416 = vmul.f32 %v2413, %v2415
    %v2417 = vadd.f32 %v2413, %v2416
    %vm2418 = vweird.f32 %v2412
    %vm2419 = vweird.f32 %v2413
    %vm2420 = vmor %vm2418, %vm2419
    %v2421 = vsel %vm2420, %v2413, %v2417
    %v2422 = vand.u32 2147483647, %v2412
    %vm2423 = vcmp.eq.f32.partialorder %v2422, 8.507059e+37
    %v2424 = vand.u32 %v2412, 2147483648
    %v2425 = vor.u32 1.1754944e-38, %v2424
    %v2426 = vsel %vm2423, %v2425, %v2421
    %v2427 = vmul.f32 1.0, %v2426
    %v2429 = vrot.slane %v2279, 6
    %v2431 = vmul.f32 %v2407, %v2429
    %v2432 = vmul.f32 %v2388, %v2408
    %v2433 = vadd.f32 %v2431, %v2432
    %v2434 = vtanh.pop %v2433
    %v2435 = vmul.f32 %v2427, %v2434
    %2436 = vst [vmem:[#allocation2 + $0x8] sm:$0x3] %v2435
    %2437 = vmatpush.msra.mxu0 %v1628
    %2438 = vmatpush.msra.mxu0 %v1624
    %2439 = vmatpush.msra.mxu0 %v1620
    %2440 = vmatpush.msra.mxu0 %v1616
    %2441 = vmatpush.msra.mxu0 %v1612
    %2442 = vmatpush.msra.mxu0 %v1608
    %2443 = vmatpush.msra.mxu0 %v1604
    %2444 = vmatpush.msra.mxu0 %v1600
    %2445 = vmatpush.msra.mxu0 %v1596
    %2446 = vmatpush.msra.mxu0 %v1592
    %2447 = vmatpush.msra.mxu0 %v1588
    %2448 = vmatpush.msra.mxu0 %v1584
    %2449 = vmatpush.msra.mxu0 %v1580
    %2450 = vmatpush.msra.mxu0 %v1576
    %2451 = vmatpush.msra.mxu0 %v1572
    %2452 = vmatpush.msra.mxu0 %v1568
    %2453 = vmatmul.f32.gmra.mxu0 %v2435
    %v2454 = vpop.f32.mrf.mxu0
    %v2455 = vadd.f32 0.0, %v2454
    %2456 = vdwg.mxu0
    %2457 = vmatpush.msra.mxu0 %v1629
    %2458 = vmatpush.msra.mxu0 %v1625
    %2459 = vmatpush.msra.mxu0 %v1621
    %2460 = vmatpush.msra.mxu0 %v1617
    %2461 = vmatpush.msra.mxu0 %v1613
    %2462 = vmatpush.msra.mxu0 %v1609
    %2463 = vmatpush.msra.mxu0 %v1605
    %2464 = vmatpush.msra.mxu0 %v1601
    %2465 = vmatpush.msra.mxu0 %v1597
    %2466 = vmatpush.msra.mxu0 %v1593
    %2467 = vmatpush.msra.mxu0 %v1589
    %2468 = vmatpush.msra.mxu0 %v1585
    %2469 = vmatpush.msra.mxu0 %v1581
    %2470 = vmatpush.msra.mxu0 %v1577
    %2471 = vmatpush.msra.mxu0 %v1573
    %2472 = vmatpush.msra.mxu0 %v1569
    %2473 = vmatmul.f32.gmra.mxu0 %v2435
    %v2474 = vpop.f32.mrf.mxu0
    %v2475 = vadd.f32 0.0, %v2474
    %2476 = vdwg.mxu0
    %2477 = vmatpush.msra.mxu0 %v1630
    %2478 = vmatpush.msra.mxu0 %v1626
    %2479 = vmatpush.msra.mxu0 %v1622
    %2480 = vmatpush.msra.mxu0 %v1618
    %2481 = vmatpush.msra.mxu0 %v1614
    %2482 = vmatpush.msra.mxu0 %v1610
    %2483 = vmatpush.msra.mxu0 %v1606
    %2484 = vmatpush.msra.mxu0 %v1602
    %2485 = vmatpush.msra.mxu0 %v1598
    %2486 = vmatpush.msra.mxu0 %v1594
    %2487 = vmatpush.msra.mxu0 %v1590
    %2488 = vmatpush.msra.mxu0 %v1586
    %2489 = vmatpush.msra.mxu0 %v1582
    %2490 = vmatpush.msra.mxu0 %v1578
    %2491 = vmatpush.msra.mxu0 %v1574
    %2492 = vmatpush.msra.mxu0 %v1570
    %2493 = vmatmul.f32.gmra.mxu0 %v2435
    %v2494 = vpop.f32.mrf.mxu0
    %v2495 = vadd.f32 0.0, %v2494
    %2496 = vdwg.mxu0
    %2497 = vmatpush.msra.mxu0 %v1631
    %2498 = vmatpush.msra.mxu0 %v1627
    %2499 = vmatpush.msra.mxu0 %v1623
    %2500 = vmatpush.msra.mxu0 %v1619
    %2501 = vmatpush.msra.mxu0 %v1615
    %2502 = vmatpush.msra.mxu0 %v1611
    %2503 = vmatpush.msra.mxu0 %v1607
    %2504 = vmatpush.msra.mxu0 %v1603
    %2505 = vmatpush.msra.mxu0 %v1599
    %2506 = vmatpush.msra.mxu0 %v1595
    %2507 = vmatpush.msra.mxu0 %v1591
    %2508 = vmatpush.msra.mxu0 %v1587
    %2509 = vmatpush.msra.mxu0 %v1583
    %2510 = vmatpush.msra.mxu0 %v1579
    %2511 = vmatpush.msra.mxu0 %v1575
    %2512 = vmatpush.msra.mxu0 %v1571
    %2513 = vmatmul.f32.gmra.mxu0 %v2435
    %v2514 = vpop.f32.mrf.mxu0
    %v2515 = vadd.f32 0.0, %v2514
    %2516 = vdwg.mxu0
    %v2521 = vrot.slane %v2455, 6
    %v2522 = vrot.slane %v2475, 6
    %v2523 = vrot.slane %v2495, 6
    %v2524 = vrot.slane %v2515, 6
    %v2529 = vadd.f32 %v1560, %v2521
    %v2530 = vadd.f32 %v1561, %v2522
    %v2531 = vadd.f32 %v1562, %v2523
    %v2532 = vadd.f32 %v1563, %v2524
    %v2533 = vxor.u32 %v2529, 2147483648
    %v2534 = vmul.f32 %v2533, 1.442695
    %v2535 = vpow.pop %v2534
    %v2536 = vadd.f32 %v2535, 1.0
    %v2537 = vrcp.pop %v2536
    %v2538 = vmul.f32 %v2536, %v2537
    %v2539 = vsub.f32 1.0, %v2538
    %v2540 = vmul.f32 %v2537, %v2539
    %v2541 = vadd.f32 %v2537, %v2540
    %vm2542 = vweird.f32 %v2536
    %vm2543 = vweird.f32 %v2537
    %vm2544 = vmor %vm2542, %vm2543
    %v2545 = vsel %vm2544, %v2537, %v2541
    %v2546 = vand.u32 2147483647, %v2536
    %vm2547 = vcmp.eq.f32.partialorder %v2546, 8.507059e+37
    %v2548 = vand.u32 %v2536, 2147483648
    %v2549 = vor.u32 1.1754944e-38, %v2548
    %v2550 = vsel %vm2547, %v2549, %v2545
    %v2551 = vmul.f32 1.0, %v2550
    %v2552 = vxor.u32 %v2530, 2147483648
    %v2553 = vmul.f32 %v2552, 1.442695
    %v2554 = vpow.pop %v2553
    %v2555 = vadd.f32 %v2554, 1.0
    %v2556 = vrcp.pop %v2555
    %v2557 = vmul.f32 %v2555, %v2556
    %v2558 = vsub.f32 1.0, %v2557
    %v2559 = vmul.f32 %v2556, %v2558
    %v2560 = vadd.f32 %v2556, %v2559
    %vm2561 = vweird.f32 %v2555
    %vm2562 = vweird.f32 %v2556
    %vm2563 = vmor %vm2561, %vm2562
    %v2564 = vsel %vm2563, %v2556, %v2560
    %v2565 = vand.u32 2147483647, %v2555
    %vm2566 = vcmp.eq.f32.partialorder %v2565, 8.507059e+37
    %v2567 = vand.u32 %v2555, 2147483648
    %v2568 = vor.u32 1.1754944e-38, %v2567
    %v2569 = vsel %vm2566, %v2568, %v2564
    %v2570 = vmul.f32 1.0, %v2569
    %v2571 = vtanh.pop %v2531
    %v2572 = vxor.u32 %v2532, 2147483648
    %v2573 = vmul.f32 %v2572, 1.442695
    %v2574 = vpow.pop %v2573
    %v2575 = vadd.f32 %v2574, 1.0
    %v2576 = vrcp.pop %v2575
    %v2577 = vmul.f32 %v2575, %v2576
    %v2578 = vsub.f32 1.0, %v2577
    %v2579 = vmul.f32 %v2576, %v2578
    %v2580 = vadd.f32 %v2576, %v2579
    %vm2581 = vweird.f32 %v2575
    %vm2582 = vweird.f32 %v2576
    %vm2583 = vmor %vm2581, %vm2582
    %v2584 = vsel %vm2583, %v2576, %v2580
    %v2585 = vand.u32 2147483647, %v2575
    %vm2586 = vcmp.eq.f32.partialorder %v2585, 8.507059e+37
    %v2587 = vand.u32 %v2575, 2147483648
    %v2588 = vor.u32 1.1754944e-38, %v2587
    %v2589 = vsel %vm2586, %v2588, %v2584
    %v2590 = vmul.f32 1.0, %v2589
    %v2592 = vrot.slane %v2433, 6
    %v2594 = vmul.f32 %v2570, %v2592
    %v2595 = vmul.f32 %v2551, %v2571
    %v2596 = vadd.f32 %v2594, %v2595
    %v2597 = vtanh.pop %v2596
    %v2598 = vmul.f32 %v2590, %v2597
    %2599 = vst [vmem:[#allocation2 + $0x8] sm:$0xc] %v2598
    %v2601 = vrot.slane %v2598, 2
    %2603 = vmatpush.msra.mxu0 %v1628
    %2604 = vmatpush.msra.mxu0 %v1624
    %2605 = vmatpush.msra.mxu0 %v1620
    %2606 = vmatpush.msra.mxu0 %v1616
    %2607 = vmatpush.msra.mxu0 %v1612
    %2608 = vmatpush.msra.mxu0 %v1608
    %2609 = vmatpush.msra.mxu0 %v1604
    %2610 = vmatpush.msra.mxu0 %v1600
    %2611 = vmatpush.msra.mxu0 %v1596
    %2612 = vmatpush.msra.mxu0 %v1592
    %2613 = vmatpush.msra.mxu0 %v1588
    %2614 = vmatpush.msra.mxu0 %v1584
    %2615 = vmatpush.msra.mxu0 %v1580
    %2616 = vmatpush.msra.mxu0 %v1576
    %2617 = vmatpush.msra.mxu0 %v1572
    %2618 = vmatpush.msra.mxu0 %v1568
    %2619 = vmatmul.f32.gmra.mxu0 %v2601
    %v2620 = vpop.f32.mrf.mxu0
    %v2621 = vadd.f32 0.0, %v2620
    %2622 = vdwg.mxu0
    %2623 = vmatpush.msra.mxu0 %v1629
    %2624 = vmatpush.msra.mxu0 %v1625
    %2625 = vmatpush.msra.mxu0 %v1621
    %2626 = vmatpush.msra.mxu0 %v1617
    %2627 = vmatpush.msra.mxu0 %v1613
    %2628 = vmatpush.msra.mxu0 %v1609
    %2629 = vmatpush.msra.mxu0 %v1605
    %2630 = vmatpush.msra.mxu0 %v1601
    %2631 = vmatpush.msra.mxu0 %v1597
    %2632 = vmatpush.msra.mxu0 %v1593
    %2633 = vmatpush.msra.mxu0 %v1589
    %2634 = vmatpush.msra.mxu0 %v1585
    %2635 = vmatpush.msra.mxu0 %v1581
    %2636 = vmatpush.msra.mxu0 %v1577
    %2637 = vmatpush.msra.mxu0 %v1573
    %2638 = vmatpush.msra.mxu0 %v1569
    %2639 = vmatmul.f32.gmra.mxu0 %v2601
    %v2640 = vpop.f32.mrf.mxu0
    %v2641 = vadd.f32 0.0, %v2640
    %2642 = vdwg.mxu0
    %2643 = vmatpush.msra.mxu0 %v1630
    %2644 = vmatpush.msra.mxu0 %v1626
    %2645 = vmatpush.msra.mxu0 %v1622
    %2646 = vmatpush.msra.mxu0 %v1618
    %2647 = vmatpush.msra.mxu0 %v1614
    %2648 = vmatpush.msra.mxu0 %v1610
    %2649 = vmatpush.msra.mxu0 %v1606
    %2650 = vmatpush.msra.mxu0 %v1602
    %2651 = vmatpush.msra.mxu0 %v1598
    %2652 = vmatpush.msra.mxu0 %v1594
    %2653 = vmatpush.msra.mxu0 %v1590
    %2654 = vmatpush.msra.mxu0 %v1586
    %2655 = vmatpush.msra.mxu0 %v1582
    %2656 = vmatpush.msra.mxu0 %v1578
    %2657 = vmatpush.msra.mxu0 %v1574
    %2658 = vmatpush.msra.mxu0 %v1570
    %2659 = vmatmul.f32.gmra.mxu0 %v2601
    %v2660 = vpop.f32.mrf.mxu0
    %v2661 = vadd.f32 0.0, %v2660
    %2662 = vdwg.mxu0
    %2663 = vmatpush.msra.mxu0 %v1631
    %2664 = vmatpush.msra.mxu0 %v1627
    %2665 = vmatpush.msra.mxu0 %v1623
    %2666 = vmatpush.msra.mxu0 %v1619
    %2667 = vmatpush.msra.mxu0 %v1615
    %2668 = vmatpush.msra.mxu0 %v1611
    %2669 = vmatpush.msra.mxu0 %v1607
    %2670 = vmatpush.msra.mxu0 %v1603
    %2671 = vmatpush.msra.mxu0 %v1599
    %2672 = vmatpush.msra.mxu0 %v1595
    %2673 = vmatpush.msra.mxu0 %v1591
    %2674 = vmatpush.msra.mxu0 %v1587
    %2675 = vmatpush.msra.mxu0 %v1583
    %2676 = vmatpush.msra.mxu0 %v1579
    %2677 = vmatpush.msra.mxu0 %v1575
    %2678 = vmatpush.msra.mxu0 %v1571
    %2679 = vmatmul.f32.gmra.mxu0 %v2601
    %v2680 = vpop.f32.mrf.mxu0
    %v2681 = vadd.f32 0.0, %v2680
    %2682 = vdwg.mxu0
    %v2687 = vrot.slane %v2621, 4
    %v2688 = vrot.slane %v2641, 4
    %v2689 = vrot.slane %v2661, 4
    %v2690 = vrot.slane %v2681, 4
    %v2695 = vadd.f32 %v1560, %v2687
    %v2696 = vadd.f32 %v1561, %v2688
    %v2697 = vadd.f32 %v1562, %v2689
    %v2698 = vadd.f32 %v1563, %v2690
    %v2699 = vxor.u32 %v2695, 2147483648
    %v2700 = vmul.f32 %v2699, 1.442695
    %v2701 = vpow.pop %v2700
    %v2702 = vadd.f32 %v2701, 1.0
    %v2703 = vrcp.pop %v2702
    %v2704 = vmul.f32 %v2702, %v2703
    %v2705 = vsub.f32 1.0, %v2704
    %v2706 = vmul.f32 %v2703, %v2705
    %v2707 = vadd.f32 %v2703, %v2706
    %vm2708 = vweird.f32 %v2702
    %vm2709 = vweird.f32 %v2703
    %vm2710 = vmor %vm2708, %vm2709
    %v2711 = vsel %vm2710, %v2703, %v2707
    %v2712 = vand.u32 2147483647, %v2702
    %vm2713 = vcmp.eq.f32.partialorder %v2712, 8.507059e+37
    %v2714 = vand.u32 %v2702, 2147483648
    %v2715 = vor.u32 1.1754944e-38, %v2714
    %v2716 = vsel %vm2713, %v2715, %v2711
    %v2717 = vmul.f32 1.0, %v2716
    %v2718 = vxor.u32 %v2696, 2147483648
    %v2719 = vmul.f32 %v2718, 1.442695
    %v2720 = vpow.pop %v2719
    %v2721 = vadd.f32 %v2720, 1.0
    %v2722 = vrcp.pop %v2721
    %v2723 = vmul.f32 %v2721, %v2722
    %v2724 = vsub.f32 1.0, %v2723
    %v2725 = vmul.f32 %v2722, %v2724
    %v2726 = vadd.f32 %v2722, %v2725
    %vm2727 = vweird.f32 %v2721
    %vm2728 = vweird.f32 %v2722
    %vm2729 = vmor %vm2727, %vm2728
    %v2730 = vsel %vm2729, %v2722, %v2726
    %v2731 = vand.u32 2147483647, %v2721
    %vm2732 = vcmp.eq.f32.partialorder %v2731, 8.507059e+37
    %v2733 = vand.u32 %v2721, 2147483648
    %v2734 = vor.u32 1.1754944e-38, %v2733
    %v2735 = vsel %vm2732, %v2734, %v2730
    %v2736 = vmul.f32 1.0, %v2735
    %v2737 = vtanh.pop %v2697
    %v2738 = vxor.u32 %v2698, 2147483648
    %v2739 = vmul.f32 %v2738, 1.442695
    %v2740 = vpow.pop %v2739
    %v2741 = vadd.f32 %v2740, 1.0
    %v2742 = vrcp.pop %v2741
    %v2743 = vmul.f32 %v2741, %v2742
    %v2744 = vsub.f32 1.0, %v2743
    %v2745 = vmul.f32 %v2742, %v2744
    %v2746 = vadd.f32 %v2742, %v2745
    %vm2747 = vweird.f32 %v2741
    %vm2748 = vweird.f32 %v2742
    %vm2749 = vmor %vm2747, %vm2748
    %v2750 = vsel %vm2749, %v2742, %v2746
    %v2751 = vand.u32 2147483647, %v2741
    %vm2752 = vcmp.eq.f32.partialorder %v2751, 8.507059e+37
    %v2753 = vand.u32 %v2741, 2147483648
    %v2754 = vor.u32 1.1754944e-38, %v2753
    %v2755 = vsel %vm2752, %v2754, %v2750
    %v2756 = vmul.f32 1.0, %v2755
    %v2758 = vrot.slane %v2596, 6
    %v2760 = vmul.f32 %v2736, %v2758
    %v2761 = vmul.f32 %v2717, %v2737
    %v2762 = vadd.f32 %v2760, %v2761
    %v2763 = vtanh.pop %v2762
    %v2764 = vmul.f32 %v2756, %v2763
    %2765 = vst [vmem:[#allocation2 + $0x8] sm:$0x30] %v2764
    %v2767 = vrot.slane %v2764, 4
    %2769 = vmatpush.msra.mxu0 %v1628
    %2770 = vmatpush.msra.mxu0 %v1624
    %2771 = vmatpush.msra.mxu0 %v1620
    %2772 = vmatpush.msra.mxu0 %v1616
    %2773 = vmatpush.msra.mxu0 %v1612
    %2774 = vmatpush.msra.mxu0 %v1608
    %2775 = vmatpush.msra.mxu0 %v1604
    %2776 = vmatpush.msra.mxu0 %v1600
    %2777 = vmatpush.msra.mxu0 %v1596
    %2778 = vmatpush.msra.mxu0 %v1592
    %2779 = vmatpush.msra.mxu0 %v1588
    %2780 = vmatpush.msra.mxu0 %v1584
    %2781 = vmatpush.msra.mxu0 %v1580
    %2782 = vmatpush.msra.mxu0 %v1576
    %2783 = vmatpush.msra.mxu0 %v1572
    %2784 = vmatpush.msra.mxu0 %v1568
    %2785 = vmatmul.f32.gmra.mxu0 %v2767
    %v2786 = vpop.f32.mrf.mxu0
    %v2787 = vadd.f32 0.0, %v2786
    %2788 = vdwg.mxu0
    %2789 = vmatpush.msra.mxu0 %v1629
    %2790 = vmatpush.msra.mxu0 %v1625
    %2791 = vmatpush.msra.mxu0 %v1621
    %2792 = vmatpush.msra.mxu0 %v1617
    %2793 = vmatpush.msra.mxu0 %v1613
    %2794 = vmatpush.msra.mxu0 %v1609
    %2795 = vmatpush.msra.mxu0 %v1605
    %2796 = vmatpush.msra.mxu0 %v1601
    %2797 = vmatpush.msra.mxu0 %v1597
    %2798 = vmatpush.msra.mxu0 %v1593
    %2799 = vmatpush.msra.mxu0 %v1589
    %2800 = vmatpush.msra.mxu0 %v1585
    %2801 = vmatpush.msra.mxu0 %v1581
    %2802 = vmatpush.msra.mxu0 %v1577
    %2803 = vmatpush.msra.mxu0 %v1573
    %2804 = vmatpush.msra.mxu0 %v1569
    %2805 = vmatmul.f32.gmra.mxu0 %v2767
    %v2806 = vpop.f32.mrf.mxu0
    %v2807 = vadd.f32 0.0, %v2806
    %2808 = vdwg.mxu0
    %2809 = vmatpush.msra.mxu0 %v1630
    %2810 = vmatpush.msra.mxu0 %v1626
    %2811 = vmatpush.msra.mxu0 %v1622
    %2812 = vmatpush.msra.mxu0 %v1618
    %2813 = vmatpush.msra.mxu0 %v1614
    %2814 = vmatpush.msra.mxu0 %v1610
    %2815 = vmatpush.msra.mxu0 %v1606
    %2816 = vmatpush.msra.mxu0 %v1602
    %2817 = vmatpush.msra.mxu0 %v1598
    %2818 = vmatpush.msra.mxu0 %v1594
    %2819 = vmatpush.msra.mxu0 %v1590
    %2820 = vmatpush.msra.mxu0 %v1586
    %2821 = vmatpush.msra.mxu0 %v1582
    %2822 = vmatpush.msra.mxu0 %v1578
    %2823 = vmatpush.msra.mxu0 %v1574
    %2824 = vmatpush.msra.mxu0 %v1570
    %2825 = vmatmul.f32.gmra.mxu0 %v2767
    %v2826 = vpop.f32.mrf.mxu0
    %v2827 = vadd.f32 0.0, %v2826
    %2828 = vdwg.mxu0
    %2829 = vmatpush.msra.mxu0 %v1631
    %2830 = vmatpush.msra.mxu0 %v1627
    %2831 = vmatpush.msra.mxu0 %v1623
    %2832 = vmatpush.msra.mxu0 %v1619
    %2833 = vmatpush.msra.mxu0 %v1615
    %2834 = vmatpush.msra.mxu0 %v1611
    %2835 = vmatpush.msra.mxu0 %v1607
    %2836 = vmatpush.msra.mxu0 %v1603
    %2837 = vmatpush.msra.mxu0 %v1599
    %2838 = vmatpush.msra.mxu0 %v1595
    %2839 = vmatpush.msra.mxu0 %v1591
    %2840 = vmatpush.msra.mxu0 %v1587
    %2841 = vmatpush.msra.mxu0 %v1583
    %2842 = vmatpush.msra.mxu0 %v1579
    %2843 = vmatpush.msra.mxu0 %v1575
    %2844 = vmatpush.msra.mxu0 %v1571
    %2845 = vmatmul.f32.gmra.mxu0 %v2767
    %v2846 = vpop.f32.mrf.mxu0
    %v2847 = vadd.f32 0.0, %v2846
    %2848 = vdwg.mxu0
    %v2853 = vrot.slane %v2787, 2
    %v2854 = vrot.slane %v2807, 2
    %v2855 = vrot.slane %v2827, 2
    %v2856 = vrot.slane %v2847, 2
    %v2861 = vadd.f32 %v1560, %v2853
    %v2862 = vadd.f32 %v1561, %v2854
    %v2863 = vadd.f32 %v1562, %v2855
    %v2864 = vadd.f32 %v1563, %v2856
    %v2865 = vxor.u32 %v2861, 2147483648
    %v2866 = vmul.f32 %v2865, 1.442695
    %v2867 = vpow.pop %v2866
    %v2868 = vadd.f32 %v2867, 1.0
    %v2869 = vrcp.pop %v2868
    %v2870 = vmul.f32 %v2868, %v2869
    %v2871 = vsub.f32 1.0, %v2870
    %v2872 = vmul.f32 %v2869, %v2871
    %v2873 = vadd.f32 %v2869, %v2872
    %vm2874 = vweird.f32 %v2868
    %vm2875 = vweird.f32 %v2869
    %vm2876 = vmor %vm2874, %vm2875
    %v2877 = vsel %vm2876, %v2869, %v2873
    %v2878 = vand.u32 2147483647, %v2868
    %vm2879 = vcmp.eq.f32.partialorder %v2878, 8.507059e+37
    %v2880 = vand.u32 %v2868, 2147483648
    %v2881 = vor.u32 1.1754944e-38, %v2880
    %v2882 = vsel %vm2879, %v2881, %v2877
    %v2883 = vmul.f32 1.0, %v2882
    %v2884 = vxor.u32 %v2862, 2147483648
    %v2885 = vmul.f32 %v2884, 1.442695
    %v2886 = vpow.pop %v2885
    %v2887 = vadd.f32 %v2886, 1.0
    %v2888 = vrcp.pop %v2887
    %v2889 = vmul.f32 %v2887, %v2888
    %v2890 = vsub.f32 1.0, %v2889
    %v2891 = vmul.f32 %v2888, %v2890
    %v2892 = vadd.f32 %v2888, %v2891
    %vm2893 = vweird.f32 %v2887
    %vm2894 = vweird.f32 %v2888
    %vm2895 = vmor %vm2893, %vm2894
    %v2896 = vsel %vm2895, %v2888, %v2892
    %v2897 = vand.u32 2147483647, %v2887
    %vm2898 = vcmp.eq.f32.partialorder %v2897, 8.507059e+37
    %v2899 = vand.u32 %v2887, 2147483648
    %v2900 = vor.u32 1.1754944e-38, %v2899
    %v2901 = vsel %vm2898, %v2900, %v2896
    %v2902 = vmul.f32 1.0, %v2901
    %v2903 = vtanh.pop %v2863
    %v2904 = vxor.u32 %v2864, 2147483648
    %v2905 = vmul.f32 %v2904, 1.442695
    %v2906 = vpow.pop %v2905
    %v2907 = vadd.f32 %v2906, 1.0
    %v2908 = vrcp.pop %v2907
    %v2909 = vmul.f32 %v2907, %v2908
    %v2910 = vsub.f32 1.0, %v2909
    %v2911 = vmul.f32 %v2908, %v2910
    %v2912 = vadd.f32 %v2908, %v2911
    %vm2913 = vweird.f32 %v2907
    %vm2914 = vweird.f32 %v2908
    %vm2915 = vmor %vm2913, %vm2914
    %v2916 = vsel %vm2915, %v2908, %v2912
    %v2917 = vand.u32 2147483647, %v2907
    %vm2918 = vcmp.eq.f32.partialorder %v2917, 8.507059e+37
    %v2919 = vand.u32 %v2907, 2147483648
    %v2920 = vor.u32 1.1754944e-38, %v2919
    %v2921 = vsel %vm2918, %v2920, %v2916
    %v2922 = vmul.f32 1.0, %v2921
    %v2924 = vrot.slane %v2762, 6
    %v2926 = vmul.f32 %v2902, %v2924
    %v2927 = vmul.f32 %v2883, %v2903
    %v2928 = vadd.f32 %v2926, %v2927
    %v2929 = vtanh.pop %v2928
    %v2930 = vmul.f32 %v2922, %v2929
    %2931 = vst [vmem:[#allocation2 + $0x8] sm:$0xc0] %v2930
    %s2932 = scalar_lea.vmem [#allocation12], 512
    %v2933 = vld [vmem:[%s2932] sm:$0xff]
    %v2934 = vld [vmem:[%s2932 + $0x8] sm:$0xff]
    %v2935 = vld [vmem:[%s2932 + $0x10] sm:$0xff]
    %v2936 = vld [vmem:[%s2932 + $0x18] sm:$0xff]
    %v2937 = vld [vmem:[%s2932 + $0x20] sm:$0xff]
    %v2938 = vld [vmem:[%s2932 + $0x28] sm:$0xff]
    %v2939 = vld [vmem:[%s2932 + $0x30] sm:$0xff]
    %v2940 = vld [vmem:[%s2932 + $0x38] sm:$0xff]
    %v2941 = vld [vmem:[%s2932 + $0x40] sm:$0xff]
    %v2942 = vld [vmem:[%s2932 + $0x48] sm:$0xff]
    %v2943 = vld [vmem:[%s2932 + $0x50] sm:$0xff]
    %v2944 = vld [vmem:[%s2932 + $0x58] sm:$0xff]
    %v2945 = vld [vmem:[%s2932 + $0x60] sm:$0xff]
    %v2946 = vld [vmem:[%s2932 + $0x68] sm:$0xff]
    %v2947 = vld [vmem:[%s2932 + $0x70] sm:$0xff]
    %v2948 = vld [vmem:[%s2932 + $0x78] sm:$0xff]
    %v2949 = vld [vmem:[%s2932 + $0x80] sm:$0xff]
    %v2950 = vld [vmem:[%s2932 + $0x88] sm:$0xff]
    %v2951 = vld [vmem:[%s2932 + $0x90] sm:$0xff]
    %v2952 = vld [vmem:[%s2932 + $0x98] sm:$0xff]
    %v2953 = vld [vmem:[%s2932 + $0xa0] sm:$0xff]
    %v2954 = vld [vmem:[%s2932 + $0xa8] sm:$0xff]
    %v2955 = vld [vmem:[%s2932 + $0xb0] sm:$0xff]
    %v2956 = vld [vmem:[%s2932 + $0xb8] sm:$0xff]
    %v2957 = vld [vmem:[%s2932 + $0xc0] sm:$0xff]
    %v2958 = vld [vmem:[%s2932 + $0xc8] sm:$0xff]
    %v2959 = vld [vmem:[%s2932 + $0xd0] sm:$0xff]
    %v2960 = vld [vmem:[%s2932 + $0xd8] sm:$0xff]
    %v2961 = vld [vmem:[%s2932 + $0xe0] sm:$0xff]
    %v2962 = vld [vmem:[%s2932 + $0xe8] sm:$0xff]
    %v2963 = vld [vmem:[%s2932 + $0xf0] sm:$0xff]
    %v2964 = vld [vmem:[%s2932 + $0xf8] sm:$0xff]
    %v2965 = vld [vmem:[%s2932 + $0x100] sm:$0xff]
    %v2966 = vld [vmem:[%s2932 + $0x108] sm:$0xff]
    %v2967 = vld [vmem:[%s2932 + $0x110] sm:$0xff]
    %v2968 = vld [vmem:[%s2932 + $0x118] sm:$0xff]
    %v2969 = vld [vmem:[%s2932 + $0x120] sm:$0xff]
    %v2970 = vld [vmem:[%s2932 + $0x128] sm:$0xff]
    %v2971 = vld [vmem:[%s2932 + $0x130] sm:$0xff]
    %v2972 = vld [vmem:[%s2932 + $0x138] sm:$0xff]
    %v2973 = vld [vmem:[%s2932 + $0x140] sm:$0xff]
    %v2974 = vld [vmem:[%s2932 + $0x148] sm:$0xff]
    %v2975 = vld [vmem:[%s2932 + $0x150] sm:$0xff]
    %v2976 = vld [vmem:[%s2932 + $0x158] sm:$0xff]
    %v2977 = vld [vmem:[%s2932 + $0x160] sm:$0xff]
    %v2978 = vld [vmem:[%s2932 + $0x168] sm:$0xff]
    %v2979 = vld [vmem:[%s2932 + $0x170] sm:$0xff]
    %v2980 = vld [vmem:[%s2932 + $0x178] sm:$0xff]
    %v2981 = vld [vmem:[%s2932 + $0x180] sm:$0xff]
    %v2982 = vld [vmem:[%s2932 + $0x188] sm:$0xff]
    %v2983 = vld [vmem:[%s2932 + $0x190] sm:$0xff]
    %v2984 = vld [vmem:[%s2932 + $0x198] sm:$0xff]
    %v2985 = vld [vmem:[%s2932 + $0x1a0] sm:$0xff]
    %v2986 = vld [vmem:[%s2932 + $0x1a8] sm:$0xff]
    %v2987 = vld [vmem:[%s2932 + $0x1b0] sm:$0xff]
    %v2988 = vld [vmem:[%s2932 + $0x1b8] sm:$0xff]
    %v2989 = vld [vmem:[%s2932 + $0x1c0] sm:$0xff]
    %v2990 = vld [vmem:[%s2932 + $0x1c8] sm:$0xff]
    %v2991 = vld [vmem:[%s2932 + $0x1d0] sm:$0xff]
    %v2992 = vld [vmem:[%s2932 + $0x1d8] sm:$0xff]
    %v2993 = vld [vmem:[%s2932 + $0x1e0] sm:$0xff]
    %v2994 = vld [vmem:[%s2932 + $0x1e8] sm:$0xff]
    %v2995 = vld [vmem:[%s2932 + $0x1f0] sm:$0xff]
    %v2996 = vld [vmem:[%s2932 + $0x1f8] sm:$0xff]
    %s2997 = scalar_lea.vmem %s11, 1
    %v2998 = vld [vmem:[%s2997] sm:$0x1]
    %s2999 = scalar_lea.vmem %s12, 1
    %v3000 = vld [vmem:[%s2999] sm:$0x1]
    %v3002 = vperm.slane %v2998, 0
    %v3005 = vperm.slane %v3000, 0
    %3007 = vmatpush.msra.mxu0 %v2993
    %3008 = vmatpush.msra.mxu0 %v2989
    %3009 = vmatpush.msra.mxu0 %v2985
    %3010 = vmatpush.msra.mxu0 %v2981
    %3011 = vmatpush.msra.mxu0 %v2977
    %3012 = vmatpush.msra.mxu0 %v2973
    %3013 = vmatpush.msra.mxu0 %v2969
    %3014 = vmatpush.msra.mxu0 %v2965
    %3015 = vmatpush.msra.mxu0 %v2961
    %3016 = vmatpush.msra.mxu0 %v2957
    %3017 = vmatpush.msra.mxu0 %v2953
    %3018 = vmatpush.msra.mxu0 %v2949
    %3019 = vmatpush.msra.mxu0 %v2945
    %3020 = vmatpush.msra.mxu0 %v2941
    %3021 = vmatpush.msra.mxu0 %v2937
    %3022 = vmatpush.msra.mxu0 %v2933
    %3023 = vmatmul.f32.gmra.mxu0 %v3002
    %v3024 = vpop.f32.mrf.mxu0
    %v3025 = vadd.f32 0.0, %v3024
    %3026 = vdwg.mxu0
    %3027 = vmatpush.msra.mxu0 %v2994
    %3028 = vmatpush.msra.mxu0 %v2990
    %3029 = vmatpush.msra.mxu0 %v2986
    %3030 = vmatpush.msra.mxu0 %v2982
    %3031 = vmatpush.msra.mxu0 %v2978
    %3032 = vmatpush.msra.mxu0 %v2974
    %3033 = vmatpush.msra.mxu0 %v2970
    %3034 = vmatpush.msra.mxu0 %v2966
    %3035 = vmatpush.msra.mxu0 %v2962
    %3036 = vmatpush.msra.mxu0 %v2958
    %3037 = vmatpush.msra.mxu0 %v2954
    %3038 = vmatpush.msra.mxu0 %v2950
    %3039 = vmatpush.msra.mxu0 %v2946
    %3040 = vmatpush.msra.mxu0 %v2942
    %3041 = vmatpush.msra.mxu0 %v2938
    %3042 = vmatpush.msra.mxu0 %v2934
    %3043 = vmatmul.f32.gmra.mxu0 %v3002
    %v3044 = vpop.f32.mrf.mxu0
    %v3045 = vadd.f32 0.0, %v3044
    %3046 = vdwg.mxu0
    %3047 = vmatpush.msra.mxu0 %v2995
    %3048 = vmatpush.msra.mxu0 %v2991
    %3049 = vmatpush.msra.mxu0 %v2987
    %3050 = vmatpush.msra.mxu0 %v2983
    %3051 = vmatpush.msra.mxu0 %v2979
    %3052 = vmatpush.msra.mxu0 %v2975
    %3053 = vmatpush.msra.mxu0 %v2971
    %3054 = vmatpush.msra.mxu0 %v2967
    %3055 = vmatpush.msra.mxu0 %v2963
    %3056 = vmatpush.msra.mxu0 %v2959
    %3057 = vmatpush.msra.mxu0 %v2955
    %3058 = vmatpush.msra.mxu0 %v2951
    %3059 = vmatpush.msra.mxu0 %v2947
    %3060 = vmatpush.msra.mxu0 %v2943
    %3061 = vmatpush.msra.mxu0 %v2939
    %3062 = vmatpush.msra.mxu0 %v2935
    %3063 = vmatmul.f32.gmra.mxu0 %v3002
    %v3064 = vpop.f32.mrf.mxu0
    %v3065 = vadd.f32 0.0, %v3064
    %3066 = vdwg.mxu0
    %3067 = vmatpush.msra.mxu0 %v2996
    %3068 = vmatpush.msra.mxu0 %v2992
    %3069 = vmatpush.msra.mxu0 %v2988
    %3070 = vmatpush.msra.mxu0 %v2984
    %3071 = vmatpush.msra.mxu0 %v2980
    %3072 = vmatpush.msra.mxu0 %v2976
    %3073 = vmatpush.msra.mxu0 %v2972
    %3074 = vmatpush.msra.mxu0 %v2968
    %3075 = vmatpush.msra.mxu0 %v2964
    %3076 = vmatpush.msra.mxu0 %v2960
    %3077 = vmatpush.msra.mxu0 %v2956
    %3078 = vmatpush.msra.mxu0 %v2952
    %3079 = vmatpush.msra.mxu0 %v2948
    %3080 = vmatpush.msra.mxu0 %v2944
    %3081 = vmatpush.msra.mxu0 %v2940
    %3082 = vmatpush.msra.mxu0 %v2936
    %3083 = vmatmul.f32.gmra.mxu0 %v3002
    %v3084 = vpop.f32.mrf.mxu0
    %v3085 = vadd.f32 0.0, %v3084
    %3086 = vdwg.mxu0
    %v3091 = vrot.slane %v3025, 2
    %v3092 = vrot.slane %v3045, 2
    %v3093 = vrot.slane %v3065, 2
    %v3094 = vrot.slane %v3085, 2
    %v3099 = vadd.f32 %v1564, %v3091
    %v3100 = vadd.f32 %v1565, %v3092
    %v3101 = vadd.f32 %v1566, %v3093
    %v3102 = vadd.f32 %v1567, %v3094
    %v3103 = vxor.u32 %v3099, 2147483648
    %v3104 = vmul.f32 %v3103, 1.442695
    %v3105 = vpow.pop %v3104
    %v3106 = vadd.f32 %v3105, 1.0
    %v3107 = vrcp.pop %v3106
    %v3108 = vmul.f32 %v3106, %v3107
    %v3109 = vsub.f32 1.0, %v3108
    %v3110 = vmul.f32 %v3107, %v3109
    %v3111 = vadd.f32 %v3107, %v3110
    %vm3112 = vweird.f32 %v3106
    %vm3113 = vweird.f32 %v3107
    %vm3114 = vmor %vm3112, %vm3113
    %v3115 = vsel %vm3114, %v3107, %v3111
    %v3116 = vand.u32 2147483647, %v3106
    %vm3117 = vcmp.eq.f32.partialorder %v3116, 8.507059e+37
    %v3118 = vand.u32 %v3106, 2147483648
    %v3119 = vor.u32 1.1754944e-38, %v3118
    %v3120 = vsel %vm3117, %v3119, %v3115
    %v3121 = vmul.f32 1.0, %v3120
    %v3122 = vxor.u32 %v3100, 2147483648
    %v3123 = vmul.f32 %v3122, 1.442695
    %v3124 = vpow.pop %v3123
    %v3125 = vadd.f32 %v3124, 1.0
    %v3126 = vrcp.pop %v3125
    %v3127 = vmul.f32 %v3125, %v3126
    %v3128 = vsub.f32 1.0, %v3127
    %v3129 = vmul.f32 %v3126, %v3128
    %v3130 = vadd.f32 %v3126, %v3129
    %vm3131 = vweird.f32 %v3125
    %vm3132 = vweird.f32 %v3126
    %vm3133 = vmor %vm3131, %vm3132
    %v3134 = vsel %vm3133, %v3126, %v3130
    %v3135 = vand.u32 2147483647, %v3125
    %vm3136 = vcmp.eq.f32.partialorder %v3135, 8.507059e+37
    %v3137 = vand.u32 %v3125, 2147483648
    %v3138 = vor.u32 1.1754944e-38, %v3137
    %v3139 = vsel %vm3136, %v3138, %v3134
    %v3140 = vmul.f32 1.0, %v3139
    %v3141 = vtanh.pop %v3101
    %v3142 = vxor.u32 %v3102, 2147483648
    %v3143 = vmul.f32 %v3142, 1.442695
    %v3144 = vpow.pop %v3143
    %v3145 = vadd.f32 %v3144, 1.0
    %v3146 = vrcp.pop %v3145
    %v3147 = vmul.f32 %v3145, %v3146
    %v3148 = vsub.f32 1.0, %v3147
    %v3149 = vmul.f32 %v3146, %v3148
    %v3150 = vadd.f32 %v3146, %v3149
    %vm3151 = vweird.f32 %v3145
    %vm3152 = vweird.f32 %v3146
    %vm3153 = vmor %vm3151, %vm3152
    %v3154 = vsel %vm3153, %v3146, %v3150
    %v3155 = vand.u32 2147483647, %v3145
    %vm3156 = vcmp.eq.f32.partialorder %v3155, 8.507059e+37
    %v3157 = vand.u32 %v3145, 2147483648
    %v3158 = vor.u32 1.1754944e-38, %v3157
    %v3159 = vsel %vm3156, %v3158, %v3154
    %v3160 = vmul.f32 1.0, %v3159
    %v3161 = vmul.f32 %v3140, %v3005
    %v3162 = vmul.f32 %v3121, %v3141
    %v3163 = vadd.f32 %v3161, %v3162
    %v3164 = vtanh.pop %v3163
    %v3165 = vmul.f32 %v3160, %v3164
    %3166 = vst [vmem:[#allocation3 + $0x8] sm:$0xc0] %v3165
    %v3168 = vrot.slane %v3165, 6
    %3170 = vmatpush.msra.mxu0 %v2993
    %3171 = vmatpush.msra.mxu0 %v2989
    %3172 = vmatpush.msra.mxu0 %v2985
    %3173 = vmatpush.msra.mxu0 %v2981
    %3174 = vmatpush.msra.mxu0 %v2977
    %3175 = vmatpush.msra.mxu0 %v2973
    %3176 = vmatpush.msra.mxu0 %v2969
    %3177 = vmatpush.msra.mxu0 %v2965
    %3178 = vmatpush.msra.mxu0 %v2961
    %3179 = vmatpush.msra.mxu0 %v2957
    %3180 = vmatpush.msra.mxu0 %v2953
    %3181 = vmatpush.msra.mxu0 %v2949
    %3182 = vmatpush.msra.mxu0 %v2945
    %3183 = vmatpush.msra.mxu0 %v2941
    %3184 = vmatpush.msra.mxu0 %v2937
    %3185 = vmatpush.msra.mxu0 %v2933
    %3186 = vmatmul.f32.gmra.mxu0 %v3168
    %v3187 = vpop.f32.mrf.mxu0
    %v3188 = vadd.f32 0.0, %v3187
    %3189 = vdwg.mxu0
    %3190 = vmatpush.msra.mxu0 %v2994
    %3191 = vmatpush.msra.mxu0 %v2990
    %3192 = vmatpush.msra.mxu0 %v2986
    %3193 = vmatpush.msra.mxu0 %v2982
    %3194 = vmatpush.msra.mxu0 %v2978
    %3195 = vmatpush.msra.mxu0 %v2974
    %3196 = vmatpush.msra.mxu0 %v2970
    %3197 = vmatpush.msra.mxu0 %v2966
    %3198 = vmatpush.msra.mxu0 %v2962
    %3199 = vmatpush.msra.mxu0 %v2958
    %3200 = vmatpush.msra.mxu0 %v2954
    %3201 = vmatpush.msra.mxu0 %v2950
    %3202 = vmatpush.msra.mxu0 %v2946
    %3203 = vmatpush.msra.mxu0 %v2942
    %3204 = vmatpush.msra.mxu0 %v2938
    %3205 = vmatpush.msra.mxu0 %v2934
    %3206 = vmatmul.f32.gmra.mxu0 %v3168
    %v3207 = vpop.f32.mrf.mxu0
    %v3208 = vadd.f32 0.0, %v3207
    %3209 = vdwg.mxu0
    %3210 = vmatpush.msra.mxu0 %v2995
    %3211 = vmatpush.msra.mxu0 %v2991
    %3212 = vmatpush.msra.mxu0 %v2987
    %3213 = vmatpush.msra.mxu0 %v2983
    %3214 = vmatpush.msra.mxu0 %v2979
    %3215 = vmatpush.msra.mxu0 %v2975
    %3216 = vmatpush.msra.mxu0 %v2971
    %3217 = vmatpush.msra.mxu0 %v2967
    %3218 = vmatpush.msra.mxu0 %v2963
    %3219 = vmatpush.msra.mxu0 %v2959
    %3220 = vmatpush.msra.mxu0 %v2955
    %3221 = vmatpush.msra.mxu0 %v2951
    %3222 = vmatpush.msra.mxu0 %v2947
    %3223 = vmatpush.msra.mxu0 %v2943
    %3224 = vmatpush.msra.mxu0 %v2939
    %3225 = vmatpush.msra.mxu0 %v2935
    %3226 = vmatmul.f32.gmra.mxu0 %v3168
    %v3227 = vpop.f32.mrf.mxu0
    %v3228 = vadd.f32 0.0, %v3227
    %3229 = vdwg.mxu0
    %3230 = vmatpush.msra.mxu0 %v2996
    %3231 = vmatpush.msra.mxu0 %v2992
    %3232 = vmatpush.msra.mxu0 %v2988
    %3233 = vmatpush.msra.mxu0 %v2984
    %3234 = vmatpush.msra.mxu0 %v2980
    %3235 = vmatpush.msra.mxu0 %v2976
    %3236 = vmatpush.msra.mxu0 %v2972
    %3237 = vmatpush.msra.mxu0 %v2968
    %3238 = vmatpush.msra.mxu0 %v2964
    %3239 = vmatpush.msra.mxu0 %v2960
    %3240 = vmatpush.msra.mxu0 %v2956
    %3241 = vmatpush.msra.mxu0 %v2952
    %3242 = vmatpush.msra.mxu0 %v2948
    %3243 = vmatpush.msra.mxu0 %v2944
    %3244 = vmatpush.msra.mxu0 %v2940
    %3245 = vmatpush.msra.mxu0 %v2936
    %3246 = vmatmul.f32.gmra.mxu0 %v3168
    %v3247 = vpop.f32.mrf.mxu0
    %v3248 = vadd.f32 0.0, %v3247
    %3249 = vdwg.mxu0
    %v3254 = vrot.slane %v3188, 4
    %v3255 = vrot.slane %v3208, 4
    %v3256 = vrot.slane %v3228, 4
    %v3257 = vrot.slane %v3248, 4
    %v3262 = vadd.f32 %v1564, %v3254
    %v3263 = vadd.f32 %v1565, %v3255
    %v3264 = vadd.f32 %v1566, %v3256
    %v3265 = vadd.f32 %v1567, %v3257
    %v3266 = vxor.u32 %v3262, 2147483648
    %v3267 = vmul.f32 %v3266, 1.442695
    %v3268 = vpow.pop %v3267
    %v3269 = vadd.f32 %v3268, 1.0
    %v3270 = vrcp.pop %v3269
    %v3271 = vmul.f32 %v3269, %v3270
    %v3272 = vsub.f32 1.0, %v3271
    %v3273 = vmul.f32 %v3270, %v3272
    %v3274 = vadd.f32 %v3270, %v3273
    %vm3275 = vweird.f32 %v3269
    %vm3276 = vweird.f32 %v3270
    %vm3277 = vmor %vm3275, %vm3276
    %v3278 = vsel %vm3277, %v3270, %v3274
    %v3279 = vand.u32 2147483647, %v3269
    %vm3280 = vcmp.eq.f32.partialorder %v3279, 8.507059e+37
    %v3281 = vand.u32 %v3269, 2147483648
    %v3282 = vor.u32 1.1754944e-38, %v3281
    %v3283 = vsel %vm3280, %v3282, %v3278
    %v3284 = vmul.f32 1.0, %v3283
    %v3285 = vxor.u32 %v3263, 2147483648
    %v3286 = vmul.f32 %v3285, 1.442695
    %v3287 = vpow.pop %v3286
    %v3288 = vadd.f32 %v3287, 1.0
    %v3289 = vrcp.pop %v3288
    %v3290 = vmul.f32 %v3288, %v3289
    %v3291 = vsub.f32 1.0, %v3290
    %v3292 = vmul.f32 %v3289, %v3291
    %v3293 = vadd.f32 %v3289, %v3292
    %vm3294 = vweird.f32 %v3288
    %vm3295 = vweird.f32 %v3289
    %vm3296 = vmor %vm3294, %vm3295
    %v3297 = vsel %vm3296, %v3289, %v3293
    %v3298 = vand.u32 2147483647, %v3288
    %vm3299 = vcmp.eq.f32.partialorder %v3298, 8.507059e+37
    %v3300 = vand.u32 %v3288, 2147483648
    %v3301 = vor.u32 1.1754944e-38, %v3300
    %v3302 = vsel %vm3299, %v3301, %v3297
    %v3303 = vmul.f32 1.0, %v3302
    %v3304 = vtanh.pop %v3264
    %v3305 = vxor.u32 %v3265, 2147483648
    %v3306 = vmul.f32 %v3305, 1.442695
    %v3307 = vpow.pop %v3306
    %v3308 = vadd.f32 %v3307, 1.0
    %v3309 = vrcp.pop %v3308
    %v3310 = vmul.f32 %v3308, %v3309
    %v3311 = vsub.f32 1.0, %v3310
    %v3312 = vmul.f32 %v3309, %v3311
    %v3313 = vadd.f32 %v3309, %v3312
    %vm3314 = vweird.f32 %v3308
    %vm3315 = vweird.f32 %v3309
    %vm3316 = vmor %vm3314, %vm3315
    %v3317 = vsel %vm3316, %v3309, %v3313
    %v3318 = vand.u32 2147483647, %v3308
    %vm3319 = vcmp.eq.f32.partialorder %v3318, 8.507059e+37
    %v3320 = vand.u32 %v3308, 2147483648
    %v3321 = vor.u32 1.1754944e-38, %v3320
    %v3322 = vsel %vm3319, %v3321, %v3317
    %v3323 = vmul.f32 1.0, %v3322
    %v3325 = vrot.slane %v3163, 2
    %v3327 = vmul.f32 %v3303, %v3325
    %v3328 = vmul.f32 %v3284, %v3304
    %v3329 = vadd.f32 %v3327, %v3328
    %v3330 = vtanh.pop %v3329
    %v3331 = vmul.f32 %v3323, %v3330
    %3332 = vst [vmem:[#allocation3 + $0x8] sm:$0x30] %v3331
    %v3334 = vrot.slane %v3331, 4
    %3336 = vmatpush.msra.mxu0 %v2993
    %3337 = vmatpush.msra.mxu0 %v2989
    %3338 = vmatpush.msra.mxu0 %v2985
    %3339 = vmatpush.msra.mxu0 %v2981
    %3340 = vmatpush.msra.mxu0 %v2977
    %3341 = vmatpush.msra.mxu0 %v2973
    %3342 = vmatpush.msra.mxu0 %v2969
    %3343 = vmatpush.msra.mxu0 %v2965
    %3344 = vmatpush.msra.mxu0 %v2961
    %3345 = vmatpush.msra.mxu0 %v2957
    %3346 = vmatpush.msra.mxu0 %v2953
    %3347 = vmatpush.msra.mxu0 %v2949
    %3348 = vmatpush.msra.mxu0 %v2945
    %3349 = vmatpush.msra.mxu0 %v2941
    %3350 = vmatpush.msra.mxu0 %v2937
    %3351 = vmatpush.msra.mxu0 %v2933
    %3352 = vmatmul.f32.gmra.mxu0 %v3334
    %v3353 = vpop.f32.mrf.mxu0
    %v3354 = vadd.f32 0.0, %v3353
    %3355 = vdwg.mxu0
    %3356 = vmatpush.msra.mxu0 %v2994
    %3357 = vmatpush.msra.mxu0 %v2990
    %3358 = vmatpush.msra.mxu0 %v2986
    %3359 = vmatpush.msra.mxu0 %v2982
    %3360 = vmatpush.msra.mxu0 %v2978
    %3361 = vmatpush.msra.mxu0 %v2974
    %3362 = vmatpush.msra.mxu0 %v2970
    %3363 = vmatpush.msra.mxu0 %v2966
    %3364 = vmatpush.msra.mxu0 %v2962
    %3365 = vmatpush.msra.mxu0 %v2958
    %3366 = vmatpush.msra.mxu0 %v2954
    %3367 = vmatpush.msra.mxu0 %v2950
    %3368 = vmatpush.msra.mxu0 %v2946
    %3369 = vmatpush.msra.mxu0 %v2942
    %3370 = vmatpush.msra.mxu0 %v2938
    %3371 = vmatpush.msra.mxu0 %v2934
    %3372 = vmatmul.f32.gmra.mxu0 %v3334
    %v3373 = vpop.f32.mrf.mxu0
    %v3374 = vadd.f32 0.0, %v3373
    %3375 = vdwg.mxu0
    %3376 = vmatpush.msra.mxu0 %v2995
    %3377 = vmatpush.msra.mxu0 %v2991
    %3378 = vmatpush.msra.mxu0 %v2987
    %3379 = vmatpush.msra.mxu0 %v2983
    %3380 = vmatpush.msra.mxu0 %v2979
    %3381 = vmatpush.msra.mxu0 %v2975
    %3382 = vmatpush.msra.mxu0 %v2971
    %3383 = vmatpush.msra.mxu0 %v2967
    %3384 = vmatpush.msra.mxu0 %v2963
    %3385 = vmatpush.msra.mxu0 %v2959
    %3386 = vmatpush.msra.mxu0 %v2955
    %3387 = vmatpush.msra.mxu0 %v2951
    %3388 = vmatpush.msra.mxu0 %v2947
    %3389 = vmatpush.msra.mxu0 %v2943
    %3390 = vmatpush.msra.mxu0 %v2939
    %3391 = vmatpush.msra.mxu0 %v2935
    %3392 = vmatmul.f32.gmra.mxu0 %v3334
    %v3393 = vpop.f32.mrf.mxu0
    %v3394 = vadd.f32 0.0, %v3393
    %3395 = vdwg.mxu0
    %3396 = vmatpush.msra.mxu0 %v2996
    %3397 = vmatpush.msra.mxu0 %v2992
    %3398 = vmatpush.msra.mxu0 %v2988
    %3399 = vmatpush.msra.mxu0 %v2984
    %3400 = vmatpush.msra.mxu0 %v2980
    %3401 = vmatpush.msra.mxu0 %v2976
    %3402 = vmatpush.msra.mxu0 %v2972
    %3403 = vmatpush.msra.mxu0 %v2968
    %3404 = vmatpush.msra.mxu0 %v2964
    %3405 = vmatpush.msra.mxu0 %v2960
    %3406 = vmatpush.msra.mxu0 %v2956
    %3407 = vmatpush.msra.mxu0 %v2952
    %3408 = vmatpush.msra.mxu0 %v2948
    %3409 = vmatpush.msra.mxu0 %v2944
    %3410 = vmatpush.msra.mxu0 %v2940
    %3411 = vmatpush.msra.mxu0 %v2936
    %3412 = vmatmul.f32.gmra.mxu0 %v3334
    %v3413 = vpop.f32.mrf.mxu0
    %v3414 = vadd.f32 0.0, %v3413
    %3415 = vdwg.mxu0
    %v3420 = vrot.slane %v3354, 6
    %v3421 = vrot.slane %v3374, 6
    %v3422 = vrot.slane %v3394, 6
    %v3423 = vrot.slane %v3414, 6
    %v3428 = vadd.f32 %v1564, %v3420
    %v3429 = vadd.f32 %v1565, %v3421
    %v3430 = vadd.f32 %v1566, %v3422
    %v3431 = vadd.f32 %v1567, %v3423
    %v3432 = vxor.u32 %v3428, 2147483648
    %v3433 = vmul.f32 %v3432, 1.442695
    %v3434 = vpow.pop %v3433
    %v3435 = vadd.f32 %v3434, 1.0
    %v3436 = vrcp.pop %v3435
    %v3437 = vmul.f32 %v3435, %v3436
    %v3438 = vsub.f32 1.0, %v3437
    %v3439 = vmul.f32 %v3436, %v3438
    %v3440 = vadd.f32 %v3436, %v3439
    %vm3441 = vweird.f32 %v3435
    %vm3442 = vweird.f32 %v3436
    %vm3443 = vmor %vm3441, %vm3442
    %v3444 = vsel %vm3443, %v3436, %v3440
    %v3445 = vand.u32 2147483647, %v3435
    %vm3446 = vcmp.eq.f32.partialorder %v3445, 8.507059e+37
    %v3447 = vand.u32 %v3435, 2147483648
    %v3448 = vor.u32 1.1754944e-38, %v3447
    %v3449 = vsel %vm3446, %v3448, %v3444
    %v3450 = vmul.f32 1.0, %v3449
    %v3451 = vxor.u32 %v3429, 2147483648
    %v3452 = vmul.f32 %v3451, 1.442695
    %v3453 = vpow.pop %v3452
    %v3454 = vadd.f32 %v3453, 1.0
    %v3455 = vrcp.pop %v3454
    %v3456 = vmul.f32 %v3454, %v3455
    %v3457 = vsub.f32 1.0, %v3456
    %v3458 = vmul.f32 %v3455, %v3457
    %v3459 = vadd.f32 %v3455, %v3458
    %vm3460 = vweird.f32 %v3454
    %vm3461 = vweird.f32 %v3455
    %vm3462 = vmor %vm3460, %vm3461
    %v3463 = vsel %vm3462, %v3455, %v3459
    %v3464 = vand.u32 2147483647, %v3454
    %vm3465 = vcmp.eq.f32.partialorder %v3464, 8.507059e+37
    %v3466 = vand.u32 %v3454, 2147483648
    %v3467 = vor.u32 1.1754944e-38, %v3466
    %v3468 = vsel %vm3465, %v3467, %v3463
    %v3469 = vmul.f32 1.0, %v3468
    %v3470 = vtanh.pop %v3430
    %v3471 = vxor.u32 %v3431, 2147483648
    %v3472 = vmul.f32 %v3471, 1.442695
    %v3473 = vpow.pop %v3472
    %v3474 = vadd.f32 %v3473, 1.0
    %v3475 = vrcp.pop %v3474
    %v3476 = vmul.f32 %v3474, %v3475
    %v3477 = vsub.f32 1.0, %v3476
    %v3478 = vmul.f32 %v3475, %v3477
    %v3479 = vadd.f32 %v3475, %v3478
    %vm3480 = vweird.f32 %v3474
    %vm3481 = vweird.f32 %v3475
    %vm3482 = vmor %vm3480, %vm3481
    %v3483 = vsel %vm3482, %v3475, %v3479
    %v3484 = vand.u32 2147483647, %v3474
    %vm3485 = vcmp.eq.f32.partialorder %v3484, 8.507059e+37
    %v3486 = vand.u32 %v3474, 2147483648
    %v3487 = vor.u32 1.1754944e-38, %v3486
    %v3488 = vsel %vm3485, %v3487, %v3483
    %v3489 = vmul.f32 1.0, %v3488
    %v3491 = vrot.slane %v3329, 2
    %v3493 = vmul.f32 %v3469, %v3491
    %v3494 = vmul.f32 %v3450, %v3470
    %v3495 = vadd.f32 %v3493, %v3494
    %v3496 = vtanh.pop %v3495
    %v3497 = vmul.f32 %v3489, %v3496
    %3498 = vst [vmem:[#allocation3 + $0x8] sm:$0xc] %v3497
    %v3500 = vrot.slane %v3497, 2
    %3502 = vmatpush.msra.mxu0 %v2993
    %3503 = vmatpush.msra.mxu0 %v2989
    %3504 = vmatpush.msra.mxu0 %v2985
    %3505 = vmatpush.msra.mxu0 %v2981
    %3506 = vmatpush.msra.mxu0 %v2977
    %3507 = vmatpush.msra.mxu0 %v2973
    %3508 = vmatpush.msra.mxu0 %v2969
    %3509 = vmatpush.msra.mxu0 %v2965
    %3510 = vmatpush.msra.mxu0 %v2961
    %3511 = vmatpush.msra.mxu0 %v2957
    %3512 = vmatpush.msra.mxu0 %v2953
    %3513 = vmatpush.msra.mxu0 %v2949
    %3514 = vmatpush.msra.mxu0 %v2945
    %3515 = vmatpush.msra.mxu0 %v2941
    %3516 = vmatpush.msra.mxu0 %v2937
    %3517 = vmatpush.msra.mxu0 %v2933
    %3518 = vmatmul.f32.gmra.mxu0 %v3500
    %v3519 = vpop.f32.mrf.mxu0
    %v3520 = vadd.f32 0.0, %v3519
    %3521 = vdwg.mxu0
    %3522 = vmatpush.msra.mxu0 %v2994
    %3523 = vmatpush.msra.mxu0 %v2990
    %3524 = vmatpush.msra.mxu0 %v2986
    %3525 = vmatpush.msra.mxu0 %v2982
    %3526 = vmatpush.msra.mxu0 %v2978
    %3527 = vmatpush.msra.mxu0 %v2974
    %3528 = vmatpush.msra.mxu0 %v2970
    %3529 = vmatpush.msra.mxu0 %v2966
    %3530 = vmatpush.msra.mxu0 %v2962
    %3531 = vmatpush.msra.mxu0 %v2958
    %3532 = vmatpush.msra.mxu0 %v2954
    %3533 = vmatpush.msra.mxu0 %v2950
    %3534 = vmatpush.msra.mxu0 %v2946
    %3535 = vmatpush.msra.mxu0 %v2942
    %3536 = vmatpush.msra.mxu0 %v2938
    %3537 = vmatpush.msra.mxu0 %v2934
    %3538 = vmatmul.f32.gmra.mxu0 %v3500
    %v3539 = vpop.f32.mrf.mxu0
    %v3540 = vadd.f32 0.0, %v3539
    %3541 = vdwg.mxu0
    %3542 = vmatpush.msra.mxu0 %v2995
    %3543 = vmatpush.msra.mxu0 %v2991
    %3544 = vmatpush.msra.mxu0 %v2987
    %3545 = vmatpush.msra.mxu0 %v2983
    %3546 = vmatpush.msra.mxu0 %v2979
    %3547 = vmatpush.msra.mxu0 %v2975
    %3548 = vmatpush.msra.mxu0 %v2971
    %3549 = vmatpush.msra.mxu0 %v2967
    %3550 = vmatpush.msra.mxu0 %v2963
    %3551 = vmatpush.msra.mxu0 %v2959
    %3552 = vmatpush.msra.mxu0 %v2955
    %3553 = vmatpush.msra.mxu0 %v2951
    %3554 = vmatpush.msra.mxu0 %v2947
    %3555 = vmatpush.msra.mxu0 %v2943
    %3556 = vmatpush.msra.mxu0 %v2939
    %3557 = vmatpush.msra.mxu0 %v2935
    %3558 = vmatmul.f32.gmra.mxu0 %v3500
    %v3559 = vpop.f32.mrf.mxu0
    %v3560 = vadd.f32 0.0, %v3559
    %3561 = vdwg.mxu0
    %3562 = vmatpush.msra.mxu0 %v2996
    %3563 = vmatpush.msra.mxu0 %v2992
    %3564 = vmatpush.msra.mxu0 %v2988
    %3565 = vmatpush.msra.mxu0 %v2984
    %3566 = vmatpush.msra.mxu0 %v2980
    %3567 = vmatpush.msra.mxu0 %v2976
    %3568 = vmatpush.msra.mxu0 %v2972
    %3569 = vmatpush.msra.mxu0 %v2968
    %3570 = vmatpush.msra.mxu0 %v2964
    %3571 = vmatpush.msra.mxu0 %v2960
    %3572 = vmatpush.msra.mxu0 %v2956
    %3573 = vmatpush.msra.mxu0 %v2952
    %3574 = vmatpush.msra.mxu0 %v2948
    %3575 = vmatpush.msra.mxu0 %v2944
    %3576 = vmatpush.msra.mxu0 %v2940
    %3577 = vmatpush.msra.mxu0 %v2936
    %3578 = vmatmul.f32.gmra.mxu0 %v3500
    %v3579 = vpop.f32.mrf.mxu0
    %v3580 = vadd.f32 0.0, %v3579
    %3581 = vdwg.mxu0
    %v3582 = vadd.f32 %v1564, %v3520
    %v3583 = vadd.f32 %v1565, %v3540
    %v3584 = vadd.f32 %v1566, %v3560
    %v3585 = vadd.f32 %v1567, %v3580
    %v3586 = vxor.u32 %v3582, 2147483648
    %v3587 = vmul.f32 %v3586, 1.442695
    %v3588 = vpow.pop %v3587
    %v3589 = vadd.f32 %v3588, 1.0
    %v3590 = vrcp.pop %v3589
    %v3591 = vmul.f32 %v3589, %v3590
    %v3592 = vsub.f32 1.0, %v3591
    %v3593 = vmul.f32 %v3590, %v3592
    %v3594 = vadd.f32 %v3590, %v3593
    %vm3595 = vweird.f32 %v3589
    %vm3596 = vweird.f32 %v3590
    %vm3597 = vmor %vm3595, %vm3596
    %v3598 = vsel %vm3597, %v3590, %v3594
    %v3599 = vand.u32 2147483647, %v3589
    %vm3600 = vcmp.eq.f32.partialorder %v3599, 8.507059e+37
    %v3601 = vand.u32 %v3589, 2147483648
    %v3602 = vor.u32 1.1754944e-38, %v3601
    %v3603 = vsel %vm3600, %v3602, %v3598
    %v3604 = vmul.f32 1.0, %v3603
    %v3605 = vxor.u32 %v3583, 2147483648
    %v3606 = vmul.f32 %v3605, 1.442695
    %v3607 = vpow.pop %v3606
    %v3608 = vadd.f32 %v3607, 1.0
    %v3609 = vrcp.pop %v3608
    %v3610 = vmul.f32 %v3608, %v3609
    %v3611 = vsub.f32 1.0, %v3610
    %v3612 = vmul.f32 %v3609, %v3611
    %v3613 = vadd.f32 %v3609, %v3612
    %vm3614 = vweird.f32 %v3608
    %vm3615 = vweird.f32 %v3609
    %vm3616 = vmor %vm3614, %vm3615
    %v3617 = vsel %vm3616, %v3609, %v3613
    %v3618 = vand.u32 2147483647, %v3608
    %vm3619 = vcmp.eq.f32.partialorder %v3618, 8.507059e+37
    %v3620 = vand.u32 %v3608, 2147483648
    %v3621 = vor.u32 1.1754944e-38, %v3620
    %v3622 = vsel %vm3619, %v3621, %v3617
    %v3623 = vmul.f32 1.0, %v3622
    %v3624 = vtanh.pop %v3584
    %v3625 = vxor.u32 %v3585, 2147483648
    %v3626 = vmul.f32 %v3625, 1.442695
    %v3627 = vpow.pop %v3626
    %v3628 = vadd.f32 %v3627, 1.0
    %v3629 = vrcp.pop %v3628
    %v3630 = vmul.f32 %v3628, %v3629
    %v3631 = vsub.f32 1.0, %v3630
    %v3632 = vmul.f32 %v3629, %v3631
    %v3633 = vadd.f32 %v3629, %v3632
    %vm3634 = vweird.f32 %v3628
    %vm3635 = vweird.f32 %v3629
    %vm3636 = vmor %vm3634, %vm3635
    %v3637 = vsel %vm3636, %v3629, %v3633
    %v3638 = vand.u32 2147483647, %v3628
    %vm3639 = vcmp.eq.f32.partialorder %v3638, 8.507059e+37
    %v3640 = vand.u32 %v3628, 2147483648
    %v3641 = vor.u32 1.1754944e-38, %v3640
    %v3642 = vsel %vm3639, %v3641, %v3637
    %v3643 = vmul.f32 1.0, %v3642
    %v3645 = vrot.slane %v3495, 2
    %v3647 = vmul.f32 %v3623, %v3645
    %v3648 = vmul.f32 %v3604, %v3624
    %v3649 = vadd.f32 %v3647, %v3648
    %v3650 = vtanh.pop %v3649
    %v3651 = vmul.f32 %v3643, %v3650
    %3652 = vst [vmem:[#allocation3 + $0x8] sm:$0x3] %v3651
    %3653 = vmatpush.msra.mxu0 %v2993
    %3654 = vmatpush.msra.mxu0 %v2989
    %3655 = vmatpush.msra.mxu0 %v2985
    %3656 = vmatpush.msra.mxu0 %v2981
    %3657 = vmatpush.msra.mxu0 %v2977
    %3658 = vmatpush.msra.mxu0 %v2973
    %3659 = vmatpush.msra.mxu0 %v2969
    %3660 = vmatpush.msra.mxu0 %v2965
    %3661 = vmatpush.msra.mxu0 %v2961
    %3662 = vmatpush.msra.mxu0 %v2957
    %3663 = vmatpush.msra.mxu0 %v2953
    %3664 = vmatpush.msra.mxu0 %v2949
    %3665 = vmatpush.msra.mxu0 %v2945
    %3666 = vmatpush.msra.mxu0 %v2941
    %3667 = vmatpush.msra.mxu0 %v2937
    %3668 = vmatpush.msra.mxu0 %v2933
    %3669 = vmatmul.f32.gmra.mxu0 %v3651
    %v3670 = vpop.f32.mrf.mxu0
    %v3671 = vadd.f32 0.0, %v3670
    %3672 = vdwg.mxu0
    %3673 = vmatpush.msra.mxu0 %v2994
    %3674 = vmatpush.msra.mxu0 %v2990
    %3675 = vmatpush.msra.mxu0 %v2986
    %3676 = vmatpush.msra.mxu0 %v2982
    %3677 = vmatpush.msra.mxu0 %v2978
    %3678 = vmatpush.msra.mxu0 %v2974
    %3679 = vmatpush.msra.mxu0 %v2970
    %3680 = vmatpush.msra.mxu0 %v2966
    %3681 = vmatpush.msra.mxu0 %v2962
    %3682 = vmatpush.msra.mxu0 %v2958
    %3683 = vmatpush.msra.mxu0 %v2954
    %3684 = vmatpush.msra.mxu0 %v2950
    %3685 = vmatpush.msra.mxu0 %v2946
    %3686 = vmatpush.msra.mxu0 %v2942
    %3687 = vmatpush.msra.mxu0 %v2938
    %3688 = vmatpush.msra.mxu0 %v2934
    %3689 = vmatmul.f32.gmra.mxu0 %v3651
    %v3690 = vpop.f32.mrf.mxu0
    %v3691 = vadd.f32 0.0, %v3690
    %3692 = vdwg.mxu0
    %3693 = vmatpush.msra.mxu0 %v2995
    %3694 = vmatpush.msra.mxu0 %v2991
    %3695 = vmatpush.msra.mxu0 %v2987
    %3696 = vmatpush.msra.mxu0 %v2983
    %3697 = vmatpush.msra.mxu0 %v2979
    %3698 = vmatpush.msra.mxu0 %v2975
    %3699 = vmatpush.msra.mxu0 %v2971
    %3700 = vmatpush.msra.mxu0 %v2967
    %3701 = vmatpush.msra.mxu0 %v2963
    %3702 = vmatpush.msra.mxu0 %v2959
    %3703 = vmatpush.msra.mxu0 %v2955
    %3704 = vmatpush.msra.mxu0 %v2951
    %3705 = vmatpush.msra.mxu0 %v2947
    %3706 = vmatpush.msra.mxu0 %v2943
    %3707 = vmatpush.msra.mxu0 %v2939
    %3708 = vmatpush.msra.mxu0 %v2935
    %3709 = vmatmul.f32.gmra.mxu0 %v3651
    %v3710 = vpop.f32.mrf.mxu0
    %v3711 = vadd.f32 0.0, %v3710
    %3712 = vdwg.mxu0
    %3713 = vmatpush.msra.mxu0 %v2996
    %3714 = vmatpush.msra.mxu0 %v2992
    %3715 = vmatpush.msra.mxu0 %v2988
    %3716 = vmatpush.msra.mxu0 %v2984
    %3717 = vmatpush.msra.mxu0 %v2980
    %3718 = vmatpush.msra.mxu0 %v2976
    %3719 = vmatpush.msra.mxu0 %v2972
    %3720 = vmatpush.msra.mxu0 %v2968
    %3721 = vmatpush.msra.mxu0 %v2964
    %3722 = vmatpush.msra.mxu0 %v2960
    %3723 = vmatpush.msra.mxu0 %v2956
    %3724 = vmatpush.msra.mxu0 %v2952
    %3725 = vmatpush.msra.mxu0 %v2948
    %3726 = vmatpush.msra.mxu0 %v2944
    %3727 = vmatpush.msra.mxu0 %v2940
    %3728 = vmatpush.msra.mxu0 %v2936
    %3729 = vmatmul.f32.gmra.mxu0 %v3651
    %v3730 = vpop.f32.mrf.mxu0
    %v3731 = vadd.f32 0.0, %v3730
    %3732 = vdwg.mxu0
    %v3737 = vrot.slane %v3671, 2
    %v3738 = vrot.slane %v3691, 2
    %v3739 = vrot.slane %v3711, 2
    %v3740 = vrot.slane %v3731, 2
    %v3745 = vadd.f32 %v1556, %v3737
    %v3746 = vadd.f32 %v1557, %v3738
    %v3747 = vadd.f32 %v1558, %v3739
    %v3748 = vadd.f32 %v1559, %v3740
    %v3749 = vxor.u32 %v3745, 2147483648
    %v3750 = vmul.f32 %v3749, 1.442695
    %v3751 = vpow.pop %v3750
    %v3752 = vadd.f32 %v3751, 1.0
    %v3753 = vrcp.pop %v3752
    %v3754 = vmul.f32 %v3752, %v3753
    %v3755 = vsub.f32 1.0, %v3754
    %v3756 = vmul.f32 %v3753, %v3755
    %v3757 = vadd.f32 %v3753, %v3756
    %vm3758 = vweird.f32 %v3752
    %vm3759 = vweird.f32 %v3753
    %vm3760 = vmor %vm3758, %vm3759
    %v3761 = vsel %vm3760, %v3753, %v3757
    %v3762 = vand.u32 2147483647, %v3752
    %vm3763 = vcmp.eq.f32.partialorder %v3762, 8.507059e+37
    %v3764 = vand.u32 %v3752, 2147483648
    %v3765 = vor.u32 1.1754944e-38, %v3764
    %v3766 = vsel %vm3763, %v3765, %v3761
    %v3767 = vmul.f32 1.0, %v3766
    %v3768 = vxor.u32 %v3746, 2147483648
    %v3769 = vmul.f32 %v3768, 1.442695
    %v3770 = vpow.pop %v3769
    %v3771 = vadd.f32 %v3770, 1.0
    %v3772 = vrcp.pop %v3771
    %v3773 = vmul.f32 %v3771, %v3772
    %v3774 = vsub.f32 1.0, %v3773
    %v3775 = vmul.f32 %v3772, %v3774
    %v3776 = vadd.f32 %v3772, %v3775
    %vm3777 = vweird.f32 %v3771
    %vm3778 = vweird.f32 %v3772
    %vm3779 = vmor %vm3777, %vm3778
    %v3780 = vsel %vm3779, %v3772, %v3776
    %v3781 = vand.u32 2147483647, %v3771
    %vm3782 = vcmp.eq.f32.partialorder %v3781, 8.507059e+37
    %v3783 = vand.u32 %v3771, 2147483648
    %v3784 = vor.u32 1.1754944e-38, %v3783
    %v3785 = vsel %vm3782, %v3784, %v3780
    %v3786 = vmul.f32 1.0, %v3785
    %v3787 = vtanh.pop %v3747
    %v3788 = vxor.u32 %v3748, 2147483648
    %v3789 = vmul.f32 %v3788, 1.442695
    %v3790 = vpow.pop %v3789
    %v3791 = vadd.f32 %v3790, 1.0
    %v3792 = vrcp.pop %v3791
    %v3793 = vmul.f32 %v3791, %v3792
    %v3794 = vsub.f32 1.0, %v3793
    %v3795 = vmul.f32 %v3792, %v3794
    %v3796 = vadd.f32 %v3792, %v3795
    %vm3797 = vweird.f32 %v3791
    %vm3798 = vweird.f32 %v3792
    %vm3799 = vmor %vm3797, %vm3798
    %v3800 = vsel %vm3799, %v3792, %v3796
    %v3801 = vand.u32 2147483647, %v3791
    %vm3802 = vcmp.eq.f32.partialorder %v3801, 8.507059e+37
    %v3803 = vand.u32 %v3791, 2147483648
    %v3804 = vor.u32 1.1754944e-38, %v3803
    %v3805 = vsel %vm3802, %v3804, %v3800
    %v3806 = vmul.f32 1.0, %v3805
    %v3808 = vrot.slane %v3649, 2
    %v3810 = vmul.f32 %v3786, %v3808
    %v3811 = vmul.f32 %v3767, %v3787
    %v3812 = vadd.f32 %v3810, %v3811
    %v3813 = vtanh.pop %v3812
    %v3814 = vmul.f32 %v3806, %v3813
    %3815 = vst [vmem:[#allocation3] sm:$0xc0] %v3814
    %v3817 = vrot.slane %v3814, 6
    %3819 = vmatpush.msra.mxu0 %v2993
    %3820 = vmatpush.msra.mxu0 %v2989
    %3821 = vmatpush.msra.mxu0 %v2985
    %3822 = vmatpush.msra.mxu0 %v2981
    %3823 = vmatpush.msra.mxu0 %v2977
    %3824 = vmatpush.msra.mxu0 %v2973
    %3825 = vmatpush.msra.mxu0 %v2969
    %3826 = vmatpush.msra.mxu0 %v2965
    %3827 = vmatpush.msra.mxu0 %v2961
    %3828 = vmatpush.msra.mxu0 %v2957
    %3829 = vmatpush.msra.mxu0 %v2953
    %3830 = vmatpush.msra.mxu0 %v2949
    %3831 = vmatpush.msra.mxu0 %v2945
    %3832 = vmatpush.msra.mxu0 %v2941
    %3833 = vmatpush.msra.mxu0 %v2937
    %3834 = vmatpush.msra.mxu0 %v2933
    %3835 = vmatmul.f32.gmra.mxu0 %v3817
    %v3836 = vpop.f32.mrf.mxu0
    %v3837 = vadd.f32 0.0, %v3836
    %3838 = vdwg.mxu0
    %3839 = vmatpush.msra.mxu0 %v2994
    %3840 = vmatpush.msra.mxu0 %v2990
    %3841 = vmatpush.msra.mxu0 %v2986
    %3842 = vmatpush.msra.mxu0 %v2982
    %3843 = vmatpush.msra.mxu0 %v2978
    %3844 = vmatpush.msra.mxu0 %v2974
    %3845 = vmatpush.msra.mxu0 %v2970
    %3846 = vmatpush.msra.mxu0 %v2966
    %3847 = vmatpush.msra.mxu0 %v2962
    %3848 = vmatpush.msra.mxu0 %v2958
    %3849 = vmatpush.msra.mxu0 %v2954
    %3850 = vmatpush.msra.mxu0 %v2950
    %3851 = vmatpush.msra.mxu0 %v2946
    %3852 = vmatpush.msra.mxu0 %v2942
    %3853 = vmatpush.msra.mxu0 %v2938
    %3854 = vmatpush.msra.mxu0 %v2934
    %3855 = vmatmul.f32.gmra.mxu0 %v3817
    %v3856 = vpop.f32.mrf.mxu0
    %v3857 = vadd.f32 0.0, %v3856
    %3858 = vdwg.mxu0
    %3859 = vmatpush.msra.mxu0 %v2995
    %3860 = vmatpush.msra.mxu0 %v2991
    %3861 = vmatpush.msra.mxu0 %v2987
    %3862 = vmatpush.msra.mxu0 %v2983
    %3863 = vmatpush.msra.mxu0 %v2979
    %3864 = vmatpush.msra.mxu0 %v2975
    %3865 = vmatpush.msra.mxu0 %v2971
    %3866 = vmatpush.msra.mxu0 %v2967
    %3867 = vmatpush.msra.mxu0 %v2963
    %3868 = vmatpush.msra.mxu0 %v2959
    %3869 = vmatpush.msra.mxu0 %v2955
    %3870 = vmatpush.msra.mxu0 %v2951
    %3871 = vmatpush.msra.mxu0 %v2947
    %3872 = vmatpush.msra.mxu0 %v2943
    %3873 = vmatpush.msra.mxu0 %v2939
    %3874 = vmatpush.msra.mxu0 %v2935
    %3875 = vmatmul.f32.gmra.mxu0 %v3817
    %v3876 = vpop.f32.mrf.mxu0
    %v3877 = vadd.f32 0.0, %v3876
    %3878 = vdwg.mxu0
    %3879 = vmatpush.msra.mxu0 %v2996
    %3880 = vmatpush.msra.mxu0 %v2992
    %3881 = vmatpush.msra.mxu0 %v2988
    %3882 = vmatpush.msra.mxu0 %v2984
    %3883 = vmatpush.msra.mxu0 %v2980
    %3884 = vmatpush.msra.mxu0 %v2976
    %3885 = vmatpush.msra.mxu0 %v2972
    %3886 = vmatpush.msra.mxu0 %v2968
    %3887 = vmatpush.msra.mxu0 %v2964
    %3888 = vmatpush.msra.mxu0 %v2960
    %3889 = vmatpush.msra.mxu0 %v2956
    %3890 = vmatpush.msra.mxu0 %v2952
    %3891 = vmatpush.msra.mxu0 %v2948
    %3892 = vmatpush.msra.mxu0 %v2944
    %3893 = vmatpush.msra.mxu0 %v2940
    %3894 = vmatpush.msra.mxu0 %v2936
    %3895 = vmatmul.f32.gmra.mxu0 %v3817
    %v3896 = vpop.f32.mrf.mxu0
    %v3897 = vadd.f32 0.0, %v3896
    %3898 = vdwg.mxu0
    %v3903 = vrot.slane %v3837, 4
    %v3904 = vrot.slane %v3857, 4
    %v3905 = vrot.slane %v3877, 4
    %v3906 = vrot.slane %v3897, 4
    %v3911 = vadd.f32 %v1556, %v3903
    %v3912 = vadd.f32 %v1557, %v3904
    %v3913 = vadd.f32 %v1558, %v3905
    %v3914 = vadd.f32 %v1559, %v3906
    %v3915 = vxor.u32 %v3911, 2147483648
    %v3916 = vmul.f32 %v3915, 1.442695
    %v3917 = vpow.pop %v3916
    %v3918 = vadd.f32 %v3917, 1.0
    %v3919 = vrcp.pop %v3918
    %v3920 = vmul.f32 %v3918, %v3919
    %v3921 = vsub.f32 1.0, %v3920
    %v3922 = vmul.f32 %v3919, %v3921
    %v3923 = vadd.f32 %v3919, %v3922
    %vm3924 = vweird.f32 %v3918
    %vm3925 = vweird.f32 %v3919
    %vm3926 = vmor %vm3924, %vm3925
    %v3927 = vsel %vm3926, %v3919, %v3923
    %v3928 = vand.u32 2147483647, %v3918
    %vm3929 = vcmp.eq.f32.partialorder %v3928, 8.507059e+37
    %v3930 = vand.u32 %v3918, 2147483648
    %v3931 = vor.u32 1.1754944e-38, %v3930
    %v3932 = vsel %vm3929, %v3931, %v3927
    %v3933 = vmul.f32 1.0, %v3932
    %v3934 = vxor.u32 %v3912, 2147483648
    %v3935 = vmul.f32 %v3934, 1.442695
    %v3936 = vpow.pop %v3935
    %v3937 = vadd.f32 %v3936, 1.0
    %v3938 = vrcp.pop %v3937
    %v3939 = vmul.f32 %v3937, %v3938
    %v3940 = vsub.f32 1.0, %v3939
    %v3941 = vmul.f32 %v3938, %v3940
    %v3942 = vadd.f32 %v3938, %v3941
    %vm3943 = vweird.f32 %v3937
    %vm3944 = vweird.f32 %v3938
    %vm3945 = vmor %vm3943, %vm3944
    %v3946 = vsel %vm3945, %v3938, %v3942
    %v3947 = vand.u32 2147483647, %v3937
    %vm3948 = vcmp.eq.f32.partialorder %v3947, 8.507059e+37
    %v3949 = vand.u32 %v3937, 2147483648
    %v3950 = vor.u32 1.1754944e-38, %v3949
    %v3951 = vsel %vm3948, %v3950, %v3946
    %v3952 = vmul.f32 1.0, %v3951
    %v3953 = vtanh.pop %v3913
    %v3954 = vxor.u32 %v3914, 2147483648
    %v3955 = vmul.f32 %v3954, 1.442695
    %v3956 = vpow.pop %v3955
    %v3957 = vadd.f32 %v3956, 1.0
    %v3958 = vrcp.pop %v3957
    %v3959 = vmul.f32 %v3957, %v3958
    %v3960 = vsub.f32 1.0, %v3959
    %v3961 = vmul.f32 %v3958, %v3960
    %v3962 = vadd.f32 %v3958, %v3961
    %vm3963 = vweird.f32 %v3957
    %vm3964 = vweird.f32 %v3958
    %vm3965 = vmor %vm3963, %vm3964
    %v3966 = vsel %vm3965, %v3958, %v3962
    %v3967 = vand.u32 2147483647, %v3957
    %vm3968 = vcmp.eq.f32.partialorder %v3967, 8.507059e+37
    %v3969 = vand.u32 %v3957, 2147483648
    %v3970 = vor.u32 1.1754944e-38, %v3969
    %v3971 = vsel %vm3968, %v3970, %v3966
    %v3972 = vmul.f32 1.0, %v3971
    %v3974 = vrot.slane %v3812, 2
    %v3976 = vmul.f32 %v3952, %v3974
    %v3977 = vmul.f32 %v3933, %v3953
    %v3978 = vadd.f32 %v3976, %v3977
    %v3979 = vtanh.pop %v3978
    %v3980 = vmul.f32 %v3972, %v3979
    %3981 = vst [vmem:[#allocation3] sm:$0x30] %v3980
    %v3983 = vrot.slane %v3980, 4
    %3985 = vmatpush.msra.mxu0 %v2993
    %3986 = vmatpush.msra.mxu0 %v2989
    %3987 = vmatpush.msra.mxu0 %v2985
    %3988 = vmatpush.msra.mxu0 %v2981
    %3989 = vmatpush.msra.mxu0 %v2977
    %3990 = vmatpush.msra.mxu0 %v2973
    %3991 = vmatpush.msra.mxu0 %v2969
    %3992 = vmatpush.msra.mxu0 %v2965
    %3993 = vmatpush.msra.mxu0 %v2961
    %3994 = vmatpush.msra.mxu0 %v2957
    %3995 = vmatpush.msra.mxu0 %v2953
    %3996 = vmatpush.msra.mxu0 %v2949
    %3997 = vmatpush.msra.mxu0 %v2945
    %3998 = vmatpush.msra.mxu0 %v2941
    %3999 = vmatpush.msra.mxu0 %v2937
    %4000 = vmatpush.msra.mxu0 %v2933
    %4001 = vmatmul.f32.gmra.mxu0 %v3983
    %v4002 = vpop.f32.mrf.mxu0
    %v4003 = vadd.f32 0.0, %v4002
    %4004 = vdwg.mxu0
    %4005 = vmatpush.msra.mxu0 %v2994
    %4006 = vmatpush.msra.mxu0 %v2990
    %4007 = vmatpush.msra.mxu0 %v2986
    %4008 = vmatpush.msra.mxu0 %v2982
    %4009 = vmatpush.msra.mxu0 %v2978
    %4010 = vmatpush.msra.mxu0 %v2974
    %4011 = vmatpush.msra.mxu0 %v2970
    %4012 = vmatpush.msra.mxu0 %v2966
    %4013 = vmatpush.msra.mxu0 %v2962
    %4014 = vmatpush.msra.mxu0 %v2958
    %4015 = vmatpush.msra.mxu0 %v2954
    %4016 = vmatpush.msra.mxu0 %v2950
    %4017 = vmatpush.msra.mxu0 %v2946
    %4018 = vmatpush.msra.mxu0 %v2942
    %4019 = vmatpush.msra.mxu0 %v2938
    %4020 = vmatpush.msra.mxu0 %v2934
    %4021 = vmatmul.f32.gmra.mxu0 %v3983
    %v4022 = vpop.f32.mrf.mxu0
    %v4023 = vadd.f32 0.0, %v4022
    %4024 = vdwg.mxu0
    %4025 = vmatpush.msra.mxu0 %v2995
    %4026 = vmatpush.msra.mxu0 %v2991
    %4027 = vmatpush.msra.mxu0 %v2987
    %4028 = vmatpush.msra.mxu0 %v2983
    %4029 = vmatpush.msra.mxu0 %v2979
    %4030 = vmatpush.msra.mxu0 %v2975
    %4031 = vmatpush.msra.mxu0 %v2971
    %4032 = vmatpush.msra.mxu0 %v2967
    %4033 = vmatpush.msra.mxu0 %v2963
    %4034 = vmatpush.msra.mxu0 %v2959
    %4035 = vmatpush.msra.mxu0 %v2955
    %4036 = vmatpush.msra.mxu0 %v2951
    %4037 = vmatpush.msra.mxu0 %v2947
    %4038 = vmatpush.msra.mxu0 %v2943
    %4039 = vmatpush.msra.mxu0 %v2939
    %4040 = vmatpush.msra.mxu0 %v2935
    %4041 = vmatmul.f32.gmra.mxu0 %v3983
    %v4042 = vpop.f32.mrf.mxu0
    %v4043 = vadd.f32 0.0, %v4042
    %4044 = vdwg.mxu0
    %4045 = vmatpush.msra.mxu0 %v2996
    %4046 = vmatpush.msra.mxu0 %v2992
    %4047 = vmatpush.msra.mxu0 %v2988
    %4048 = vmatpush.msra.mxu0 %v2984
    %4049 = vmatpush.msra.mxu0 %v2980
    %4050 = vmatpush.msra.mxu0 %v2976
    %4051 = vmatpush.msra.mxu0 %v2972
    %4052 = vmatpush.msra.mxu0 %v2968
    %4053 = vmatpush.msra.mxu0 %v2964
    %4054 = vmatpush.msra.mxu0 %v2960
    %4055 = vmatpush.msra.mxu0 %v2956
    %4056 = vmatpush.msra.mxu0 %v2952
    %4057 = vmatpush.msra.mxu0 %v2948
    %4058 = vmatpush.msra.mxu0 %v2944
    %4059 = vmatpush.msra.mxu0 %v2940
    %4060 = vmatpush.msra.mxu0 %v2936
    %4061 = vmatmul.f32.gmra.mxu0 %v3983
    %v4062 = vpop.f32.mrf.mxu0
    %v4063 = vadd.f32 0.0, %v4062
    %4064 = vdwg.mxu0
    %v4069 = vrot.slane %v4003, 6
    %v4070 = vrot.slane %v4023, 6
    %v4071 = vrot.slane %v4043, 6
    %v4072 = vrot.slane %v4063, 6
    %v4077 = vadd.f32 %v1556, %v4069
    %v4078 = vadd.f32 %v1557, %v4070
    %v4079 = vadd.f32 %v1558, %v4071
    %v4080 = vadd.f32 %v1559, %v4072
    %v4081 = vxor.u32 %v4077, 2147483648
    %v4082 = vmul.f32 %v4081, 1.442695
    %v4083 = vpow.pop %v4082
    %v4084 = vadd.f32 %v4083, 1.0
    %v4085 = vrcp.pop %v4084
    %v4086 = vmul.f32 %v4084, %v4085
    %v4087 = vsub.f32 1.0, %v4086
    %v4088 = vmul.f32 %v4085, %v4087
    %v4089 = vadd.f32 %v4085, %v4088
    %vm4090 = vweird.f32 %v4084
    %vm4091 = vweird.f32 %v4085
    %vm4092 = vmor %vm4090, %vm4091
    %v4093 = vsel %vm4092, %v4085, %v4089
    %v4094 = vand.u32 2147483647, %v4084
    %vm4095 = vcmp.eq.f32.partialorder %v4094, 8.507059e+37
    %v4096 = vand.u32 %v4084, 2147483648
    %v4097 = vor.u32 1.1754944e-38, %v4096
    %v4098 = vsel %vm4095, %v4097, %v4093
    %v4099 = vmul.f32 1.0, %v4098
    %v4100 = vxor.u32 %v4078, 2147483648
    %v4101 = vmul.f32 %v4100, 1.442695
    %v4102 = vpow.pop %v4101
    %v4103 = vadd.f32 %v4102, 1.0
    %v4104 = vrcp.pop %v4103
    %v4105 = vmul.f32 %v4103, %v4104
    %v4106 = vsub.f32 1.0, %v4105
    %v4107 = vmul.f32 %v4104, %v4106
    %v4108 = vadd.f32 %v4104, %v4107
    %vm4109 = vweird.f32 %v4103
    %vm4110 = vweird.f32 %v4104
    %vm4111 = vmor %vm4109, %vm4110
    %v4112 = vsel %vm4111, %v4104, %v4108
    %v4113 = vand.u32 2147483647, %v4103
    %vm4114 = vcmp.eq.f32.partialorder %v4113, 8.507059e+37
    %v4115 = vand.u32 %v4103, 2147483648
    %v4116 = vor.u32 1.1754944e-38, %v4115
    %v4117 = vsel %vm4114, %v4116, %v4112
    %v4118 = vmul.f32 1.0, %v4117
    %v4119 = vtanh.pop %v4079
    %v4120 = vxor.u32 %v4080, 2147483648
    %v4121 = vmul.f32 %v4120, 1.442695
    %v4122 = vpow.pop %v4121
    %v4123 = vadd.f32 %v4122, 1.0
    %v4124 = vrcp.pop %v4123
    %v4125 = vmul.f32 %v4123, %v4124
    %v4126 = vsub.f32 1.0, %v4125
    %v4127 = vmul.f32 %v4124, %v4126
    %v4128 = vadd.f32 %v4124, %v4127
    %vm4129 = vweird.f32 %v4123
    %vm4130 = vweird.f32 %v4124
    %vm4131 = vmor %vm4129, %vm4130
    %v4132 = vsel %vm4131, %v4124, %v4128
    %v4133 = vand.u32 2147483647, %v4123
    %vm4134 = vcmp.eq.f32.partialorder %v4133, 8.507059e+37
    %v4135 = vand.u32 %v4123, 2147483648
    %v4136 = vor.u32 1.1754944e-38, %v4135
    %v4137 = vsel %vm4134, %v4136, %v4132
    %v4138 = vmul.f32 1.0, %v4137
    %v4140 = vrot.slane %v3978, 2
    %v4142 = vmul.f32 %v4118, %v4140
    %v4143 = vmul.f32 %v4099, %v4119
    %v4144 = vadd.f32 %v4142, %v4143
    %v4145 = vtanh.pop %v4144
    %v4146 = vmul.f32 %v4138, %v4145
    %4147 = vst [vmem:[#allocation3] sm:$0xc] %v4146
    %v4149 = vrot.slane %v4146, 2
    %4151 = vmatpush.msra.mxu0 %v2993
    %4152 = vmatpush.msra.mxu0 %v2989
    %4153 = vmatpush.msra.mxu0 %v2985
    %4154 = vmatpush.msra.mxu0 %v2981
    %4155 = vmatpush.msra.mxu0 %v2977
    %4156 = vmatpush.msra.mxu0 %v2973
    %4157 = vmatpush.msra.mxu0 %v2969
    %4158 = vmatpush.msra.mxu0 %v2965
    %4159 = vmatpush.msra.mxu0 %v2961
    %4160 = vmatpush.msra.mxu0 %v2957
    %4161 = vmatpush.msra.mxu0 %v2953
    %4162 = vmatpush.msra.mxu0 %v2949
    %4163 = vmatpush.msra.mxu0 %v2945
    %4164 = vmatpush.msra.mxu0 %v2941
    %4165 = vmatpush.msra.mxu0 %v2937
    %4166 = vmatpush.msra.mxu0 %v2933
    %4167 = vmatmul.f32.gmra.mxu0 %v4149
    %v4168 = vpop.f32.mrf.mxu0
    %v4169 = vadd.f32 0.0, %v4168
    %4170 = vdwg.mxu0
    %4171 = vmatpush.msra.mxu0 %v2994
    %4172 = vmatpush.msra.mxu0 %v2990
    %4173 = vmatpush.msra.mxu0 %v2986
    %4174 = vmatpush.msra.mxu0 %v2982
    %4175 = vmatpush.msra.mxu0 %v2978
    %4176 = vmatpush.msra.mxu0 %v2974
    %4177 = vmatpush.msra.mxu0 %v2970
    %4178 = vmatpush.msra.mxu0 %v2966
    %4179 = vmatpush.msra.mxu0 %v2962
    %4180 = vmatpush.msra.mxu0 %v2958
    %4181 = vmatpush.msra.mxu0 %v2954
    %4182 = vmatpush.msra.mxu0 %v2950
    %4183 = vmatpush.msra.mxu0 %v2946
    %4184 = vmatpush.msra.mxu0 %v2942
    %4185 = vmatpush.msra.mxu0 %v2938
    %4186 = vmatpush.msra.mxu0 %v2934
    %4187 = vmatmul.f32.gmra.mxu0 %v4149
    %v4188 = vpop.f32.mrf.mxu0
    %v4189 = vadd.f32 0.0, %v4188
    %4190 = vdwg.mxu0
    %4191 = vmatpush.msra.mxu0 %v2995
    %4192 = vmatpush.msra.mxu0 %v2991
    %4193 = vmatpush.msra.mxu0 %v2987
    %4194 = vmatpush.msra.mxu0 %v2983
    %4195 = vmatpush.msra.mxu0 %v2979
    %4196 = vmatpush.msra.mxu0 %v2975
    %4197 = vmatpush.msra.mxu0 %v2971
    %4198 = vmatpush.msra.mxu0 %v2967
    %4199 = vmatpush.msra.mxu0 %v2963
    %4200 = vmatpush.msra.mxu0 %v2959
    %4201 = vmatpush.msra.mxu0 %v2955
    %4202 = vmatpush.msra.mxu0 %v2951
    %4203 = vmatpush.msra.mxu0 %v2947
    %4204 = vmatpush.msra.mxu0 %v2943
    %4205 = vmatpush.msra.mxu0 %v2939
    %4206 = vmatpush.msra.mxu0 %v2935
    %4207 = vmatmul.f32.gmra.mxu0 %v4149
    %v4208 = vpop.f32.mrf.mxu0
    %v4209 = vadd.f32 0.0, %v4208
    %4210 = vdwg.mxu0
    %4211 = vmatpush.msra.mxu0 %v2996
    %4212 = vmatpush.msra.mxu0 %v2992
    %4213 = vmatpush.msra.mxu0 %v2988
    %4214 = vmatpush.msra.mxu0 %v2984
    %4215 = vmatpush.msra.mxu0 %v2980
    %4216 = vmatpush.msra.mxu0 %v2976
    %4217 = vmatpush.msra.mxu0 %v2972
    %4218 = vmatpush.msra.mxu0 %v2968
    %4219 = vmatpush.msra.mxu0 %v2964
    %4220 = vmatpush.msra.mxu0 %v2960
    %4221 = vmatpush.msra.mxu0 %v2956
    %4222 = vmatpush.msra.mxu0 %v2952
    %4223 = vmatpush.msra.mxu0 %v2948
    %4224 = vmatpush.msra.mxu0 %v2944
    %4225 = vmatpush.msra.mxu0 %v2940
    %4226 = vmatpush.msra.mxu0 %v2936
    %4227 = vmatmul.f32.gmra.mxu0 %v4149
    %v4228 = vpop.f32.mrf.mxu0
    %v4229 = vadd.f32 0.0, %v4228
    %4230 = vdwg.mxu0
    %v4231 = vadd.f32 %v1556, %v4169
    %v4232 = vadd.f32 %v1557, %v4189
    %v4233 = vadd.f32 %v1558, %v4209
    %v4234 = vadd.f32 %v1559, %v4229
    %v4235 = vxor.u32 %v4231, 2147483648
    %v4236 = vmul.f32 %v4235, 1.442695
    %v4237 = vpow.pop %v4236
    %v4238 = vadd.f32 %v4237, 1.0
    %v4239 = vrcp.pop %v4238
    %v4240 = vmul.f32 %v4238, %v4239
    %v4241 = vsub.f32 1.0, %v4240
    %v4242 = vmul.f32 %v4239, %v4241
    %v4243 = vadd.f32 %v4239, %v4242
    %vm4244 = vweird.f32 %v4238
    %vm4245 = vweird.f32 %v4239
    %vm4246 = vmor %vm4244, %vm4245
    %v4247 = vsel %vm4246, %v4239, %v4243
    %v4248 = vand.u32 2147483647, %v4238
    %vm4249 = vcmp.eq.f32.partialorder %v4248, 8.507059e+37
    %v4250 = vand.u32 %v4238, 2147483648
    %v4251 = vor.u32 1.1754944e-38, %v4250
    %v4252 = vsel %vm4249, %v4251, %v4247
    %v4253 = vmul.f32 1.0, %v4252
    %v4254 = vxor.u32 %v4232, 2147483648
    %v4255 = vmul.f32 %v4254, 1.442695
    %v4256 = vpow.pop %v4255
    %v4257 = vadd.f32 %v4256, 1.0
    %v4258 = vrcp.pop %v4257
    %v4259 = vmul.f32 %v4257, %v4258
    %v4260 = vsub.f32 1.0, %v4259
    %v4261 = vmul.f32 %v4258, %v4260
    %v4262 = vadd.f32 %v4258, %v4261
    %vm4263 = vweird.f32 %v4257
    %vm4264 = vweird.f32 %v4258
    %vm4265 = vmor %vm4263, %vm4264
    %v4266 = vsel %vm4265, %v4258, %v4262
    %v4267 = vand.u32 2147483647, %v4257
    %vm4268 = vcmp.eq.f32.partialorder %v4267, 8.507059e+37
    %v4269 = vand.u32 %v4257, 2147483648
    %v4270 = vor.u32 1.1754944e-38, %v4269
    %v4271 = vsel %vm4268, %v4270, %v4266
    %v4272 = vmul.f32 1.0, %v4271
    %v4273 = vtanh.pop %v4233
    %v4274 = vxor.u32 %v4234, 2147483648
    %v4275 = vmul.f32 %v4274, 1.442695
    %v4276 = vpow.pop %v4275
    %v4277 = vadd.f32 %v4276, 1.0
    %v4278 = vrcp.pop %v4277
    %v4279 = vmul.f32 %v4277, %v4278
    %v4280 = vsub.f32 1.0, %v4279
    %v4281 = vmul.f32 %v4278, %v4280
    %v4282 = vadd.f32 %v4278, %v4281
    %vm4283 = vweird.f32 %v4277
    %vm4284 = vweird.f32 %v4278
    %vm4285 = vmor %vm4283, %vm4284
    %v4286 = vsel %vm4285, %v4278, %v4282
    %v4287 = vand.u32 2147483647, %v4277
    %vm4288 = vcmp.eq.f32.partialorder %v4287, 8.507059e+37
    %v4289 = vand.u32 %v4277, 2147483648
    %v4290 = vor.u32 1.1754944e-38, %v4289
    %v4291 = vsel %vm4288, %v4290, %v4286
    %v4292 = vmul.f32 1.0, %v4291
    %v4294 = vrot.slane %v4144, 2
    %v4296 = vmul.f32 %v4272, %v4294
    %v4297 = vmul.f32 %v4253, %v4273
    %v4298 = vadd.f32 %v4296, %v4297
    %v4299 = vtanh.pop %v4298
    %v4300 = vmul.f32 %v4292, %v4299
    %4301 = vst [vmem:[#allocation3] sm:$0x3] %v4300
    %v4302 = vld [vmem:[#allocation2] sm:$0xff]
    %v4303 = vld [vmem:[#allocation2 + $0x8] sm:$0xff]
    %v4304 = vld [vmem:[#allocation3] sm:$0xff]
    %v4305 = vld [vmem:[#allocation3 + $0x8] sm:$0xff]
    %v4306 = vld [vmem:[#allocation14] sm:$0xff]
    %v4307 = vld [vmem:[#allocation14 + $0x8] sm:$0xff]
    %v4308 = vld [vmem:[#allocation14 + $0x10] sm:$0xff]
    %v4309 = vld [vmem:[#allocation14 + $0x18] sm:$0xff]
    %v4310 = vld [vmem:[#allocation14 + $0x20] sm:$0xff]
    %v4311 = vld [vmem:[#allocation14 + $0x28] sm:$0xff]
    %v4312 = vld [vmem:[#allocation14 + $0x30] sm:$0xff]
    %v4313 = vld [vmem:[#allocation14 + $0x38] sm:$0xff]
    %v4314 = vld [vmem:[#allocation14 + $0x40] sm:$0xff]
    %v4315 = vld [vmem:[#allocation14 + $0x48] sm:$0xff]
    %v4316 = vld [vmem:[#allocation14 + $0x50] sm:$0xff]
    %v4317 = vld [vmem:[#allocation14 + $0x58] sm:$0xff]
    %v4318 = vld [vmem:[#allocation14 + $0x60] sm:$0xff]
    %v4319 = vld [vmem:[#allocation14 + $0x68] sm:$0xff]
    %v4320 = vld [vmem:[#allocation14 + $0x70] sm:$0xff]
    %v4321 = vld [vmem:[#allocation14 + $0x78] sm:$0xff]
    %v4322 = vld [vmem:[#allocation14 + $0x80] sm:$0xff]
    %v4323 = vld [vmem:[#allocation14 + $0x88] sm:$0xff]
    %v4324 = vld [vmem:[#allocation14 + $0x90] sm:$0xff]
    %v4325 = vld [vmem:[#allocation14 + $0x98] sm:$0xff]
    %v4326 = vld [vmem:[#allocation14 + $0xa0] sm:$0xff]
    %v4327 = vld [vmem:[#allocation14 + $0xa8] sm:$0xff]
    %v4328 = vld [vmem:[#allocation14 + $0xb0] sm:$0xff]
    %v4329 = vld [vmem:[#allocation14 + $0xb8] sm:$0xff]
    %v4330 = vld [vmem:[#allocation14 + $0xc0] sm:$0xff]
    %v4331 = vld [vmem:[#allocation14 + $0xc8] sm:$0xff]
    %v4332 = vld [vmem:[#allocation14 + $0xd0] sm:$0xff]
    %v4333 = vld [vmem:[#allocation14 + $0xd8] sm:$0xff]
    %v4334 = vld [vmem:[#allocation14 + $0xe0] sm:$0xff]
    %v4335 = vld [vmem:[#allocation14 + $0xe8] sm:$0xff]
    %v4336 = vld [vmem:[#allocation14 + $0xf0] sm:$0xff]
    %v4337 = vld [vmem:[#allocation14 + $0xf8] sm:$0xff]
    %v4338 = vld [vmem:[#allocation14 + $0x100] sm:$0xff]
    %v4339 = vld [vmem:[#allocation14 + $0x108] sm:$0xff]
    %v4340 = vld [vmem:[#allocation14 + $0x110] sm:$0xff]
    %v4341 = vld [vmem:[#allocation14 + $0x118] sm:$0xff]
    %v4342 = vld [vmem:[#allocation14 + $0x120] sm:$0xff]
    %v4343 = vld [vmem:[#allocation14 + $0x128] sm:$0xff]
    %v4344 = vld [vmem:[#allocation14 + $0x130] sm:$0xff]
    %v4345 = vld [vmem:[#allocation14 + $0x138] sm:$0xff]
    %v4346 = vld [vmem:[#allocation14 + $0x140] sm:$0xff]
    %v4347 = vld [vmem:[#allocation14 + $0x148] sm:$0xff]
    %v4348 = vld [vmem:[#allocation14 + $0x150] sm:$0xff]
    %v4349 = vld [vmem:[#allocation14 + $0x158] sm:$0xff]
    %v4350 = vld [vmem:[#allocation14 + $0x160] sm:$0xff]
    %v4351 = vld [vmem:[#allocation14 + $0x168] sm:$0xff]
    %v4352 = vld [vmem:[#allocation14 + $0x170] sm:$0xff]
    %v4353 = vld [vmem:[#allocation14 + $0x178] sm:$0xff]
    %v4354 = vld [vmem:[#allocation14 + $0x180] sm:$0xff]
    %v4355 = vld [vmem:[#allocation14 + $0x188] sm:$0xff]
    %v4356 = vld [vmem:[#allocation14 + $0x190] sm:$0xff]
    %v4357 = vld [vmem:[#allocation14 + $0x198] sm:$0xff]
    %v4358 = vld [vmem:[#allocation14 + $0x1a0] sm:$0xff]
    %v4359 = vld [vmem:[#allocation14 + $0x1a8] sm:$0xff]
    %v4360 = vld [vmem:[#allocation14 + $0x1b0] sm:$0xff]
    %v4361 = vld [vmem:[#allocation14 + $0x1b8] sm:$0xff]
    %v4362 = vld [vmem:[#allocation14 + $0x1c0] sm:$0xff]
    %v4363 = vld [vmem:[#allocation14 + $0x1c8] sm:$0xff]
    %v4364 = vld [vmem:[#allocation14 + $0x1d0] sm:$0xff]
    %v4365 = vld [vmem:[#allocation14 + $0x1d8] sm:$0xff]
    %v4366 = vld [vmem:[#allocation14 + $0x1e0] sm:$0xff]
    %v4367 = vld [vmem:[#allocation14 + $0x1e8] sm:$0xff]
    %v4368 = vld [vmem:[#allocation14 + $0x1f0] sm:$0xff]
    %v4369 = vld [vmem:[#allocation14 + $0x1f8] sm:$0xff]
    %v4370 = vld [vmem:[#allocation14 + $0x200] sm:$0xff]
    %v4371 = vld [vmem:[#allocation14 + $0x208] sm:$0xff]
    %v4372 = vld [vmem:[#allocation14 + $0x210] sm:$0xff]
    %v4373 = vld [vmem:[#allocation14 + $0x218] sm:$0xff]
    %v4374 = vld [vmem:[#allocation14 + $0x220] sm:$0xff]
    %v4375 = vld [vmem:[#allocation14 + $0x228] sm:$0xff]
    %v4376 = vld [vmem:[#allocation14 + $0x230] sm:$0xff]
    %v4377 = vld [vmem:[#allocation14 + $0x238] sm:$0xff]
    %v4378 = vld [vmem:[#allocation14 + $0x240] sm:$0xff]
    %v4379 = vld [vmem:[#allocation14 + $0x248] sm:$0xff]
    %v4380 = vld [vmem:[#allocation14 + $0x250] sm:$0xff]
    %v4381 = vld [vmem:[#allocation14 + $0x258] sm:$0xff]
    %v4382 = vld [vmem:[#allocation14 + $0x260] sm:$0xff]
    %v4383 = vld [vmem:[#allocation14 + $0x268] sm:$0xff]
    %v4384 = vld [vmem:[#allocation14 + $0x270] sm:$0xff]
    %v4385 = vld [vmem:[#allocation14 + $0x278] sm:$0xff]
    %v4386 = vld [vmem:[#allocation14 + $0x280] sm:$0xff]
    %v4387 = vld [vmem:[#allocation14 + $0x288] sm:$0xff]
    %v4388 = vld [vmem:[#allocation14 + $0x290] sm:$0xff]
    %v4389 = vld [vmem:[#allocation14 + $0x298] sm:$0xff]
    %v4390 = vld [vmem:[#allocation14 + $0x2a0] sm:$0xff]
    %v4391 = vld [vmem:[#allocation14 + $0x2a8] sm:$0xff]
    %v4392 = vld [vmem:[#allocation14 + $0x2b0] sm:$0xff]
    %v4393 = vld [vmem:[#allocation14 + $0x2b8] sm:$0xff]
    %v4394 = vld [vmem:[#allocation14 + $0x2c0] sm:$0xff]
    %v4395 = vld [vmem:[#allocation14 + $0x2c8] sm:$0xff]
    %v4396 = vld [vmem:[#allocation14 + $0x2d0] sm:$0xff]
    %v4397 = vld [vmem:[#allocation14 + $0x2d8] sm:$0xff]
    %v4398 = vld [vmem:[#allocation14 + $0x2e0] sm:$0xff]
    %v4399 = vld [vmem:[#allocation14 + $0x2e8] sm:$0xff]
    %v4400 = vld [vmem:[#allocation14 + $0x2f0] sm:$0xff]
    %v4401 = vld [vmem:[#allocation14 + $0x2f8] sm:$0xff]
    %v4402 = vld [vmem:[#allocation14 + $0x300] sm:$0xff]
    %v4403 = vld [vmem:[#allocation14 + $0x308] sm:$0xff]
    %v4404 = vld [vmem:[#allocation14 + $0x310] sm:$0xff]
    %v4405 = vld [vmem:[#allocation14 + $0x318] sm:$0xff]
    %v4406 = vld [vmem:[#allocation14 + $0x320] sm:$0xff]
    %v4407 = vld [vmem:[#allocation14 + $0x328] sm:$0xff]
    %v4408 = vld [vmem:[#allocation14 + $0x330] sm:$0xff]
    %v4409 = vld [vmem:[#allocation14 + $0x338] sm:$0xff]
    %v4410 = vld [vmem:[#allocation14 + $0x340] sm:$0xff]
    %v4411 = vld [vmem:[#allocation14 + $0x348] sm:$0xff]
    %v4412 = vld [vmem:[#allocation14 + $0x350] sm:$0xff]
    %v4413 = vld [vmem:[#allocation14 + $0x358] sm:$0xff]
    %v4414 = vld [vmem:[#allocation14 + $0x360] sm:$0xff]
    %v4415 = vld [vmem:[#allocation14 + $0x368] sm:$0xff]
    %v4416 = vld [vmem:[#allocation14 + $0x370] sm:$0xff]
    %v4417 = vld [vmem:[#allocation14 + $0x378] sm:$0xff]
    %v4418 = vld [vmem:[#allocation14 + $0x380] sm:$0xff]
    %v4419 = vld [vmem:[#allocation14 + $0x388] sm:$0xff]
    %v4420 = vld [vmem:[#allocation14 + $0x390] sm:$0xff]
    %v4421 = vld [vmem:[#allocation14 + $0x398] sm:$0xff]
    %v4422 = vld [vmem:[#allocation14 + $0x3a0] sm:$0xff]
    %v4423 = vld [vmem:[#allocation14 + $0x3a8] sm:$0xff]
    %v4424 = vld [vmem:[#allocation14 + $0x3b0] sm:$0xff]
    %v4425 = vld [vmem:[#allocation14 + $0x3b8] sm:$0xff]
    %v4426 = vld [vmem:[#allocation14 + $0x3c0] sm:$0xff]
    %v4427 = vld [vmem:[#allocation14 + $0x3c8] sm:$0xff]
    %v4428 = vld [vmem:[#allocation14 + $0x3d0] sm:$0xff]
    %v4429 = vld [vmem:[#allocation14 + $0x3d8] sm:$0xff]
    %v4430 = vld [vmem:[#allocation14 + $0x3e0] sm:$0xff]
    %v4431 = vld [vmem:[#allocation14 + $0x3e8] sm:$0xff]
    %v4432 = vld [vmem:[#allocation14 + $0x3f0] sm:$0xff]
    %v4433 = vld [vmem:[#allocation14 + $0x3f8] sm:$0xff]
    %v4434 = vld [vmem:[#allocation15] sm:$0xff]
    %v4435 = vld [vmem:[#allocation15 + $0x8] sm:$0xff]
    %v4436 = vld [vmem:[#allocation15 + $0x10] sm:$0xff]
    %v4437 = vld [vmem:[#allocation15 + $0x18] sm:$0xff]
    %v4438 = vld [vmem:[#allocation15 + $0x20] sm:$0xff]
    %v4439 = vld [vmem:[#allocation15 + $0x28] sm:$0xff]
    %v4440 = vld [vmem:[#allocation15 + $0x30] sm:$0xff]
    %v4441 = vld [vmem:[#allocation15 + $0x38] sm:$0xff]
    %v4442 = vld [vmem:[#allocation15 + $0x40] sm:$0xff]
    %v4443 = vld [vmem:[#allocation15 + $0x48] sm:$0xff]
    %v4444 = vld [vmem:[#allocation15 + $0x50] sm:$0xff]
    %v4445 = vld [vmem:[#allocation15 + $0x58] sm:$0xff]
    %v4446 = vld [vmem:[#allocation15 + $0x60] sm:$0xff]
    %v4447 = vld [vmem:[#allocation15 + $0x68] sm:$0xff]
    %v4448 = vld [vmem:[#allocation15 + $0x70] sm:$0xff]
    %v4449 = vld [vmem:[#allocation15 + $0x78] sm:$0xff]
    %v4450 = vld [vmem:[#allocation15 + $0x80] sm:$0xff]
    %v4451 = vld [vmem:[#allocation15 + $0x88] sm:$0xff]
    %v4452 = vld [vmem:[#allocation15 + $0x90] sm:$0xff]
    %v4453 = vld [vmem:[#allocation15 + $0x98] sm:$0xff]
    %v4454 = vld [vmem:[#allocation15 + $0xa0] sm:$0xff]
    %v4455 = vld [vmem:[#allocation15 + $0xa8] sm:$0xff]
    %v4456 = vld [vmem:[#allocation15 + $0xb0] sm:$0xff]
    %v4457 = vld [vmem:[#allocation15 + $0xb8] sm:$0xff]
    %v4458 = vld [vmem:[#allocation15 + $0xc0] sm:$0xff]
    %v4459 = vld [vmem:[#allocation15 + $0xc8] sm:$0xff]
    %v4460 = vld [vmem:[#allocation15 + $0xd0] sm:$0xff]
    %v4461 = vld [vmem:[#allocation15 + $0xd8] sm:$0xff]
    %v4462 = vld [vmem:[#allocation15 + $0xe0] sm:$0xff]
    %v4463 = vld [vmem:[#allocation15 + $0xe8] sm:$0xff]
    %v4464 = vld [vmem:[#allocation15 + $0xf0] sm:$0xff]
    %v4465 = vld [vmem:[#allocation15 + $0xf8] sm:$0xff]
    %v4466 = vld [vmem:[#allocation15 + $0x100] sm:$0xff]
    %v4467 = vld [vmem:[#allocation15 + $0x108] sm:$0xff]
    %v4468 = vld [vmem:[#allocation15 + $0x110] sm:$0xff]
    %v4469 = vld [vmem:[#allocation15 + $0x118] sm:$0xff]
    %v4470 = vld [vmem:[#allocation15 + $0x120] sm:$0xff]
    %v4471 = vld [vmem:[#allocation15 + $0x128] sm:$0xff]
    %v4472 = vld [vmem:[#allocation15 + $0x130] sm:$0xff]
    %v4473 = vld [vmem:[#allocation15 + $0x138] sm:$0xff]
    %v4474 = vld [vmem:[#allocation15 + $0x140] sm:$0xff]
    %v4475 = vld [vmem:[#allocation15 + $0x148] sm:$0xff]
    %v4476 = vld [vmem:[#allocation15 + $0x150] sm:$0xff]
    %v4477 = vld [vmem:[#allocation15 + $0x158] sm:$0xff]
    %v4478 = vld [vmem:[#allocation15 + $0x160] sm:$0xff]
    %v4479 = vld [vmem:[#allocation15 + $0x168] sm:$0xff]
    %v4480 = vld [vmem:[#allocation15 + $0x170] sm:$0xff]
    %v4481 = vld [vmem:[#allocation15 + $0x178] sm:$0xff]
    %v4482 = vld [vmem:[#allocation15 + $0x180] sm:$0xff]
    %v4483 = vld [vmem:[#allocation15 + $0x188] sm:$0xff]
    %v4484 = vld [vmem:[#allocation15 + $0x190] sm:$0xff]
    %v4485 = vld [vmem:[#allocation15 + $0x198] sm:$0xff]
    %v4486 = vld [vmem:[#allocation15 + $0x1a0] sm:$0xff]
    %v4487 = vld [vmem:[#allocation15 + $0x1a8] sm:$0xff]
    %v4488 = vld [vmem:[#allocation15 + $0x1b0] sm:$0xff]
    %v4489 = vld [vmem:[#allocation15 + $0x1b8] sm:$0xff]
    %v4490 = vld [vmem:[#allocation15 + $0x1c0] sm:$0xff]
    %v4491 = vld [vmem:[#allocation15 + $0x1c8] sm:$0xff]
    %v4492 = vld [vmem:[#allocation15 + $0x1d0] sm:$0xff]
    %v4493 = vld [vmem:[#allocation15 + $0x1d8] sm:$0xff]
    %v4494 = vld [vmem:[#allocation15 + $0x1e0] sm:$0xff]
    %v4495 = vld [vmem:[#allocation15 + $0x1e8] sm:$0xff]
    %v4496 = vld [vmem:[#allocation15 + $0x1f0] sm:$0xff]
    %v4497 = vld [vmem:[#allocation15 + $0x1f8] sm:$0xff]
    %v4498 = vld [vmem:[#allocation15 + $0x200] sm:$0xff]
    %v4499 = vld [vmem:[#allocation15 + $0x208] sm:$0xff]
    %v4500 = vld [vmem:[#allocation15 + $0x210] sm:$0xff]
    %v4501 = vld [vmem:[#allocation15 + $0x218] sm:$0xff]
    %v4502 = vld [vmem:[#allocation15 + $0x220] sm:$0xff]
    %v4503 = vld [vmem:[#allocation15 + $0x228] sm:$0xff]
    %v4504 = vld [vmem:[#allocation15 + $0x230] sm:$0xff]
    %v4505 = vld [vmem:[#allocation15 + $0x238] sm:$0xff]
    %v4506 = vld [vmem:[#allocation15 + $0x240] sm:$0xff]
    %v4507 = vld [vmem:[#allocation15 + $0x248] sm:$0xff]
    %v4508 = vld [vmem:[#allocation15 + $0x250] sm:$0xff]
    %v4509 = vld [vmem:[#allocation15 + $0x258] sm:$0xff]
    %v4510 = vld [vmem:[#allocation15 + $0x260] sm:$0xff]
    %v4511 = vld [vmem:[#allocation15 + $0x268] sm:$0xff]
    %v4512 = vld [vmem:[#allocation15 + $0x270] sm:$0xff]
    %v4513 = vld [vmem:[#allocation15 + $0x278] sm:$0xff]
    %v4514 = vld [vmem:[#allocation15 + $0x280] sm:$0xff]
    %v4515 = vld [vmem:[#allocation15 + $0x288] sm:$0xff]
    %v4516 = vld [vmem:[#allocation15 + $0x290] sm:$0xff]
    %v4517 = vld [vmem:[#allocation15 + $0x298] sm:$0xff]
    %v4518 = vld [vmem:[#allocation15 + $0x2a0] sm:$0xff]
    %v4519 = vld [vmem:[#allocation15 + $0x2a8] sm:$0xff]
    %v4520 = vld [vmem:[#allocation15 + $0x2b0] sm:$0xff]
    %v4521 = vld [vmem:[#allocation15 + $0x2b8] sm:$0xff]
    %v4522 = vld [vmem:[#allocation15 + $0x2c0] sm:$0xff]
    %v4523 = vld [vmem:[#allocation15 + $0x2c8] sm:$0xff]
    %v4524 = vld [vmem:[#allocation15 + $0x2d0] sm:$0xff]
    %v4525 = vld [vmem:[#allocation15 + $0x2d8] sm:$0xff]
    %v4526 = vld [vmem:[#allocation15 + $0x2e0] sm:$0xff]
    %v4527 = vld [vmem:[#allocation15 + $0x2e8] sm:$0xff]
    %v4528 = vld [vmem:[#allocation15 + $0x2f0] sm:$0xff]
    %v4529 = vld [vmem:[#allocation15 + $0x2f8] sm:$0xff]
    %v4530 = vld [vmem:[#allocation15 + $0x300] sm:$0xff]
    %v4531 = vld [vmem:[#allocation15 + $0x308] sm:$0xff]
    %v4532 = vld [vmem:[#allocation15 + $0x310] sm:$0xff]
    %v4533 = vld [vmem:[#allocation15 + $0x318] sm:$0xff]
    %v4534 = vld [vmem:[#allocation15 + $0x320] sm:$0xff]
    %v4535 = vld [vmem:[#allocation15 + $0x328] sm:$0xff]
    %v4536 = vld [vmem:[#allocation15 + $0x330] sm:$0xff]
    %v4537 = vld [vmem:[#allocation15 + $0x338] sm:$0xff]
    %v4538 = vld [vmem:[#allocation15 + $0x340] sm:$0xff]
    %v4539 = vld [vmem:[#allocation15 + $0x348] sm:$0xff]
    %v4540 = vld [vmem:[#allocation15 + $0x350] sm:$0xff]
    %v4541 = vld [vmem:[#allocation15 + $0x358] sm:$0xff]
    %v4542 = vld [vmem:[#allocation15 + $0x360] sm:$0xff]
    %v4543 = vld [vmem:[#allocation15 + $0x368] sm:$0xff]
    %v4544 = vld [vmem:[#allocation15 + $0x370] sm:$0xff]
    %v4545 = vld [vmem:[#allocation15 + $0x378] sm:$0xff]
    %v4546 = vld [vmem:[#allocation15 + $0x380] sm:$0xff]
    %v4547 = vld [vmem:[#allocation15 + $0x388] sm:$0xff]
    %v4548 = vld [vmem:[#allocation15 + $0x390] sm:$0xff]
    %v4549 = vld [vmem:[#allocation15 + $0x398] sm:$0xff]
    %v4550 = vld [vmem:[#allocation15 + $0x3a0] sm:$0xff]
    %v4551 = vld [vmem:[#allocation15 + $0x3a8] sm:$0xff]
    %v4552 = vld [vmem:[#allocation15 + $0x3b0] sm:$0xff]
    %v4553 = vld [vmem:[#allocation15 + $0x3b8] sm:$0xff]
    %v4554 = vld [vmem:[#allocation15 + $0x3c0] sm:$0xff]
    %v4555 = vld [vmem:[#allocation15 + $0x3c8] sm:$0xff]
    %v4556 = vld [vmem:[#allocation15 + $0x3d0] sm:$0xff]
    %v4557 = vld [vmem:[#allocation15 + $0x3d8] sm:$0xff]
    %v4558 = vld [vmem:[#allocation15 + $0x3e0] sm:$0xff]
    %v4559 = vld [vmem:[#allocation15 + $0x3e8] sm:$0xff]
    %v4560 = vld [vmem:[#allocation15 + $0x3f0] sm:$0xff]
    %v4561 = vld [vmem:[#allocation15 + $0x3f8] sm:$0xff]
    %4562 = vmatpush.msra.mxu0 %v4554
    %4563 = vmatpush.msra.mxu0 %v4546
    %4564 = vmatpush.msra.mxu0 %v4538
    %4565 = vmatpush.msra.mxu0 %v4530
    %4566 = vmatpush.msra.mxu0 %v4522
    %4567 = vmatpush.msra.mxu0 %v4514
    %4568 = vmatpush.msra.mxu0 %v4506
    %4569 = vmatpush.msra.mxu0 %v4498
    %4570 = vmatpush.msra.mxu0 %v4490
    %4571 = vmatpush.msra.mxu0 %v4482
    %4572 = vmatpush.msra.mxu0 %v4474
    %4573 = vmatpush.msra.mxu0 %v4466
    %4574 = vmatpush.msra.mxu0 %v4458
    %4575 = vmatpush.msra.mxu0 %v4450
    %4576 = vmatpush.msra.mxu0 %v4442
    %4577 = vmatpush.msra.mxu0 %v4434
    %4578 = vmatmul.f32.gmra.mxu0 %v4304
    %v4579 = vpop.f32.mrf.mxu0
    %v4580 = vadd.f32 0.0, %v4579
    %4581 = vmatmul.f32.gmra.mxu0 %v4305
    %v4582 = vpop.f32.mrf.mxu0
    %v4583 = vadd.f32 0.0, %v4582
    %4584 = vdwg.mxu0
    %4585 = vmatpush.msra.mxu0 %v4555
    %4586 = vmatpush.msra.mxu0 %v4547
    %4587 = vmatpush.msra.mxu0 %v4539
    %4588 = vmatpush.msra.mxu0 %v4531
    %4589 = vmatpush.msra.mxu0 %v4523
    %4590 = vmatpush.msra.mxu0 %v4515
    %4591 = vmatpush.msra.mxu0 %v4507
    %4592 = vmatpush.msra.mxu0 %v4499
    %4593 = vmatpush.msra.mxu0 %v4491
    %4594 = vmatpush.msra.mxu0 %v4483
    %4595 = vmatpush.msra.mxu0 %v4475
    %4596 = vmatpush.msra.mxu0 %v4467
    %4597 = vmatpush.msra.mxu0 %v4459
    %4598 = vmatpush.msra.mxu0 %v4451
    %4599 = vmatpush.msra.mxu0 %v4443
    %4600 = vmatpush.msra.mxu0 %v4435
    %4601 = vmatmul.f32.gmra.mxu0 %v4304
    %v4602 = vpop.f32.mrf.mxu0
    %v4603 = vadd.f32 0.0, %v4602
    %4604 = vmatmul.f32.gmra.mxu0 %v4305
    %v4605 = vpop.f32.mrf.mxu0
    %v4606 = vadd.f32 0.0, %v4605
    %4607 = vdwg.mxu0
    %4608 = vmatpush.msra.mxu0 %v4556
    %4609 = vmatpush.msra.mxu0 %v4548
    %4610 = vmatpush.msra.mxu0 %v4540
    %4611 = vmatpush.msra.mxu0 %v4532
    %4612 = vmatpush.msra.mxu0 %v4524
    %4613 = vmatpush.msra.mxu0 %v4516
    %4614 = vmatpush.msra.mxu0 %v4508
    %4615 = vmatpush.msra.mxu0 %v4500
    %4616 = vmatpush.msra.mxu0 %v4492
    %4617 = vmatpush.msra.mxu0 %v4484
    %4618 = vmatpush.msra.mxu0 %v4476
    %4619 = vmatpush.msra.mxu0 %v4468
    %4620 = vmatpush.msra.mxu0 %v4460
    %4621 = vmatpush.msra.mxu0 %v4452
    %4622 = vmatpush.msra.mxu0 %v4444
    %4623 = vmatpush.msra.mxu0 %v4436
    %4624 = vmatmul.f32.gmra.mxu0 %v4304
    %v4625 = vpop.f32.mrf.mxu0
    %v4626 = vadd.f32 0.0, %v4625
    %4627 = vmatmul.f32.gmra.mxu0 %v4305
    %v4628 = vpop.f32.mrf.mxu0
    %v4629 = vadd.f32 0.0, %v4628
    %4630 = vdwg.mxu0
    %4631 = vmatpush.msra.mxu0 %v4557
    %4632 = vmatpush.msra.mxu0 %v4549
    %4633 = vmatpush.msra.mxu0 %v4541
    %4634 = vmatpush.msra.mxu0 %v4533
    %4635 = vmatpush.msra.mxu0 %v4525
    %4636 = vmatpush.msra.mxu0 %v4517
    %4637 = vmatpush.msra.mxu0 %v4509
    %4638 = vmatpush.msra.mxu0 %v4501
    %4639 = vmatpush.msra.mxu0 %v4493
    %4640 = vmatpush.msra.mxu0 %v4485
    %4641 = vmatpush.msra.mxu0 %v4477
    %4642 = vmatpush.msra.mxu0 %v4469
    %4643 = vmatpush.msra.mxu0 %v4461
    %4644 = vmatpush.msra.mxu0 %v4453
    %4645 = vmatpush.msra.mxu0 %v4445
    %4646 = vmatpush.msra.mxu0 %v4437
    %4647 = vmatmul.f32.gmra.mxu0 %v4304
    %v4648 = vpop.f32.mrf.mxu0
    %v4649 = vadd.f32 0.0, %v4648
    %4650 = vmatmul.f32.gmra.mxu0 %v4305
    %v4651 = vpop.f32.mrf.mxu0
    %v4652 = vadd.f32 0.0, %v4651
    %4653 = vdwg.mxu0
    %4654 = vmatpush.msra.mxu0 %v4558
    %4655 = vmatpush.msra.mxu0 %v4550
    %4656 = vmatpush.msra.mxu0 %v4542
    %4657 = vmatpush.msra.mxu0 %v4534
    %4658 = vmatpush.msra.mxu0 %v4526
    %4659 = vmatpush.msra.mxu0 %v4518
    %4660 = vmatpush.msra.mxu0 %v4510
    %4661 = vmatpush.msra.mxu0 %v4502
    %4662 = vmatpush.msra.mxu0 %v4494
    %4663 = vmatpush.msra.mxu0 %v4486
    %4664 = vmatpush.msra.mxu0 %v4478
    %4665 = vmatpush.msra.mxu0 %v4470
    %4666 = vmatpush.msra.mxu0 %v4462
    %4667 = vmatpush.msra.mxu0 %v4454
    %4668 = vmatpush.msra.mxu0 %v4446
    %4669 = vmatpush.msra.mxu0 %v4438
    %4670 = vmatmul.f32.gmra.mxu0 %v4304
    %v4671 = vpop.f32.mrf.mxu0
    %v4672 = vadd.f32 0.0, %v4671
    %4673 = vmatmul.f32.gmra.mxu0 %v4305
    %v4674 = vpop.f32.mrf.mxu0
    %v4675 = vadd.f32 0.0, %v4674
    %4676 = vdwg.mxu0
    %4677 = vmatpush.msra.mxu0 %v4559
    %4678 = vmatpush.msra.mxu0 %v4551
    %4679 = vmatpush.msra.mxu0 %v4543
    %4680 = vmatpush.msra.mxu0 %v4535
    %4681 = vmatpush.msra.mxu0 %v4527
    %4682 = vmatpush.msra.mxu0 %v4519
    %4683 = vmatpush.msra.mxu0 %v4511
    %4684 = vmatpush.msra.mxu0 %v4503
    %4685 = vmatpush.msra.mxu0 %v4495
    %4686 = vmatpush.msra.mxu0 %v4487
    %4687 = vmatpush.msra.mxu0 %v4479
    %4688 = vmatpush.msra.mxu0 %v4471
    %4689 = vmatpush.msra.mxu0 %v4463
    %4690 = vmatpush.msra.mxu0 %v4455
    %4691 = vmatpush.msra.mxu0 %v4447
    %4692 = vmatpush.msra.mxu0 %v4439
    %4693 = vmatmul.f32.gmra.mxu0 %v4304
    %v4694 = vpop.f32.mrf.mxu0
    %v4695 = vadd.f32 0.0, %v4694
    %4696 = vmatmul.f32.gmra.mxu0 %v4305
    %v4697 = vpop.f32.mrf.mxu0
    %v4698 = vadd.f32 0.0, %v4697
    %4699 = vdwg.mxu0
    %4700 = vmatpush.msra.mxu0 %v4560
    %4701 = vmatpush.msra.mxu0 %v4552
    %4702 = vmatpush.msra.mxu0 %v4544
    %4703 = vmatpush.msra.mxu0 %v4536
    %4704 = vmatpush.msra.mxu0 %v4528
    %4705 = vmatpush.msra.mxu0 %v4520
    %4706 = vmatpush.msra.mxu0 %v4512
    %4707 = vmatpush.msra.mxu0 %v4504
    %4708 = vmatpush.msra.mxu0 %v4496
    %4709 = vmatpush.msra.mxu0 %v4488
    %4710 = vmatpush.msra.mxu0 %v4480
    %4711 = vmatpush.msra.mxu0 %v4472
    %4712 = vmatpush.msra.mxu0 %v4464
    %4713 = vmatpush.msra.mxu0 %v4456
    %4714 = vmatpush.msra.mxu0 %v4448
    %4715 = vmatpush.msra.mxu0 %v4440
    %4716 = vmatmul.f32.gmra.mxu0 %v4304
    %v4717 = vpop.f32.mrf.mxu0
    %v4718 = vadd.f32 0.0, %v4717
    %4719 = vmatmul.f32.gmra.mxu0 %v4305
    %v4720 = vpop.f32.mrf.mxu0
    %v4721 = vadd.f32 0.0, %v4720
    %4722 = vdwg.mxu0
    %4723 = vmatpush.msra.mxu0 %v4561
    %4724 = vmatpush.msra.mxu0 %v4553
    %4725 = vmatpush.msra.mxu0 %v4545
    %4726 = vmatpush.msra.mxu0 %v4537
    %4727 = vmatpush.msra.mxu0 %v4529
    %4728 = vmatpush.msra.mxu0 %v4521
    %4729 = vmatpush.msra.mxu0 %v4513
    %4730 = vmatpush.msra.mxu0 %v4505
    %4731 = vmatpush.msra.mxu0 %v4497
    %4732 = vmatpush.msra.mxu0 %v4489
    %4733 = vmatpush.msra.mxu0 %v4481
    %4734 = vmatpush.msra.mxu0 %v4473
    %4735 = vmatpush.msra.mxu0 %v4465
    %4736 = vmatpush.msra.mxu0 %v4457
    %4737 = vmatpush.msra.mxu0 %v4449
    %4738 = vmatpush.msra.mxu0 %v4441
    %4739 = vmatmul.f32.gmra.mxu0 %v4304
    %v4740 = vpop.f32.mrf.mxu0
    %v4741 = vadd.f32 0.0, %v4740
    %4742 = vmatmul.f32.gmra.mxu0 %v4305
    %v4743 = vpop.f32.mrf.mxu0
    %v4744 = vadd.f32 0.0, %v4743
    %4745 = vdwg.mxu0
    %4746 = vmatpush.msra.mxu0 %v4426
    %4747 = vmatpush.msra.mxu0 %v4418
    %4748 = vmatpush.msra.mxu0 %v4410
    %4749 = vmatpush.msra.mxu0 %v4402
    %4750 = vmatpush.msra.mxu0 %v4394
    %4751 = vmatpush.msra.mxu0 %v4386
    %4752 = vmatpush.msra.mxu0 %v4378
    %4753 = vmatpush.msra.mxu0 %v4370
    %4754 = vmatpush.msra.mxu0 %v4362
    %4755 = vmatpush.msra.mxu0 %v4354
    %4756 = vmatpush.msra.mxu0 %v4346
    %4757 = vmatpush.msra.mxu0 %v4338
    %4758 = vmatpush.msra.mxu0 %v4330
    %4759 = vmatpush.msra.mxu0 %v4322
    %4760 = vmatpush.msra.mxu0 %v4314
    %4761 = vmatpush.msra.mxu0 %v4306
    %4762 = vmatmul.f32.gmra.mxu0 %v4302
    %v4763 = vpop.f32.mrf.mxu0
    %v4764 = vadd.f32 %v4580, %v4763
    %4765 = vmatmul.f32.gmra.mxu0 %v4303
    %v4766 = vpop.f32.mrf.mxu0
    %v4767 = vadd.f32 %v4583, %v4766
    %4768 = vdwg.mxu0
    %4769 = vmatpush.msra.mxu0 %v4427
    %4770 = vmatpush.msra.mxu0 %v4419
    %4771 = vmatpush.msra.mxu0 %v4411
    %4772 = vmatpush.msra.mxu0 %v4403
    %4773 = vmatpush.msra.mxu0 %v4395
    %4774 = vmatpush.msra.mxu0 %v4387
    %4775 = vmatpush.msra.mxu0 %v4379
    %4776 = vmatpush.msra.mxu0 %v4371
    %4777 = vmatpush.msra.mxu0 %v4363
    %4778 = vmatpush.msra.mxu0 %v4355
    %4779 = vmatpush.msra.mxu0 %v4347
    %4780 = vmatpush.msra.mxu0 %v4339
    %4781 = vmatpush.msra.mxu0 %v4331
    %4782 = vmatpush.msra.mxu0 %v4323
    %4783 = vmatpush.msra.mxu0 %v4315
    %4784 = vmatpush.msra.mxu0 %v4307
    %4785 = vmatmul.f32.gmra.mxu0 %v4302
    %v4786 = vpop.f32.mrf.mxu0
    %v4787 = vadd.f32 %v4603, %v4786
    %4788 = vmatmul.f32.gmra.mxu0 %v4303
    %v4789 = vpop.f32.mrf.mxu0
    %v4790 = vadd.f32 %v4606, %v4789
    %4791 = vdwg.mxu0
    %4792 = vmatpush.msra.mxu0 %v4428
    %4793 = vmatpush.msra.mxu0 %v4420
    %4794 = vmatpush.msra.mxu0 %v4412
    %4795 = vmatpush.msra.mxu0 %v4404
    %4796 = vmatpush.msra.mxu0 %v4396
    %4797 = vmatpush.msra.mxu0 %v4388
    %4798 = vmatpush.msra.mxu0 %v4380
    %4799 = vmatpush.msra.mxu0 %v4372
    %4800 = vmatpush.msra.mxu0 %v4364
    %4801 = vmatpush.msra.mxu0 %v4356
    %4802 = vmatpush.msra.mxu0 %v4348
    %4803 = vmatpush.msra.mxu0 %v4340
    %4804 = vmatpush.msra.mxu0 %v4332
    %4805 = vmatpush.msra.mxu0 %v4324
    %4806 = vmatpush.msra.mxu0 %v4316
    %4807 = vmatpush.msra.mxu0 %v4308
    %4808 = vmatmul.f32.gmra.mxu0 %v4302
    %v4809 = vpop.f32.mrf.mxu0
    %v4810 = vadd.f32 %v4626, %v4809
    %4811 = vmatmul.f32.gmra.mxu0 %v4303
    %v4812 = vpop.f32.mrf.mxu0
    %v4813 = vadd.f32 %v4629, %v4812
    %4814 = vdwg.mxu0
    %4815 = vmatpush.msra.mxu0 %v4429
    %4816 = vmatpush.msra.mxu0 %v4421
    %4817 = vmatpush.msra.mxu0 %v4413
    %4818 = vmatpush.msra.mxu0 %v4405
    %4819 = vmatpush.msra.mxu0 %v4397
    %4820 = vmatpush.msra.mxu0 %v4389
    %4821 = vmatpush.msra.mxu0 %v4381
    %4822 = vmatpush.msra.mxu0 %v4373
    %4823 = vmatpush.msra.mxu0 %v4365
    %4824 = vmatpush.msra.mxu0 %v4357
    %4825 = vmatpush.msra.mxu0 %v4349
    %4826 = vmatpush.msra.mxu0 %v4341
    %4827 = vmatpush.msra.mxu0 %v4333
    %4828 = vmatpush.msra.mxu0 %v4325
    %4829 = vmatpush.msra.mxu0 %v4317
    %4830 = vmatpush.msra.mxu0 %v4309
    %4831 = vmatmul.f32.gmra.mxu0 %v4302
    %v4832 = vpop.f32.mrf.mxu0
    %v4833 = vadd.f32 %v4649, %v4832
    %4834 = vmatmul.f32.gmra.mxu0 %v4303
    %v4835 = vpop.f32.mrf.mxu0
    %v4836 = vadd.f32 %v4652, %v4835
    %4837 = vdwg.mxu0
    %4838 = vmatpush.msra.mxu0 %v4430
    %4839 = vmatpush.msra.mxu0 %v4422
    %4840 = vmatpush.msra.mxu0 %v4414
    %4841 = vmatpush.msra.mxu0 %v4406
    %4842 = vmatpush.msra.mxu0 %v4398
    %4843 = vmatpush.msra.mxu0 %v4390
    %4844 = vmatpush.msra.mxu0 %v4382
    %4845 = vmatpush.msra.mxu0 %v4374
    %4846 = vmatpush.msra.mxu0 %v4366
    %4847 = vmatpush.msra.mxu0 %v4358
    %4848 = vmatpush.msra.mxu0 %v4350
    %4849 = vmatpush.msra.mxu0 %v4342
    %4850 = vmatpush.msra.mxu0 %v4334
    %4851 = vmatpush.msra.mxu0 %v4326
    %4852 = vmatpush.msra.mxu0 %v4318
    %4853 = vmatpush.msra.mxu0 %v4310
    %4854 = vmatmul.f32.gmra.mxu0 %v4302
    %v4855 = vpop.f32.mrf.mxu0
    %v4856 = vadd.f32 %v4672, %v4855
    %4857 = vmatmul.f32.gmra.mxu0 %v4303
    %v4858 = vpop.f32.mrf.mxu0
    %v4859 = vadd.f32 %v4675, %v4858
    %4860 = vdwg.mxu0
    %4861 = vmatpush.msra.mxu0 %v4431
    %4862 = vmatpush.msra.mxu0 %v4423
    %4863 = vmatpush.msra.mxu0 %v4415
    %4864 = vmatpush.msra.mxu0 %v4407
    %4865 = vmatpush.msra.mxu0 %v4399
    %4866 = vmatpush.msra.mxu0 %v4391
    %4867 = vmatpush.msra.mxu0 %v4383
    %4868 = vmatpush.msra.mxu0 %v4375
    %4869 = vmatpush.msra.mxu0 %v4367
    %4870 = vmatpush.msra.mxu0 %v4359
    %4871 = vmatpush.msra.mxu0 %v4351
    %4872 = vmatpush.msra.mxu0 %v4343
    %4873 = vmatpush.msra.mxu0 %v4335
    %4874 = vmatpush.msra.mxu0 %v4327
    %4875 = vmatpush.msra.mxu0 %v4319
    %4876 = vmatpush.msra.mxu0 %v4311
    %4877 = vmatmul.f32.gmra.mxu0 %v4302
    %v4878 = vpop.f32.mrf.mxu0
    %v4879 = vadd.f32 %v4695, %v4878
    %4880 = vmatmul.f32.gmra.mxu0 %v4303
    %v4881 = vpop.f32.mrf.mxu0
    %v4882 = vadd.f32 %v4698, %v4881
    %4883 = vdwg.mxu0
    %4884 = vmatpush.msra.mxu0 %v4432
    %4885 = vmatpush.msra.mxu0 %v4424
    %4886 = vmatpush.msra.mxu0 %v4416
    %4887 = vmatpush.msra.mxu0 %v4408
    %4888 = vmatpush.msra.mxu0 %v4400
    %4889 = vmatpush.msra.mxu0 %v4392
    %4890 = vmatpush.msra.mxu0 %v4384
    %4891 = vmatpush.msra.mxu0 %v4376
    %4892 = vmatpush.msra.mxu0 %v4368
    %4893 = vmatpush.msra.mxu0 %v4360
    %4894 = vmatpush.msra.mxu0 %v4352
    %4895 = vmatpush.msra.mxu0 %v4344
    %4896 = vmatpush.msra.mxu0 %v4336
    %4897 = vmatpush.msra.mxu0 %v4328
    %4898 = vmatpush.msra.mxu0 %v4320
    %4899 = vmatpush.msra.mxu0 %v4312
    %4900 = vmatmul.f32.gmra.mxu0 %v4302
    %v4901 = vpop.f32.mrf.mxu0
    %v4902 = vadd.f32 %v4718, %v4901
    %4903 = vmatmul.f32.gmra.mxu0 %v4303
    %v4904 = vpop.f32.mrf.mxu0
    %v4905 = vadd.f32 %v4721, %v4904
    %4906 = vdwg.mxu0
    %4907 = vmatpush.msra.mxu0 %v4433
    %4908 = vmatpush.msra.mxu0 %v4425
    %4909 = vmatpush.msra.mxu0 %v4417
    %4910 = vmatpush.msra.mxu0 %v4409
    %4911 = vmatpush.msra.mxu0 %v4401
    %4912 = vmatpush.msra.mxu0 %v4393
    %4913 = vmatpush.msra.mxu0 %v4385
    %4914 = vmatpush.msra.mxu0 %v4377
    %4915 = vmatpush.msra.mxu0 %v4369
    %4916 = vmatpush.msra.mxu0 %v4361
    %4917 = vmatpush.msra.mxu0 %v4353
    %4918 = vmatpush.msra.mxu0 %v4345
    %4919 = vmatpush.msra.mxu0 %v4337
    %4920 = vmatpush.msra.mxu0 %v4329
    %4921 = vmatpush.msra.mxu0 %v4321
    %4922 = vmatpush.msra.mxu0 %v4313
    %4923 = vmatmul.f32.gmra.mxu0 %v4302
    %v4924 = vpop.f32.mrf.mxu0
    %v4925 = vadd.f32 %v4741, %v4924
    %4926 = vmatmul.f32.gmra.mxu0 %v4303
    %v4927 = vpop.f32.mrf.mxu0
    %v4928 = vadd.f32 %v4744, %v4927
    %4929 = vdwg.mxu0
    %v4930 = vld [vmem:[%s10] sm:$0xff]
    %v4932 = vperm.slane %v4930, 0
    %v4933 = vperm.slane %v4930, 1
    %v4934 = vperm.slane %v4930, 2
    %v4935 = vperm.slane %v4930, 3
    %v4936 = vperm.slane %v4930, 4
    %v4937 = vperm.slane %v4930, 5
    %v4938 = vperm.slane %v4930, 6
    %v4939 = vperm.slane %v4930, 7
    %v4948 = vadd.f32 %v4764, %v4932
    %v4949 = vadd.f32 %v4787, %v4933
    %v4950 = vadd.f32 %v4810, %v4934
    %v4951 = vadd.f32 %v4833, %v4935
    %v4952 = vadd.f32 %v4856, %v4936
    %v4953 = vadd.f32 %v4879, %v4937
    %v4954 = vadd.f32 %v4902, %v4938
    %v4955 = vadd.f32 %v4925, %v4939
    %v4956 = vadd.f32 %v4767, %v4932
    %v4957 = vadd.f32 %v4790, %v4933
    %v4958 = vadd.f32 %v4813, %v4934
    %v4959 = vadd.f32 %v4836, %v4935
    %v4960 = vadd.f32 %v4859, %v4936
    %v4961 = vadd.f32 %v4882, %v4937
    %v4962 = vadd.f32 %v4905, %v4938
    %v4963 = vadd.f32 %v4928, %v4939
    %v4964 = vld [vmem:[#allocation17] sm:$0xff]
    %v4965 = vld [vmem:[#allocation17 + $0x8] sm:$0xff]
    %v4966 = vld [vmem:[#allocation17 + $0x10] sm:$0xff]
    %v4967 = vld [vmem:[#allocation17 + $0x18] sm:$0xff]
    %v4968 = vld [vmem:[#allocation17 + $0x20] sm:$0xff]
    %v4969 = vld [vmem:[#allocation17 + $0x28] sm:$0xff]
    %v4970 = vld [vmem:[#allocation17 + $0x30] sm:$0xff]
    %v4971 = vld [vmem:[#allocation17 + $0x38] sm:$0xff]
    %v4972 = vld [vmem:[#allocation17 + $0x40] sm:$0xff]
    %v4973 = vld [vmem:[#allocation17 + $0x48] sm:$0xff]
    %v4974 = vld [vmem:[#allocation17 + $0x50] sm:$0xff]
    %v4975 = vld [vmem:[#allocation17 + $0x58] sm:$0xff]
    %v4976 = vld [vmem:[#allocation17 + $0x60] sm:$0xff]
    %v4977 = vld [vmem:[#allocation17 + $0x68] sm:$0xff]
    %v4978 = vld [vmem:[#allocation17 + $0x70] sm:$0xff]
    %v4979 = vld [vmem:[#allocation17 + $0x78] sm:$0xff]
    %v4980 = vld [vmem:[#allocation17 + $0x80] sm:$0xff]
    %v4981 = vld [vmem:[#allocation17 + $0x88] sm:$0xff]
    %v4982 = vld [vmem:[#allocation17 + $0x90] sm:$0xff]
    %v4983 = vld [vmem:[#allocation17 + $0x98] sm:$0xff]
    %v4984 = vld [vmem:[#allocation17 + $0xa0] sm:$0xff]
    %v4985 = vld [vmem:[#allocation17 + $0xa8] sm:$0xff]
    %v4986 = vld [vmem:[#allocation17 + $0xb0] sm:$0xff]
    %v4987 = vld [vmem:[#allocation17 + $0xb8] sm:$0xff]
    %v4988 = vld [vmem:[#allocation17 + $0xc0] sm:$0xff]
    %v4989 = vld [vmem:[#allocation17 + $0xc8] sm:$0xff]
    %v4990 = vld [vmem:[#allocation17 + $0xd0] sm:$0xff]
    %v4991 = vld [vmem:[#allocation17 + $0xd8] sm:$0xff]
    %v4992 = vld [vmem:[#allocation17 + $0xe0] sm:$0xff]
    %v4993 = vld [vmem:[#allocation17 + $0xe8] sm:$0xff]
    %v4994 = vld [vmem:[#allocation17 + $0xf0] sm:$0xff]
    %v4995 = vld [vmem:[#allocation17 + $0xf8] sm:$0xff]
    %v4996 = vld [vmem:[#allocation17 + $0x100] sm:$0xff]
    %v4997 = vld [vmem:[#allocation17 + $0x108] sm:$0xff]
    %v4998 = vld [vmem:[#allocation17 + $0x110] sm:$0xff]
    %v4999 = vld [vmem:[#allocation17 + $0x118] sm:$0xff]
    %v5000 = vld [vmem:[#allocation17 + $0x120] sm:$0xff]
    %v5001 = vld [vmem:[#allocation17 + $0x128] sm:$0xff]
    %v5002 = vld [vmem:[#allocation17 + $0x130] sm:$0xff]
    %v5003 = vld [vmem:[#allocation17 + $0x138] sm:$0xff]
    %v5004 = vld [vmem:[#allocation17 + $0x140] sm:$0xff]
    %v5005 = vld [vmem:[#allocation17 + $0x148] sm:$0xff]
    %v5006 = vld [vmem:[#allocation17 + $0x150] sm:$0xff]
    %v5007 = vld [vmem:[#allocation17 + $0x158] sm:$0xff]
    %v5008 = vld [vmem:[#allocation17 + $0x160] sm:$0xff]
    %v5009 = vld [vmem:[#allocation17 + $0x168] sm:$0xff]
    %v5010 = vld [vmem:[#allocation17 + $0x170] sm:$0xff]
    %v5011 = vld [vmem:[#allocation17 + $0x178] sm:$0xff]
    %v5012 = vld [vmem:[#allocation17 + $0x180] sm:$0xff]
    %v5013 = vld [vmem:[#allocation17 + $0x188] sm:$0xff]
    %v5014 = vld [vmem:[#allocation17 + $0x190] sm:$0xff]
    %v5015 = vld [vmem:[#allocation17 + $0x198] sm:$0xff]
    %v5016 = vld [vmem:[#allocation17 + $0x1a0] sm:$0xff]
    %v5017 = vld [vmem:[#allocation17 + $0x1a8] sm:$0xff]
    %v5018 = vld [vmem:[#allocation17 + $0x1b0] sm:$0xff]
    %v5019 = vld [vmem:[#allocation17 + $0x1b8] sm:$0xff]
    %v5020 = vld [vmem:[#allocation17 + $0x1c0] sm:$0xff]
    %v5021 = vld [vmem:[#allocation17 + $0x1c8] sm:$0xff]
    %v5022 = vld [vmem:[#allocation17 + $0x1d0] sm:$0xff]
    %v5023 = vld [vmem:[#allocation17 + $0x1d8] sm:$0xff]
    %v5024 = vld [vmem:[#allocation17 + $0x1e0] sm:$0xff]
    %v5025 = vld [vmem:[#allocation17 + $0x1e8] sm:$0xff]
    %v5026 = vld [vmem:[#allocation17 + $0x1f0] sm:$0xff]
    %v5027 = vld [vmem:[#allocation17 + $0x1f8] sm:$0xff]
    %s5028 = scalar_lea.vmem %s11, 2
    %v5029 = vld [vmem:[%s5028] sm:$0x1]
    %s5030 = scalar_lea.vmem %s12, 2
    %v5031 = vld [vmem:[%s5030] sm:$0x1]
    %v5033 = vperm.slane %v5029, 0
    %v5036 = vperm.slane %v5031, 0
    %5038 = vmatpush.msra.mxu0 %v5024
    %5039 = vmatpush.msra.mxu0 %v5020
    %5040 = vmatpush.msra.mxu0 %v5016
    %5041 = vmatpush.msra.mxu0 %v5012
    %5042 = vmatpush.msra.mxu0 %v5008
    %5043 = vmatpush.msra.mxu0 %v5004
    %5044 = vmatpush.msra.mxu0 %v5000
    %5045 = vmatpush.msra.mxu0 %v4996
    %5046 = vmatpush.msra.mxu0 %v4992
    %5047 = vmatpush.msra.mxu0 %v4988
    %5048 = vmatpush.msra.mxu0 %v4984
    %5049 = vmatpush.msra.mxu0 %v4980
    %5050 = vmatpush.msra.mxu0 %v4976
    %5051 = vmatpush.msra.mxu0 %v4972
    %5052 = vmatpush.msra.mxu0 %v4968
    %5053 = vmatpush.msra.mxu0 %v4964
    %5054 = vmatmul.f32.gmra.mxu0 %v5033
    %v5055 = vpop.f32.mrf.mxu0
    %v5056 = vadd.f32 0.0, %v5055
    %5057 = vdwg.mxu0
    %5058 = vmatpush.msra.mxu0 %v5025
    %5059 = vmatpush.msra.mxu0 %v5021
    %5060 = vmatpush.msra.mxu0 %v5017
    %5061 = vmatpush.msra.mxu0 %v5013
    %5062 = vmatpush.msra.mxu0 %v5009
    %5063 = vmatpush.msra.mxu0 %v5005
    %5064 = vmatpush.msra.mxu0 %v5001
    %5065 = vmatpush.msra.mxu0 %v4997
    %5066 = vmatpush.msra.mxu0 %v4993
    %5067 = vmatpush.msra.mxu0 %v4989
    %5068 = vmatpush.msra.mxu0 %v4985
    %5069 = vmatpush.msra.mxu0 %v4981
    %5070 = vmatpush.msra.mxu0 %v4977
    %5071 = vmatpush.msra.mxu0 %v4973
    %5072 = vmatpush.msra.mxu0 %v4969
    %5073 = vmatpush.msra.mxu0 %v4965
    %5074 = vmatmul.f32.gmra.mxu0 %v5033
    %v5075 = vpop.f32.mrf.mxu0
    %v5076 = vadd.f32 0.0, %v5075
    %5077 = vdwg.mxu0
    %5078 = vmatpush.msra.mxu0 %v5026
    %5079 = vmatpush.msra.mxu0 %v5022
    %5080 = vmatpush.msra.mxu0 %v5018
    %5081 = vmatpush.msra.mxu0 %v5014
    %5082 = vmatpush.msra.mxu0 %v5010
    %5083 = vmatpush.msra.mxu0 %v5006
    %5084 = vmatpush.msra.mxu0 %v5002
    %5085 = vmatpush.msra.mxu0 %v4998
    %5086 = vmatpush.msra.mxu0 %v4994
    %5087 = vmatpush.msra.mxu0 %v4990
    %5088 = vmatpush.msra.mxu0 %v4986
    %5089 = vmatpush.msra.mxu0 %v4982
    %5090 = vmatpush.msra.mxu0 %v4978
    %5091 = vmatpush.msra.mxu0 %v4974
    %5092 = vmatpush.msra.mxu0 %v4970
    %5093 = vmatpush.msra.mxu0 %v4966
    %5094 = vmatmul.f32.gmra.mxu0 %v5033
    %v5095 = vpop.f32.mrf.mxu0
    %v5096 = vadd.f32 0.0, %v5095
    %5097 = vdwg.mxu0
    %5098 = vmatpush.msra.mxu0 %v5027
    %5099 = vmatpush.msra.mxu0 %v5023
    %5100 = vmatpush.msra.mxu0 %v5019
    %5101 = vmatpush.msra.mxu0 %v5015
    %5102 = vmatpush.msra.mxu0 %v5011
    %5103 = vmatpush.msra.mxu0 %v5007
    %5104 = vmatpush.msra.mxu0 %v5003
    %5105 = vmatpush.msra.mxu0 %v4999
    %5106 = vmatpush.msra.mxu0 %v4995
    %5107 = vmatpush.msra.mxu0 %v4991
    %5108 = vmatpush.msra.mxu0 %v4987
    %5109 = vmatpush.msra.mxu0 %v4983
    %5110 = vmatpush.msra.mxu0 %v4979
    %5111 = vmatpush.msra.mxu0 %v4975
    %5112 = vmatpush.msra.mxu0 %v4971
    %5113 = vmatpush.msra.mxu0 %v4967
    %5114 = vmatmul.f32.gmra.mxu0 %v5033
    %v5115 = vpop.f32.mrf.mxu0
    %v5116 = vadd.f32 0.0, %v5115
    %5117 = vdwg.mxu0
    %v5118 = vadd.f32 %v4948, %v5056
    %v5119 = vadd.f32 %v4949, %v5076
    %v5120 = vadd.f32 %v4950, %v5096
    %v5121 = vadd.f32 %v4951, %v5116
    %v5122 = vxor.u32 %v5118, 2147483648
    %v5123 = vmul.f32 %v5122, 1.442695
    %v5124 = vpow.pop %v5123
    %v5125 = vadd.f32 %v5124, 1.0
    %v5126 = vrcp.pop %v5125
    %v5127 = vmul.f32 %v5125, %v5126
    %v5128 = vsub.f32 1.0, %v5127
    %v5129 = vmul.f32 %v5126, %v5128
    %v5130 = vadd.f32 %v5126, %v5129
    %vm5131 = vweird.f32 %v5125
    %vm5132 = vweird.f32 %v5126
    %vm5133 = vmor %vm5131, %vm5132
    %v5134 = vsel %vm5133, %v5126, %v5130
    %v5135 = vand.u32 2147483647, %v5125
    %vm5136 = vcmp.eq.f32.partialorder %v5135, 8.507059e+37
    %v5137 = vand.u32 %v5125, 2147483648
    %v5138 = vor.u32 1.1754944e-38, %v5137
    %v5139 = vsel %vm5136, %v5138, %v5134
    %v5140 = vmul.f32 1.0, %v5139
    %v5141 = vxor.u32 %v5119, 2147483648
    %v5142 = vmul.f32 %v5141, 1.442695
    %v5143 = vpow.pop %v5142
    %v5144 = vadd.f32 %v5143, 1.0
    %v5145 = vrcp.pop %v5144
    %v5146 = vmul.f32 %v5144, %v5145
    %v5147 = vsub.f32 1.0, %v5146
    %v5148 = vmul.f32 %v5145, %v5147
    %v5149 = vadd.f32 %v5145, %v5148
    %vm5150 = vweird.f32 %v5144
    %vm5151 = vweird.f32 %v5145
    %vm5152 = vmor %vm5150, %vm5151
    %v5153 = vsel %vm5152, %v5145, %v5149
    %v5154 = vand.u32 2147483647, %v5144
    %vm5155 = vcmp.eq.f32.partialorder %v5154, 8.507059e+37
    %v5156 = vand.u32 %v5144, 2147483648
    %v5157 = vor.u32 1.1754944e-38, %v5156
    %v5158 = vsel %vm5155, %v5157, %v5153
    %v5159 = vmul.f32 1.0, %v5158
    %v5160 = vtanh.pop %v5120
    %v5161 = vxor.u32 %v5121, 2147483648
    %v5162 = vmul.f32 %v5161, 1.442695
    %v5163 = vpow.pop %v5162
    %v5164 = vadd.f32 %v5163, 1.0
    %v5165 = vrcp.pop %v5164
    %v5166 = vmul.f32 %v5164, %v5165
    %v5167 = vsub.f32 1.0, %v5166
    %v5168 = vmul.f32 %v5165, %v5167
    %v5169 = vadd.f32 %v5165, %v5168
    %vm5170 = vweird.f32 %v5164
    %vm5171 = vweird.f32 %v5165
    %vm5172 = vmor %vm5170, %vm5171
    %v5173 = vsel %vm5172, %v5165, %v5169
    %v5174 = vand.u32 2147483647, %v5164
    %vm5175 = vcmp.eq.f32.partialorder %v5174, 8.507059e+37
    %v5176 = vand.u32 %v5164, 2147483648
    %v5177 = vor.u32 1.1754944e-38, %v5176
    %v5178 = vsel %vm5175, %v5177, %v5173
    %v5179 = vmul.f32 1.0, %v5178
    %v5180 = vmul.f32 %v5159, %v5036
    %v5181 = vmul.f32 %v5140, %v5160
    %v5182 = vadd.f32 %v5180, %v5181
    %v5183 = vtanh.pop %v5182
    %v5184 = vmul.f32 %v5179, %v5183
    %5185 = vst [vmem:[#allocation4] sm:$0x3] %v5184
    %5186 = vmatpush.msra.mxu0 %v5024
    %5187 = vmatpush.msra.mxu0 %v5020
    %5188 = vmatpush.msra.mxu0 %v5016
    %5189 = vmatpush.msra.mxu0 %v5012
    %5190 = vmatpush.msra.mxu0 %v5008
    %5191 = vmatpush.msra.mxu0 %v5004
    %5192 = vmatpush.msra.mxu0 %v5000
    %5193 = vmatpush.msra.mxu0 %v4996
    %5194 = vmatpush.msra.mxu0 %v4992
    %5195 = vmatpush.msra.mxu0 %v4988
    %5196 = vmatpush.msra.mxu0 %v4984
    %5197 = vmatpush.msra.mxu0 %v4980
    %5198 = vmatpush.msra.mxu0 %v4976
    %5199 = vmatpush.msra.mxu0 %v4972
    %5200 = vmatpush.msra.mxu0 %v4968
    %5201 = vmatpush.msra.mxu0 %v4964
    %5202 = vmatmul.f32.gmra.mxu0 %v5184
    %v5203 = vpop.f32.mrf.mxu0
    %v5204 = vadd.f32 0.0, %v5203
    %5205 = vdwg.mxu0
    %5206 = vmatpush.msra.mxu0 %v5025
    %5207 = vmatpush.msra.mxu0 %v5021
    %5208 = vmatpush.msra.mxu0 %v5017
    %5209 = vmatpush.msra.mxu0 %v5013
    %5210 = vmatpush.msra.mxu0 %v5009
    %5211 = vmatpush.msra.mxu0 %v5005
    %5212 = vmatpush.msra.mxu0 %v5001
    %5213 = vmatpush.msra.mxu0 %v4997
    %5214 = vmatpush.msra.mxu0 %v4993
    %5215 = vmatpush.msra.mxu0 %v4989
    %5216 = vmatpush.msra.mxu0 %v4985
    %5217 = vmatpush.msra.mxu0 %v4981
    %5218 = vmatpush.msra.mxu0 %v4977
    %5219 = vmatpush.msra.mxu0 %v4973
    %5220 = vmatpush.msra.mxu0 %v4969
    %5221 = vmatpush.msra.mxu0 %v4965
    %5222 = vmatmul.f32.gmra.mxu0 %v5184
    %v5223 = vpop.f32.mrf.mxu0
    %v5224 = vadd.f32 0.0, %v5223
    %5225 = vdwg.mxu0
    %5226 = vmatpush.msra.mxu0 %v5026
    %5227 = vmatpush.msra.mxu0 %v5022
    %5228 = vmatpush.msra.mxu0 %v5018
    %5229 = vmatpush.msra.mxu0 %v5014
    %5230 = vmatpush.msra.mxu0 %v5010
    %5231 = vmatpush.msra.mxu0 %v5006
    %5232 = vmatpush.msra.mxu0 %v5002
    %5233 = vmatpush.msra.mxu0 %v4998
    %5234 = vmatpush.msra.mxu0 %v4994
    %5235 = vmatpush.msra.mxu0 %v4990
    %5236 = vmatpush.msra.mxu0 %v4986
    %5237 = vmatpush.msra.mxu0 %v4982
    %5238 = vmatpush.msra.mxu0 %v4978
    %5239 = vmatpush.msra.mxu0 %v4974
    %5240 = vmatpush.msra.mxu0 %v4970
    %5241 = vmatpush.msra.mxu0 %v4966
    %5242 = vmatmul.f32.gmra.mxu0 %v5184
    %v5243 = vpop.f32.mrf.mxu0
    %v5244 = vadd.f32 0.0, %v5243
    %5245 = vdwg.mxu0
    %5246 = vmatpush.msra.mxu0 %v5027
    %5247 = vmatpush.msra.mxu0 %v5023
    %5248 = vmatpush.msra.mxu0 %v5019
    %5249 = vmatpush.msra.mxu0 %v5015
    %5250 = vmatpush.msra.mxu0 %v5011
    %5251 = vmatpush.msra.mxu0 %v5007
    %5252 = vmatpush.msra.mxu0 %v5003
    %5253 = vmatpush.msra.mxu0 %v4999
    %5254 = vmatpush.msra.mxu0 %v4995
    %5255 = vmatpush.msra.mxu0 %v4991
    %5256 = vmatpush.msra.mxu0 %v4987
    %5257 = vmatpush.msra.mxu0 %v4983
    %5258 = vmatpush.msra.mxu0 %v4979
    %5259 = vmatpush.msra.mxu0 %v4975
    %5260 = vmatpush.msra.mxu0 %v4971
    %5261 = vmatpush.msra.mxu0 %v4967
    %5262 = vmatmul.f32.gmra.mxu0 %v5184
    %v5263 = vpop.f32.mrf.mxu0
    %v5264 = vadd.f32 0.0, %v5263
    %5265 = vdwg.mxu0
    %v5270 = vrot.slane %v5204, 6
    %v5271 = vrot.slane %v5224, 6
    %v5272 = vrot.slane %v5244, 6
    %v5273 = vrot.slane %v5264, 6
    %v5278 = vadd.f32 %v4948, %v5270
    %v5279 = vadd.f32 %v4949, %v5271
    %v5280 = vadd.f32 %v4950, %v5272
    %v5281 = vadd.f32 %v4951, %v5273
    %v5282 = vxor.u32 %v5278, 2147483648
    %v5283 = vmul.f32 %v5282, 1.442695
    %v5284 = vpow.pop %v5283
    %v5285 = vadd.f32 %v5284, 1.0
    %v5286 = vrcp.pop %v5285
    %v5287 = vmul.f32 %v5285, %v5286
    %v5288 = vsub.f32 1.0, %v5287
    %v5289 = vmul.f32 %v5286, %v5288
    %v5290 = vadd.f32 %v5286, %v5289
    %vm5291 = vweird.f32 %v5285
    %vm5292 = vweird.f32 %v5286
    %vm5293 = vmor %vm5291, %vm5292
    %v5294 = vsel %vm5293, %v5286, %v5290
    %v5295 = vand.u32 2147483647, %v5285
    %vm5296 = vcmp.eq.f32.partialorder %v5295, 8.507059e+37
    %v5297 = vand.u32 %v5285, 2147483648
    %v5298 = vor.u32 1.1754944e-38, %v5297
    %v5299 = vsel %vm5296, %v5298, %v5294
    %v5300 = vmul.f32 1.0, %v5299
    %v5301 = vxor.u32 %v5279, 2147483648
    %v5302 = vmul.f32 %v5301, 1.442695
    %v5303 = vpow.pop %v5302
    %v5304 = vadd.f32 %v5303, 1.0
    %v5305 = vrcp.pop %v5304
    %v5306 = vmul.f32 %v5304, %v5305
    %v5307 = vsub.f32 1.0, %v5306
    %v5308 = vmul.f32 %v5305, %v5307
    %v5309 = vadd.f32 %v5305, %v5308
    %vm5310 = vweird.f32 %v5304
    %vm5311 = vweird.f32 %v5305
    %vm5312 = vmor %vm5310, %vm5311
    %v5313 = vsel %vm5312, %v5305, %v5309
    %v5314 = vand.u32 2147483647, %v5304
    %vm5315 = vcmp.eq.f32.partialorder %v5314, 8.507059e+37
    %v5316 = vand.u32 %v5304, 2147483648
    %v5317 = vor.u32 1.1754944e-38, %v5316
    %v5318 = vsel %vm5315, %v5317, %v5313
    %v5319 = vmul.f32 1.0, %v5318
    %v5320 = vtanh.pop %v5280
    %v5321 = vxor.u32 %v5281, 2147483648
    %v5322 = vmul.f32 %v5321, 1.442695
    %v5323 = vpow.pop %v5322
    %v5324 = vadd.f32 %v5323, 1.0
    %v5325 = vrcp.pop %v5324
    %v5326 = vmul.f32 %v5324, %v5325
    %v5327 = vsub.f32 1.0, %v5326
    %v5328 = vmul.f32 %v5325, %v5327
    %v5329 = vadd.f32 %v5325, %v5328
    %vm5330 = vweird.f32 %v5324
    %vm5331 = vweird.f32 %v5325
    %vm5332 = vmor %vm5330, %vm5331
    %v5333 = vsel %vm5332, %v5325, %v5329
    %v5334 = vand.u32 2147483647, %v5324
    %vm5335 = vcmp.eq.f32.partialorder %v5334, 8.507059e+37
    %v5336 = vand.u32 %v5324, 2147483648
    %v5337 = vor.u32 1.1754944e-38, %v5336
    %v5338 = vsel %vm5335, %v5337, %v5333
    %v5339 = vmul.f32 1.0, %v5338
    %v5341 = vrot.slane %v5182, 6
    %v5343 = vmul.f32 %v5319, %v5341
    %v5344 = vmul.f32 %v5300, %v5320
    %v5345 = vadd.f32 %v5343, %v5344
    %v5346 = vtanh.pop %v5345
    %v5347 = vmul.f32 %v5339, %v5346
    %5348 = vst [vmem:[#allocation4] sm:$0xc] %v5347
    %v5350 = vrot.slane %v5347, 2
    %5352 = vmatpush.msra.mxu0 %v5024
    %5353 = vmatpush.msra.mxu0 %v5020
    %5354 = vmatpush.msra.mxu0 %v5016
    %5355 = vmatpush.msra.mxu0 %v5012
    %5356 = vmatpush.msra.mxu0 %v5008
    %5357 = vmatpush.msra.mxu0 %v5004
    %5358 = vmatpush.msra.mxu0 %v5000
    %5359 = vmatpush.msra.mxu0 %v4996
    %5360 = vmatpush.msra.mxu0 %v4992
    %5361 = vmatpush.msra.mxu0 %v4988
    %5362 = vmatpush.msra.mxu0 %v4984
    %5363 = vmatpush.msra.mxu0 %v4980
    %5364 = vmatpush.msra.mxu0 %v4976
    %5365 = vmatpush.msra.mxu0 %v4972
    %5366 = vmatpush.msra.mxu0 %v4968
    %5367 = vmatpush.msra.mxu0 %v4964
    %5368 = vmatmul.f32.gmra.mxu0 %v5350
    %v5369 = vpop.f32.mrf.mxu0
    %v5370 = vadd.f32 0.0, %v5369
    %5371 = vdwg.mxu0
    %5372 = vmatpush.msra.mxu0 %v5025
    %5373 = vmatpush.msra.mxu0 %v5021
    %5374 = vmatpush.msra.mxu0 %v5017
    %5375 = vmatpush.msra.mxu0 %v5013
    %5376 = vmatpush.msra.mxu0 %v5009
    %5377 = vmatpush.msra.mxu0 %v5005
    %5378 = vmatpush.msra.mxu0 %v5001
    %5379 = vmatpush.msra.mxu0 %v4997
    %5380 = vmatpush.msra.mxu0 %v4993
    %5381 = vmatpush.msra.mxu0 %v4989
    %5382 = vmatpush.msra.mxu0 %v4985
    %5383 = vmatpush.msra.mxu0 %v4981
    %5384 = vmatpush.msra.mxu0 %v4977
    %5385 = vmatpush.msra.mxu0 %v4973
    %5386 = vmatpush.msra.mxu0 %v4969
    %5387 = vmatpush.msra.mxu0 %v4965
    %5388 = vmatmul.f32.gmra.mxu0 %v5350
    %v5389 = vpop.f32.mrf.mxu0
    %v5390 = vadd.f32 0.0, %v5389
    %5391 = vdwg.mxu0
    %5392 = vmatpush.msra.mxu0 %v5026
    %5393 = vmatpush.msra.mxu0 %v5022
    %5394 = vmatpush.msra.mxu0 %v5018
    %5395 = vmatpush.msra.mxu0 %v5014
    %5396 = vmatpush.msra.mxu0 %v5010
    %5397 = vmatpush.msra.mxu0 %v5006
    %5398 = vmatpush.msra.mxu0 %v5002
    %5399 = vmatpush.msra.mxu0 %v4998
    %5400 = vmatpush.msra.mxu0 %v4994
    %5401 = vmatpush.msra.mxu0 %v4990
    %5402 = vmatpush.msra.mxu0 %v4986
    %5403 = vmatpush.msra.mxu0 %v4982
    %5404 = vmatpush.msra.mxu0 %v4978
    %5405 = vmatpush.msra.mxu0 %v4974
    %5406 = vmatpush.msra.mxu0 %v4970
    %5407 = vmatpush.msra.mxu0 %v4966
    %5408 = vmatmul.f32.gmra.mxu0 %v5350
    %v5409 = vpop.f32.mrf.mxu0
    %v5410 = vadd.f32 0.0, %v5409
    %5411 = vdwg.mxu0
    %5412 = vmatpush.msra.mxu0 %v5027
    %5413 = vmatpush.msra.mxu0 %v5023
    %5414 = vmatpush.msra.mxu0 %v5019
    %5415 = vmatpush.msra.mxu0 %v5015
    %5416 = vmatpush.msra.mxu0 %v5011
    %5417 = vmatpush.msra.mxu0 %v5007
    %5418 = vmatpush.msra.mxu0 %v5003
    %5419 = vmatpush.msra.mxu0 %v4999
    %5420 = vmatpush.msra.mxu0 %v4995
    %5421 = vmatpush.msra.mxu0 %v4991
    %5422 = vmatpush.msra.mxu0 %v4987
    %5423 = vmatpush.msra.mxu0 %v4983
    %5424 = vmatpush.msra.mxu0 %v4979
    %5425 = vmatpush.msra.mxu0 %v4975
    %5426 = vmatpush.msra.mxu0 %v4971
    %5427 = vmatpush.msra.mxu0 %v4967
    %5428 = vmatmul.f32.gmra.mxu0 %v5350
    %v5429 = vpop.f32.mrf.mxu0
    %v5430 = vadd.f32 0.0, %v5429
    %5431 = vdwg.mxu0
    %v5436 = vrot.slane %v5370, 4
    %v5437 = vrot.slane %v5390, 4
    %v5438 = vrot.slane %v5410, 4
    %v5439 = vrot.slane %v5430, 4
    %v5444 = vadd.f32 %v4948, %v5436
    %v5445 = vadd.f32 %v4949, %v5437
    %v5446 = vadd.f32 %v4950, %v5438
    %v5447 = vadd.f32 %v4951, %v5439
    %v5448 = vxor.u32 %v5444, 2147483648
    %v5449 = vmul.f32 %v5448, 1.442695
    %v5450 = vpow.pop %v5449
    %v5451 = vadd.f32 %v5450, 1.0
    %v5452 = vrcp.pop %v5451
    %v5453 = vmul.f32 %v5451, %v5452
    %v5454 = vsub.f32 1.0, %v5453
    %v5455 = vmul.f32 %v5452, %v5454
    %v5456 = vadd.f32 %v5452, %v5455
    %vm5457 = vweird.f32 %v5451
    %vm5458 = vweird.f32 %v5452
    %vm5459 = vmor %vm5457, %vm5458
    %v5460 = vsel %vm5459, %v5452, %v5456
    %v5461 = vand.u32 2147483647, %v5451
    %vm5462 = vcmp.eq.f32.partialorder %v5461, 8.507059e+37
    %v5463 = vand.u32 %v5451, 2147483648
    %v5464 = vor.u32 1.1754944e-38, %v5463
    %v5465 = vsel %vm5462, %v5464, %v5460
    %v5466 = vmul.f32 1.0, %v5465
    %v5467 = vxor.u32 %v5445, 2147483648
    %v5468 = vmul.f32 %v5467, 1.442695
    %v5469 = vpow.pop %v5468
    %v5470 = vadd.f32 %v5469, 1.0
    %v5471 = vrcp.pop %v5470
    %v5472 = vmul.f32 %v5470, %v5471
    %v5473 = vsub.f32 1.0, %v5472
    %v5474 = vmul.f32 %v5471, %v5473
    %v5475 = vadd.f32 %v5471, %v5474
    %vm5476 = vweird.f32 %v5470
    %vm5477 = vweird.f32 %v5471
    %vm5478 = vmor %vm5476, %vm5477
    %v5479 = vsel %vm5478, %v5471, %v5475
    %v5480 = vand.u32 2147483647, %v5470
    %vm5481 = vcmp.eq.f32.partialorder %v5480, 8.507059e+37
    %v5482 = vand.u32 %v5470, 2147483648
    %v5483 = vor.u32 1.1754944e-38, %v5482
    %v5484 = vsel %vm5481, %v5483, %v5479
    %v5485 = vmul.f32 1.0, %v5484
    %v5486 = vtanh.pop %v5446
    %v5487 = vxor.u32 %v5447, 2147483648
    %v5488 = vmul.f32 %v5487, 1.442695
    %v5489 = vpow.pop %v5488
    %v5490 = vadd.f32 %v5489, 1.0
    %v5491 = vrcp.pop %v5490
    %v5492 = vmul.f32 %v5490, %v5491
    %v5493 = vsub.f32 1.0, %v5492
    %v5494 = vmul.f32 %v5491, %v5493
    %v5495 = vadd.f32 %v5491, %v5494
    %vm5496 = vweird.f32 %v5490
    %vm5497 = vweird.f32 %v5491
    %vm5498 = vmor %vm5496, %vm5497
    %v5499 = vsel %vm5498, %v5491, %v5495
    %v5500 = vand.u32 2147483647, %v5490
    %vm5501 = vcmp.eq.f32.partialorder %v5500, 8.507059e+37
    %v5502 = vand.u32 %v5490, 2147483648
    %v5503 = vor.u32 1.1754944e-38, %v5502
    %v5504 = vsel %vm5501, %v5503, %v5499
    %v5505 = vmul.f32 1.0, %v5504
    %v5507 = vrot.slane %v5345, 6
    %v5509 = vmul.f32 %v5485, %v5507
    %v5510 = vmul.f32 %v5466, %v5486
    %v5511 = vadd.f32 %v5509, %v5510
    %v5512 = vtanh.pop %v5511
    %v5513 = vmul.f32 %v5505, %v5512
    %5514 = vst [vmem:[#allocation4] sm:$0x30] %v5513
    %v5516 = vrot.slane %v5513, 4
    %5518 = vmatpush.msra.mxu0 %v5024
    %5519 = vmatpush.msra.mxu0 %v5020
    %5520 = vmatpush.msra.mxu0 %v5016
    %5521 = vmatpush.msra.mxu0 %v5012
    %5522 = vmatpush.msra.mxu0 %v5008
    %5523 = vmatpush.msra.mxu0 %v5004
    %5524 = vmatpush.msra.mxu0 %v5000
    %5525 = vmatpush.msra.mxu0 %v4996
    %5526 = vmatpush.msra.mxu0 %v4992
    %5527 = vmatpush.msra.mxu0 %v4988
    %5528 = vmatpush.msra.mxu0 %v4984
    %5529 = vmatpush.msra.mxu0 %v4980
    %5530 = vmatpush.msra.mxu0 %v4976
    %5531 = vmatpush.msra.mxu0 %v4972
    %5532 = vmatpush.msra.mxu0 %v4968
    %5533 = vmatpush.msra.mxu0 %v4964
    %5534 = vmatmul.f32.gmra.mxu0 %v5516
    %v5535 = vpop.f32.mrf.mxu0
    %v5536 = vadd.f32 0.0, %v5535
    %5537 = vdwg.mxu0
    %5538 = vmatpush.msra.mxu0 %v5025
    %5539 = vmatpush.msra.mxu0 %v5021
    %5540 = vmatpush.msra.mxu0 %v5017
    %5541 = vmatpush.msra.mxu0 %v5013
    %5542 = vmatpush.msra.mxu0 %v5009
    %5543 = vmatpush.msra.mxu0 %v5005
    %5544 = vmatpush.msra.mxu0 %v5001
    %5545 = vmatpush.msra.mxu0 %v4997
    %5546 = vmatpush.msra.mxu0 %v4993
    %5547 = vmatpush.msra.mxu0 %v4989
    %5548 = vmatpush.msra.mxu0 %v4985
    %5549 = vmatpush.msra.mxu0 %v4981
    %5550 = vmatpush.msra.mxu0 %v4977
    %5551 = vmatpush.msra.mxu0 %v4973
    %5552 = vmatpush.msra.mxu0 %v4969
    %5553 = vmatpush.msra.mxu0 %v4965
    %5554 = vmatmul.f32.gmra.mxu0 %v5516
    %v5555 = vpop.f32.mrf.mxu0
    %v5556 = vadd.f32 0.0, %v5555
    %5557 = vdwg.mxu0
    %5558 = vmatpush.msra.mxu0 %v5026
    %5559 = vmatpush.msra.mxu0 %v5022
    %5560 = vmatpush.msra.mxu0 %v5018
    %5561 = vmatpush.msra.mxu0 %v5014
    %5562 = vmatpush.msra.mxu0 %v5010
    %5563 = vmatpush.msra.mxu0 %v5006
    %5564 = vmatpush.msra.mxu0 %v5002
    %5565 = vmatpush.msra.mxu0 %v4998
    %5566 = vmatpush.msra.mxu0 %v4994
    %5567 = vmatpush.msra.mxu0 %v4990
    %5568 = vmatpush.msra.mxu0 %v4986
    %5569 = vmatpush.msra.mxu0 %v4982
    %5570 = vmatpush.msra.mxu0 %v4978
    %5571 = vmatpush.msra.mxu0 %v4974
    %5572 = vmatpush.msra.mxu0 %v4970
    %5573 = vmatpush.msra.mxu0 %v4966
    %5574 = vmatmul.f32.gmra.mxu0 %v5516
    %v5575 = vpop.f32.mrf.mxu0
    %v5576 = vadd.f32 0.0, %v5575
    %5577 = vdwg.mxu0
    %5578 = vmatpush.msra.mxu0 %v5027
    %5579 = vmatpush.msra.mxu0 %v5023
    %5580 = vmatpush.msra.mxu0 %v5019
    %5581 = vmatpush.msra.mxu0 %v5015
    %5582 = vmatpush.msra.mxu0 %v5011
    %5583 = vmatpush.msra.mxu0 %v5007
    %5584 = vmatpush.msra.mxu0 %v5003
    %5585 = vmatpush.msra.mxu0 %v4999
    %5586 = vmatpush.msra.mxu0 %v4995
    %5587 = vmatpush.msra.mxu0 %v4991
    %5588 = vmatpush.msra.mxu0 %v4987
    %5589 = vmatpush.msra.mxu0 %v4983
    %5590 = vmatpush.msra.mxu0 %v4979
    %5591 = vmatpush.msra.mxu0 %v4975
    %5592 = vmatpush.msra.mxu0 %v4971
    %5593 = vmatpush.msra.mxu0 %v4967
    %5594 = vmatmul.f32.gmra.mxu0 %v5516
    %v5595 = vpop.f32.mrf.mxu0
    %v5596 = vadd.f32 0.0, %v5595
    %5597 = vdwg.mxu0
    %v5602 = vrot.slane %v5536, 2
    %v5603 = vrot.slane %v5556, 2
    %v5604 = vrot.slane %v5576, 2
    %v5605 = vrot.slane %v5596, 2
    %v5610 = vadd.f32 %v4948, %v5602
    %v5611 = vadd.f32 %v4949, %v5603
    %v5612 = vadd.f32 %v4950, %v5604
    %v5613 = vadd.f32 %v4951, %v5605
    %v5614 = vxor.u32 %v5610, 2147483648
    %v5615 = vmul.f32 %v5614, 1.442695
    %v5616 = vpow.pop %v5615
    %v5617 = vadd.f32 %v5616, 1.0
    %v5618 = vrcp.pop %v5617
    %v5619 = vmul.f32 %v5617, %v5618
    %v5620 = vsub.f32 1.0, %v5619
    %v5621 = vmul.f32 %v5618, %v5620
    %v5622 = vadd.f32 %v5618, %v5621
    %vm5623 = vweird.f32 %v5617
    %vm5624 = vweird.f32 %v5618
    %vm5625 = vmor %vm5623, %vm5624
    %v5626 = vsel %vm5625, %v5618, %v5622
    %v5627 = vand.u32 2147483647, %v5617
    %vm5628 = vcmp.eq.f32.partialorder %v5627, 8.507059e+37
    %v5629 = vand.u32 %v5617, 2147483648
    %v5630 = vor.u32 1.1754944e-38, %v5629
    %v5631 = vsel %vm5628, %v5630, %v5626
    %v5632 = vmul.f32 1.0, %v5631
    %v5633 = vxor.u32 %v5611, 2147483648
    %v5634 = vmul.f32 %v5633, 1.442695
    %v5635 = vpow.pop %v5634
    %v5636 = vadd.f32 %v5635, 1.0
    %v5637 = vrcp.pop %v5636
    %v5638 = vmul.f32 %v5636, %v5637
    %v5639 = vsub.f32 1.0, %v5638
    %v5640 = vmul.f32 %v5637, %v5639
    %v5641 = vadd.f32 %v5637, %v5640
    %vm5642 = vweird.f32 %v5636
    %vm5643 = vweird.f32 %v5637
    %vm5644 = vmor %vm5642, %vm5643
    %v5645 = vsel %vm5644, %v5637, %v5641
    %v5646 = vand.u32 2147483647, %v5636
    %vm5647 = vcmp.eq.f32.partialorder %v5646, 8.507059e+37
    %v5648 = vand.u32 %v5636, 2147483648
    %v5649 = vor.u32 1.1754944e-38, %v5648
    %v5650 = vsel %vm5647, %v5649, %v5645
    %v5651 = vmul.f32 1.0, %v5650
    %v5652 = vtanh.pop %v5612
    %v5653 = vxor.u32 %v5613, 2147483648
    %v5654 = vmul.f32 %v5653, 1.442695
    %v5655 = vpow.pop %v5654
    %v5656 = vadd.f32 %v5655, 1.0
    %v5657 = vrcp.pop %v5656
    %v5658 = vmul.f32 %v5656, %v5657
    %v5659 = vsub.f32 1.0, %v5658
    %v5660 = vmul.f32 %v5657, %v5659
    %v5661 = vadd.f32 %v5657, %v5660
    %vm5662 = vweird.f32 %v5656
    %vm5663 = vweird.f32 %v5657
    %vm5664 = vmor %vm5662, %vm5663
    %v5665 = vsel %vm5664, %v5657, %v5661
    %v5666 = vand.u32 2147483647, %v5656
    %vm5667 = vcmp.eq.f32.partialorder %v5666, 8.507059e+37
    %v5668 = vand.u32 %v5656, 2147483648
    %v5669 = vor.u32 1.1754944e-38, %v5668
    %v5670 = vsel %vm5667, %v5669, %v5665
    %v5671 = vmul.f32 1.0, %v5670
    %v5673 = vrot.slane %v5511, 6
    %v5675 = vmul.f32 %v5651, %v5673
    %v5676 = vmul.f32 %v5632, %v5652
    %v5677 = vadd.f32 %v5675, %v5676
    %v5678 = vtanh.pop %v5677
    %v5679 = vmul.f32 %v5671, %v5678
    %5680 = vst [vmem:[#allocation4] sm:$0xc0] %v5679
    %v5682 = vrot.slane %v5679, 6
    %5684 = vmatpush.msra.mxu0 %v5024
    %5685 = vmatpush.msra.mxu0 %v5020
    %5686 = vmatpush.msra.mxu0 %v5016
    %5687 = vmatpush.msra.mxu0 %v5012
    %5688 = vmatpush.msra.mxu0 %v5008
    %5689 = vmatpush.msra.mxu0 %v5004
    %5690 = vmatpush.msra.mxu0 %v5000
    %5691 = vmatpush.msra.mxu0 %v4996
    %5692 = vmatpush.msra.mxu0 %v4992
    %5693 = vmatpush.msra.mxu0 %v4988
    %5694 = vmatpush.msra.mxu0 %v4984
    %5695 = vmatpush.msra.mxu0 %v4980
    %5696 = vmatpush.msra.mxu0 %v4976
    %5697 = vmatpush.msra.mxu0 %v4972
    %5698 = vmatpush.msra.mxu0 %v4968
    %5699 = vmatpush.msra.mxu0 %v4964
    %5700 = vmatmul.f32.gmra.mxu0 %v5682
    %v5701 = vpop.f32.mrf.mxu0
    %v5702 = vadd.f32 0.0, %v5701
    %5703 = vdwg.mxu0
    %5704 = vmatpush.msra.mxu0 %v5025
    %5705 = vmatpush.msra.mxu0 %v5021
    %5706 = vmatpush.msra.mxu0 %v5017
    %5707 = vmatpush.msra.mxu0 %v5013
    %5708 = vmatpush.msra.mxu0 %v5009
    %5709 = vmatpush.msra.mxu0 %v5005
    %5710 = vmatpush.msra.mxu0 %v5001
    %5711 = vmatpush.msra.mxu0 %v4997
    %5712 = vmatpush.msra.mxu0 %v4993
    %5713 = vmatpush.msra.mxu0 %v4989
    %5714 = vmatpush.msra.mxu0 %v4985
    %5715 = vmatpush.msra.mxu0 %v4981
    %5716 = vmatpush.msra.mxu0 %v4977
    %5717 = vmatpush.msra.mxu0 %v4973
    %5718 = vmatpush.msra.mxu0 %v4969
    %5719 = vmatpush.msra.mxu0 %v4965
    %5720 = vmatmul.f32.gmra.mxu0 %v5682
    %v5721 = vpop.f32.mrf.mxu0
    %v5722 = vadd.f32 0.0, %v5721
    %5723 = vdwg.mxu0
    %5724 = vmatpush.msra.mxu0 %v5026
    %5725 = vmatpush.msra.mxu0 %v5022
    %5726 = vmatpush.msra.mxu0 %v5018
    %5727 = vmatpush.msra.mxu0 %v5014
    %5728 = vmatpush.msra.mxu0 %v5010
    %5729 = vmatpush.msra.mxu0 %v5006
    %5730 = vmatpush.msra.mxu0 %v5002
    %5731 = vmatpush.msra.mxu0 %v4998
    %5732 = vmatpush.msra.mxu0 %v4994
    %5733 = vmatpush.msra.mxu0 %v4990
    %5734 = vmatpush.msra.mxu0 %v4986
    %5735 = vmatpush.msra.mxu0 %v4982
    %5736 = vmatpush.msra.mxu0 %v4978
    %5737 = vmatpush.msra.mxu0 %v4974
    %5738 = vmatpush.msra.mxu0 %v4970
    %5739 = vmatpush.msra.mxu0 %v4966
    %5740 = vmatmul.f32.gmra.mxu0 %v5682
    %v5741 = vpop.f32.mrf.mxu0
    %v5742 = vadd.f32 0.0, %v5741
    %5743 = vdwg.mxu0
    %5744 = vmatpush.msra.mxu0 %v5027
    %5745 = vmatpush.msra.mxu0 %v5023
    %5746 = vmatpush.msra.mxu0 %v5019
    %5747 = vmatpush.msra.mxu0 %v5015
    %5748 = vmatpush.msra.mxu0 %v5011
    %5749 = vmatpush.msra.mxu0 %v5007
    %5750 = vmatpush.msra.mxu0 %v5003
    %5751 = vmatpush.msra.mxu0 %v4999
    %5752 = vmatpush.msra.mxu0 %v4995
    %5753 = vmatpush.msra.mxu0 %v4991
    %5754 = vmatpush.msra.mxu0 %v4987
    %5755 = vmatpush.msra.mxu0 %v4983
    %5756 = vmatpush.msra.mxu0 %v4979
    %5757 = vmatpush.msra.mxu0 %v4975
    %5758 = vmatpush.msra.mxu0 %v4971
    %5759 = vmatpush.msra.mxu0 %v4967
    %5760 = vmatmul.f32.gmra.mxu0 %v5682
    %v5761 = vpop.f32.mrf.mxu0
    %v5762 = vadd.f32 0.0, %v5761
    %5763 = vdwg.mxu0
    %v5764 = vadd.f32 %v4956, %v5702
    %v5765 = vadd.f32 %v4957, %v5722
    %v5766 = vadd.f32 %v4958, %v5742
    %v5767 = vadd.f32 %v4959, %v5762
    %v5768 = vxor.u32 %v5764, 2147483648
    %v5769 = vmul.f32 %v5768, 1.442695
    %v5770 = vpow.pop %v5769
    %v5771 = vadd.f32 %v5770, 1.0
    %v5772 = vrcp.pop %v5771
    %v5773 = vmul.f32 %v5771, %v5772
    %v5774 = vsub.f32 1.0, %v5773
    %v5775 = vmul.f32 %v5772, %v5774
    %v5776 = vadd.f32 %v5772, %v5775
    %vm5777 = vweird.f32 %v5771
    %vm5778 = vweird.f32 %v5772
    %vm5779 = vmor %vm5777, %vm5778
    %v5780 = vsel %vm5779, %v5772, %v5776
    %v5781 = vand.u32 2147483647, %v5771
    %vm5782 = vcmp.eq.f32.partialorder %v5781, 8.507059e+37
    %v5783 = vand.u32 %v5771, 2147483648
    %v5784 = vor.u32 1.1754944e-38, %v5783
    %v5785 = vsel %vm5782, %v5784, %v5780
    %v5786 = vmul.f32 1.0, %v5785
    %v5787 = vxor.u32 %v5765, 2147483648
    %v5788 = vmul.f32 %v5787, 1.442695
    %v5789 = vpow.pop %v5788
    %v5790 = vadd.f32 %v5789, 1.0
    %v5791 = vrcp.pop %v5790
    %v5792 = vmul.f32 %v5790, %v5791
    %v5793 = vsub.f32 1.0, %v5792
    %v5794 = vmul.f32 %v5791, %v5793
    %v5795 = vadd.f32 %v5791, %v5794
    %vm5796 = vweird.f32 %v5790
    %vm5797 = vweird.f32 %v5791
    %vm5798 = vmor %vm5796, %vm5797
    %v5799 = vsel %vm5798, %v5791, %v5795
    %v5800 = vand.u32 2147483647, %v5790
    %vm5801 = vcmp.eq.f32.partialorder %v5800, 8.507059e+37
    %v5802 = vand.u32 %v5790, 2147483648
    %v5803 = vor.u32 1.1754944e-38, %v5802
    %v5804 = vsel %vm5801, %v5803, %v5799
    %v5805 = vmul.f32 1.0, %v5804
    %v5806 = vtanh.pop %v5766
    %v5807 = vxor.u32 %v5767, 2147483648
    %v5808 = vmul.f32 %v5807, 1.442695
    %v5809 = vpow.pop %v5808
    %v5810 = vadd.f32 %v5809, 1.0
    %v5811 = vrcp.pop %v5810
    %v5812 = vmul.f32 %v5810, %v5811
    %v5813 = vsub.f32 1.0, %v5812
    %v5814 = vmul.f32 %v5811, %v5813
    %v5815 = vadd.f32 %v5811, %v5814
    %vm5816 = vweird.f32 %v5810
    %vm5817 = vweird.f32 %v5811
    %vm5818 = vmor %vm5816, %vm5817
    %v5819 = vsel %vm5818, %v5811, %v5815
    %v5820 = vand.u32 2147483647, %v5810
    %vm5821 = vcmp.eq.f32.partialorder %v5820, 8.507059e+37
    %v5822 = vand.u32 %v5810, 2147483648
    %v5823 = vor.u32 1.1754944e-38, %v5822
    %v5824 = vsel %vm5821, %v5823, %v5819
    %v5825 = vmul.f32 1.0, %v5824
    %v5827 = vrot.slane %v5677, 6
    %v5829 = vmul.f32 %v5805, %v5827
    %v5830 = vmul.f32 %v5786, %v5806
    %v5831 = vadd.f32 %v5829, %v5830
    %v5832 = vtanh.pop %v5831
    %v5833 = vmul.f32 %v5825, %v5832
    %5834 = vst [vmem:[#allocation4 + $0x8] sm:$0x3] %v5833
    %5835 = vmatpush.msra.mxu0 %v5024
    %5836 = vmatpush.msra.mxu0 %v5020
    %5837 = vmatpush.msra.mxu0 %v5016
    %5838 = vmatpush.msra.mxu0 %v5012
    %5839 = vmatpush.msra.mxu0 %v5008
    %5840 = vmatpush.msra.mxu0 %v5004
    %5841 = vmatpush.msra.mxu0 %v5000
    %5842 = vmatpush.msra.mxu0 %v4996
    %5843 = vmatpush.msra.mxu0 %v4992
    %5844 = vmatpush.msra.mxu0 %v4988
    %5845 = vmatpush.msra.mxu0 %v4984
    %5846 = vmatpush.msra.mxu0 %v4980
    %5847 = vmatpush.msra.mxu0 %v4976
    %5848 = vmatpush.msra.mxu0 %v4972
    %5849 = vmatpush.msra.mxu0 %v4968
    %5850 = vmatpush.msra.mxu0 %v4964
    %5851 = vmatmul.f32.gmra.mxu0 %v5833
    %v5852 = vpop.f32.mrf.mxu0
    %v5853 = vadd.f32 0.0, %v5852
    %5854 = vdwg.mxu0
    %5855 = vmatpush.msra.mxu0 %v5025
    %5856 = vmatpush.msra.mxu0 %v5021
    %5857 = vmatpush.msra.mxu0 %v5017
    %5858 = vmatpush.msra.mxu0 %v5013
    %5859 = vmatpush.msra.mxu0 %v5009
    %5860 = vmatpush.msra.mxu0 %v5005
    %5861 = vmatpush.msra.mxu0 %v5001
    %5862 = vmatpush.msra.mxu0 %v4997
    %5863 = vmatpush.msra.mxu0 %v4993
    %5864 = vmatpush.msra.mxu0 %v4989
    %5865 = vmatpush.msra.mxu0 %v4985
    %5866 = vmatpush.msra.mxu0 %v4981
    %5867 = vmatpush.msra.mxu0 %v4977
    %5868 = vmatpush.msra.mxu0 %v4973
    %5869 = vmatpush.msra.mxu0 %v4969
    %5870 = vmatpush.msra.mxu0 %v4965
    %5871 = vmatmul.f32.gmra.mxu0 %v5833
    %v5872 = vpop.f32.mrf.mxu0
    %v5873 = vadd.f32 0.0, %v5872
    %5874 = vdwg.mxu0
    %5875 = vmatpush.msra.mxu0 %v5026
    %5876 = vmatpush.msra.mxu0 %v5022
    %5877 = vmatpush.msra.mxu0 %v5018
    %5878 = vmatpush.msra.mxu0 %v5014
    %5879 = vmatpush.msra.mxu0 %v5010
    %5880 = vmatpush.msra.mxu0 %v5006
    %5881 = vmatpush.msra.mxu0 %v5002
    %5882 = vmatpush.msra.mxu0 %v4998
    %5883 = vmatpush.msra.mxu0 %v4994
    %5884 = vmatpush.msra.mxu0 %v4990
    %5885 = vmatpush.msra.mxu0 %v4986
    %5886 = vmatpush.msra.mxu0 %v4982
    %5887 = vmatpush.msra.mxu0 %v4978
    %5888 = vmatpush.msra.mxu0 %v4974
    %5889 = vmatpush.msra.mxu0 %v4970
    %5890 = vmatpush.msra.mxu0 %v4966
    %5891 = vmatmul.f32.gmra.mxu0 %v5833
    %v5892 = vpop.f32.mrf.mxu0
    %v5893 = vadd.f32 0.0, %v5892
    %5894 = vdwg.mxu0
    %5895 = vmatpush.msra.mxu0 %v5027
    %5896 = vmatpush.msra.mxu0 %v5023
    %5897 = vmatpush.msra.mxu0 %v5019
    %5898 = vmatpush.msra.mxu0 %v5015
    %5899 = vmatpush.msra.mxu0 %v5011
    %5900 = vmatpush.msra.mxu0 %v5007
    %5901 = vmatpush.msra.mxu0 %v5003
    %5902 = vmatpush.msra.mxu0 %v4999
    %5903 = vmatpush.msra.mxu0 %v4995
    %5904 = vmatpush.msra.mxu0 %v4991
    %5905 = vmatpush.msra.mxu0 %v4987
    %5906 = vmatpush.msra.mxu0 %v4983
    %5907 = vmatpush.msra.mxu0 %v4979
    %5908 = vmatpush.msra.mxu0 %v4975
    %5909 = vmatpush.msra.mxu0 %v4971
    %5910 = vmatpush.msra.mxu0 %v4967
    %5911 = vmatmul.f32.gmra.mxu0 %v5833
    %v5912 = vpop.f32.mrf.mxu0
    %v5913 = vadd.f32 0.0, %v5912
    %5914 = vdwg.mxu0
    %v5919 = vrot.slane %v5853, 6
    %v5920 = vrot.slane %v5873, 6
    %v5921 = vrot.slane %v5893, 6
    %v5922 = vrot.slane %v5913, 6
    %v5927 = vadd.f32 %v4956, %v5919
    %v5928 = vadd.f32 %v4957, %v5920
    %v5929 = vadd.f32 %v4958, %v5921
    %v5930 = vadd.f32 %v4959, %v5922
    %v5931 = vxor.u32 %v5927, 2147483648
    %v5932 = vmul.f32 %v5931, 1.442695
    %v5933 = vpow.pop %v5932
    %v5934 = vadd.f32 %v5933, 1.0
    %v5935 = vrcp.pop %v5934
    %v5936 = vmul.f32 %v5934, %v5935
    %v5937 = vsub.f32 1.0, %v5936
    %v5938 = vmul.f32 %v5935, %v5937
    %v5939 = vadd.f32 %v5935, %v5938
    %vm5940 = vweird.f32 %v5934
    %vm5941 = vweird.f32 %v5935
    %vm5942 = vmor %vm5940, %vm5941
    %v5943 = vsel %vm5942, %v5935, %v5939
    %v5944 = vand.u32 2147483647, %v5934
    %vm5945 = vcmp.eq.f32.partialorder %v5944, 8.507059e+37
    %v5946 = vand.u32 %v5934, 2147483648
    %v5947 = vor.u32 1.1754944e-38, %v5946
    %v5948 = vsel %vm5945, %v5947, %v5943
    %v5949 = vmul.f32 1.0, %v5948
    %v5950 = vxor.u32 %v5928, 2147483648
    %v5951 = vmul.f32 %v5950, 1.442695
    %v5952 = vpow.pop %v5951
    %v5953 = vadd.f32 %v5952, 1.0
    %v5954 = vrcp.pop %v5953
    %v5955 = vmul.f32 %v5953, %v5954
    %v5956 = vsub.f32 1.0, %v5955
    %v5957 = vmul.f32 %v5954, %v5956
    %v5958 = vadd.f32 %v5954, %v5957
    %vm5959 = vweird.f32 %v5953
    %vm5960 = vweird.f32 %v5954
    %vm5961 = vmor %vm5959, %vm5960
    %v5962 = vsel %vm5961, %v5954, %v5958
    %v5963 = vand.u32 2147483647, %v5953
    %vm5964 = vcmp.eq.f32.partialorder %v5963, 8.507059e+37
    %v5965 = vand.u32 %v5953, 2147483648
    %v5966 = vor.u32 1.1754944e-38, %v5965
    %v5967 = vsel %vm5964, %v5966, %v5962
    %v5968 = vmul.f32 1.0, %v5967
    %v5969 = vtanh.pop %v5929
    %v5970 = vxor.u32 %v5930, 2147483648
    %v5971 = vmul.f32 %v5970, 1.442695
    %v5972 = vpow.pop %v5971
    %v5973 = vadd.f32 %v5972, 1.0
    %v5974 = vrcp.pop %v5973
    %v5975 = vmul.f32 %v5973, %v5974
    %v5976 = vsub.f32 1.0, %v5975
    %v5977 = vmul.f32 %v5974, %v5976
    %v5978 = vadd.f32 %v5974, %v5977
    %vm5979 = vweird.f32 %v5973
    %vm5980 = vweird.f32 %v5974
    %vm5981 = vmor %vm5979, %vm5980
    %v5982 = vsel %vm5981, %v5974, %v5978
    %v5983 = vand.u32 2147483647, %v5973
    %vm5984 = vcmp.eq.f32.partialorder %v5983, 8.507059e+37
    %v5985 = vand.u32 %v5973, 2147483648
    %v5986 = vor.u32 1.1754944e-38, %v5985
    %v5987 = vsel %vm5984, %v5986, %v5982
    %v5988 = vmul.f32 1.0, %v5987
    %v5990 = vrot.slane %v5831, 6
    %v5992 = vmul.f32 %v5968, %v5990
    %v5993 = vmul.f32 %v5949, %v5969
    %v5994 = vadd.f32 %v5992, %v5993
    %v5995 = vtanh.pop %v5994
    %v5996 = vmul.f32 %v5988, %v5995
    %5997 = vst [vmem:[#allocation4 + $0x8] sm:$0xc] %v5996
    %v5999 = vrot.slane %v5996, 2
    %6001 = vmatpush.msra.mxu0 %v5024
    %6002 = vmatpush.msra.mxu0 %v5020
    %6003 = vmatpush.msra.mxu0 %v5016
    %6004 = vmatpush.msra.mxu0 %v5012
    %6005 = vmatpush.msra.mxu0 %v5008
    %6006 = vmatpush.msra.mxu0 %v5004
    %6007 = vmatpush.msra.mxu0 %v5000
    %6008 = vmatpush.msra.mxu0 %v4996
    %6009 = vmatpush.msra.mxu0 %v4992
    %6010 = vmatpush.msra.mxu0 %v4988
    %6011 = vmatpush.msra.mxu0 %v4984
    %6012 = vmatpush.msra.mxu0 %v4980
    %6013 = vmatpush.msra.mxu0 %v4976
    %6014 = vmatpush.msra.mxu0 %v4972
    %6015 = vmatpush.msra.mxu0 %v4968
    %6016 = vmatpush.msra.mxu0 %v4964
    %6017 = vmatmul.f32.gmra.mxu0 %v5999
    %v6018 = vpop.f32.mrf.mxu0
    %v6019 = vadd.f32 0.0, %v6018
    %6020 = vdwg.mxu0
    %6021 = vmatpush.msra.mxu0 %v5025
    %6022 = vmatpush.msra.mxu0 %v5021
    %6023 = vmatpush.msra.mxu0 %v5017
    %6024 = vmatpush.msra.mxu0 %v5013
    %6025 = vmatpush.msra.mxu0 %v5009
    %6026 = vmatpush.msra.mxu0 %v5005
    %6027 = vmatpush.msra.mxu0 %v5001
    %6028 = vmatpush.msra.mxu0 %v4997
    %6029 = vmatpush.msra.mxu0 %v4993
    %6030 = vmatpush.msra.mxu0 %v4989
    %6031 = vmatpush.msra.mxu0 %v4985
    %6032 = vmatpush.msra.mxu0 %v4981
    %6033 = vmatpush.msra.mxu0 %v4977
    %6034 = vmatpush.msra.mxu0 %v4973
    %6035 = vmatpush.msra.mxu0 %v4969
    %6036 = vmatpush.msra.mxu0 %v4965
    %6037 = vmatmul.f32.gmra.mxu0 %v5999
    %v6038 = vpop.f32.mrf.mxu0
    %v6039 = vadd.f32 0.0, %v6038
    %6040 = vdwg.mxu0
    %6041 = vmatpush.msra.mxu0 %v5026
    %6042 = vmatpush.msra.mxu0 %v5022
    %6043 = vmatpush.msra.mxu0 %v5018
    %6044 = vmatpush.msra.mxu0 %v5014
    %6045 = vmatpush.msra.mxu0 %v5010
    %6046 = vmatpush.msra.mxu0 %v5006
    %6047 = vmatpush.msra.mxu0 %v5002
    %6048 = vmatpush.msra.mxu0 %v4998
    %6049 = vmatpush.msra.mxu0 %v4994
    %6050 = vmatpush.msra.mxu0 %v4990
    %6051 = vmatpush.msra.mxu0 %v4986
    %6052 = vmatpush.msra.mxu0 %v4982
    %6053 = vmatpush.msra.mxu0 %v4978
    %6054 = vmatpush.msra.mxu0 %v4974
    %6055 = vmatpush.msra.mxu0 %v4970
    %6056 = vmatpush.msra.mxu0 %v4966
    %6057 = vmatmul.f32.gmra.mxu0 %v5999
    %v6058 = vpop.f32.mrf.mxu0
    %v6059 = vadd.f32 0.0, %v6058
    %6060 = vdwg.mxu0
    %6061 = vmatpush.msra.mxu0 %v5027
    %6062 = vmatpush.msra.mxu0 %v5023
    %6063 = vmatpush.msra.mxu0 %v5019
    %6064 = vmatpush.msra.mxu0 %v5015
    %6065 = vmatpush.msra.mxu0 %v5011
    %6066 = vmatpush.msra.mxu0 %v5007
    %6067 = vmatpush.msra.mxu0 %v5003
    %6068 = vmatpush.msra.mxu0 %v4999
    %6069 = vmatpush.msra.mxu0 %v4995
    %6070 = vmatpush.msra.mxu0 %v4991
    %6071 = vmatpush.msra.mxu0 %v4987
    %6072 = vmatpush.msra.mxu0 %v4983
    %6073 = vmatpush.msra.mxu0 %v4979
    %6074 = vmatpush.msra.mxu0 %v4975
    %6075 = vmatpush.msra.mxu0 %v4971
    %6076 = vmatpush.msra.mxu0 %v4967
    %6077 = vmatmul.f32.gmra.mxu0 %v5999
    %v6078 = vpop.f32.mrf.mxu0
    %v6079 = vadd.f32 0.0, %v6078
    %6080 = vdwg.mxu0
    %v6085 = vrot.slane %v6019, 4
    %v6086 = vrot.slane %v6039, 4
    %v6087 = vrot.slane %v6059, 4
    %v6088 = vrot.slane %v6079, 4
    %v6093 = vadd.f32 %v4956, %v6085
    %v6094 = vadd.f32 %v4957, %v6086
    %v6095 = vadd.f32 %v4958, %v6087
    %v6096 = vadd.f32 %v4959, %v6088
    %v6097 = vxor.u32 %v6093, 2147483648
    %v6098 = vmul.f32 %v6097, 1.442695
    %v6099 = vpow.pop %v6098
    %v6100 = vadd.f32 %v6099, 1.0
    %v6101 = vrcp.pop %v6100
    %v6102 = vmul.f32 %v6100, %v6101
    %v6103 = vsub.f32 1.0, %v6102
    %v6104 = vmul.f32 %v6101, %v6103
    %v6105 = vadd.f32 %v6101, %v6104
    %vm6106 = vweird.f32 %v6100
    %vm6107 = vweird.f32 %v6101
    %vm6108 = vmor %vm6106, %vm6107
    %v6109 = vsel %vm6108, %v6101, %v6105
    %v6110 = vand.u32 2147483647, %v6100
    %vm6111 = vcmp.eq.f32.partialorder %v6110, 8.507059e+37
    %v6112 = vand.u32 %v6100, 2147483648
    %v6113 = vor.u32 1.1754944e-38, %v6112
    %v6114 = vsel %vm6111, %v6113, %v6109
    %v6115 = vmul.f32 1.0, %v6114
    %v6116 = vxor.u32 %v6094, 2147483648
    %v6117 = vmul.f32 %v6116, 1.442695
    %v6118 = vpow.pop %v6117
    %v6119 = vadd.f32 %v6118, 1.0
    %v6120 = vrcp.pop %v6119
    %v6121 = vmul.f32 %v6119, %v6120
    %v6122 = vsub.f32 1.0, %v6121
    %v6123 = vmul.f32 %v6120, %v6122
    %v6124 = vadd.f32 %v6120, %v6123
    %vm6125 = vweird.f32 %v6119
    %vm6126 = vweird.f32 %v6120
    %vm6127 = vmor %vm6125, %vm6126
    %v6128 = vsel %vm6127, %v6120, %v6124
    %v6129 = vand.u32 2147483647, %v6119
    %vm6130 = vcmp.eq.f32.partialorder %v6129, 8.507059e+37
    %v6131 = vand.u32 %v6119, 2147483648
    %v6132 = vor.u32 1.1754944e-38, %v6131
    %v6133 = vsel %vm6130, %v6132, %v6128
    %v6134 = vmul.f32 1.0, %v6133
    %v6135 = vtanh.pop %v6095
    %v6136 = vxor.u32 %v6096, 2147483648
    %v6137 = vmul.f32 %v6136, 1.442695
    %v6138 = vpow.pop %v6137
    %v6139 = vadd.f32 %v6138, 1.0
    %v6140 = vrcp.pop %v6139
    %v6141 = vmul.f32 %v6139, %v6140
    %v6142 = vsub.f32 1.0, %v6141
    %v6143 = vmul.f32 %v6140, %v6142
    %v6144 = vadd.f32 %v6140, %v6143
    %vm6145 = vweird.f32 %v6139
    %vm6146 = vweird.f32 %v6140
    %vm6147 = vmor %vm6145, %vm6146
    %v6148 = vsel %vm6147, %v6140, %v6144
    %v6149 = vand.u32 2147483647, %v6139
    %vm6150 = vcmp.eq.f32.partialorder %v6149, 8.507059e+37
    %v6151 = vand.u32 %v6139, 2147483648
    %v6152 = vor.u32 1.1754944e-38, %v6151
    %v6153 = vsel %vm6150, %v6152, %v6148
    %v6154 = vmul.f32 1.0, %v6153
    %v6156 = vrot.slane %v5994, 6
    %v6158 = vmul.f32 %v6134, %v6156
    %v6159 = vmul.f32 %v6115, %v6135
    %v6160 = vadd.f32 %v6158, %v6159
    %v6161 = vtanh.pop %v6160
    %v6162 = vmul.f32 %v6154, %v6161
    %6163 = vst [vmem:[#allocation4 + $0x8] sm:$0x30] %v6162
    %v6165 = vrot.slane %v6162, 4
    %6167 = vmatpush.msra.mxu0 %v5024
    %6168 = vmatpush.msra.mxu0 %v5020
    %6169 = vmatpush.msra.mxu0 %v5016
    %6170 = vmatpush.msra.mxu0 %v5012
    %6171 = vmatpush.msra.mxu0 %v5008
    %6172 = vmatpush.msra.mxu0 %v5004
    %6173 = vmatpush.msra.mxu0 %v5000
    %6174 = vmatpush.msra.mxu0 %v4996
    %6175 = vmatpush.msra.mxu0 %v4992
    %6176 = vmatpush.msra.mxu0 %v4988
    %6177 = vmatpush.msra.mxu0 %v4984
    %6178 = vmatpush.msra.mxu0 %v4980
    %6179 = vmatpush.msra.mxu0 %v4976
    %6180 = vmatpush.msra.mxu0 %v4972
    %6181 = vmatpush.msra.mxu0 %v4968
    %6182 = vmatpush.msra.mxu0 %v4964
    %6183 = vmatmul.f32.gmra.mxu0 %v6165
    %v6184 = vpop.f32.mrf.mxu0
    %v6185 = vadd.f32 0.0, %v6184
    %6186 = vdwg.mxu0
    %6187 = vmatpush.msra.mxu0 %v5025
    %6188 = vmatpush.msra.mxu0 %v5021
    %6189 = vmatpush.msra.mxu0 %v5017
    %6190 = vmatpush.msra.mxu0 %v5013
    %6191 = vmatpush.msra.mxu0 %v5009
    %6192 = vmatpush.msra.mxu0 %v5005
    %6193 = vmatpush.msra.mxu0 %v5001
    %6194 = vmatpush.msra.mxu0 %v4997
    %6195 = vmatpush.msra.mxu0 %v4993
    %6196 = vmatpush.msra.mxu0 %v4989
    %6197 = vmatpush.msra.mxu0 %v4985
    %6198 = vmatpush.msra.mxu0 %v4981
    %6199 = vmatpush.msra.mxu0 %v4977
    %6200 = vmatpush.msra.mxu0 %v4973
    %6201 = vmatpush.msra.mxu0 %v4969
    %6202 = vmatpush.msra.mxu0 %v4965
    %6203 = vmatmul.f32.gmra.mxu0 %v6165
    %v6204 = vpop.f32.mrf.mxu0
    %v6205 = vadd.f32 0.0, %v6204
    %6206 = vdwg.mxu0
    %6207 = vmatpush.msra.mxu0 %v5026
    %6208 = vmatpush.msra.mxu0 %v5022
    %6209 = vmatpush.msra.mxu0 %v5018
    %6210 = vmatpush.msra.mxu0 %v5014
    %6211 = vmatpush.msra.mxu0 %v5010
    %6212 = vmatpush.msra.mxu0 %v5006
    %6213 = vmatpush.msra.mxu0 %v5002
    %6214 = vmatpush.msra.mxu0 %v4998
    %6215 = vmatpush.msra.mxu0 %v4994
    %6216 = vmatpush.msra.mxu0 %v4990
    %6217 = vmatpush.msra.mxu0 %v4986
    %6218 = vmatpush.msra.mxu0 %v4982
    %6219 = vmatpush.msra.mxu0 %v4978
    %6220 = vmatpush.msra.mxu0 %v4974
    %6221 = vmatpush.msra.mxu0 %v4970
    %6222 = vmatpush.msra.mxu0 %v4966
    %6223 = vmatmul.f32.gmra.mxu0 %v6165
    %v6224 = vpop.f32.mrf.mxu0
    %v6225 = vadd.f32 0.0, %v6224
    %6226 = vdwg.mxu0
    %6227 = vmatpush.msra.mxu0 %v5027
    %6228 = vmatpush.msra.mxu0 %v5023
    %6229 = vmatpush.msra.mxu0 %v5019
    %6230 = vmatpush.msra.mxu0 %v5015
    %6231 = vmatpush.msra.mxu0 %v5011
    %6232 = vmatpush.msra.mxu0 %v5007
    %6233 = vmatpush.msra.mxu0 %v5003
    %6234 = vmatpush.msra.mxu0 %v4999
    %6235 = vmatpush.msra.mxu0 %v4995
    %6236 = vmatpush.msra.mxu0 %v4991
    %6237 = vmatpush.msra.mxu0 %v4987
    %6238 = vmatpush.msra.mxu0 %v4983
    %6239 = vmatpush.msra.mxu0 %v4979
    %6240 = vmatpush.msra.mxu0 %v4975
    %6241 = vmatpush.msra.mxu0 %v4971
    %6242 = vmatpush.msra.mxu0 %v4967
    %6243 = vmatmul.f32.gmra.mxu0 %v6165
    %v6244 = vpop.f32.mrf.mxu0
    %v6245 = vadd.f32 0.0, %v6244
    %6246 = vdwg.mxu0
    %v6251 = vrot.slane %v6185, 2
    %v6252 = vrot.slane %v6205, 2
    %v6253 = vrot.slane %v6225, 2
    %v6254 = vrot.slane %v6245, 2
    %v6259 = vadd.f32 %v4956, %v6251
    %v6260 = vadd.f32 %v4957, %v6252
    %v6261 = vadd.f32 %v4958, %v6253
    %v6262 = vadd.f32 %v4959, %v6254
    %v6263 = vxor.u32 %v6259, 2147483648
    %v6264 = vmul.f32 %v6263, 1.442695
    %v6265 = vpow.pop %v6264
    %v6266 = vadd.f32 %v6265, 1.0
    %v6267 = vrcp.pop %v6266
    %v6268 = vmul.f32 %v6266, %v6267
    %v6269 = vsub.f32 1.0, %v6268
    %v6270 = vmul.f32 %v6267, %v6269
    %v6271 = vadd.f32 %v6267, %v6270
    %vm6272 = vweird.f32 %v6266
    %vm6273 = vweird.f32 %v6267
    %vm6274 = vmor %vm6272, %vm6273
    %v6275 = vsel %vm6274, %v6267, %v6271
    %v6276 = vand.u32 2147483647, %v6266
    %vm6277 = vcmp.eq.f32.partialorder %v6276, 8.507059e+37
    %v6278 = vand.u32 %v6266, 2147483648
    %v6279 = vor.u32 1.1754944e-38, %v6278
    %v6280 = vsel %vm6277, %v6279, %v6275
    %v6281 = vmul.f32 1.0, %v6280
    %v6282 = vxor.u32 %v6260, 2147483648
    %v6283 = vmul.f32 %v6282, 1.442695
    %v6284 = vpow.pop %v6283
    %v6285 = vadd.f32 %v6284, 1.0
    %v6286 = vrcp.pop %v6285
    %v6287 = vmul.f32 %v6285, %v6286
    %v6288 = vsub.f32 1.0, %v6287
    %v6289 = vmul.f32 %v6286, %v6288
    %v6290 = vadd.f32 %v6286, %v6289
    %vm6291 = vweird.f32 %v6285
    %vm6292 = vweird.f32 %v6286
    %vm6293 = vmor %vm6291, %vm6292
    %v6294 = vsel %vm6293, %v6286, %v6290
    %v6295 = vand.u32 2147483647, %v6285
    %vm6296 = vcmp.eq.f32.partialorder %v6295, 8.507059e+37
    %v6297 = vand.u32 %v6285, 2147483648
    %v6298 = vor.u32 1.1754944e-38, %v6297
    %v6299 = vsel %vm6296, %v6298, %v6294
    %v6300 = vmul.f32 1.0, %v6299
    %v6301 = vtanh.pop %v6261
    %v6302 = vxor.u32 %v6262, 2147483648
    %v6303 = vmul.f32 %v6302, 1.442695
    %v6304 = vpow.pop %v6303
    %v6305 = vadd.f32 %v6304, 1.0
    %v6306 = vrcp.pop %v6305
    %v6307 = vmul.f32 %v6305, %v6306
    %v6308 = vsub.f32 1.0, %v6307
    %v6309 = vmul.f32 %v6306, %v6308
    %v6310 = vadd.f32 %v6306, %v6309
    %vm6311 = vweird.f32 %v6305
    %vm6312 = vweird.f32 %v6306
    %vm6313 = vmor %vm6311, %vm6312
    %v6314 = vsel %vm6313, %v6306, %v6310
    %v6315 = vand.u32 2147483647, %v6305
    %vm6316 = vcmp.eq.f32.partialorder %v6315, 8.507059e+37
    %v6317 = vand.u32 %v6305, 2147483648
    %v6318 = vor.u32 1.1754944e-38, %v6317
    %v6319 = vsel %vm6316, %v6318, %v6314
    %v6320 = vmul.f32 1.0, %v6319
    %v6322 = vrot.slane %v6160, 6
    %v6324 = vmul.f32 %v6300, %v6322
    %v6325 = vmul.f32 %v6281, %v6301
    %v6326 = vadd.f32 %v6324, %v6325
    %v6327 = vtanh.pop %v6326
    %v6328 = vmul.f32 %v6320, %v6327
    %6329 = vst [vmem:[#allocation4 + $0x8] sm:$0xc0] %v6328
    %s6330 = scalar_lea.vmem [#allocation17], 512
    %v6331 = vld [vmem:[%s6330] sm:$0xff]
    %v6332 = vld [vmem:[%s6330 + $0x8] sm:$0xff]
    %v6333 = vld [vmem:[%s6330 + $0x10] sm:$0xff]
    %v6334 = vld [vmem:[%s6330 + $0x18] sm:$0xff]
    %v6335 = vld [vmem:[%s6330 + $0x20] sm:$0xff]
    %v6336 = vld [vmem:[%s6330 + $0x28] sm:$0xff]
    %v6337 = vld [vmem:[%s6330 + $0x30] sm:$0xff]
    %v6338 = vld [vmem:[%s6330 + $0x38] sm:$0xff]
    %v6339 = vld [vmem:[%s6330 + $0x40] sm:$0xff]
    %v6340 = vld [vmem:[%s6330 + $0x48] sm:$0xff]
    %v6341 = vld [vmem:[%s6330 + $0x50] sm:$0xff]
    %v6342 = vld [vmem:[%s6330 + $0x58] sm:$0xff]
    %v6343 = vld [vmem:[%s6330 + $0x60] sm:$0xff]
    %v6344 = vld [vmem:[%s6330 + $0x68] sm:$0xff]
    %v6345 = vld [vmem:[%s6330 + $0x70] sm:$0xff]
    %v6346 = vld [vmem:[%s6330 + $0x78] sm:$0xff]
    %v6347 = vld [vmem:[%s6330 + $0x80] sm:$0xff]
    %v6348 = vld [vmem:[%s6330 + $0x88] sm:$0xff]
    %v6349 = vld [vmem:[%s6330 + $0x90] sm:$0xff]
    %v6350 = vld [vmem:[%s6330 + $0x98] sm:$0xff]
    %v6351 = vld [vmem:[%s6330 + $0xa0] sm:$0xff]
    %v6352 = vld [vmem:[%s6330 + $0xa8] sm:$0xff]
    %v6353 = vld [vmem:[%s6330 + $0xb0] sm:$0xff]
    %v6354 = vld [vmem:[%s6330 + $0xb8] sm:$0xff]
    %v6355 = vld [vmem:[%s6330 + $0xc0] sm:$0xff]
    %v6356 = vld [vmem:[%s6330 + $0xc8] sm:$0xff]
    %v6357 = vld [vmem:[%s6330 + $0xd0] sm:$0xff]
    %v6358 = vld [vmem:[%s6330 + $0xd8] sm:$0xff]
    %v6359 = vld [vmem:[%s6330 + $0xe0] sm:$0xff]
    %v6360 = vld [vmem:[%s6330 + $0xe8] sm:$0xff]
    %v6361 = vld [vmem:[%s6330 + $0xf0] sm:$0xff]
    %v6362 = vld [vmem:[%s6330 + $0xf8] sm:$0xff]
    %v6363 = vld [vmem:[%s6330 + $0x100] sm:$0xff]
    %v6364 = vld [vmem:[%s6330 + $0x108] sm:$0xff]
    %v6365 = vld [vmem:[%s6330 + $0x110] sm:$0xff]
    %v6366 = vld [vmem:[%s6330 + $0x118] sm:$0xff]
    %v6367 = vld [vmem:[%s6330 + $0x120] sm:$0xff]
    %v6368 = vld [vmem:[%s6330 + $0x128] sm:$0xff]
    %v6369 = vld [vmem:[%s6330 + $0x130] sm:$0xff]
    %v6370 = vld [vmem:[%s6330 + $0x138] sm:$0xff]
    %v6371 = vld [vmem:[%s6330 + $0x140] sm:$0xff]
    %v6372 = vld [vmem:[%s6330 + $0x148] sm:$0xff]
    %v6373 = vld [vmem:[%s6330 + $0x150] sm:$0xff]
    %v6374 = vld [vmem:[%s6330 + $0x158] sm:$0xff]
    %v6375 = vld [vmem:[%s6330 + $0x160] sm:$0xff]
    %v6376 = vld [vmem:[%s6330 + $0x168] sm:$0xff]
    %v6377 = vld [vmem:[%s6330 + $0x170] sm:$0xff]
    %v6378 = vld [vmem:[%s6330 + $0x178] sm:$0xff]
    %v6379 = vld [vmem:[%s6330 + $0x180] sm:$0xff]
    %v6380 = vld [vmem:[%s6330 + $0x188] sm:$0xff]
    %v6381 = vld [vmem:[%s6330 + $0x190] sm:$0xff]
    %v6382 = vld [vmem:[%s6330 + $0x198] sm:$0xff]
    %v6383 = vld [vmem:[%s6330 + $0x1a0] sm:$0xff]
    %v6384 = vld [vmem:[%s6330 + $0x1a8] sm:$0xff]
    %v6385 = vld [vmem:[%s6330 + $0x1b0] sm:$0xff]
    %v6386 = vld [vmem:[%s6330 + $0x1b8] sm:$0xff]
    %v6387 = vld [vmem:[%s6330 + $0x1c0] sm:$0xff]
    %v6388 = vld [vmem:[%s6330 + $0x1c8] sm:$0xff]
    %v6389 = vld [vmem:[%s6330 + $0x1d0] sm:$0xff]
    %v6390 = vld [vmem:[%s6330 + $0x1d8] sm:$0xff]
    %v6391 = vld [vmem:[%s6330 + $0x1e0] sm:$0xff]
    %v6392 = vld [vmem:[%s6330 + $0x1e8] sm:$0xff]
    %v6393 = vld [vmem:[%s6330 + $0x1f0] sm:$0xff]
    %v6394 = vld [vmem:[%s6330 + $0x1f8] sm:$0xff]
    %s6395 = scalar_lea.vmem %s11, 3
    %v6396 = vld [vmem:[%s6395] sm:$0x1]
    %s6397 = scalar_lea.vmem %s12, 3
    %v6398 = vld [vmem:[%s6397] sm:$0x1]
    %v6400 = vperm.slane %v6396, 0
    %v6403 = vperm.slane %v6398, 0
    %6405 = vmatpush.msra.mxu0 %v6391
    %6406 = vmatpush.msra.mxu0 %v6387
    %6407 = vmatpush.msra.mxu0 %v6383
    %6408 = vmatpush.msra.mxu0 %v6379
    %6409 = vmatpush.msra.mxu0 %v6375
    %6410 = vmatpush.msra.mxu0 %v6371
    %6411 = vmatpush.msra.mxu0 %v6367
    %6412 = vmatpush.msra.mxu0 %v6363
    %6413 = vmatpush.msra.mxu0 %v6359
    %6414 = vmatpush.msra.mxu0 %v6355
    %6415 = vmatpush.msra.mxu0 %v6351
    %6416 = vmatpush.msra.mxu0 %v6347
    %6417 = vmatpush.msra.mxu0 %v6343
    %6418 = vmatpush.msra.mxu0 %v6339
    %6419 = vmatpush.msra.mxu0 %v6335
    %6420 = vmatpush.msra.mxu0 %v6331
    %6421 = vmatmul.f32.gmra.mxu0 %v6400
    %v6422 = vpop.f32.mrf.mxu0
    %v6423 = vadd.f32 0.0, %v6422
    %6424 = vdwg.mxu0
    %6425 = vmatpush.msra.mxu0 %v6392
    %6426 = vmatpush.msra.mxu0 %v6388
    %6427 = vmatpush.msra.mxu0 %v6384
    %6428 = vmatpush.msra.mxu0 %v6380
    %6429 = vmatpush.msra.mxu0 %v6376
    %6430 = vmatpush.msra.mxu0 %v6372
    %6431 = vmatpush.msra.mxu0 %v6368
    %6432 = vmatpush.msra.mxu0 %v6364
    %6433 = vmatpush.msra.mxu0 %v6360
    %6434 = vmatpush.msra.mxu0 %v6356
    %6435 = vmatpush.msra.mxu0 %v6352
    %6436 = vmatpush.msra.mxu0 %v6348
    %6437 = vmatpush.msra.mxu0 %v6344
    %6438 = vmatpush.msra.mxu0 %v6340
    %6439 = vmatpush.msra.mxu0 %v6336
    %6440 = vmatpush.msra.mxu0 %v6332
    %6441 = vmatmul.f32.gmra.mxu0 %v6400
    %v6442 = vpop.f32.mrf.mxu0
    %v6443 = vadd.f32 0.0, %v6442
    %6444 = vdwg.mxu0
    %6445 = vmatpush.msra.mxu0 %v6393
    %6446 = vmatpush.msra.mxu0 %v6389
    %6447 = vmatpush.msra.mxu0 %v6385
    %6448 = vmatpush.msra.mxu0 %v6381
    %6449 = vmatpush.msra.mxu0 %v6377
    %6450 = vmatpush.msra.mxu0 %v6373
    %6451 = vmatpush.msra.mxu0 %v6369
    %6452 = vmatpush.msra.mxu0 %v6365
    %6453 = vmatpush.msra.mxu0 %v6361
    %6454 = vmatpush.msra.mxu0 %v6357
    %6455 = vmatpush.msra.mxu0 %v6353
    %6456 = vmatpush.msra.mxu0 %v6349
    %6457 = vmatpush.msra.mxu0 %v6345
    %6458 = vmatpush.msra.mxu0 %v6341
    %6459 = vmatpush.msra.mxu0 %v6337
    %6460 = vmatpush.msra.mxu0 %v6333
    %6461 = vmatmul.f32.gmra.mxu0 %v6400
    %v6462 = vpop.f32.mrf.mxu0
    %v6463 = vadd.f32 0.0, %v6462
    %6464 = vdwg.mxu0
    %6465 = vmatpush.msra.mxu0 %v6394
    %6466 = vmatpush.msra.mxu0 %v6390
    %6467 = vmatpush.msra.mxu0 %v6386
    %6468 = vmatpush.msra.mxu0 %v6382
    %6469 = vmatpush.msra.mxu0 %v6378
    %6470 = vmatpush.msra.mxu0 %v6374
    %6471 = vmatpush.msra.mxu0 %v6370
    %6472 = vmatpush.msra.mxu0 %v6366
    %6473 = vmatpush.msra.mxu0 %v6362
    %6474 = vmatpush.msra.mxu0 %v6358
    %6475 = vmatpush.msra.mxu0 %v6354
    %6476 = vmatpush.msra.mxu0 %v6350
    %6477 = vmatpush.msra.mxu0 %v6346
    %6478 = vmatpush.msra.mxu0 %v6342
    %6479 = vmatpush.msra.mxu0 %v6338
    %6480 = vmatpush.msra.mxu0 %v6334
    %6481 = vmatmul.f32.gmra.mxu0 %v6400
    %v6482 = vpop.f32.mrf.mxu0
    %v6483 = vadd.f32 0.0, %v6482
    %6484 = vdwg.mxu0
    %v6489 = vrot.slane %v6423, 2
    %v6490 = vrot.slane %v6443, 2
    %v6491 = vrot.slane %v6463, 2
    %v6492 = vrot.slane %v6483, 2
    %v6497 = vadd.f32 %v4960, %v6489
    %v6498 = vadd.f32 %v4961, %v6490
    %v6499 = vadd.f32 %v4962, %v6491
    %v6500 = vadd.f32 %v4963, %v6492
    %v6501 = vxor.u32 %v6497, 2147483648
    %v6502 = vmul.f32 %v6501, 1.442695
    %v6503 = vpow.pop %v6502
    %v6504 = vadd.f32 %v6503, 1.0
    %v6505 = vrcp.pop %v6504
    %v6506 = vmul.f32 %v6504, %v6505
    %v6507 = vsub.f32 1.0, %v6506
    %v6508 = vmul.f32 %v6505, %v6507
    %v6509 = vadd.f32 %v6505, %v6508
    %vm6510 = vweird.f32 %v6504
    %vm6511 = vweird.f32 %v6505
    %vm6512 = vmor %vm6510, %vm6511
    %v6513 = vsel %vm6512, %v6505, %v6509
    %v6514 = vand.u32 2147483647, %v6504
    %vm6515 = vcmp.eq.f32.partialorder %v6514, 8.507059e+37
    %v6516 = vand.u32 %v6504, 2147483648
    %v6517 = vor.u32 1.1754944e-38, %v6516
    %v6518 = vsel %vm6515, %v6517, %v6513
    %v6519 = vmul.f32 1.0, %v6518
    %v6520 = vxor.u32 %v6498, 2147483648
    %v6521 = vmul.f32 %v6520, 1.442695
    %v6522 = vpow.pop %v6521
    %v6523 = vadd.f32 %v6522, 1.0
    %v6524 = vrcp.pop %v6523
    %v6525 = vmul.f32 %v6523, %v6524
    %v6526 = vsub.f32 1.0, %v6525
    %v6527 = vmul.f32 %v6524, %v6526
    %v6528 = vadd.f32 %v6524, %v6527
    %vm6529 = vweird.f32 %v6523
    %vm6530 = vweird.f32 %v6524
    %vm6531 = vmor %vm6529, %vm6530
    %v6532 = vsel %vm6531, %v6524, %v6528
    %v6533 = vand.u32 2147483647, %v6523
    %vm6534 = vcmp.eq.f32.partialorder %v6533, 8.507059e+37
    %v6535 = vand.u32 %v6523, 2147483648
    %v6536 = vor.u32 1.1754944e-38, %v6535
    %v6537 = vsel %vm6534, %v6536, %v6532
    %v6538 = vmul.f32 1.0, %v6537
    %v6539 = vtanh.pop %v6499
    %v6540 = vxor.u32 %v6500, 2147483648
    %v6541 = vmul.f32 %v6540, 1.442695
    %v6542 = vpow.pop %v6541
    %v6543 = vadd.f32 %v6542, 1.0
    %v6544 = vrcp.pop %v6543
    %v6545 = vmul.f32 %v6543, %v6544
    %v6546 = vsub.f32 1.0, %v6545
    %v6547 = vmul.f32 %v6544, %v6546
    %v6548 = vadd.f32 %v6544, %v6547
    %vm6549 = vweird.f32 %v6543
    %vm6550 = vweird.f32 %v6544
    %vm6551 = vmor %vm6549, %vm6550
    %v6552 = vsel %vm6551, %v6544, %v6548
    %v6553 = vand.u32 2147483647, %v6543
    %vm6554 = vcmp.eq.f32.partialorder %v6553, 8.507059e+37
    %v6555 = vand.u32 %v6543, 2147483648
    %v6556 = vor.u32 1.1754944e-38, %v6555
    %v6557 = vsel %vm6554, %v6556, %v6552
    %v6558 = vmul.f32 1.0, %v6557
    %v6559 = vmul.f32 %v6538, %v6403
    %v6560 = vmul.f32 %v6519, %v6539
    %v6561 = vadd.f32 %v6559, %v6560
    %v6562 = vtanh.pop %v6561
    %v6563 = vmul.f32 %v6558, %v6562
    %6564 = vst [vmem:[#allocation5 + $0x8] sm:$0xc0] %v6563
    %v6566 = vrot.slane %v6563, 6
    %6568 = vmatpush.msra.mxu0 %v6391
    %6569 = vmatpush.msra.mxu0 %v6387
    %6570 = vmatpush.msra.mxu0 %v6383
    %6571 = vmatpush.msra.mxu0 %v6379
    %6572 = vmatpush.msra.mxu0 %v6375
    %6573 = vmatpush.msra.mxu0 %v6371
    %6574 = vmatpush.msra.mxu0 %v6367
    %6575 = vmatpush.msra.mxu0 %v6363
    %6576 = vmatpush.msra.mxu0 %v6359
    %6577 = vmatpush.msra.mxu0 %v6355
    %6578 = vmatpush.msra.mxu0 %v6351
    %6579 = vmatpush.msra.mxu0 %v6347
    %6580 = vmatpush.msra.mxu0 %v6343
    %6581 = vmatpush.msra.mxu0 %v6339
    %6582 = vmatpush.msra.mxu0 %v6335
    %6583 = vmatpush.msra.mxu0 %v6331
    %6584 = vmatmul.f32.gmra.mxu0 %v6566
    %v6585 = vpop.f32.mrf.mxu0
    %v6586 = vadd.f32 0.0, %v6585
    %6587 = vdwg.mxu0
    %6588 = vmatpush.msra.mxu0 %v6392
    %6589 = vmatpush.msra.mxu0 %v6388
    %6590 = vmatpush.msra.mxu0 %v6384
    %6591 = vmatpush.msra.mxu0 %v6380
    %6592 = vmatpush.msra.mxu0 %v6376
    %6593 = vmatpush.msra.mxu0 %v6372
    %6594 = vmatpush.msra.mxu0 %v6368
    %6595 = vmatpush.msra.mxu0 %v6364
    %6596 = vmatpush.msra.mxu0 %v6360
    %6597 = vmatpush.msra.mxu0 %v6356
    %6598 = vmatpush.msra.mxu0 %v6352
    %6599 = vmatpush.msra.mxu0 %v6348
    %6600 = vmatpush.msra.mxu0 %v6344
    %6601 = vmatpush.msra.mxu0 %v6340
    %6602 = vmatpush.msra.mxu0 %v6336
    %6603 = vmatpush.msra.mxu0 %v6332
    %6604 = vmatmul.f32.gmra.mxu0 %v6566
    %v6605 = vpop.f32.mrf.mxu0
    %v6606 = vadd.f32 0.0, %v6605
    %6607 = vdwg.mxu0
    %6608 = vmatpush.msra.mxu0 %v6393
    %6609 = vmatpush.msra.mxu0 %v6389
    %6610 = vmatpush.msra.mxu0 %v6385
    %6611 = vmatpush.msra.mxu0 %v6381
    %6612 = vmatpush.msra.mxu0 %v6377
    %6613 = vmatpush.msra.mxu0 %v6373
    %6614 = vmatpush.msra.mxu0 %v6369
    %6615 = vmatpush.msra.mxu0 %v6365
    %6616 = vmatpush.msra.mxu0 %v6361
    %6617 = vmatpush.msra.mxu0 %v6357
    %6618 = vmatpush.msra.mxu0 %v6353
    %6619 = vmatpush.msra.mxu0 %v6349
    %6620 = vmatpush.msra.mxu0 %v6345
    %6621 = vmatpush.msra.mxu0 %v6341
    %6622 = vmatpush.msra.mxu0 %v6337
    %6623 = vmatpush.msra.mxu0 %v6333
    %6624 = vmatmul.f32.gmra.mxu0 %v6566
    %v6625 = vpop.f32.mrf.mxu0
    %v6626 = vadd.f32 0.0, %v6625
    %6627 = vdwg.mxu0
    %6628 = vmatpush.msra.mxu0 %v6394
    %6629 = vmatpush.msra.mxu0 %v6390
    %6630 = vmatpush.msra.mxu0 %v6386
    %6631 = vmatpush.msra.mxu0 %v6382
    %6632 = vmatpush.msra.mxu0 %v6378
    %6633 = vmatpush.msra.mxu0 %v6374
    %6634 = vmatpush.msra.mxu0 %v6370
    %6635 = vmatpush.msra.mxu0 %v6366
    %6636 = vmatpush.msra.mxu0 %v6362
    %6637 = vmatpush.msra.mxu0 %v6358
    %6638 = vmatpush.msra.mxu0 %v6354
    %6639 = vmatpush.msra.mxu0 %v6350
    %6640 = vmatpush.msra.mxu0 %v6346
    %6641 = vmatpush.msra.mxu0 %v6342
    %6642 = vmatpush.msra.mxu0 %v6338
    %6643 = vmatpush.msra.mxu0 %v6334
    %6644 = vmatmul.f32.gmra.mxu0 %v6566
    %v6645 = vpop.f32.mrf.mxu0
    %v6646 = vadd.f32 0.0, %v6645
    %6647 = vdwg.mxu0
    %v6652 = vrot.slane %v6586, 4
    %v6653 = vrot.slane %v6606, 4
    %v6654 = vrot.slane %v6626, 4
    %v6655 = vrot.slane %v6646, 4
    %v6660 = vadd.f32 %v4960, %v6652
    %v6661 = vadd.f32 %v4961, %v6653
    %v6662 = vadd.f32 %v4962, %v6654
    %v6663 = vadd.f32 %v4963, %v6655
    %v6664 = vxor.u32 %v6660, 2147483648
    %v6665 = vmul.f32 %v6664, 1.442695
    %v6666 = vpow.pop %v6665
    %v6667 = vadd.f32 %v6666, 1.0
    %v6668 = vrcp.pop %v6667
    %v6669 = vmul.f32 %v6667, %v6668
    %v6670 = vsub.f32 1.0, %v6669
    %v6671 = vmul.f32 %v6668, %v6670
    %v6672 = vadd.f32 %v6668, %v6671
    %vm6673 = vweird.f32 %v6667
    %vm6674 = vweird.f32 %v6668
    %vm6675 = vmor %vm6673, %vm6674
    %v6676 = vsel %vm6675, %v6668, %v6672
    %v6677 = vand.u32 2147483647, %v6667
    %vm6678 = vcmp.eq.f32.partialorder %v6677, 8.507059e+37
    %v6679 = vand.u32 %v6667, 2147483648
    %v6680 = vor.u32 1.1754944e-38, %v6679
    %v6681 = vsel %vm6678, %v6680, %v6676
    %v6682 = vmul.f32 1.0, %v6681
    %v6683 = vxor.u32 %v6661, 2147483648
    %v6684 = vmul.f32 %v6683, 1.442695
    %v6685 = vpow.pop %v6684
    %v6686 = vadd.f32 %v6685, 1.0
    %v6687 = vrcp.pop %v6686
    %v6688 = vmul.f32 %v6686, %v6687
    %v6689 = vsub.f32 1.0, %v6688
    %v6690 = vmul.f32 %v6687, %v6689
    %v6691 = vadd.f32 %v6687, %v6690
    %vm6692 = vweird.f32 %v6686
    %vm6693 = vweird.f32 %v6687
    %vm6694 = vmor %vm6692, %vm6693
    %v6695 = vsel %vm6694, %v6687, %v6691
    %v6696 = vand.u32 2147483647, %v6686
    %vm6697 = vcmp.eq.f32.partialorder %v6696, 8.507059e+37
    %v6698 = vand.u32 %v6686, 2147483648
    %v6699 = vor.u32 1.1754944e-38, %v6698
    %v6700 = vsel %vm6697, %v6699, %v6695
    %v6701 = vmul.f32 1.0, %v6700
    %v6702 = vtanh.pop %v6662
    %v6703 = vxor.u32 %v6663, 2147483648
    %v6704 = vmul.f32 %v6703, 1.442695
    %v6705 = vpow.pop %v6704
    %v6706 = vadd.f32 %v6705, 1.0
    %v6707 = vrcp.pop %v6706
    %v6708 = vmul.f32 %v6706, %v6707
    %v6709 = vsub.f32 1.0, %v6708
    %v6710 = vmul.f32 %v6707, %v6709
    %v6711 = vadd.f32 %v6707, %v6710
    %vm6712 = vweird.f32 %v6706
    %vm6713 = vweird.f32 %v6707
    %vm6714 = vmor %vm6712, %vm6713
    %v6715 = vsel %vm6714, %v6707, %v6711
    %v6716 = vand.u32 2147483647, %v6706
    %vm6717 = vcmp.eq.f32.partialorder %v6716, 8.507059e+37
    %v6718 = vand.u32 %v6706, 2147483648
    %v6719 = vor.u32 1.1754944e-38, %v6718
    %v6720 = vsel %vm6717, %v6719, %v6715
    %v6721 = vmul.f32 1.0, %v6720
    %v6723 = vrot.slane %v6561, 2
    %v6725 = vmul.f32 %v6701, %v6723
    %v6726 = vmul.f32 %v6682, %v6702
    %v6727 = vadd.f32 %v6725, %v6726
    %v6728 = vtanh.pop %v6727
    %v6729 = vmul.f32 %v6721, %v6728
    %6730 = vst [vmem:[#allocation5 + $0x8] sm:$0x30] %v6729
    %v6732 = vrot.slane %v6729, 4
    %6734 = vmatpush.msra.mxu0 %v6391
    %6735 = vmatpush.msra.mxu0 %v6387
    %6736 = vmatpush.msra.mxu0 %v6383
    %6737 = vmatpush.msra.mxu0 %v6379
    %6738 = vmatpush.msra.mxu0 %v6375
    %6739 = vmatpush.msra.mxu0 %v6371
    %6740 = vmatpush.msra.mxu0 %v6367
    %6741 = vmatpush.msra.mxu0 %v6363
    %6742 = vmatpush.msra.mxu0 %v6359
    %6743 = vmatpush.msra.mxu0 %v6355
    %6744 = vmatpush.msra.mxu0 %v6351
    %6745 = vmatpush.msra.mxu0 %v6347
    %6746 = vmatpush.msra.mxu0 %v6343
    %6747 = vmatpush.msra.mxu0 %v6339
    %6748 = vmatpush.msra.mxu0 %v6335
    %6749 = vmatpush.msra.mxu0 %v6331
    %6750 = vmatmul.f32.gmra.mxu0 %v6732
    %v6751 = vpop.f32.mrf.mxu0
    %v6752 = vadd.f32 0.0, %v6751
    %6753 = vdwg.mxu0
    %6754 = vmatpush.msra.mxu0 %v6392
    %6755 = vmatpush.msra.mxu0 %v6388
    %6756 = vmatpush.msra.mxu0 %v6384
    %6757 = vmatpush.msra.mxu0 %v6380
    %6758 = vmatpush.msra.mxu0 %v6376
    %6759 = vmatpush.msra.mxu0 %v6372
    %6760 = vmatpush.msra.mxu0 %v6368
    %6761 = vmatpush.msra.mxu0 %v6364
    %6762 = vmatpush.msra.mxu0 %v6360
    %6763 = vmatpush.msra.mxu0 %v6356
    %6764 = vmatpush.msra.mxu0 %v6352
    %6765 = vmatpush.msra.mxu0 %v6348
    %6766 = vmatpush.msra.mxu0 %v6344
    %6767 = vmatpush.msra.mxu0 %v6340
    %6768 = vmatpush.msra.mxu0 %v6336
    %6769 = vmatpush.msra.mxu0 %v6332
    %6770 = vmatmul.f32.gmra.mxu0 %v6732
    %v6771 = vpop.f32.mrf.mxu0
    %v6772 = vadd.f32 0.0, %v6771
    %6773 = vdwg.mxu0
    %6774 = vmatpush.msra.mxu0 %v6393
    %6775 = vmatpush.msra.mxu0 %v6389
    %6776 = vmatpush.msra.mxu0 %v6385
    %6777 = vmatpush.msra.mxu0 %v6381
    %6778 = vmatpush.msra.mxu0 %v6377
    %6779 = vmatpush.msra.mxu0 %v6373
    %6780 = vmatpush.msra.mxu0 %v6369
    %6781 = vmatpush.msra.mxu0 %v6365
    %6782 = vmatpush.msra.mxu0 %v6361
    %6783 = vmatpush.msra.mxu0 %v6357
    %6784 = vmatpush.msra.mxu0 %v6353
    %6785 = vmatpush.msra.mxu0 %v6349
    %6786 = vmatpush.msra.mxu0 %v6345
    %6787 = vmatpush.msra.mxu0 %v6341
    %6788 = vmatpush.msra.mxu0 %v6337
    %6789 = vmatpush.msra.mxu0 %v6333
    %6790 = vmatmul.f32.gmra.mxu0 %v6732
    %v6791 = vpop.f32.mrf.mxu0
    %v6792 = vadd.f32 0.0, %v6791
    %6793 = vdwg.mxu0
    %6794 = vmatpush.msra.mxu0 %v6394
    %6795 = vmatpush.msra.mxu0 %v6390
    %6796 = vmatpush.msra.mxu0 %v6386
    %6797 = vmatpush.msra.mxu0 %v6382
    %6798 = vmatpush.msra.mxu0 %v6378
    %6799 = vmatpush.msra.mxu0 %v6374
    %6800 = vmatpush.msra.mxu0 %v6370
    %6801 = vmatpush.msra.mxu0 %v6366
    %6802 = vmatpush.msra.mxu0 %v6362
    %6803 = vmatpush.msra.mxu0 %v6358
    %6804 = vmatpush.msra.mxu0 %v6354
    %6805 = vmatpush.msra.mxu0 %v6350
    %6806 = vmatpush.msra.mxu0 %v6346
    %6807 = vmatpush.msra.mxu0 %v6342
    %6808 = vmatpush.msra.mxu0 %v6338
    %6809 = vmatpush.msra.mxu0 %v6334
    %6810 = vmatmul.f32.gmra.mxu0 %v6732
    %v6811 = vpop.f32.mrf.mxu0
    %v6812 = vadd.f32 0.0, %v6811
    %6813 = vdwg.mxu0
    %v6818 = vrot.slane %v6752, 6
    %v6819 = vrot.slane %v6772, 6
    %v6820 = vrot.slane %v6792, 6
    %v6821 = vrot.slane %v6812, 6
    %v6826 = vadd.f32 %v4960, %v6818
    %v6827 = vadd.f32 %v4961, %v6819
    %v6828 = vadd.f32 %v4962, %v6820
    %v6829 = vadd.f32 %v4963, %v6821
    %v6830 = vxor.u32 %v6826, 2147483648
    %v6831 = vmul.f32 %v6830, 1.442695
    %v6832 = vpow.pop %v6831
    %v6833 = vadd.f32 %v6832, 1.0
    %v6834 = vrcp.pop %v6833
    %v6835 = vmul.f32 %v6833, %v6834
    %v6836 = vsub.f32 1.0, %v6835
    %v6837 = vmul.f32 %v6834, %v6836
    %v6838 = vadd.f32 %v6834, %v6837
    %vm6839 = vweird.f32 %v6833
    %vm6840 = vweird.f32 %v6834
    %vm6841 = vmor %vm6839, %vm6840
    %v6842 = vsel %vm6841, %v6834, %v6838
    %v6843 = vand.u32 2147483647, %v6833
    %vm6844 = vcmp.eq.f32.partialorder %v6843, 8.507059e+37
    %v6845 = vand.u32 %v6833, 2147483648
    %v6846 = vor.u32 1.1754944e-38, %v6845
    %v6847 = vsel %vm6844, %v6846, %v6842
    %v6848 = vmul.f32 1.0, %v6847
    %v6849 = vxor.u32 %v6827, 2147483648
    %v6850 = vmul.f32 %v6849, 1.442695
    %v6851 = vpow.pop %v6850
    %v6852 = vadd.f32 %v6851, 1.0
    %v6853 = vrcp.pop %v6852
    %v6854 = vmul.f32 %v6852, %v6853
    %v6855 = vsub.f32 1.0, %v6854
    %v6856 = vmul.f32 %v6853, %v6855
    %v6857 = vadd.f32 %v6853, %v6856
    %vm6858 = vweird.f32 %v6852
    %vm6859 = vweird.f32 %v6853
    %vm6860 = vmor %vm6858, %vm6859
    %v6861 = vsel %vm6860, %v6853, %v6857
    %v6862 = vand.u32 2147483647, %v6852
    %vm6863 = vcmp.eq.f32.partialorder %v6862, 8.507059e+37
    %v6864 = vand.u32 %v6852, 2147483648
    %v6865 = vor.u32 1.1754944e-38, %v6864
    %v6866 = vsel %vm6863, %v6865, %v6861
    %v6867 = vmul.f32 1.0, %v6866
    %v6868 = vtanh.pop %v6828
    %v6869 = vxor.u32 %v6829, 2147483648
    %v6870 = vmul.f32 %v6869, 1.442695
    %v6871 = vpow.pop %v6870
    %v6872 = vadd.f32 %v6871, 1.0
    %v6873 = vrcp.pop %v6872
    %v6874 = vmul.f32 %v6872, %v6873
    %v6875 = vsub.f32 1.0, %v6874
    %v6876 = vmul.f32 %v6873, %v6875
    %v6877 = vadd.f32 %v6873, %v6876
    %vm6878 = vweird.f32 %v6872
    %vm6879 = vweird.f32 %v6873
    %vm6880 = vmor %vm6878, %vm6879
    %v6881 = vsel %vm6880, %v6873, %v6877
    %v6882 = vand.u32 2147483647, %v6872
    %vm6883 = vcmp.eq.f32.partialorder %v6882, 8.507059e+37
    %v6884 = vand.u32 %v6872, 2147483648
    %v6885 = vor.u32 1.1754944e-38, %v6884
    %v6886 = vsel %vm6883, %v6885, %v6881
    %v6887 = vmul.f32 1.0, %v6886
    %v6889 = vrot.slane %v6727, 2
    %v6891 = vmul.f32 %v6867, %v6889
    %v6892 = vmul.f32 %v6848, %v6868
    %v6893 = vadd.f32 %v6891, %v6892
    %v6894 = vtanh.pop %v6893
    %v6895 = vmul.f32 %v6887, %v6894
    %6896 = vst [vmem:[#allocation5 + $0x8] sm:$0xc] %v6895
    %v6898 = vrot.slane %v6895, 2
    %6900 = vmatpush.msra.mxu0 %v6391
    %6901 = vmatpush.msra.mxu0 %v6387
    %6902 = vmatpush.msra.mxu0 %v6383
    %6903 = vmatpush.msra.mxu0 %v6379
    %6904 = vmatpush.msra.mxu0 %v6375
    %6905 = vmatpush.msra.mxu0 %v6371
    %6906 = vmatpush.msra.mxu0 %v6367
    %6907 = vmatpush.msra.mxu0 %v6363
    %6908 = vmatpush.msra.mxu0 %v6359
    %6909 = vmatpush.msra.mxu0 %v6355
    %6910 = vmatpush.msra.mxu0 %v6351
    %6911 = vmatpush.msra.mxu0 %v6347
    %6912 = vmatpush.msra.mxu0 %v6343
    %6913 = vmatpush.msra.mxu0 %v6339
    %6914 = vmatpush.msra.mxu0 %v6335
    %6915 = vmatpush.msra.mxu0 %v6331
    %6916 = vmatmul.f32.gmra.mxu0 %v6898
    %v6917 = vpop.f32.mrf.mxu0
    %v6918 = vadd.f32 0.0, %v6917
    %6919 = vdwg.mxu0
    %6920 = vmatpush.msra.mxu0 %v6392
    %6921 = vmatpush.msra.mxu0 %v6388
    %6922 = vmatpush.msra.mxu0 %v6384
    %6923 = vmatpush.msra.mxu0 %v6380
    %6924 = vmatpush.msra.mxu0 %v6376
    %6925 = vmatpush.msra.mxu0 %v6372
    %6926 = vmatpush.msra.mxu0 %v6368
    %6927 = vmatpush.msra.mxu0 %v6364
    %6928 = vmatpush.msra.mxu0 %v6360
    %6929 = vmatpush.msra.mxu0 %v6356
    %6930 = vmatpush.msra.mxu0 %v6352
    %6931 = vmatpush.msra.mxu0 %v6348
    %6932 = vmatpush.msra.mxu0 %v6344
    %6933 = vmatpush.msra.mxu0 %v6340
    %6934 = vmatpush.msra.mxu0 %v6336
    %6935 = vmatpush.msra.mxu0 %v6332
    %6936 = vmatmul.f32.gmra.mxu0 %v6898
    %v6937 = vpop.f32.mrf.mxu0
    %v6938 = vadd.f32 0.0, %v6937
    %6939 = vdwg.mxu0
    %6940 = vmatpush.msra.mxu0 %v6393
    %6941 = vmatpush.msra.mxu0 %v6389
    %6942 = vmatpush.msra.mxu0 %v6385
    %6943 = vmatpush.msra.mxu0 %v6381
    %6944 = vmatpush.msra.mxu0 %v6377
    %6945 = vmatpush.msra.mxu0 %v6373
    %6946 = vmatpush.msra.mxu0 %v6369
    %6947 = vmatpush.msra.mxu0 %v6365
    %6948 = vmatpush.msra.mxu0 %v6361
    %6949 = vmatpush.msra.mxu0 %v6357
    %6950 = vmatpush.msra.mxu0 %v6353
    %6951 = vmatpush.msra.mxu0 %v6349
    %6952 = vmatpush.msra.mxu0 %v6345
    %6953 = vmatpush.msra.mxu0 %v6341
    %6954 = vmatpush.msra.mxu0 %v6337
    %6955 = vmatpush.msra.mxu0 %v6333
    %6956 = vmatmul.f32.gmra.mxu0 %v6898
    %v6957 = vpop.f32.mrf.mxu0
    %v6958 = vadd.f32 0.0, %v6957
    %6959 = vdwg.mxu0
    %6960 = vmatpush.msra.mxu0 %v6394
    %6961 = vmatpush.msra.mxu0 %v6390
    %6962 = vmatpush.msra.mxu0 %v6386
    %6963 = vmatpush.msra.mxu0 %v6382
    %6964 = vmatpush.msra.mxu0 %v6378
    %6965 = vmatpush.msra.mxu0 %v6374
    %6966 = vmatpush.msra.mxu0 %v6370
    %6967 = vmatpush.msra.mxu0 %v6366
    %6968 = vmatpush.msra.mxu0 %v6362
    %6969 = vmatpush.msra.mxu0 %v6358
    %6970 = vmatpush.msra.mxu0 %v6354
    %6971 = vmatpush.msra.mxu0 %v6350
    %6972 = vmatpush.msra.mxu0 %v6346
    %6973 = vmatpush.msra.mxu0 %v6342
    %6974 = vmatpush.msra.mxu0 %v6338
    %6975 = vmatpush.msra.mxu0 %v6334
    %6976 = vmatmul.f32.gmra.mxu0 %v6898
    %v6977 = vpop.f32.mrf.mxu0
    %v6978 = vadd.f32 0.0, %v6977
    %6979 = vdwg.mxu0
    %v6980 = vadd.f32 %v4960, %v6918
    %v6981 = vadd.f32 %v4961, %v6938
    %v6982 = vadd.f32 %v4962, %v6958
    %v6983 = vadd.f32 %v4963, %v6978
    %v6984 = vxor.u32 %v6980, 2147483648
    %v6985 = vmul.f32 %v6984, 1.442695
    %v6986 = vpow.pop %v6985
    %v6987 = vadd.f32 %v6986, 1.0
    %v6988 = vrcp.pop %v6987
    %v6989 = vmul.f32 %v6987, %v6988
    %v6990 = vsub.f32 1.0, %v6989
    %v6991 = vmul.f32 %v6988, %v6990
    %v6992 = vadd.f32 %v6988, %v6991
    %vm6993 = vweird.f32 %v6987
    %vm6994 = vweird.f32 %v6988
    %vm6995 = vmor %vm6993, %vm6994
    %v6996 = vsel %vm6995, %v6988, %v6992
    %v6997 = vand.u32 2147483647, %v6987
    %vm6998 = vcmp.eq.f32.partialorder %v6997, 8.507059e+37
    %v6999 = vand.u32 %v6987, 2147483648
    %v7000 = vor.u32 1.1754944e-38, %v6999
    %v7001 = vsel %vm6998, %v7000, %v6996
    %v7002 = vmul.f32 1.0, %v7001
    %v7003 = vxor.u32 %v6981, 2147483648
    %v7004 = vmul.f32 %v7003, 1.442695
    %v7005 = vpow.pop %v7004
    %v7006 = vadd.f32 %v7005, 1.0
    %v7007 = vrcp.pop %v7006
    %v7008 = vmul.f32 %v7006, %v7007
    %v7009 = vsub.f32 1.0, %v7008
    %v7010 = vmul.f32 %v7007, %v7009
    %v7011 = vadd.f32 %v7007, %v7010
    %vm7012 = vweird.f32 %v7006
    %vm7013 = vweird.f32 %v7007
    %vm7014 = vmor %vm7012, %vm7013
    %v7015 = vsel %vm7014, %v7007, %v7011
    %v7016 = vand.u32 2147483647, %v7006
    %vm7017 = vcmp.eq.f32.partialorder %v7016, 8.507059e+37
    %v7018 = vand.u32 %v7006, 2147483648
    %v7019 = vor.u32 1.1754944e-38, %v7018
    %v7020 = vsel %vm7017, %v7019, %v7015
    %v7021 = vmul.f32 1.0, %v7020
    %v7022 = vtanh.pop %v6982
    %v7023 = vxor.u32 %v6983, 2147483648
    %v7024 = vmul.f32 %v7023, 1.442695
    %v7025 = vpow.pop %v7024
    %v7026 = vadd.f32 %v7025, 1.0
    %v7027 = vrcp.pop %v7026
    %v7028 = vmul.f32 %v7026, %v7027
    %v7029 = vsub.f32 1.0, %v7028
    %v7030 = vmul.f32 %v7027, %v7029
    %v7031 = vadd.f32 %v7027, %v7030
    %vm7032 = vweird.f32 %v7026
    %vm7033 = vweird.f32 %v7027
    %vm7034 = vmor %vm7032, %vm7033
    %v7035 = vsel %vm7034, %v7027, %v7031
    %v7036 = vand.u32 2147483647, %v7026
    %vm7037 = vcmp.eq.f32.partialorder %v7036, 8.507059e+37
    %v7038 = vand.u32 %v7026, 2147483648
    %v7039 = vor.u32 1.1754944e-38, %v7038
    %v7040 = vsel %vm7037, %v7039, %v7035
    %v7041 = vmul.f32 1.0, %v7040
    %v7043 = vrot.slane %v6893, 2
    %v7045 = vmul.f32 %v7021, %v7043
    %v7046 = vmul.f32 %v7002, %v7022
    %v7047 = vadd.f32 %v7045, %v7046
    %v7048 = vtanh.pop %v7047
    %v7049 = vmul.f32 %v7041, %v7048
    %7050 = vst [vmem:[#allocation5 + $0x8] sm:$0x3] %v7049
    %7051 = vmatpush.msra.mxu0 %v6391
    %7052 = vmatpush.msra.mxu0 %v6387
    %7053 = vmatpush.msra.mxu0 %v6383
    %7054 = vmatpush.msra.mxu0 %v6379
    %7055 = vmatpush.msra.mxu0 %v6375
    %7056 = vmatpush.msra.mxu0 %v6371
    %7057 = vmatpush.msra.mxu0 %v6367
    %7058 = vmatpush.msra.mxu0 %v6363
    %7059 = vmatpush.msra.mxu0 %v6359
    %7060 = vmatpush.msra.mxu0 %v6355
    %7061 = vmatpush.msra.mxu0 %v6351
    %7062 = vmatpush.msra.mxu0 %v6347
    %7063 = vmatpush.msra.mxu0 %v6343
    %7064 = vmatpush.msra.mxu0 %v6339
    %7065 = vmatpush.msra.mxu0 %v6335
    %7066 = vmatpush.msra.mxu0 %v6331
    %7067 = vmatmul.f32.gmra.mxu0 %v7049
    %v7068 = vpop.f32.mrf.mxu0
    %v7069 = vadd.f32 0.0, %v7068
    %7070 = vdwg.mxu0
    %7071 = vmatpush.msra.mxu0 %v6392
    %7072 = vmatpush.msra.mxu0 %v6388
    %7073 = vmatpush.msra.mxu0 %v6384
    %7074 = vmatpush.msra.mxu0 %v6380
    %7075 = vmatpush.msra.mxu0 %v6376
    %7076 = vmatpush.msra.mxu0 %v6372
    %7077 = vmatpush.msra.mxu0 %v6368
    %7078 = vmatpush.msra.mxu0 %v6364
    %7079 = vmatpush.msra.mxu0 %v6360
    %7080 = vmatpush.msra.mxu0 %v6356
    %7081 = vmatpush.msra.mxu0 %v6352
    %7082 = vmatpush.msra.mxu0 %v6348
    %7083 = vmatpush.msra.mxu0 %v6344
    %7084 = vmatpush.msra.mxu0 %v6340
    %7085 = vmatpush.msra.mxu0 %v6336
    %7086 = vmatpush.msra.mxu0 %v6332
    %7087 = vmatmul.f32.gmra.mxu0 %v7049
    %v7088 = vpop.f32.mrf.mxu0
    %v7089 = vadd.f32 0.0, %v7088
    %7090 = vdwg.mxu0
    %7091 = vmatpush.msra.mxu0 %v6393
    %7092 = vmatpush.msra.mxu0 %v6389
    %7093 = vmatpush.msra.mxu0 %v6385
    %7094 = vmatpush.msra.mxu0 %v6381
    %7095 = vmatpush.msra.mxu0 %v6377
    %7096 = vmatpush.msra.mxu0 %v6373
    %7097 = vmatpush.msra.mxu0 %v6369
    %7098 = vmatpush.msra.mxu0 %v6365
    %7099 = vmatpush.msra.mxu0 %v6361
    %7100 = vmatpush.msra.mxu0 %v6357
    %7101 = vmatpush.msra.mxu0 %v6353
    %7102 = vmatpush.msra.mxu0 %v6349
    %7103 = vmatpush.msra.mxu0 %v6345
    %7104 = vmatpush.msra.mxu0 %v6341
    %7105 = vmatpush.msra.mxu0 %v6337
    %7106 = vmatpush.msra.mxu0 %v6333
    %7107 = vmatmul.f32.gmra.mxu0 %v7049
    %v7108 = vpop.f32.mrf.mxu0
    %v7109 = vadd.f32 0.0, %v7108
    %7110 = vdwg.mxu0
    %7111 = vmatpush.msra.mxu0 %v6394
    %7112 = vmatpush.msra.mxu0 %v6390
    %7113 = vmatpush.msra.mxu0 %v6386
    %7114 = vmatpush.msra.mxu0 %v6382
    %7115 = vmatpush.msra.mxu0 %v6378
    %7116 = vmatpush.msra.mxu0 %v6374
    %7117 = vmatpush.msra.mxu0 %v6370
    %7118 = vmatpush.msra.mxu0 %v6366
    %7119 = vmatpush.msra.mxu0 %v6362
    %7120 = vmatpush.msra.mxu0 %v6358
    %7121 = vmatpush.msra.mxu0 %v6354
    %7122 = vmatpush.msra.mxu0 %v6350
    %7123 = vmatpush.msra.mxu0 %v6346
    %7124 = vmatpush.msra.mxu0 %v6342
    %7125 = vmatpush.msra.mxu0 %v6338
    %7126 = vmatpush.msra.mxu0 %v6334
    %7127 = vmatmul.f32.gmra.mxu0 %v7049
    %v7128 = vpop.f32.mrf.mxu0
    %v7129 = vadd.f32 0.0, %v7128
    %7130 = vdwg.mxu0
    %v7135 = vrot.slane %v7069, 2
    %v7136 = vrot.slane %v7089, 2
    %v7137 = vrot.slane %v7109, 2
    %v7138 = vrot.slane %v7129, 2
    %v7143 = vadd.f32 %v4952, %v7135
    %v7144 = vadd.f32 %v4953, %v7136
    %v7145 = vadd.f32 %v4954, %v7137
    %v7146 = vadd.f32 %v4955, %v7138
    %v7147 = vxor.u32 %v7143, 2147483648
    %v7148 = vmul.f32 %v7147, 1.442695
    %v7149 = vpow.pop %v7148
    %v7150 = vadd.f32 %v7149, 1.0
    %v7151 = vrcp.pop %v7150
    %v7152 = vmul.f32 %v7150, %v7151
    %v7153 = vsub.f32 1.0, %v7152
    %v7154 = vmul.f32 %v7151, %v7153
    %v7155 = vadd.f32 %v7151, %v7154
    %vm7156 = vweird.f32 %v7150
    %vm7157 = vweird.f32 %v7151
    %vm7158 = vmor %vm7156, %vm7157
    %v7159 = vsel %vm7158, %v7151, %v7155
    %v7160 = vand.u32 2147483647, %v7150
    %vm7161 = vcmp.eq.f32.partialorder %v7160, 8.507059e+37
    %v7162 = vand.u32 %v7150, 2147483648
    %v7163 = vor.u32 1.1754944e-38, %v7162
    %v7164 = vsel %vm7161, %v7163, %v7159
    %v7165 = vmul.f32 1.0, %v7164
    %v7166 = vxor.u32 %v7144, 2147483648
    %v7167 = vmul.f32 %v7166, 1.442695
    %v7168 = vpow.pop %v7167
    %v7169 = vadd.f32 %v7168, 1.0
    %v7170 = vrcp.pop %v7169
    %v7171 = vmul.f32 %v7169, %v7170
    %v7172 = vsub.f32 1.0, %v7171
    %v7173 = vmul.f32 %v7170, %v7172
    %v7174 = vadd.f32 %v7170, %v7173
    %vm7175 = vweird.f32 %v7169
    %vm7176 = vweird.f32 %v7170
    %vm7177 = vmor %vm7175, %vm7176
    %v7178 = vsel %vm7177, %v7170, %v7174
    %v7179 = vand.u32 2147483647, %v7169
    %vm7180 = vcmp.eq.f32.partialorder %v7179, 8.507059e+37
    %v7181 = vand.u32 %v7169, 2147483648
    %v7182 = vor.u32 1.1754944e-38, %v7181
    %v7183 = vsel %vm7180, %v7182, %v7178
    %v7184 = vmul.f32 1.0, %v7183
    %v7185 = vtanh.pop %v7145
    %v7186 = vxor.u32 %v7146, 2147483648
    %v7187 = vmul.f32 %v7186, 1.442695
    %v7188 = vpow.pop %v7187
    %v7189 = vadd.f32 %v7188, 1.0
    %v7190 = vrcp.pop %v7189
    %v7191 = vmul.f32 %v7189, %v7190
    %v7192 = vsub.f32 1.0, %v7191
    %v7193 = vmul.f32 %v7190, %v7192
    %v7194 = vadd.f32 %v7190, %v7193
    %vm7195 = vweird.f32 %v7189
    %vm7196 = vweird.f32 %v7190
    %vm7197 = vmor %vm7195, %vm7196
    %v7198 = vsel %vm7197, %v7190, %v7194
    %v7199 = vand.u32 2147483647, %v7189
    %vm7200 = vcmp.eq.f32.partialorder %v7199, 8.507059e+37
    %v7201 = vand.u32 %v7189, 2147483648
    %v7202 = vor.u32 1.1754944e-38, %v7201
    %v7203 = vsel %vm7200, %v7202, %v7198
    %v7204 = vmul.f32 1.0, %v7203
    %v7206 = vrot.slane %v7047, 2
    %v7208 = vmul.f32 %v7184, %v7206
    %v7209 = vmul.f32 %v7165, %v7185
    %v7210 = vadd.f32 %v7208, %v7209
    %v7211 = vtanh.pop %v7210
    %v7212 = vmul.f32 %v7204, %v7211
    %7213 = vst [vmem:[#allocation5] sm:$0xc0] %v7212
    %v7215 = vrot.slane %v7212, 6
    %7217 = vmatpush.msra.mxu0 %v6391
    %7218 = vmatpush.msra.mxu0 %v6387
    %7219 = vmatpush.msra.mxu0 %v6383
    %7220 = vmatpush.msra.mxu0 %v6379
    %7221 = vmatpush.msra.mxu0 %v6375
    %7222 = vmatpush.msra.mxu0 %v6371
    %7223 = vmatpush.msra.mxu0 %v6367
    %7224 = vmatpush.msra.mxu0 %v6363
    %7225 = vmatpush.msra.mxu0 %v6359
    %7226 = vmatpush.msra.mxu0 %v6355
    %7227 = vmatpush.msra.mxu0 %v6351
    %7228 = vmatpush.msra.mxu0 %v6347
    %7229 = vmatpush.msra.mxu0 %v6343
    %7230 = vmatpush.msra.mxu0 %v6339
    %7231 = vmatpush.msra.mxu0 %v6335
    %7232 = vmatpush.msra.mxu0 %v6331
    %7233 = vmatmul.f32.gmra.mxu0 %v7215
    %v7234 = vpop.f32.mrf.mxu0
    %v7235 = vadd.f32 0.0, %v7234
    %7236 = vdwg.mxu0
    %7237 = vmatpush.msra.mxu0 %v6392
    %7238 = vmatpush.msra.mxu0 %v6388
    %7239 = vmatpush.msra.mxu0 %v6384
    %7240 = vmatpush.msra.mxu0 %v6380
    %7241 = vmatpush.msra.mxu0 %v6376
    %7242 = vmatpush.msra.mxu0 %v6372
    %7243 = vmatpush.msra.mxu0 %v6368
    %7244 = vmatpush.msra.mxu0 %v6364
    %7245 = vmatpush.msra.mxu0 %v6360
    %7246 = vmatpush.msra.mxu0 %v6356
    %7247 = vmatpush.msra.mxu0 %v6352
    %7248 = vmatpush.msra.mxu0 %v6348
    %7249 = vmatpush.msra.mxu0 %v6344
    %7250 = vmatpush.msra.mxu0 %v6340
    %7251 = vmatpush.msra.mxu0 %v6336
    %7252 = vmatpush.msra.mxu0 %v6332
    %7253 = vmatmul.f32.gmra.mxu0 %v7215
    %v7254 = vpop.f32.mrf.mxu0
    %v7255 = vadd.f32 0.0, %v7254
    %7256 = vdwg.mxu0
    %7257 = vmatpush.msra.mxu0 %v6393
    %7258 = vmatpush.msra.mxu0 %v6389
    %7259 = vmatpush.msra.mxu0 %v6385
    %7260 = vmatpush.msra.mxu0 %v6381
    %7261 = vmatpush.msra.mxu0 %v6377
    %7262 = vmatpush.msra.mxu0 %v6373
    %7263 = vmatpush.msra.mxu0 %v6369
    %7264 = vmatpush.msra.mxu0 %v6365
    %7265 = vmatpush.msra.mxu0 %v6361
    %7266 = vmatpush.msra.mxu0 %v6357
    %7267 = vmatpush.msra.mxu0 %v6353
    %7268 = vmatpush.msra.mxu0 %v6349
    %7269 = vmatpush.msra.mxu0 %v6345
    %7270 = vmatpush.msra.mxu0 %v6341
    %7271 = vmatpush.msra.mxu0 %v6337
    %7272 = vmatpush.msra.mxu0 %v6333
    %7273 = vmatmul.f32.gmra.mxu0 %v7215
    %v7274 = vpop.f32.mrf.mxu0
    %v7275 = vadd.f32 0.0, %v7274
    %7276 = vdwg.mxu0
    %7277 = vmatpush.msra.mxu0 %v6394
    %7278 = vmatpush.msra.mxu0 %v6390
    %7279 = vmatpush.msra.mxu0 %v6386
    %7280 = vmatpush.msra.mxu0 %v6382
    %7281 = vmatpush.msra.mxu0 %v6378
    %7282 = vmatpush.msra.mxu0 %v6374
    %7283 = vmatpush.msra.mxu0 %v6370
    %7284 = vmatpush.msra.mxu0 %v6366
    %7285 = vmatpush.msra.mxu0 %v6362
    %7286 = vmatpush.msra.mxu0 %v6358
    %7287 = vmatpush.msra.mxu0 %v6354
    %7288 = vmatpush.msra.mxu0 %v6350
    %7289 = vmatpush.msra.mxu0 %v6346
    %7290 = vmatpush.msra.mxu0 %v6342
    %7291 = vmatpush.msra.mxu0 %v6338
    %7292 = vmatpush.msra.mxu0 %v6334
    %7293 = vmatmul.f32.gmra.mxu0 %v7215
    %v7294 = vpop.f32.mrf.mxu0
    %v7295 = vadd.f32 0.0, %v7294
    %7296 = vdwg.mxu0
    %v7301 = vrot.slane %v7235, 4
    %v7302 = vrot.slane %v7255, 4
    %v7303 = vrot.slane %v7275, 4
    %v7304 = vrot.slane %v7295, 4
    %v7309 = vadd.f32 %v4952, %v7301
    %v7310 = vadd.f32 %v4953, %v7302
    %v7311 = vadd.f32 %v4954, %v7303
    %v7312 = vadd.f32 %v4955, %v7304
    %v7313 = vxor.u32 %v7309, 2147483648
    %v7314 = vmul.f32 %v7313, 1.442695
    %v7315 = vpow.pop %v7314
    %v7316 = vadd.f32 %v7315, 1.0
    %v7317 = vrcp.pop %v7316
    %v7318 = vmul.f32 %v7316, %v7317
    %v7319 = vsub.f32 1.0, %v7318
    %v7320 = vmul.f32 %v7317, %v7319
    %v7321 = vadd.f32 %v7317, %v7320
    %vm7322 = vweird.f32 %v7316
    %vm7323 = vweird.f32 %v7317
    %vm7324 = vmor %vm7322, %vm7323
    %v7325 = vsel %vm7324, %v7317, %v7321
    %v7326 = vand.u32 2147483647, %v7316
    %vm7327 = vcmp.eq.f32.partialorder %v7326, 8.507059e+37
    %v7328 = vand.u32 %v7316, 2147483648
    %v7329 = vor.u32 1.1754944e-38, %v7328
    %v7330 = vsel %vm7327, %v7329, %v7325
    %v7331 = vmul.f32 1.0, %v7330
    %v7332 = vxor.u32 %v7310, 2147483648
    %v7333 = vmul.f32 %v7332, 1.442695
    %v7334 = vpow.pop %v7333
    %v7335 = vadd.f32 %v7334, 1.0
    %v7336 = vrcp.pop %v7335
    %v7337 = vmul.f32 %v7335, %v7336
    %v7338 = vsub.f32 1.0, %v7337
    %v7339 = vmul.f32 %v7336, %v7338
    %v7340 = vadd.f32 %v7336, %v7339
    %vm7341 = vweird.f32 %v7335
    %vm7342 = vweird.f32 %v7336
    %vm7343 = vmor %vm7341, %vm7342
    %v7344 = vsel %vm7343, %v7336, %v7340
    %v7345 = vand.u32 2147483647, %v7335
    %vm7346 = vcmp.eq.f32.partialorder %v7345, 8.507059e+37
    %v7347 = vand.u32 %v7335, 2147483648
    %v7348 = vor.u32 1.1754944e-38, %v7347
    %v7349 = vsel %vm7346, %v7348, %v7344
    %v7350 = vmul.f32 1.0, %v7349
    %v7351 = vtanh.pop %v7311
    %v7352 = vxor.u32 %v7312, 2147483648
    %v7353 = vmul.f32 %v7352, 1.442695
    %v7354 = vpow.pop %v7353
    %v7355 = vadd.f32 %v7354, 1.0
    %v7356 = vrcp.pop %v7355
    %v7357 = vmul.f32 %v7355, %v7356
    %v7358 = vsub.f32 1.0, %v7357
    %v7359 = vmul.f32 %v7356, %v7358
    %v7360 = vadd.f32 %v7356, %v7359
    %vm7361 = vweird.f32 %v7355
    %vm7362 = vweird.f32 %v7356
    %vm7363 = vmor %vm7361, %vm7362
    %v7364 = vsel %vm7363, %v7356, %v7360
    %v7365 = vand.u32 2147483647, %v7355
    %vm7366 = vcmp.eq.f32.partialorder %v7365, 8.507059e+37
    %v7367 = vand.u32 %v7355, 2147483648
    %v7368 = vor.u32 1.1754944e-38, %v7367
    %v7369 = vsel %vm7366, %v7368, %v7364
    %v7370 = vmul.f32 1.0, %v7369
    %v7372 = vrot.slane %v7210, 2
    %v7374 = vmul.f32 %v7350, %v7372
    %v7375 = vmul.f32 %v7331, %v7351
    %v7376 = vadd.f32 %v7374, %v7375
    %v7377 = vtanh.pop %v7376
    %v7378 = vmul.f32 %v7370, %v7377
    %7379 = vst [vmem:[#allocation5] sm:$0x30] %v7378
    %v7381 = vrot.slane %v7378, 4
    %7383 = vmatpush.msra.mxu0 %v6391
    %7384 = vmatpush.msra.mxu0 %v6387
    %7385 = vmatpush.msra.mxu0 %v6383
    %7386 = vmatpush.msra.mxu0 %v6379
    %7387 = vmatpush.msra.mxu0 %v6375
    %7388 = vmatpush.msra.mxu0 %v6371
    %7389 = vmatpush.msra.mxu0 %v6367
    %7390 = vmatpush.msra.mxu0 %v6363
    %7391 = vmatpush.msra.mxu0 %v6359
    %7392 = vmatpush.msra.mxu0 %v6355
    %7393 = vmatpush.msra.mxu0 %v6351
    %7394 = vmatpush.msra.mxu0 %v6347
    %7395 = vmatpush.msra.mxu0 %v6343
    %7396 = vmatpush.msra.mxu0 %v6339
    %7397 = vmatpush.msra.mxu0 %v6335
    %7398 = vmatpush.msra.mxu0 %v6331
    %7399 = vmatmul.f32.gmra.mxu0 %v7381
    %v7400 = vpop.f32.mrf.mxu0
    %v7401 = vadd.f32 0.0, %v7400
    %7402 = vdwg.mxu0
    %7403 = vmatpush.msra.mxu0 %v6392
    %7404 = vmatpush.msra.mxu0 %v6388
    %7405 = vmatpush.msra.mxu0 %v6384
    %7406 = vmatpush.msra.mxu0 %v6380
    %7407 = vmatpush.msra.mxu0 %v6376
    %7408 = vmatpush.msra.mxu0 %v6372
    %7409 = vmatpush.msra.mxu0 %v6368
    %7410 = vmatpush.msra.mxu0 %v6364
    %7411 = vmatpush.msra.mxu0 %v6360
    %7412 = vmatpush.msra.mxu0 %v6356
    %7413 = vmatpush.msra.mxu0 %v6352
    %7414 = vmatpush.msra.mxu0 %v6348
    %7415 = vmatpush.msra.mxu0 %v6344
    %7416 = vmatpush.msra.mxu0 %v6340
    %7417 = vmatpush.msra.mxu0 %v6336
    %7418 = vmatpush.msra.mxu0 %v6332
    %7419 = vmatmul.f32.gmra.mxu0 %v7381
    %v7420 = vpop.f32.mrf.mxu0
    %v7421 = vadd.f32 0.0, %v7420
    %7422 = vdwg.mxu0
    %7423 = vmatpush.msra.mxu0 %v6393
    %7424 = vmatpush.msra.mxu0 %v6389
    %7425 = vmatpush.msra.mxu0 %v6385
    %7426 = vmatpush.msra.mxu0 %v6381
    %7427 = vmatpush.msra.mxu0 %v6377
    %7428 = vmatpush.msra.mxu0 %v6373
    %7429 = vmatpush.msra.mxu0 %v6369
    %7430 = vmatpush.msra.mxu0 %v6365
    %7431 = vmatpush.msra.mxu0 %v6361
    %7432 = vmatpush.msra.mxu0 %v6357
    %7433 = vmatpush.msra.mxu0 %v6353
    %7434 = vmatpush.msra.mxu0 %v6349
    %7435 = vmatpush.msra.mxu0 %v6345
    %7436 = vmatpush.msra.mxu0 %v6341
    %7437 = vmatpush.msra.mxu0 %v6337
    %7438 = vmatpush.msra.mxu0 %v6333
    %7439 = vmatmul.f32.gmra.mxu0 %v7381
    %v7440 = vpop.f32.mrf.mxu0
    %v7441 = vadd.f32 0.0, %v7440
    %7442 = vdwg.mxu0
    %7443 = vmatpush.msra.mxu0 %v6394
    %7444 = vmatpush.msra.mxu0 %v6390
    %7445 = vmatpush.msra.mxu0 %v6386
    %7446 = vmatpush.msra.mxu0 %v6382
    %7447 = vmatpush.msra.mxu0 %v6378
    %7448 = vmatpush.msra.mxu0 %v6374
    %7449 = vmatpush.msra.mxu0 %v6370
    %7450 = vmatpush.msra.mxu0 %v6366
    %7451 = vmatpush.msra.mxu0 %v6362
    %7452 = vmatpush.msra.mxu0 %v6358
    %7453 = vmatpush.msra.mxu0 %v6354
    %7454 = vmatpush.msra.mxu0 %v6350
    %7455 = vmatpush.msra.mxu0 %v6346
    %7456 = vmatpush.msra.mxu0 %v6342
    %7457 = vmatpush.msra.mxu0 %v6338
    %7458 = vmatpush.msra.mxu0 %v6334
    %7459 = vmatmul.f32.gmra.mxu0 %v7381
    %v7460 = vpop.f32.mrf.mxu0
    %v7461 = vadd.f32 0.0, %v7460
    %7462 = vdwg.mxu0
    %v7467 = vrot.slane %v7401, 6
    %v7468 = vrot.slane %v7421, 6
    %v7469 = vrot.slane %v7441, 6
    %v7470 = vrot.slane %v7461, 6
    %v7475 = vadd.f32 %v4952, %v7467
    %v7476 = vadd.f32 %v4953, %v7468
    %v7477 = vadd.f32 %v4954, %v7469
    %v7478 = vadd.f32 %v4955, %v7470
    %v7479 = vxor.u32 %v7475, 2147483648
    %v7480 = vmul.f32 %v7479, 1.442695
    %v7481 = vpow.pop %v7480
    %v7482 = vadd.f32 %v7481, 1.0
    %v7483 = vrcp.pop %v7482
    %v7484 = vmul.f32 %v7482, %v7483
    %v7485 = vsub.f32 1.0, %v7484
    %v7486 = vmul.f32 %v7483, %v7485
    %v7487 = vadd.f32 %v7483, %v7486
    %vm7488 = vweird.f32 %v7482
    %vm7489 = vweird.f32 %v7483
    %vm7490 = vmor %vm7488, %vm7489
    %v7491 = vsel %vm7490, %v7483, %v7487
    %v7492 = vand.u32 2147483647, %v7482
    %vm7493 = vcmp.eq.f32.partialorder %v7492, 8.507059e+37
    %v7494 = vand.u32 %v7482, 2147483648
    %v7495 = vor.u32 1.1754944e-38, %v7494
    %v7496 = vsel %vm7493, %v7495, %v7491
    %v7497 = vmul.f32 1.0, %v7496
    %v7498 = vxor.u32 %v7476, 2147483648
    %v7499 = vmul.f32 %v7498, 1.442695
    %v7500 = vpow.pop %v7499
    %v7501 = vadd.f32 %v7500, 1.0
    %v7502 = vrcp.pop %v7501
    %v7503 = vmul.f32 %v7501, %v7502
    %v7504 = vsub.f32 1.0, %v7503
    %v7505 = vmul.f32 %v7502, %v7504
    %v7506 = vadd.f32 %v7502, %v7505
    %vm7507 = vweird.f32 %v7501
    %vm7508 = vweird.f32 %v7502
    %vm7509 = vmor %vm7507, %vm7508
    %v7510 = vsel %vm7509, %v7502, %v7506
    %v7511 = vand.u32 2147483647, %v7501
    %vm7512 = vcmp.eq.f32.partialorder %v7511, 8.507059e+37
    %v7513 = vand.u32 %v7501, 2147483648
    %v7514 = vor.u32 1.1754944e-38, %v7513
    %v7515 = vsel %vm7512, %v7514, %v7510
    %v7516 = vmul.f32 1.0, %v7515
    %v7517 = vtanh.pop %v7477
    %v7518 = vxor.u32 %v7478, 2147483648
    %v7519 = vmul.f32 %v7518, 1.442695
    %v7520 = vpow.pop %v7519
    %v7521 = vadd.f32 %v7520, 1.0
    %v7522 = vrcp.pop %v7521
    %v7523 = vmul.f32 %v7521, %v7522
    %v7524 = vsub.f32 1.0, %v7523
    %v7525 = vmul.f32 %v7522, %v7524
    %v7526 = vadd.f32 %v7522, %v7525
    %vm7527 = vweird.f32 %v7521
    %vm7528 = vweird.f32 %v7522
    %vm7529 = vmor %vm7527, %vm7528
    %v7530 = vsel %vm7529, %v7522, %v7526
    %v7531 = vand.u32 2147483647, %v7521
    %vm7532 = vcmp.eq.f32.partialorder %v7531, 8.507059e+37
    %v7533 = vand.u32 %v7521, 2147483648
    %v7534 = vor.u32 1.1754944e-38, %v7533
    %v7535 = vsel %vm7532, %v7534, %v7530
    %v7536 = vmul.f32 1.0, %v7535
    %v7538 = vrot.slane %v7376, 2
    %v7540 = vmul.f32 %v7516, %v7538
    %v7541 = vmul.f32 %v7497, %v7517
    %v7542 = vadd.f32 %v7540, %v7541
    %v7543 = vtanh.pop %v7542
    %v7544 = vmul.f32 %v7536, %v7543
    %7545 = vst [vmem:[#allocation5] sm:$0xc] %v7544
    %v7547 = vrot.slane %v7544, 2
    %7549 = vmatpush.msra.mxu0 %v6391
    %7550 = vmatpush.msra.mxu0 %v6387
    %7551 = vmatpush.msra.mxu0 %v6383
    %7552 = vmatpush.msra.mxu0 %v6379
    %7553 = vmatpush.msra.mxu0 %v6375
    %7554 = vmatpush.msra.mxu0 %v6371
    %7555 = vmatpush.msra.mxu0 %v6367
    %7556 = vmatpush.msra.mxu0 %v6363
    %7557 = vmatpush.msra.mxu0 %v6359
    %7558 = vmatpush.msra.mxu0 %v6355
    %7559 = vmatpush.msra.mxu0 %v6351
    %7560 = vmatpush.msra.mxu0 %v6347
    %7561 = vmatpush.msra.mxu0 %v6343
    %7562 = vmatpush.msra.mxu0 %v6339
    %7563 = vmatpush.msra.mxu0 %v6335
    %7564 = vmatpush.msra.mxu0 %v6331
    %7565 = vmatmul.f32.gmra.mxu0 %v7547
    %v7566 = vpop.f32.mrf.mxu0
    %v7567 = vadd.f32 0.0, %v7566
    %7568 = vdwg.mxu0
    %7569 = vmatpush.msra.mxu0 %v6392
    %7570 = vmatpush.msra.mxu0 %v6388
    %7571 = vmatpush.msra.mxu0 %v6384
    %7572 = vmatpush.msra.mxu0 %v6380
    %7573 = vmatpush.msra.mxu0 %v6376
    %7574 = vmatpush.msra.mxu0 %v6372
    %7575 = vmatpush.msra.mxu0 %v6368
    %7576 = vmatpush.msra.mxu0 %v6364
    %7577 = vmatpush.msra.mxu0 %v6360
    %7578 = vmatpush.msra.mxu0 %v6356
    %7579 = vmatpush.msra.mxu0 %v6352
    %7580 = vmatpush.msra.mxu0 %v6348
    %7581 = vmatpush.msra.mxu0 %v6344
    %7582 = vmatpush.msra.mxu0 %v6340
    %7583 = vmatpush.msra.mxu0 %v6336
    %7584 = vmatpush.msra.mxu0 %v6332
    %7585 = vmatmul.f32.gmra.mxu0 %v7547
    %v7586 = vpop.f32.mrf.mxu0
    %v7587 = vadd.f32 0.0, %v7586
    %7588 = vdwg.mxu0
    %7589 = vmatpush.msra.mxu0 %v6393
    %7590 = vmatpush.msra.mxu0 %v6389
    %7591 = vmatpush.msra.mxu0 %v6385
    %7592 = vmatpush.msra.mxu0 %v6381
    %7593 = vmatpush.msra.mxu0 %v6377
    %7594 = vmatpush.msra.mxu0 %v6373
    %7595 = vmatpush.msra.mxu0 %v6369
    %7596 = vmatpush.msra.mxu0 %v6365
    %7597 = vmatpush.msra.mxu0 %v6361
    %7598 = vmatpush.msra.mxu0 %v6357
    %7599 = vmatpush.msra.mxu0 %v6353
    %7600 = vmatpush.msra.mxu0 %v6349
    %7601 = vmatpush.msra.mxu0 %v6345
    %7602 = vmatpush.msra.mxu0 %v6341
    %7603 = vmatpush.msra.mxu0 %v6337
    %7604 = vmatpush.msra.mxu0 %v6333
    %7605 = vmatmul.f32.gmra.mxu0 %v7547
    %v7606 = vpop.f32.mrf.mxu0
    %v7607 = vadd.f32 0.0, %v7606
    %7608 = vdwg.mxu0
    %7609 = vmatpush.msra.mxu0 %v6394
    %7610 = vmatpush.msra.mxu0 %v6390
    %7611 = vmatpush.msra.mxu0 %v6386
    %7612 = vmatpush.msra.mxu0 %v6382
    %7613 = vmatpush.msra.mxu0 %v6378
    %7614 = vmatpush.msra.mxu0 %v6374
    %7615 = vmatpush.msra.mxu0 %v6370
    %7616 = vmatpush.msra.mxu0 %v6366
    %7617 = vmatpush.msra.mxu0 %v6362
    %7618 = vmatpush.msra.mxu0 %v6358
    %7619 = vmatpush.msra.mxu0 %v6354
    %7620 = vmatpush.msra.mxu0 %v6350
    %7621 = vmatpush.msra.mxu0 %v6346
    %7622 = vmatpush.msra.mxu0 %v6342
    %7623 = vmatpush.msra.mxu0 %v6338
    %7624 = vmatpush.msra.mxu0 %v6334
    %7625 = vmatmul.f32.gmra.mxu0 %v7547
    %v7626 = vpop.f32.mrf.mxu0
    %v7627 = vadd.f32 0.0, %v7626
    %7628 = vdwg.mxu0
    %v7629 = vadd.f32 %v4952, %v7567
    %v7630 = vadd.f32 %v4953, %v7587
    %v7631 = vadd.f32 %v4954, %v7607
    %v7632 = vadd.f32 %v4955, %v7627
    %v7633 = vxor.u32 %v7629, 2147483648
    %v7634 = vmul.f32 %v7633, 1.442695
    %v7635 = vpow.pop %v7634
    %v7636 = vadd.f32 %v7635, 1.0
    %v7637 = vrcp.pop %v7636
    %v7638 = vmul.f32 %v7636, %v7637
    %v7639 = vsub.f32 1.0, %v7638
    %v7640 = vmul.f32 %v7637, %v7639
    %v7641 = vadd.f32 %v7637, %v7640
    %vm7642 = vweird.f32 %v7636
    %vm7643 = vweird.f32 %v7637
    %vm7644 = vmor %vm7642, %vm7643
    %v7645 = vsel %vm7644, %v7637, %v7641
    %v7646 = vand.u32 2147483647, %v7636
    %vm7647 = vcmp.eq.f32.partialorder %v7646, 8.507059e+37
    %v7648 = vand.u32 %v7636, 2147483648
    %v7649 = vor.u32 1.1754944e-38, %v7648
    %v7650 = vsel %vm7647, %v7649, %v7645
    %v7651 = vmul.f32 1.0, %v7650
    %v7652 = vxor.u32 %v7630, 2147483648
    %v7653 = vmul.f32 %v7652, 1.442695
    %v7654 = vpow.pop %v7653
    %v7655 = vadd.f32 %v7654, 1.0
    %v7656 = vrcp.pop %v7655
    %v7657 = vmul.f32 %v7655, %v7656
    %v7658 = vsub.f32 1.0, %v7657
    %v7659 = vmul.f32 %v7656, %v7658
    %v7660 = vadd.f32 %v7656, %v7659
    %vm7661 = vweird.f32 %v7655
    %vm7662 = vweird.f32 %v7656
    %vm7663 = vmor %vm7661, %vm7662
    %v7664 = vsel %vm7663, %v7656, %v7660
    %v7665 = vand.u32 2147483647, %v7655
    %vm7666 = vcmp.eq.f32.partialorder %v7665, 8.507059e+37
    %v7667 = vand.u32 %v7655, 2147483648
    %v7668 = vor.u32 1.1754944e-38, %v7667
    %v7669 = vsel %vm7666, %v7668, %v7664
    %v7670 = vmul.f32 1.0, %v7669
    %v7671 = vtanh.pop %v7631
    %v7672 = vxor.u32 %v7632, 2147483648
    %v7673 = vmul.f32 %v7672, 1.442695
    %v7674 = vpow.pop %v7673
    %v7675 = vadd.f32 %v7674, 1.0
    %v7676 = vrcp.pop %v7675
    %v7677 = vmul.f32 %v7675, %v7676
    %v7678 = vsub.f32 1.0, %v7677
    %v7679 = vmul.f32 %v7676, %v7678
    %v7680 = vadd.f32 %v7676, %v7679
    %vm7681 = vweird.f32 %v7675
    %vm7682 = vweird.f32 %v7676
    %vm7683 = vmor %vm7681, %vm7682
    %v7684 = vsel %vm7683, %v7676, %v7680
    %v7685 = vand.u32 2147483647, %v7675
    %vm7686 = vcmp.eq.f32.partialorder %v7685, 8.507059e+37
    %v7687 = vand.u32 %v7675, 2147483648
    %v7688 = vor.u32 1.1754944e-38, %v7687
    %v7689 = vsel %vm7686, %v7688, %v7684
    %v7690 = vmul.f32 1.0, %v7689
    %v7692 = vrot.slane %v7542, 2
    %v7694 = vmul.f32 %v7670, %v7692
    %v7695 = vmul.f32 %v7651, %v7671
    %v7696 = vadd.f32 %v7694, %v7695
    %v7697 = vtanh.pop %v7696
    %v7698 = vmul.f32 %v7690, %v7697
    %7699 = vst [vmem:[#allocation5] sm:$0x3] %v7698
    %v7700 = vld [vmem:[#allocation4] sm:$0xff]
    %v7701 = vld [vmem:[#allocation4 + $0x8] sm:$0xff]
    %v7702 = vld [vmem:[#allocation5] sm:$0xff]
    %v7703 = vld [vmem:[#allocation5 + $0x8] sm:$0xff]
    %v7704 = vld [vmem:[%s13] sm:$0xff]
    %v7705 = vld [vmem:[%s13 + $0x8] sm:$0xff]
    %v7706 = vld [vmem:[%s13 + $0x10] sm:$0xff]
    %v7707 = vld [vmem:[%s13 + $0x18] sm:$0xff]
    %v7708 = vld [vmem:[%s13 + $0x20] sm:$0xff]
    %v7709 = vld [vmem:[%s13 + $0x28] sm:$0xff]
    %v7710 = vld [vmem:[%s13 + $0x30] sm:$0xff]
    %v7711 = vld [vmem:[%s13 + $0x38] sm:$0xff]
    %v7712 = vld [vmem:[%s13 + $0x40] sm:$0xff]
    %v7713 = vld [vmem:[%s13 + $0x48] sm:$0xff]
    %v7714 = vld [vmem:[%s13 + $0x50] sm:$0xff]
    %v7715 = vld [vmem:[%s13 + $0x58] sm:$0xff]
    %v7716 = vld [vmem:[%s13 + $0x60] sm:$0xff]
    %v7717 = vld [vmem:[%s13 + $0x68] sm:$0xff]
    %v7718 = vld [vmem:[%s13 + $0x70] sm:$0xff]
    %v7719 = vld [vmem:[%s13 + $0x78] sm:$0xff]
    %v7720 = vld [vmem:[%s14] sm:$0xff]
    %v7721 = vld [vmem:[%s14 + $0x8] sm:$0xff]
    %v7722 = vld [vmem:[%s14 + $0x10] sm:$0xff]
    %v7723 = vld [vmem:[%s14 + $0x18] sm:$0xff]
    %v7724 = vld [vmem:[%s14 + $0x20] sm:$0xff]
    %v7725 = vld [vmem:[%s14 + $0x28] sm:$0xff]
    %v7726 = vld [vmem:[%s14 + $0x30] sm:$0xff]
    %v7727 = vld [vmem:[%s14 + $0x38] sm:$0xff]
    %v7728 = vld [vmem:[%s14 + $0x40] sm:$0xff]
    %v7729 = vld [vmem:[%s14 + $0x48] sm:$0xff]
    %v7730 = vld [vmem:[%s14 + $0x50] sm:$0xff]
    %v7731 = vld [vmem:[%s14 + $0x58] sm:$0xff]
    %v7732 = vld [vmem:[%s14 + $0x60] sm:$0xff]
    %v7733 = vld [vmem:[%s14 + $0x68] sm:$0xff]
    %v7734 = vld [vmem:[%s14 + $0x70] sm:$0xff]
    %v7735 = vld [vmem:[%s14 + $0x78] sm:$0xff]
    %7736 = vmatpush.msra.mxu0 %v7735
    %7737 = vmatpush.msra.mxu0 %v7734
    %7738 = vmatpush.msra.mxu0 %v7733
    %7739 = vmatpush.msra.mxu0 %v7732
    %7740 = vmatpush.msra.mxu0 %v7731
    %7741 = vmatpush.msra.mxu0 %v7730
    %7742 = vmatpush.msra.mxu0 %v7729
    %7743 = vmatpush.msra.mxu0 %v7728
    %7744 = vmatpush.msra.mxu0 %v7727
    %7745 = vmatpush.msra.mxu0 %v7726
    %7746 = vmatpush.msra.mxu0 %v7725
    %7747 = vmatpush.msra.mxu0 %v7724
    %7748 = vmatpush.msra.mxu0 %v7723
    %7749 = vmatpush.msra.mxu0 %v7722
    %7750 = vmatpush.msra.mxu0 %v7721
    %7751 = vmatpush.msra.mxu0 %v7720
    %7752 = vmatmul.f32.gmra.mxu0 %v7702
    %v7753 = vpop.f32.mrf.mxu0
    %v7754 = vadd.f32 0.0, %v7753
    %7755 = vmatmul.f32.gmra.mxu0 %v7703
    %v7756 = vpop.f32.mrf.mxu0
    %v7757 = vadd.f32 0.0, %v7756
    %7758 = vdwg.mxu0
    %7759 = vmatpush.msra.mxu0 %v7719
    %7760 = vmatpush.msra.mxu0 %v7718
    %7761 = vmatpush.msra.mxu0 %v7717
    %7762 = vmatpush.msra.mxu0 %v7716
    %7763 = vmatpush.msra.mxu0 %v7715
    %7764 = vmatpush.msra.mxu0 %v7714
    %7765 = vmatpush.msra.mxu0 %v7713
    %7766 = vmatpush.msra.mxu0 %v7712
    %7767 = vmatpush.msra.mxu0 %v7711
    %7768 = vmatpush.msra.mxu0 %v7710
    %7769 = vmatpush.msra.mxu0 %v7709
    %7770 = vmatpush.msra.mxu0 %v7708
    %7771 = vmatpush.msra.mxu0 %v7707
    %7772 = vmatpush.msra.mxu0 %v7706
    %7773 = vmatpush.msra.mxu0 %v7705
    %7774 = vmatpush.msra.mxu0 %v7704
    %7775 = vmatmul.f32.gmra.mxu0 %v7700
    %v7776 = vpop.f32.mrf.mxu0
    %v7777 = vadd.f32 %v7754, %v7776
    %7778 = vmatmul.f32.gmra.mxu0 %v7701
    %v7779 = vpop.f32.mrf.mxu0
    %v7780 = vadd.f32 %v7757, %v7779
    %7781 = vdwg.mxu0
    %v7782 = vld [vmem:[%s19] sm:$0xff]
    %v7783 = vld [vmem:[%s19 + $0x8] sm:$0xff]
    %v7784 = vsub.f32 1.0, %v7782
    %v7785 = vsub.f32 1.0, %v7783
    %v7786 = vmul.f32 %v7784, 1e+30
    %v7787 = vmul.f32 %v7785, 1e+30
    %7789 = vset.pattern.permute.xlu0 0
    %7790 = vperm.xlu0 %7789, %v7777
    %v7791 = vpop.permute.xlu0 %7790
    %7794 = vset.pattern.permute.xlu0 0
    %7795 = vperm.xlu0 %7794, %v7780
    %v7796 = vpop.permute.xlu0 %7795
    %v7798 = vsub.f32 %v7791, %v7786
    %v7799 = vsub.f32 %v7796, %v7787
    %vm7800 = vcmask 15360
    %v7801 = vsel %vm7800, %v7798, -inf
    %v7802 = vsel %vm7800, %v7799, -inf
    %v7803 = vmax.f32 %v7801, %v7802
    %v7804 = vrot.slane %v7803, 4
    %v7805 = vmax.f32 %v7803, %v7804
    %v7806 = vrot.slane %v7805, 2
    %v7807 = vmax.f32 %v7805, %v7806
    %v7808 = vrot.slane %v7807, 1
    %v7809 = vmax.f32 %v7807, %v7808
    %v7810 = vsub.f32 %v7798, %v7809
    %v7811 = vsub.f32 %v7799, %v7809
    %v7812 = vmul.f32 %v7810, 1.442695
    %v7813 = vpow.pop %v7812
    %v7814 = vmul.f32 %v7811, 1.442695
    %v7815 = vpow.pop %v7814
    %v7816 = vmul.f32 %v7813, %v7782
    %v7817 = vmul.f32 %v7815, %v7783
    %v7818 = vsel %vm7800, %v7816, 0.0
    %v7819 = vsel %vm7800, %v7817, 0.0
    %v7820 = vadd.f32 %v7818, %v7819
    %v7821 = vrot.slane %v7820, 4
    %v7822 = vadd.f32 %v7820, %v7821
    %v7823 = vrot.slane %v7822, 2
    %v7824 = vadd.f32 %v7822, %v7823
    %v7825 = vrot.slane %v7824, 1
    %v7826 = vadd.f32 %v7824, %v7825
    %v7827 = vrcp.pop %v7826
    %v7828 = vmul.f32 %v7816, %v7827
    %v7829 = vmul.f32 %v7817, %v7827
    %v7830 = vsel %vm7800, %v7828, 0.0
    %7831 = vadd.xlane.f32.xlu0 %v7830
    %v7832 = vpop.xlane.xlu0 %7831
    %v7833 = vsel %vm7800, %v7829, 0.0
    %7834 = vadd.xlane.f32.xlu0 %v7833
    %v7835 = vpop.xlane.xlu0 %7834
    %v7836 = vld [vmem:[%s20] sm:$0x3]
    %v7837 = vmul.f32 %v7832, %v7700
    %v7838 = vmul.f32 %v7835, %v7701
    %vm7839 = vcmask 130048
    %v7841 = vsel %vm7839, %v7836, 0
    %7843 = vmatpush.msra.mxu0 0.0
    %7844 = vmatpush.msra.mxu0 0.0
    %7845 = vmatpush.msra.mxu0 0.0
    %7846 = vmatpush.msra.mxu0 0.0
    %7847 = vmatpush.msra.mxu0 0.0
    %7848 = vmatpush.msra.mxu0 0.0
    %7849 = vmatpush.msra.mxu0 0.0
    %7850 = vmatpush.msra.mxu0 0.0
    %7851 = vmatpush.msra.mxu0 0.0
    %7852 = vmatpush.msra.mxu0 0.0
    %7853 = vmatpush.msra.mxu0 0.0
    %7854 = vmatpush.msra.mxu0 0.0
    %7855 = vmatpush.msra.mxu0 0.0
    %7856 = vmatpush.msra.mxu0 0.0
    %7857 = vmatpush.msra.mxu0 %v7838
    %7858 = vmatpush.msra.mxu0 %v7837
    %7859 = vmatmul.f32.gmra.mxu0 %v7841
    %v7860 = vpop.f32.mrf.mxu0
    %v7861 = vadd.f32 0.0, %v7860
    %7862 = vdwg.mxu0
    %v7863 = vmul.f32 %v7832, %v7702
    %v7864 = vmul.f32 %v7835, %v7703
    %7865 = vmatpush.msra.mxu0 0.0
    %7866 = vmatpush.msra.mxu0 0.0
    %7867 = vmatpush.msra.mxu0 0.0
    %7868 = vmatpush.msra.mxu0 0.0
    %7869 = vmatpush.msra.mxu0 0.0
    %7870 = vmatpush.msra.mxu0 0.0
    %7871 = vmatpush.msra.mxu0 0.0
    %7872 = vmatpush.msra.mxu0 0.0
    %7873 = vmatpush.msra.mxu0 0.0
    %7874 = vmatpush.msra.mxu0 0.0
    %7875 = vmatpush.msra.mxu0 0.0
    %7876 = vmatpush.msra.mxu0 0.0
    %7877 = vmatpush.msra.mxu0 0.0
    %7878 = vmatpush.msra.mxu0 0.0
    %7879 = vmatpush.msra.mxu0 %v7864
    %7880 = vmatpush.msra.mxu0 %v7863
    %7881 = vmatmul.f32.gmra.mxu0 %v7841
    %v7882 = vpop.f32.mrf.mxu0
    %v7883 = vadd.f32 0.0, %v7882
    %7884 = vdwg.mxu0
    %v7885 = vld [vmem:[%s15] sm:$0xff]
    %v7886 = vld [vmem:[%s15 + $0x8] sm:$0xff]
    %v7887 = vld [vmem:[%s15 + $0x10] sm:$0xff]
    %v7888 = vld [vmem:[%s15 + $0x18] sm:$0xff]
    %v7889 = vld [vmem:[%s15 + $0x20] sm:$0xff]
    %v7890 = vld [vmem:[%s15 + $0x28] sm:$0xff]
    %v7891 = vld [vmem:[%s15 + $0x30] sm:$0xff]
    %v7892 = vld [vmem:[%s15 + $0x38] sm:$0xff]
    %v7893 = vld [vmem:[%s15 + $0x40] sm:$0xff]
    %v7894 = vld [vmem:[%s15 + $0x48] sm:$0xff]
    %v7895 = vld [vmem:[%s15 + $0x50] sm:$0xff]
    %v7896 = vld [vmem:[%s15 + $0x58] sm:$0xff]
    %v7897 = vld [vmem:[%s15 + $0x60] sm:$0xff]
    %v7898 = vld [vmem:[%s15 + $0x68] sm:$0xff]
    %v7899 = vld [vmem:[%s15 + $0x70] sm:$0xff]
    %v7900 = vld [vmem:[%s15 + $0x78] sm:$0xff]
    %v7901 = vld [vmem:[%s16] sm:$0xff]
    %v7902 = vld [vmem:[%s16 + $0x8] sm:$0xff]
    %v7903 = vld [vmem:[%s16 + $0x10] sm:$0xff]
    %v7904 = vld [vmem:[%s16 + $0x18] sm:$0xff]
    %v7905 = vld [vmem:[%s16 + $0x20] sm:$0xff]
    %v7906 = vld [vmem:[%s16 + $0x28] sm:$0xff]
    %v7907 = vld [vmem:[%s16 + $0x30] sm:$0xff]
    %v7908 = vld [vmem:[%s16 + $0x38] sm:$0xff]
    %v7909 = vld [vmem:[%s16 + $0x40] sm:$0xff]
    %v7910 = vld [vmem:[%s16 + $0x48] sm:$0xff]
    %v7911 = vld [vmem:[%s16 + $0x50] sm:$0xff]
    %v7912 = vld [vmem:[%s16 + $0x58] sm:$0xff]
    %v7913 = vld [vmem:[%s16 + $0x60] sm:$0xff]
    %v7914 = vld [vmem:[%s16 + $0x68] sm:$0xff]
    %v7915 = vld [vmem:[%s16 + $0x70] sm:$0xff]
    %v7916 = vld [vmem:[%s16 + $0x78] sm:$0xff]
    %7917 = vmatpush.msra.mxu0 %v7916
    %7918 = vmatpush.msra.mxu0 %v7915
    %7919 = vmatpush.msra.mxu0 %v7914
    %7920 = vmatpush.msra.mxu0 %v7913
    %7921 = vmatpush.msra.mxu0 %v7912
    %7922 = vmatpush.msra.mxu0 %v7911
    %7923 = vmatpush.msra.mxu0 %v7910
    %7924 = vmatpush.msra.mxu0 %v7909
    %7925 = vmatpush.msra.mxu0 %v7908
    %7926 = vmatpush.msra.mxu0 %v7907
    %7927 = vmatpush.msra.mxu0 %v7906
    %7928 = vmatpush.msra.mxu0 %v7905
    %7929 = vmatpush.msra.mxu0 %v7904
    %7930 = vmatpush.msra.mxu0 %v7903
    %7931 = vmatpush.msra.mxu0 %v7902
    %7932 = vmatpush.msra.mxu0 %v7901
    %7933 = vmatmul.f32.gmra.mxu0 %v7883
    %v7934 = vpop.f32.mrf.mxu0
    %v7935 = vadd.f32 0.0, %v7934
    %7936 = vdwg.mxu0
    %7937 = vmatpush.msra.mxu0 %v7900
    %7938 = vmatpush.msra.mxu0 %v7899
    %7939 = vmatpush.msra.mxu0 %v7898
    %7940 = vmatpush.msra.mxu0 %v7897
    %7941 = vmatpush.msra.mxu0 %v7896
    %7942 = vmatpush.msra.mxu0 %v7895
    %7943 = vmatpush.msra.mxu0 %v7894
    %7944 = vmatpush.msra.mxu0 %v7893
    %7945 = vmatpush.msra.mxu0 %v7892
    %7946 = vmatpush.msra.mxu0 %v7891
    %7947 = vmatpush.msra.mxu0 %v7890
    %7948 = vmatpush.msra.mxu0 %v7889
    %7949 = vmatpush.msra.mxu0 %v7888
    %7950 = vmatpush.msra.mxu0 %v7887
    %7951 = vmatpush.msra.mxu0 %v7886
    %7952 = vmatpush.msra.mxu0 %v7885
    %7953 = vmatmul.f32.gmra.mxu0 %v7861
    %v7954 = vpop.f32.mrf.mxu0
    %v7955 = vadd.f32 %v7935, %v7954
    %7956 = vdwg.mxu0
    %v7957 = vld [vmem:[%s17] sm:$0x1]
    %v7959 = vperm.slane %v7957, 0
    %v7961 = vadd.f32 %v7955, %v7959
    %s7962 = sld [smem:[#allocation18]]
    %vm7963 = vcmp.ge.f32.partialorder %v7961, 0.0
    %v7964 = vstv %s7962
    %v7965 = vmul.f32 %v7964, %v7961
    %v7966 = vsel %vm7963, %v7961, %v7965
    %v7967 = vld [vmem:[%s18] sm:$0xff]
    %v7968 = vld [vmem:[%s18 + $0x8] sm:$0xff]
    %v7969 = vld [vmem:[%s18 + $0x10] sm:$0xff]
    %v7970 = vld [vmem:[%s18 + $0x18] sm:$0xff]
    %v7971 = vld [vmem:[%s18 + $0x20] sm:$0xff]
    %v7972 = vld [vmem:[%s18 + $0x28] sm:$0xff]
    %v7973 = vld [vmem:[%s18 + $0x30] sm:$0xff]
    %v7974 = vld [vmem:[%s18 + $0x38] sm:$0xff]
    %s7975 = sld [smem:[#allocation18 + $0x1]]
    %v7976 = vstv %s7975
    %v7978 = vsel %vm219, %v7966, 0
    %7980 = vmatpush.msra.mxu0 0.0
    %7981 = vmatpush.msra.mxu0 0.0
    %7982 = vmatpush.msra.mxu0 0.0
    %7983 = vmatpush.msra.mxu0 0.0
    %7984 = vmatpush.msra.mxu0 0.0
    %7985 = vmatpush.msra.mxu0 0.0
    %7986 = vmatpush.msra.mxu0 0.0
    %7987 = vmatpush.msra.mxu0 0.0
    %7988 = vmatpush.msra.mxu0 %v7974
    %7989 = vmatpush.msra.mxu0 %v7973
    %7990 = vmatpush.msra.mxu0 %v7972
    %7991 = vmatpush.msra.mxu0 %v7971
    %7992 = vmatpush.msra.mxu0 %v7970
    %7993 = vmatpush.msra.mxu0 %v7969
    %7994 = vmatpush.msra.mxu0 %v7968
    %7995 = vmatpush.msra.mxu0 %v7967
    %7996 = vmatmul.f32.gmra.mxu0 %v7978
    %v7997 = vpop.f32.mrf.mxu0
    %v7998 = vadd.f32 %v7976, %v7997
    %7999 = vdwg.mxu0
    %vm8000 = vcmask 1024
    %8001 = vst.msk [vmem:[%s22] sm:$0x3] %vm8000, %v7998
    // Predicated region
    $region122: #{tpu_custom_call.1} parent=1 // pred_check
      _
    $region123: #{tpu_custom_call.1} parent=1 // pred_check_branch
      %8003 = sbr.rel (0) target = $region125
    $region124: #{tpu_custom_call.1} parent=1 // pred_region
      _
    $region125: #{tpu_custom_call.1} parent=1 // pred_fallthru
      _
    // Predicated region
    $region126: #{tpu_custom_call.1} parent=1 // pred_check
      _
    $region127: #{tpu_custom_call.1} parent=1 // pred_check_branch
      %8005 = sbr.rel (0) target = $region129
    $region128: #{tpu_custom_call.1} parent=1 // pred_region
      _
    $region129: #{tpu_custom_call.1} parent=1 // pred_fallthru
      _
    %8006 = vsyncpa [#allocation7], 1
    %8007 = vsyncpa [#allocation10], 1
    %8008 = vsyncpa [#allocation13], 1
    %8009 = vsyncpa [#allocation16], 1
    %8010 = vsyncpa [#allocation8], 1

</llo_original>
